<compile_context>
chip_gen: v6e
topology: v6e:2x2x1
jax: 0.10.0
libtpu: 0.0.40
codegen_flags: <defaults>
</compile_context>

<pallas_src>
import math
from functools import partial

import jax
import jax.numpy as jnp
from jax import lax
from jax.experimental import pallas as pl
from jax.experimental.pallas import tpu as pltpu

_SQRT2_INV = 1.0 / math.sqrt(2.0)
_LN_EPS = 1e-5
_BN_EPS = 1e-5


# ----------------------------- in-kernel math --------------------------------

def _erf(x):
    # Exact-erf GELU via Abramowitz-Stegun 7.1.26 (|err| < 1.5e-7); lax.erf has no
    # guaranteed Mosaic lowering.  Matches PyTorch's exact nn.GELU() to ~fp32.
    a1, a2, a3, a4, a5 = 0.254829592, -0.284496736, 1.421413741, -1.453152027, 1.061405429
    p = 0.3275911
    sgn = jnp.where(x >= 0.0, 1.0, -1.0)
    ax = jnp.abs(x)
    t = 1.0 / (1.0 + p * ax)
    poly = ((((a5 * t + a4) * t + a3) * t + a2) * t + a1) * t
    return sgn * (1.0 - poly * jnp.exp(-ax * ax))


def _gelu(x):
    return 0.5 * x * (1.0 + _erf(x * _SQRT2_INV))


def _attend_ln(lat, inp, wq, wkv, gamma, beta, scale, eps, D):
    """Single-head cross-attention (q = 1 latent token, kv = image tokens, merged
    K/V projection) + residual + LayerNorm.  All operands are in-register values."""
    q = jnp.dot(lat, wq, preferred_element_type=jnp.float32)          # (1, D)
    kv = jnp.dot(inp, wkv, preferred_element_type=jnp.float32)        # (N, 2D)
    k_ = kv[:, :D]
    v_ = kv[:, D:]
    sim = lax.dot_general(q, k_, (((1,), (1,)), ((), ())),
                          preferred_element_type=jnp.float32) * scale  # (1, N)
    sim = sim - jnp.max(sim, axis=-1, keepdims=True)
    p = jnp.exp(sim)
    attn = p / jnp.sum(p, axis=-1, keepdims=True)
    out = jnp.dot(attn, v_, preferred_element_type=jnp.float32)        # (1, D)
    y = lat + out                                                      # residual
    mu = jnp.mean(y, axis=-1, keepdims=True)
    var = jnp.mean(jnp.square(y - mu), axis=-1, keepdims=True)
    return ((y - mu) * lax.rsqrt(var + eps)) * gamma + beta


# -------------------------------- fused kernel ---------------------------------

def _fused_kernel(pat_ref, lat_ref, mask_ref, we_ref, te_ref, wq_ref, wkv_ref,
                  g_ref, b_ref, w1_ref, t1_ref, w2_ref, t2_ref, w3_ref, t3_ref,
                  wh_ref, bh_ref, out_ref, hpad_ref, hcat_ref,
                  *, L, k, Wo, HW, D, halo, scale, eps):
    """Whole Conformer_1 forward for one batch image; everything stays on-chip."""
    pad = k // 2

    # Zero the halo scratch once per image; row-overflow taps read zeros from it
    # (the interior is overwritten each layer, the halo stays zero).
    hpad_ref[...] = jnp.zeros_like(hpad_ref)

    # Hoisted constant operand loads (shared attention / LN weights).
    wq = wq_ref[...]
    wkv = wkv_ref[...]
    gamma = g_ref[...]
    beta = b_ref[...]
    col_masks = [mask_ref[i] for i in range(k)]     # k x (HW, 1) column-validity masks

    # Patch-embed matmul (BN folded into columns) + GELU.
    x = _gelu(jnp.dot(pat_ref[0], we_ref[...], preferred_element_type=jnp.float32)
              + te_ref[...])                                           # (HW, D)
    # First cross-attention + residual + LayerNorm on the latent token.
    lat = _attend_ln(lat_ref[...], x, wq, wkv, gamma, beta, scale, eps, D)

    for l in range(L):                                                 # unrolled, L static
        # conv1 (1x1) + BN + GELU
        h = _gelu(jnp.dot(x, w1_ref[l], preferred_element_type=jnp.float32) + t1_ref[l])
        # Stage into the zero-padded halo buffer (sublane-aligned interior offset).
        hpad_ref[pl.ds(halo, HW), :] = h
        # Pack every kxk tap (shifted view * column mask) into one lane-dense buffer.
        for kh in range(k):
            for kw in range(k):
                off = (kh - pad) * Wo + (kw - pad)
                tap = kh * k + kw
                shifted = hpad_ref[pl.ds(halo + off, HW), :]            # static sublane slice
                hcat_ref[:, pl.ds(tap * D, D)] = shifted * col_masks[kw]
        # conv2 (kxk) as ONE im2col matmul over K = k*k*D, + BN + GELU
        h2 = _gelu(jnp.dot(hcat_ref[...], w2_ref[l], preferred_element_type=jnp.float32)
                   + t2_ref[l])
        # conv3 (1x1) + BN + GELU + residual
        x = x + _gelu(jnp.dot(h2, w3_ref[l], preferred_element_type=jnp.float32) + t3_ref[l])
        # cross-attention + residual + LayerNorm
        lat = _attend_ln(lat, x, wq, wkv, gamma, beta, scale, eps, D)

    # mean over n (n == 1) + classification head, fused.
    out_ref[0] = (jnp.dot(lat, wh_ref[...], preferred_element_type=jnp.float32)
                  + bh_ref[...]).astype(out_ref.dtype)


def _fused_call(patches, latent, masks, w_emb, t_emb, wq, wkv, gamma, beta,
                w1s, t1s, w2s, t2s, w3s, t3s, w_head, b_head, *, k, Wo, D, scale):
    B, HW, Kp = patches.shape
    L = w1s.shape[0]
    kk = k * k
    C = w_head.shape[1]
    pad = k // 2
    halo = ((pad * Wo + pad + 7) // 8) * 8          # sublane-aligned halo rows

    kernel = partial(_fused_kernel, L=L, k=k, Wo=Wo, HW=HW, D=D,
                     halo=halo, scale=scale, eps=_LN_EPS)

    out = pl.pallas_call(
        kernel,
        grid=(B,),
        in_specs=[
            pl.BlockSpec((1, HW, Kp), lambda i: (i, 0, 0)),       # patches (per image)
            pl.BlockSpec((1, D), lambda i: (0, 0)),               # latent parameter
            pl.BlockSpec((k, HW, 1), lambda i: (0, 0, 0)),        # column-validity masks
            pl.BlockSpec((Kp, D), lambda i: (0, 0)),              # embed weight (BN folded)
            pl.BlockSpec((1, D), lambda i: (0, 0)),               # embed shift
            pl.BlockSpec((D, D), lambda i: (0, 0)),               # Wq
            pl.BlockSpec((D, 2 * D), lambda i: (0, 0)),           # merged W_kv
            pl.BlockSpec((1, D), lambda i: (0, 0)),               # LN gamma
            pl.BlockSpec((1, D), lambda i: (0, 0)),               # LN beta
            pl.BlockSpec((L, D, D), lambda i: (0, 0, 0)),         # conv1 weights (stacked)
            pl.BlockSpec((L, 1, D), lambda i: (0, 0, 0)),         # conv1 shifts
            pl.BlockSpec((L, kk * D, D), lambda i: (0, 0, 0)),    # conv2 im2col weights
            pl.BlockSpec((L, 1, D), lambda i: (0, 0, 0)),         # conv2 shifts
            pl.BlockSpec((L, D, D), lambda i: (0, 0, 0)),         # conv3 weights
            pl.BlockSpec((L, 1, D), lambda i: (0, 0, 0)),         # conv3 shifts
            pl.BlockSpec((D, C), lambda i: (0, 0)),               # head weight
            pl.BlockSpec((1, C), lambda i: (0, 0)),               # head bias
        ],
        out_specs=pl.BlockSpec((1, 1, C), lambda i: (i, 0, 0)),
        out_shape=jax.ShapeDtypeStruct((B, 1, C), jnp.float32),
        scratch_shapes=[
            pltpu.VMEM((HW + 2 * halo, D), jnp.float32),          # zero-padded halo buffer
            pltpu.VMEM((HW, kk * D), jnp.float32),                # packed im2col taps
        ],
        compiler_params=pltpu.CompilerParams(dimension_semantics=("parallel",)),
    )(patches, latent, masks, w_emb, t_emb, wq, wkv, gamma, beta,
      w1s, t1s, w2s, t2s, w3s, t3s, w_head, b_head)
    return out.reshape(B, C)


# --------------------------- BN folding / weight prep ---------------------------

def _fold_bn(bn, bias):
    s = bn['gamma'] / jnp.sqrt(bn['var'] + _BN_EPS)
    t = ((bias if bias is not None else 0.0) - bn['mean']) * s + bn['beta']
    return s, t


def _prep_conv1x1(w_oihw, bias, bn):
    s, t = _fold_bn(bn, bias)
    w = w_oihw[:, :, 0, 0].T * s[None, :]             # (Cin, Cout), BN scale folded
    return w, t.reshape(1, -1)


def _prep_convkk(w_oihw, bn):
    # (O, I, kh, kw) -> im2col layout (kh*kw*I, O) matching the kernel's tap packing.
    s, t = _fold_bn(bn, None)
    co, ci, k, _ = w_oihw.shape
    w = jnp.transpose(w_oihw, (2, 3, 1, 0)).reshape(k * k * ci, co) * s[None, :]
    return w, t.reshape(1, -1)


def _prep_embed(w_oihw, bias, bn):
    s, t = _fold_bn(bn, bias)
    co, ci, p, _ = w_oihw.shape
    w = jnp.transpose(w_oihw, (2, 3, 1, 0)).reshape(p * p * ci, co) * s[None, :]
    return w, t.reshape(1, -1)


# ------------------------------- forward ----------------------------------------

def conformer_forward(x_nchw, params, cfg):
    D, k, p = cfg['hidden_dim'], cfg['kernel_size'], cfg['patch_size']
    b = x_nchw.shape[0]
    x = jnp.transpose(x_nchw, (0, 2, 3, 1))            # NHWC
    _, H, W, Cin = x.shape
    Ho, Wo = H // p, W // p
    HW = Ho * Wo
    pad = k // 2
    scale = float(D) ** -0.5                            # heads=1, dim_head=D

    # patch extraction (plain-JAX glue; column order (ph, pw, cin))
    patches = (x.reshape(b, Ho, p, Wo, p, Cin)
                .transpose(0, 1, 3, 2, 4, 5)
                .reshape(b, HW, p * p * Cin))

    # Host-precomputed column-validity masks for the in-kernel kxk conv taps
    # (row overflow is handled by the zero halo buffer, so masks depend only on dw).
    j = jnp.arange(HW, dtype=jnp.int32) % Wo
    dw = jnp.arange(k, dtype=jnp.int32) - pad
    jd = j[None, :] + dw[:, None]
    masks = ((jd >= 0) & (jd < Wo)).astype(jnp.float32)[:, :, None]   # (k, HW, 1)

    emb = params['embed']
    w_emb, t_emb = _prep_embed(emb['w'], emb['b'], emb['bn'])
    a, ln = params['attn'], params['ln']
    wkv_cat = jnp.concatenate([a['wkv'][0], a['wkv'][1]], axis=1)      # (D, 2D) merged K|V
    gamma = ln['gamma'].reshape(1, D)
    beta = ln['beta'].reshape(1, D)

    w1s, t1s, w2s, t2s, w3s, t3s = [], [], [], [], [], []
    for lyr in params['layers']:
        w1, t1 = _prep_conv1x1(lyr['w1'], lyr['b1'], lyr['bn1'])
        w2, t2 = _prep_convkk(lyr['w2'], lyr['bn2'])
        w3, t3 = _prep_conv1x1(lyr['w3'], lyr['b3'], lyr['bn3'])
        w1s.append(w1); t1s.append(t1); w2s.append(w2)
        t2s.append(t2); w3s.append(w3); t3s.append(t3)
    w1s, t1s = jnp.stack(w1s), jnp.stack(t1s)
    w2s, t2s = jnp.stack(w2s), jnp.stack(t2s)
    w3s, t3s = jnp.stack(w3s), jnp.stack(t3s)

    return _fused_call(patches, params['latent'], masks, w_emb, t_emb, a['wq'], wkv_cat,
                       gamma, beta, w1s, t1s, w2s, t2s, w3s, t3s,
                       params['logits_w'], params['logits_b'].reshape(1, -1),
                       k=k, Wo=Wo, D=D, scale=scale)


# ------------------------- pure-JAX reference (for checking) --------------------

def reference_forward(x_nchw, params, cfg):
    D, k, p = cfg['hidden_dim'], cfg['kernel_size'], cfg['patch_size']
    hi = lax.Precision.HIGHEST
    scale = float(D) ** -0.5

    def conv2d(a, w, stride, pad, bias):
        y = lax.conv_general_dilated(
            a, w, window_strides=(stride, stride),
            padding=[(pad, pad), (pad, pad)],
            dimension_numbers=('NHWC', 'OIHW', 'NHWC'),
            precision=hi)
        return y if bias is None else y + bias

    def bn(a, P):
        return (a - P['mean']) / jnp.sqrt(P['var'] + _BN_EPS) * P['gamma'] + P['beta']

    def attend_ln(latent, inp):
        ap, ln = params['attn'], params['ln']
        q = jnp.einsum('bnd,de->bne', latent, ap['wq'], precision=hi)
        k_ = jnp.einsum('bnd,de->bne', inp, ap['wkv'][0], precision=hi)
        v_ = jnp.einsum('bnd,de->bne', inp, ap['wkv'][1], precision=hi)
        sim = jnp.einsum('bid,bjd->bij', q, k_, precision=hi) * scale
        attn = jax.nn.softmax(sim, axis=-1)
        out = jnp.einsum('bij,bjd->bid', attn, v_, precision=hi)
        y = latent + out
        mu = jnp.mean(y, axis=-1, keepdims=True)
        var = jnp.mean(jnp.square(y - mu), axis=-1, keepdims=True)
        return (y - mu) / jnp.sqrt(var + _LN_EPS) * ln['gamma'] + ln['beta']

    b = x_nchw.shape[0]
    x = jnp.transpose(x_nchw, (0, 2, 3, 1))
    emb = params['embed']
    x = _gelu(bn(conv2d(x, emb['w'], p, 0, emb['b']), emb['bn']))
    latent = jnp.broadcast_to(params['latent'][None, :, :], (b, 1, D))
    latent = attend_ln(latent, x.reshape(b, -1, D))
    for lyr in params['layers']:
        h = _gelu(bn(conv2d(x, lyr['w1'], 1, 0, lyr['b1']), lyr['bn1']))
        h = _gelu(bn(conv2d(h, lyr['w2'], 1, k // 2, None), lyr['bn2']))
        h = _gelu(bn(conv2d(h, lyr['w3'], 1, 0, lyr['b3']), lyr['bn3']))
        x = x + h
        latent = attend_ln(latent, x.reshape(b, -1, D))
    lat = jnp.mean(latent, axis=1)
    return jnp.einsum('bd,dc->bc', lat, params['logits_w'], precision=hi) + params['logits_b']


# ------------------------------- params ----------------------------------------

def init_params(key, cfg):
    D, k, p, C = cfg['hidden_dim'], cfg['kernel_size'], cfg['patch_size'], cfg['num_classes']
    keys = iter(jax.random.split(key, 256))

    def nrm(shape, sc):
        return jax.random.normal(next(keys), shape, jnp.float32) * sc

    def bnp():
        return dict(gamma=jax.random.uniform(next(keys), (D,), jnp.float32, 0.5, 1.5),
                    beta=nrm((D,), 0.1),
                    mean=nrm((D,), 0.1),
                    var=jax.random.uniform(next(keys), (D,), jnp.float32, 0.5, 1.5))

    params = {}
    params['latent'] = nrm((1, D), 1.0)                                  # nn.Parameter(randn(1, D))
    params['embed'] = dict(w=nrm((D, 3, p, p), 1.0 / math.sqrt(3 * p * p)),  # torch (O,I,kh,kw)
                           b=nrm((D,), 0.05),
                           bn=bnp())
    layers = []
    for _ in range(cfg['num_layers']):
        layers.append(dict(
            w1=nrm((D, D, 1, 1), 1.0 / math.sqrt(D)), b1=nrm((D,), 0.05), bn1=bnp(),
            w2=nrm((D, D, k, k), 1.0 / math.sqrt(D * k * k)), bn2=bnp(),
            w3=nrm((D, D, 1, 1), 1.0 / math.sqrt(D)), b3=nrm((D,), 0.05), bn3=bnp()))
    params['layers'] = layers
    params['attn'] = dict(wq=nrm((D, D), 1.0 / math.sqrt(D)),            # (in, out)
                          wkv=nrm((2, D, D), 1.0 / math.sqrt(D)))        # stacked k/v (in, out)
    params['ln'] = dict(gamma=jnp.ones((D,), jnp.float32), beta=jnp.zeros((D,), jnp.float32))
    params['logits_w'] = nrm((D, C), 1.0 / math.sqrt(D))
    params['logits_b'] = nrm((C,), 0.05)
    return params


# --------------------------------- main -----------------------------------------

if __name__ == "__main__":
    cfg = dict(num_layers=2, hidden_dim=32, kernel_size=5, patch_size=2, num_classes=10)
    key = jax.random.PRNGKey(0)
    kp, kx = jax.random.split(key)
    params = init_params(kp, cfg)
    x = jax.random.normal(kx, (2, 3, 16, 16), jnp.float32)   # NCHW, 3 channels as in the module

    fwd = jax.jit(partial(conformer_forward, cfg=cfg))
    logits = fwd(x, params)
    jax.block_until_ready(logits)

    ref = jax.jit(partial(reference_forward, cfg=cfg))(x, params)
    jax.block_until_ready(ref)

    assert logits.shape == (2, cfg['num_classes'])
    assert bool(jnp.all(jnp.isfinite(logits)))
    err = float(jnp.max(jnp.abs(logits - ref)))
    tol = 1e-2 + 1e-2 * float(jnp.max(jnp.abs(ref)))
    assert err <= tol, f"kernel/reference mismatch: max abs err = {err} (tol {tol})"
    print("KERNEL_OK")
</pallas_src>

<mosaic_0001>
module attributes {stable_mosaic.version = 11 : i64} {
  func.func @_fused_kernel(%arg0: i32, %arg1: memref<1x64x12xf32, #tpu.memory_space<vmem>>, %arg2: memref<1x32xf32, #tpu.memory_space<vmem>>, %arg3: memref<5x64x1xf32, #tpu.memory_space<vmem>>, %arg4: memref<12x32xf32, #tpu.memory_space<vmem>>, %arg5: memref<1x32xf32, #tpu.memory_space<vmem>>, %arg6: memref<32x32xf32, #tpu.memory_space<vmem>>, %arg7: memref<32x64xf32, #tpu.memory_space<vmem>>, %arg8: memref<1x32xf32, #tpu.memory_space<vmem>>, %arg9: memref<1x32xf32, #tpu.memory_space<vmem>>, %arg10: memref<2x32x32xf32, #tpu.memory_space<vmem>>, %arg11: memref<2x1x32xf32, #tpu.memory_space<vmem>>, %arg12: memref<2x800x32xf32, #tpu.memory_space<vmem>>, %arg13: memref<2x1x32xf32, #tpu.memory_space<vmem>>, %arg14: memref<2x32x32xf32, #tpu.memory_space<vmem>>, %arg15: memref<2x1x32xf32, #tpu.memory_space<vmem>>, %arg16: memref<32x10xf32, #tpu.memory_space<vmem>>, %arg17: memref<1x10xf32, #tpu.memory_space<vmem>>, %arg18: memref<1x1x10xf32, #tpu.memory_space<vmem>>, %arg19: memref<112x32xf32, #tpu.memory_space<vmem>>, %arg20: memref<64x800xf32, #tpu.memory_space<vmem>>) attributes {dimension_semantics = [#tpu.dimension_semantics<parallel>], iteration_bounds = array<i64: 2>, scalar_prefetch = 0 : i64, scratch_operands = 2 : i64, tpu.core_type = #tpu.core_type<tc>, window_params = [{transform_indices = @transform_0, window_bounds = array<i64: 1, 64, 12>}, {pipeline_mode = #tpu.pipeline_mode<synchronous>, transform_indices = @transform_1, window_bounds = array<i64: 1, 32>}, {pipeline_mode = #tpu.pipeline_mode<synchronous>, transform_indices = @transform_2, window_bounds = array<i64: 5, 64, 1>}, {pipeline_mode = #tpu.pipeline_mode<synchronous>, transform_indices = @transform_3, window_bounds = array<i64: 12, 32>}, {pipeline_mode = #tpu.pipeline_mode<synchronous>, transform_indices = @transform_4, window_bounds = array<i64: 1, 32>}, {pipeline_mode = #tpu.pipeline_mode<synchronous>, transform_indices = @transform_5, window_bounds = array<i64: 32, 32>}, {pipeline_mode = #tpu.pipeline_mode<synchronous>, transform_indices = @transform_6, window_bounds = array<i64: 32, 64>}, {pipeline_mode = #tpu.pipeline_mode<synchronous>, transform_indices = @transform_7, window_bounds = array<i64: 1, 32>}, {pipeline_mode = #tpu.pipeline_mode<synchronous>, transform_indices = @transform_8, window_bounds = array<i64: 1, 32>}, {pipeline_mode = #tpu.pipeline_mode<synchronous>, transform_indices = @transform_9, window_bounds = array<i64: 2, 32, 32>}, {pipeline_mode = #tpu.pipeline_mode<synchronous>, transform_indices = @transform_10, window_bounds = array<i64: 2, 1, 32>}, {pipeline_mode = #tpu.pipeline_mode<synchronous>, transform_indices = @transform_11, window_bounds = array<i64: 2, 800, 32>}, {pipeline_mode = #tpu.pipeline_mode<synchronous>, transform_indices = @transform_12, window_bounds = array<i64: 2, 1, 32>}, {pipeline_mode = #tpu.pipeline_mode<synchronous>, transform_indices = @transform_13, window_bounds = array<i64: 2, 32, 32>}, {pipeline_mode = #tpu.pipeline_mode<synchronous>, transform_indices = @transform_14, window_bounds = array<i64: 2, 1, 32>}, {pipeline_mode = #tpu.pipeline_mode<synchronous>, transform_indices = @transform_15, window_bounds = array<i64: 32, 10>}, {pipeline_mode = #tpu.pipeline_mode<synchronous>, transform_indices = @transform_16, window_bounds = array<i64: 1, 10>}, {transform_indices = @transform_17, window_bounds = array<i64: 1, 1, 10>}]} {
    %cst = arith.constant 0.000000e+00 : f32
    %0 = vector.broadcast %cst : f32 to vector<112x32xf32>
    %c0 = arith.constant 0 : index
    %c0_0 = arith.constant 0 : index
    %1 = vector.load %arg19[%c0, %c0_0] : memref<112x32xf32, #tpu.memory_space<vmem>>, vector<112x32xf32>
    tpu.vector_store %arg19[%c0, %c0_0], %0 {strides = array<i32>} : memref<112x32xf32, #tpu.memory_space<vmem>>, vector<112x32xf32>,
    %c0_1 = arith.constant 0 : index
    %c0_2 = arith.constant 0 : index
    %2 = vector.load %arg6[%c0_1, %c0_2] : memref<32x32xf32, #tpu.memory_space<vmem>>, vector<32x32xf32>
    %c0_3 = arith.constant 0 : index
    %c0_4 = arith.constant 0 : index
    %3 = vector.load %arg7[%c0_3, %c0_4] : memref<32x64xf32, #tpu.memory_space<vmem>>, vector<32x64xf32>
    %c0_5 = arith.constant 0 : index
    %c0_6 = arith.constant 0 : index
    %4 = vector.load %arg8[%c0_5, %c0_6] : memref<1x32xf32, #tpu.memory_space<vmem>>, vector<1x32xf32>
    %c0_7 = arith.constant 0 : index
    %c0_8 = arith.constant 0 : index
    %5 = vector.load %arg9[%c0_7, %c0_8] : memref<1x32xf32, #tpu.memory_space<vmem>>, vector<1x32xf32>
    %c0_9 = arith.constant 0 : index
    %c0_10 = arith.constant 0 : index
    %c0_11 = arith.constant 0 : index
    %6 = vector.load %arg3[%c0_9, %c0_10, %c0_11] : memref<5x64x1xf32, #tpu.memory_space<vmem>>, vector<1x64x1xf32>
    %7 = vector.shape_cast %6 : vector<1x64x1xf32> to vector<64x1xf32>
    %c1 = arith.constant 1 : index
    %c0_12 = arith.constant 0 : index
    %c0_13 = arith.constant 0 : index
    %8 = vector.load %arg3[%c1, %c0_12, %c0_13] : memref<5x64x1xf32, #tpu.memory_space<vmem>>, vector<1x64x1xf32>
    %9 = vector.shape_cast %8 : vector<1x64x1xf32> to vector<64x1xf32>
    %c2 = arith.constant 2 : index
    %c0_14 = arith.constant 0 : index
    %c0_15 = arith.constant 0 : index
    %10 = vector.load %arg3[%c2, %c0_14, %c0_15] : memref<5x64x1xf32, #tpu.memory_space<vmem>>, vector<1x64x1xf32>
    %11 = vector.shape_cast %10 : vector<1x64x1xf32> to vector<64x1xf32>
    %c3 = arith.constant 3 : index
    %c0_16 = arith.constant 0 : index
    %c0_17 = arith.constant 0 : index
    %12 = vector.load %arg3[%c3, %c0_16, %c0_17] : memref<5x64x1xf32, #tpu.memory_space<vmem>>, vector<1x64x1xf32>
    %13 = vector.shape_cast %12 : vector<1x64x1xf32> to vector<64x1xf32>
    %c4 = arith.constant 4 : index
    %c0_18 = arith.constant 0 : index
    %c0_19 = arith.constant 0 : index
    %14 = vector.load %arg3[%c4, %c0_18, %c0_19] : memref<5x64x1xf32, #tpu.memory_space<vmem>>, vector<1x64x1xf32>
    %15 = vector.shape_cast %14 : vector<1x64x1xf32> to vector<64x1xf32>
    %c0_20 = arith.constant 0 : index
    %c0_21 = arith.constant 0 : index
    %c0_22 = arith.constant 0 : index
    %16 = vector.load %arg1[%c0_20, %c0_21, %c0_22] : memref<1x64x12xf32, #tpu.memory_space<vmem>>, vector<1x64x12xf32>
    %17 = vector.shape_cast %16 : vector<1x64x12xf32> to vector<64x12xf32>
    %c0_23 = arith.constant 0 : index
    %c0_24 = arith.constant 0 : index
    %18 = vector.load %arg4[%c0_23, %c0_24] : memref<12x32xf32, #tpu.memory_space<vmem>>, vector<12x32xf32>
    %cst_25 = arith.constant dense<0.000000e+00> : vector<64x32xf32>
    %19 = tpu.matmul %17, %18, %cst_25 {dimension_numbers = #tpu.dot_dimension_numbers<[1], [0], [0], [1], [0, 0, 1, 1], [], []>} : vector<64x12xf32>, vector<12x32xf32>, vector<64x32xf32> -> vector<64x32xf32>
    %c0_26 = arith.constant 0 : index
    %c0_27 = arith.constant 0 : index
    %20 = vector.load %arg5[%c0_26, %c0_27] : memref<1x32xf32, #tpu.memory_space<vmem>>, vector<1x32xf32>
    %21 = vector.broadcast %20 : vector<1x32xf32> to vector<64x32xf32>
    %22 = arith.addf %19, %21 : vector<64x32xf32>
    %cst_28 = arith.constant 5.000000e-01 : f32
    %23 = vector.broadcast %cst_28 : f32 to vector<64x32xf32>
    %24 = arith.mulf %23, %22 : vector<64x32xf32>
    %cst_29 = arith.constant 0.707106769 : f32
    %25 = vector.broadcast %cst_29 : f32 to vector<64x32xf32>
    %26 = arith.mulf %22, %25 : vector<64x32xf32>
    %cst_30 = arith.constant 0.000000e+00 : f32
    %27 = vector.broadcast %cst_30 : f32 to vector<64x32xf32>
    %28 = arith.cmpf oge, %26, %27 : vector<64x32xf32>
    %cst_31 = arith.constant 1.000000e+00 : f32
    %cst_32 = arith.constant -1.000000e+00 : f32
    %29 = vector.broadcast %cst_31 : f32 to vector<64x32xf32>
    %30 = vector.broadcast %cst_32 : f32 to vector<64x32xf32>
    %31 = arith.select %28, %29, %30 : vector<64x32xi1>, vector<64x32xf32>
    %32 = math.absf %26 : vector<64x32xf32>
    %cst_33 = arith.constant 0.327591091 : f32
    %33 = vector.broadcast %cst_33 : f32 to vector<64x32xf32>
    %34 = arith.mulf %33, %32 : vector<64x32xf32>
    %cst_34 = arith.constant 1.000000e+00 : f32
    %35 = vector.broadcast %cst_34 : f32 to vector<64x32xf32>
    %36 = arith.addf %35, %34 : vector<64x32xf32>
    %cst_35 = arith.constant 1.000000e+00 : f32
    %37 = vector.broadcast %cst_35 : f32 to vector<64x32xf32>
    %38 = arith.divf %37, %36 : vector<64x32xf32>
    %cst_36 = arith.constant 1.06140542 : f32
    %39 = vector.broadcast %cst_36 : f32 to vector<64x32xf32>
    %40 = arith.mulf %39, %38 : vector<64x32xf32>
    %cst_37 = arith.constant -1.45315206 : f32
    %41 = vector.broadcast %cst_37 : f32 to vector<64x32xf32>
    %42 = arith.addf %40, %41 : vector<64x32xf32>
    %43 = arith.mulf %42, %38 : vector<64x32xf32>
    %cst_38 = arith.constant 1.42141378 : f32
    %44 = vector.broadcast %cst_38 : f32 to vector<64x32xf32>
    %45 = arith.addf %43, %44 : vector<64x32xf32>
    %46 = arith.mulf %45, %38 : vector<64x32xf32>
    %cst_39 = arith.constant -0.284496725 : f32
    %47 = vector.broadcast %cst_39 : f32 to vector<64x32xf32>
    %48 = arith.addf %46, %47 : vector<64x32xf32>
    %49 = arith.mulf %48, %38 : vector<64x32xf32>
    %cst_40 = arith.constant 0.254829586 : f32
    %50 = vector.broadcast %cst_40 : f32 to vector<64x32xf32>
    %51 = arith.addf %49, %50 : vector<64x32xf32>
    %52 = arith.mulf %51, %38 : vector<64x32xf32>
    %cst_41 = arith.constant 0.000000e+00 : f32
    %53 = vector.broadcast %cst_41 : f32 to vector<64x32xf32>
    %54 = arith.subf %53, %32 : vector<64x32xf32>
    %55 = arith.mulf %54, %32 : vector<64x32xf32>
    %56 = math.exp %55 : vector<64x32xf32>
    %57 = arith.mulf %52, %56 : vector<64x32xf32>
    %cst_42 = arith.constant 1.000000e+00 : f32
    %58 = vector.broadcast %cst_42 : f32 to vector<64x32xf32>
    %59 = arith.subf %58, %57 : vector<64x32xf32>
    %60 = arith.mulf %31, %59 : vector<64x32xf32>
    %cst_43 = arith.constant 1.000000e+00 : f32
    %61 = vector.broadcast %cst_43 : f32 to vector<64x32xf32>
    %62 = arith.addf %61, %60 : vector<64x32xf32>
    %63 = arith.mulf %24, %62 : vector<64x32xf32>
    %c0_44 = arith.constant 0 : index
    %c0_45 = arith.constant 0 : index
    %64 = vector.load %arg2[%c0_44, %c0_45] : memref<1x32xf32, #tpu.memory_space<vmem>>, vector<1x32xf32>
    %cst_46 = arith.constant dense<0.000000e+00> : vector<1x32xf32>
    %65 = tpu.matmul %64, %2, %cst_46 {dimension_numbers = #tpu.dot_dimension_numbers<[1], [0], [0], [1], [0, 0, 1, 1], [], []>} : vector<1x32xf32>, vector<32x32xf32>, vector<1x32xf32> -> vector<1x32xf32>
    %cst_47 = arith.constant dense<0.000000e+00> : vector<64x64xf32>
    %66 = tpu.matmul %63, %3, %cst_47 {dimension_numbers = #tpu.dot_dimension_numbers<[1], [0], [0], [1], [0, 0, 1, 1], [], []>} : vector<64x32xf32>, vector<32x64xf32>, vector<64x64xf32> -> vector<64x64xf32>
    %67 = vector.extract_strided_slice %66 {offsets = [0, 0], sizes = [64, 32], strides = [1, 1]} : vector<64x64xf32> to vector<64x32xf32>
    %68 = vector.extract_strided_slice %66 {offsets = [0, 32], sizes = [64, 32], strides = [1, 1]} : vector<64x64xf32> to vector<64x32xf32>
    %cst_48 = arith.constant dense<0.000000e+00> : vector<1x64xf32>
    %69 = tpu.matmul %65, %67, %cst_48 {dimension_numbers = #tpu.dot_dimension_numbers<[1], [1], [0], [0], [0, 0, 1, 0], [], []>} : vector<1x32xf32>, vector<64x32xf32>, vector<1x64xf32> -> vector<1x64xf32>
    %cst_49 = arith.constant 0.176776692 : f32
    %70 = vector.broadcast %cst_49 : f32 to vector<1x64xf32>
    %71 = arith.mulf %69, %70 : vector<1x64xf32>
    %cst_50 = arith.constant dense<0xFF800000> : vector<1xf32>
    %72 = vector.multi_reduction <maximumf>, %71, %cst_50 [1] : vector<1x64xf32> to vector<1xf32>
    %73 = vector.shape_cast %72 : vector<1xf32> to vector<1x1xf32>
    %74 = vector.broadcast %73 : vector<1x1xf32> to vector<1x64xf32>
    %75 = arith.subf %71, %74 : vector<1x64xf32>
    %76 = math.exp %75 : vector<1x64xf32>
    %cst_51 = arith.constant dense<0.000000e+00> : vector<1xf32>
    %77 = vector.multi_reduction <add>, %76, %cst_51 [1] : vector<1x64xf32> to vector<1xf32>
    %78 = vector.shape_cast %77 : vector<1xf32> to vector<1x1xf32>
    %79 = vector.broadcast %78 : vector<1x1xf32> to vector<1x64xf32>
    %80 = arith.divf %76, %79 : vector<1x64xf32>
    %cst_52 = arith.constant dense<0.000000e+00> : vector<1x32xf32>
    %81 = tpu.matmul %80, %68, %cst_52 {dimension_numbers = #tpu.dot_dimension_numbers<[1], [0], [0], [1], [0, 0, 1, 1], [], []>} : vector<1x64xf32>, vector<64x32xf32>, vector<1x32xf32> -> vector<1x32xf32>
    %82 = arith.addf %64, %81 : vector<1x32xf32>
    %cst_53 = arith.constant dense<0.000000e+00> : vector<1xf32>
    %83 = vector.multi_reduction <add>, %82, %cst_53 [1] : vector<1x32xf32> to vector<1xf32>
    %84 = vector.shape_cast %83 : vector<1xf32> to vector<1x1xf32>
    %cst_54 = arith.constant 3.200000e+01 : f32
    %85 = vector.broadcast %cst_54 : f32 to vector<1x1xf32>
    %86 = arith.divf %84, %85 : vector<1x1xf32>
    %87 = vector.broadcast %86 : vector<1x1xf32> to vector<1x32xf32>
    %88 = arith.subf %82, %87 : vector<1x32xf32>
    %89 = arith.mulf %88, %88 : vector<1x32xf32>
    %cst_55 = arith.constant dense<0.000000e+00> : vector<1xf32>
    %90 = vector.multi_reduction <add>, %89, %cst_55 [1] : vector<1x32xf32> to vector<1xf32>
    %91 = vector.shape_cast %90 : vector<1xf32> to vector<1x1xf32>
    %cst_56 = arith.constant 3.200000e+01 : f32
    %92 = vector.broadcast %cst_56 : f32 to vector<1x1xf32>
    %93 = arith.divf %91, %92 : vector<1x1xf32>
    %94 = vector.broadcast %86 : vector<1x1xf32> to vector<1x32xf32>
    %95 = arith.subf %82, %94 : vector<1x32xf32>
    %cst_57 = arith.constant 9.99999974E-6 : f32
    %96 = vector.broadcast %cst_57 : f32 to vector<1x1xf32>
    %97 = arith.addf %93, %96 : vector<1x1xf32>
    %98 = math.rsqrt %97 : vector<1x1xf32>
    %99 = vector.broadcast %98 : vector<1x1xf32> to vector<1x32xf32>
    %100 = arith.mulf %95, %99 : vector<1x32xf32>
    %101 = arith.mulf %100, %4 : vector<1x32xf32>
    %102 = arith.addf %101, %5 : vector<1x32xf32>
    %c0_58 = arith.constant 0 : index
    %c0_59 = arith.constant 0 : index
    %c0_60 = arith.constant 0 : index
    %103 = vector.load %arg10[%c0_58, %c0_59, %c0_60] : memref<2x32x32xf32, #tpu.memory_space<vmem>>, vector<1x32x32xf32>
    %104 = vector.shape_cast %103 : vector<1x32x32xf32> to vector<32x32xf32>
    %cst_61 = arith.constant dense<0.000000e+00> : vector<64x32xf32>
    %105 = tpu.matmul %63, %104, %cst_61 {dimension_numbers = #tpu.dot_dimension_numbers<[1], [0], [0], [1], [0, 0, 1, 1], [], []>} : vector<64x32xf32>, vector<32x32xf32>, vector<64x32xf32> -> vector<64x32xf32>
    %c0_62 = arith.constant 0 : index
    %c0_63 = arith.constant 0 : index
    %c0_64 = arith.constant 0 : index
    %106 = vector.load %arg11[%c0_62, %c0_63, %c0_64] : memref<2x1x32xf32, #tpu.memory_space<vmem>>, vector<1x1x32xf32>
    %107 = vector.shape_cast %106 : vector<1x1x32xf32> to vector<1x32xf32>
    %108 = vector.broadcast %107 : vector<1x32xf32> to vector<64x32xf32>
    %109 = arith.addf %105, %108 : vector<64x32xf32>
    %cst_65 = arith.constant 5.000000e-01 : f32
    %110 = vector.broadcast %cst_65 : f32 to vector<64x32xf32>
    %111 = arith.mulf %110, %109 : vector<64x32xf32>
    %cst_66 = arith.constant 0.707106769 : f32
    %112 = vector.broadcast %cst_66 : f32 to vector<64x32xf32>
    %113 = arith.mulf %109, %112 : vector<64x32xf32>
    %cst_67 = arith.constant 0.000000e+00 : f32
    %114 = vector.broadcast %cst_67 : f32 to vector<64x32xf32>
    %115 = arith.cmpf oge, %113, %114 : vector<64x32xf32>
    %cst_68 = arith.constant 1.000000e+00 : f32
    %cst_69 = arith.constant -1.000000e+00 : f32
    %116 = vector.broadcast %cst_68 : f32 to vector<64x32xf32>
    %117 = vector.broadcast %cst_69 : f32 to vector<64x32xf32>
    %118 = arith.select %115, %116, %117 : vector<64x32xi1>, vector<64x32xf32>
    %119 = math.absf %113 : vector<64x32xf32>
    %cst_70 = arith.constant 0.327591091 : f32
    %120 = vector.broadcast %cst_70 : f32 to vector<64x32xf32>
    %121 = arith.mulf %120, %119 : vector<64x32xf32>
    %cst_71 = arith.constant 1.000000e+00 : f32
    %122 = vector.broadcast %cst_71 : f32 to vector<64x32xf32>
    %123 = arith.addf %122, %121 : vector<64x32xf32>
    %cst_72 = arith.constant 1.000000e+00 : f32
    %124 = vector.broadcast %cst_72 : f32 to vector<64x32xf32>
    %125 = arith.divf %124, %123 : vector<64x32xf32>
    %cst_73 = arith.constant 1.06140542 : f32
    %126 = vector.broadcast %cst_73 : f32 to vector<64x32xf32>
    %127 = arith.mulf %126, %125 : vector<64x32xf32>
    %cst_74 = arith.constant -1.45315206 : f32
    %128 = vector.broadcast %cst_74 : f32 to vector<64x32xf32>
    %129 = arith.addf %127, %128 : vector<64x32xf32>
    %130 = arith.mulf %129, %125 : vector<64x32xf32>
    %cst_75 = arith.constant 1.42141378 : f32
    %131 = vector.broadcast %cst_75 : f32 to vector<64x32xf32>
    %132 = arith.addf %130, %131 : vector<64x32xf32>
    %133 = arith.mulf %132, %125 : vector<64x32xf32>
    %cst_76 = arith.constant -0.284496725 : f32
    %134 = vector.broadcast %cst_76 : f32 to vector<64x32xf32>
    %135 = arith.addf %133, %134 : vector<64x32xf32>
    %136 = arith.mulf %135, %125 : vector<64x32xf32>
    %cst_77 = arith.constant 0.254829586 : f32
    %137 = vector.broadcast %cst_77 : f32 to vector<64x32xf32>
    %138 = arith.addf %136, %137 : vector<64x32xf32>
    %139 = arith.mulf %138, %125 : vector<64x32xf32>
    %cst_78 = arith.constant 0.000000e+00 : f32
    %140 = vector.broadcast %cst_78 : f32 to vector<64x32xf32>
    %141 = arith.subf %140, %119 : vector<64x32xf32>
    %142 = arith.mulf %141, %119 : vector<64x32xf32>
    %143 = math.exp %142 : vector<64x32xf32>
    %144 = arith.mulf %139, %143 : vector<64x32xf32>
    %cst_79 = arith.constant 1.000000e+00 : f32
    %145 = vector.broadcast %cst_79 : f32 to vector<64x32xf32>
    %146 = arith.subf %145, %144 : vector<64x32xf32>
    %147 = arith.mulf %118, %146 : vector<64x32xf32>
    %cst_80 = arith.constant 1.000000e+00 : f32
    %148 = vector.broadcast %cst_80 : f32 to vector<64x32xf32>
    %149 = arith.addf %148, %147 : vector<64x32xf32>
    %150 = arith.mulf %111, %149 : vector<64x32xf32>
    %c24 = arith.constant 24 : index
    %c0_81 = arith.constant 0 : index
    %151 = vector.load %arg19[%c24, %c0_81] : memref<112x32xf32, #tpu.memory_space<vmem>>, vector<64x32xf32>
    tpu.vector_store %arg19[%c24, %c0_81], %150 {strides = array<i32>} : memref<112x32xf32, #tpu.memory_space<vmem>>, vector<64x32xf32>,
    %c6 = arith.constant 6 : index
    %c0_82 = arith.constant 0 : index
    %152 = vector.load %arg19[%c6, %c0_82] : memref<112x32xf32, #tpu.memory_space<vmem>>, vector<64x32xf32>
    %153 = vector.broadcast %7 : vector<64x1xf32> to vector<64x32xf32>
    %154 = arith.mulf %152, %153 : vector<64x32xf32>
    %c0_83 = arith.constant 0 : index
    %c0_84 = arith.constant 0 : index
    %155 = vector.load %arg20[%c0_83, %c0_84] : memref<64x800xf32, #tpu.memory_space<vmem>>, vector<64x32xf32>
    tpu.vector_store %arg20[%c0_83, %c0_84], %154 {strides = array<i32>} : memref<64x800xf32, #tpu.memory_space<vmem>>, vector<64x32xf32>,
    %c7 = arith.constant 7 : index
    %c0_85 = arith.constant 0 : index
    %156 = vector.load %arg19[%c7, %c0_85] : memref<112x32xf32, #tpu.memory_space<vmem>>, vector<64x32xf32>
    %157 = vector.broadcast %9 : vector<64x1xf32> to vector<64x32xf32>
    %158 = arith.mulf %156, %157 : vector<64x32xf32>
    %c0_86 = arith.constant 0 : index
    %c32 = arith.constant 32 : index
    %159 = vector.load %arg20[%c0_86, %c32] : memref<64x800xf32, #tpu.memory_space<vmem>>, vector<64x32xf32>
    tpu.vector_store %arg20[%c0_86, %c32], %158 {strides = array<i32>} : memref<64x800xf32, #tpu.memory_space<vmem>>, vector<64x32xf32>,
    %c8 = arith.constant 8 : index
    %c0_87 = arith.constant 0 : index
    %160 = vector.load %arg19[%c8, %c0_87] : memref<112x32xf32, #tpu.memory_space<vmem>>, vector<64x32xf32>
    %161 = vector.broadcast %11 : vector<64x1xf32> to vector<64x32xf32>
    %162 = arith.mulf %160, %161 : vector<64x32xf32>
    %c0_88 = arith.constant 0 : index
    %c64 = arith.constant 64 : index
    %163 = vector.load %arg20[%c0_88, %c64] : memref<64x800xf32, #tpu.memory_space<vmem>>, vector<64x32xf32>
    tpu.vector_store %arg20[%c0_88, %c64], %162 {strides = array<i32>} : memref<64x800xf32, #tpu.memory_space<vmem>>, vector<64x32xf32>,
    %c9 = arith.constant 9 : index
    %c0_89 = arith.constant 0 : index
    %164 = vector.load %arg19[%c9, %c0_89] : memref<112x32xf32, #tpu.memory_space<vmem>>, vector<64x32xf32>
    %165 = vector.broadcast %13 : vector<64x1xf32> to vector<64x32xf32>
    %166 = arith.mulf %164, %165 : vector<64x32xf32>
    %c0_90 = arith.constant 0 : index
    %c96 = arith.constant 96 : index
    %167 = vector.load %arg20[%c0_90, %c96] : memref<64x800xf32, #tpu.memory_space<vmem>>, vector<64x32xf32>
    tpu.vector_store %arg20[%c0_90, %c96], %166 {strides = array<i32>} : memref<64x800xf32, #tpu.memory_space<vmem>>, vector<64x32xf32>,
    %c10 = arith.constant 10 : index
    %c0_91 = arith.constant 0 : index
    %168 = vector.load %arg19[%c10, %c0_91] : memref<112x32xf32, #tpu.memory_space<vmem>>, vector<64x32xf32>
    %169 = vector.broadcast %15 : vector<64x1xf32> to vector<64x32xf32>
    %170 = arith.mulf %168, %169 : vector<64x32xf32>
    %c0_92 = arith.constant 0 : index
    %c128 = arith.constant 128 : index
    %171 = vector.load %arg20[%c0_92, %c128] : memref<64x800xf32, #tpu.memory_space<vmem>>, vector<64x32xf32>
    tpu.vector_store %arg20[%c0_92, %c128], %170 {strides = array<i32>} : memref<64x800xf32, #tpu.memory_space<vmem>>, vector<64x32xf32>,
    %c14 = arith.constant 14 : index
    %c0_93 = arith.constant 0 : index
    %172 = vector.load %arg19[%c14, %c0_93] : memref<112x32xf32, #tpu.memory_space<vmem>>, vector<64x32xf32>
    %173 = vector.broadcast %7 : vector<64x1xf32> to vector<64x32xf32>
    %174 = arith.mulf %172, %173 : vector<64x32xf32>
    %c0_94 = arith.constant 0 : index
    %c160 = arith.constant 160 : index
    %175 = vector.load %arg20[%c0_94, %c160] : memref<64x800xf32, #tpu.memory_space<vmem>>, vector<64x32xf32>
    tpu.vector_store %arg20[%c0_94, %c160], %174 {strides = array<i32>} : memref<64x800xf32, #tpu.memory_space<vmem>>, vector<64x32xf32>,
    %c15 = arith.constant 15 : index
    %c0_95 = arith.constant 0 : index
    %176 = vector.load %arg19[%c15, %c0_95] : memref<112x32xf32, #tpu.memory_space<vmem>>, vector<64x32xf32>
    %177 = vector.broadcast %9 : vector<64x1xf32> to vector<64x32xf32>
    %178 = arith.mulf %176, %177 : vector<64x32xf32>
    %c0_96 = arith.constant 0 : index
    %c192 = arith.constant 192 : index
    %179 = vector.load %arg20[%c0_96, %c192] : memref<64x800xf32, #tpu.memory_space<vmem>>, vector<64x32xf32>
    tpu.vector_store %arg20[%c0_96, %c192], %178 {strides = array<i32>} : memref<64x800xf32, #tpu.memory_space<vmem>>, vector<64x32xf32>,
    %c16 = arith.constant 16 : index
    %c0_97 = arith.constant 0 : index
    %180 = vector.load %arg19[%c16, %c0_97] : memref<112x32xf32, #tpu.memory_space<vmem>>, vector<64x32xf32>
    %181 = vector.broadcast %11 : vector<64x1xf32> to vector<64x32xf32>
    %182 = arith.mulf %180, %181 : vector<64x32xf32>
    %c0_98 = arith.constant 0 : index
    %c224 = arith.constant 224 : index
    %183 = vector.load %arg20[%c0_98, %c224] : memref<64x800xf32, #tpu.memory_space<vmem>>, vector<64x32xf32>
    tpu.vector_store %arg20[%c0_98, %c224], %182 {strides = array<i32>} : memref<64x800xf32, #tpu.memory_space<vmem>>, vector<64x32xf32>,
    %c17 = arith.constant 17 : index
    %c0_99 = arith.constant 0 : index
    %184 = vector.load %arg19[%c17, %c0_99] : memref<112x32xf32, #tpu.memory_space<vmem>>, vector<64x32xf32>
    %185 = vector.broadcast %13 : vector<64x1xf32> to vector<64x32xf32>
    %186 = arith.mulf %184, %185 : vector<64x32xf32>
    %c0_100 = arith.constant 0 : index
    %c256 = arith.constant 256 : index
    %187 = vector.load %arg20[%c0_100, %c256] : memref<64x800xf32, #tpu.memory_space<vmem>>, vector<64x32xf32>
    tpu.vector_store %arg20[%c0_100, %c256], %186 {strides = array<i32>} : memref<64x800xf32, #tpu.memory_space<vmem>>, vector<64x32xf32>,
    %c18 = arith.constant 18 : index
    %c0_101 = arith.constant 0 : index
    %188 = vector.load %arg19[%c18, %c0_101] : memref<112x32xf32, #tpu.memory_space<vmem>>, vector<64x32xf32>
    %189 = vector.broadcast %15 : vector<64x1xf32> to vector<64x32xf32>
    %190 = arith.mulf %188, %189 : vector<64x32xf32>
    %c0_102 = arith.constant 0 : index
    %c288 = arith.constant 288 : index
    %191 = vector.load %arg20[%c0_102, %c288] : memref<64x800xf32, #tpu.memory_space<vmem>>, vector<64x32xf32>
    tpu.vector_store %arg20[%c0_102, %c288], %190 {strides = array<i32>} : memref<64x800xf32, #tpu.memory_space<vmem>>, vector<64x32xf32>,
    %c22 = arith.constant 22 : index
    %c0_103 = arith.constant 0 : index
    %192 = vector.load %arg19[%c22, %c0_103] : memref<112x32xf32, #tpu.memory_space<vmem>>, vector<64x32xf32>
    %193 = vector.broadcast %7 : vector<64x1xf32> to vector<64x32xf32>
    %194 = arith.mulf %192, %193 : vector<64x32xf32>
    %c0_104 = arith.constant 0 : index
    %c320 = arith.constant 320 : index
    %195 = vector.load %arg20[%c0_104, %c320] : memref<64x800xf32, #tpu.memory_space<vmem>>, vector<64x32xf32>
    tpu.vector_store %arg20[%c0_104, %c320], %194 {strides = array<i32>} : memref<64x800xf32, #tpu.memory_space<vmem>>, vector<64x32xf32>,
    %c23 = arith.constant 23 : index
    %c0_105 = arith.constant 0 : index
    %196 = vector.load %arg19[%c23, %c0_105] : memref<112x32xf32, #tpu.memory_space<vmem>>, vector<64x32xf32>
    %197 = vector.broadcast %9 : vector<64x1xf32> to vector<64x32xf32>
    %198 = arith.mulf %196, %197 : vector<64x32xf32>
    %c0_106 = arith.constant 0 : index
    %c352 = arith.constant 352 : index
    %199 = vector.load %arg20[%c0_106, %c352] : memref<64x800xf32, #tpu.memory_space<vmem>>, vector<64x32xf32>
    tpu.vector_store %arg20[%c0_106, %c352], %198 {strides = array<i32>} : memref<64x800xf32, #tpu.memory_space<vmem>>, vector<64x32xf32>,
    %c24_107 = arith.constant 24 : index
    %c0_108 = arith.constant 0 : index
    %200 = vector.load %arg19[%c24_107, %c0_108] : memref<112x32xf32, #tpu.memory_space<vmem>>, vector<64x32xf32>
    %201 = vector.broadcast %11 : vector<64x1xf32> to vector<64x32xf32>
    %202 = arith.mulf %200, %201 : vector<64x32xf32>
    %c0_109 = arith.constant 0 : index
    %c384 = arith.constant 384 : index
    %203 = vector.load %arg20[%c0_109, %c384] : memref<64x800xf32, #tpu.memory_space<vmem>>, vector<64x32xf32>
    tpu.vector_store %arg20[%c0_109, %c384], %202 {strides = array<i32>} : memref<64x800xf32, #tpu.memory_space<vmem>>, vector<64x32xf32>,
    %c25 = arith.constant 25 : index
    %c0_110 = arith.constant 0 : index
    %204 = vector.load %arg19[%c25, %c0_110] : memref<112x32xf32, #tpu.memory_space<vmem>>, vector<64x32xf32>
    %205 = vector.broadcast %13 : vector<64x1xf32> to vector<64x32xf32>
    %206 = arith.mulf %204, %205 : vector<64x32xf32>
    %c0_111 = arith.constant 0 : index
    %c416 = arith.constant 416 : index
    %207 = vector.load %arg20[%c0_111, %c416] : memref<64x800xf32, #tpu.memory_space<vmem>>, vector<64x32xf32>
    tpu.vector_store %arg20[%c0_111, %c416], %206 {strides = array<i32>} : memref<64x800xf32, #tpu.memory_space<vmem>>, vector<64x32xf32>,
    %c26 = arith.constant 26 : index
    %c0_112 = arith.constant 0 : index
    %208 = vector.load %arg19[%c26, %c0_112] : memref<112x32xf32, #tpu.memory_space<vmem>>, vector<64x32xf32>
    %209 = vector.broadcast %15 : vector<64x1xf32> to vector<64x32xf32>
    %210 = arith.mulf %208, %209 : vector<64x32xf32>
    %c0_113 = arith.constant 0 : index
    %c448 = arith.constant 448 : index
    %211 = vector.load %arg20[%c0_113, %c448] : memref<64x800xf32, #tpu.memory_space<vmem>>, vector<64x32xf32>
    tpu.vector_store %arg20[%c0_113, %c448], %210 {strides = array<i32>} : memref<64x800xf32, #tpu.memory_space<vmem>>, vector<64x32xf32>,
    %c30 = arith.constant 30 : index
    %c0_114 = arith.constant 0 : index
    %212 = vector.load %arg19[%c30, %c0_114] : memref<112x32xf32, #tpu.memory_space<vmem>>, vector<64x32xf32>
    %213 = vector.broadcast %7 : vector<64x1xf32> to vector<64x32xf32>
    %214 = arith.mulf %212, %213 : vector<64x32xf32>
    %c0_115 = arith.constant 0 : index
    %c480 = arith.constant 480 : index
    %215 = vector.load %arg20[%c0_115, %c480] : memref<64x800xf32, #tpu.memory_space<vmem>>, vector<64x32xf32>
    tpu.vector_store %arg20[%c0_115, %c480], %214 {strides = array<i32>} : memref<64x800xf32, #tpu.memory_space<vmem>>, vector<64x32xf32>,
    %c31 = arith.constant 31 : index
    %c0_116 = arith.constant 0 : index
    %216 = vector.load %arg19[%c31, %c0_116] : memref<112x32xf32, #tpu.memory_space<vmem>>, vector<64x32xf32>
    %217 = vector.broadcast %9 : vector<64x1xf32> to vector<64x32xf32>
    %218 = arith.mulf %216, %217 : vector<64x32xf32>
    %c0_117 = arith.constant 0 : index
    %c512 = arith.constant 512 : index
    %219 = vector.load %arg20[%c0_117, %c512] : memref<64x800xf32, #tpu.memory_space<vmem>>, vector<64x32xf32>
    tpu.vector_store %arg20[%c0_117, %c512], %218 {strides = array<i32>} : memref<64x800xf32, #tpu.memory_space<vmem>>, vector<64x32xf32>,
    %c32_118 = arith.constant 32 : index
    %c0_119 = arith.constant 0 : index
    %220 = vector.load %arg19[%c32_118, %c0_119] : memref<112x32xf32, #tpu.memory_space<vmem>>, vector<64x32xf32>
    %221 = vector.broadcast %11 : vector<64x1xf32> to vector<64x32xf32>
    %222 = arith.mulf %220, %221 : vector<64x32xf32>
    %c0_120 = arith.constant 0 : index
    %c544 = arith.constant 544 : index
    %223 = vector.load %arg20[%c0_120, %c544] : memref<64x800xf32, #tpu.memory_space<vmem>>, vector<64x32xf32>
    tpu.vector_store %arg20[%c0_120, %c544], %222 {strides = array<i32>} : memref<64x800xf32, #tpu.memory_space<vmem>>, vector<64x32xf32>,
    %c33 = arith.constant 33 : index
    %c0_121 = arith.constant 0 : index
    %224 = vector.load %arg19[%c33, %c0_121] : memref<112x32xf32, #tpu.memory_space<vmem>>, vector<64x32xf32>
    %225 = vector.broadcast %13 : vector<64x1xf32> to vector<64x32xf32>
    %226 = arith.mulf %224, %225 : vector<64x32xf32>
    %c0_122 = arith.constant 0 : index
    %c576 = arith.constant 576 : index
    %227 = vector.load %arg20[%c0_122, %c576] : memref<64x800xf32, #tpu.memory_space<vmem>>, vector<64x32xf32>
    tpu.vector_store %arg20[%c0_122, %c576], %226 {strides = array<i32>} : memref<64x800xf32, #tpu.memory_space<vmem>>, vector<64x32xf32>,
    %c34 = arith.constant 34 : index
    %c0_123 = arith.constant 0 : index
    %228 = vector.load %arg19[%c34, %c0_123] : memref<112x32xf32, #tpu.memory_space<vmem>>, vector<64x32xf32>
    %229 = vector.broadcast %15 : vector<64x1xf32> to vector<64x32xf32>
    %230 = arith.mulf %228, %229 : vector<64x32xf32>
    %c0_124 = arith.constant 0 : index
    %c608 = arith.constant 608 : index
    %231 = vector.load %arg20[%c0_124, %c608] : memref<64x800xf32, #tpu.memory_space<vmem>>, vector<64x32xf32>
    tpu.vector_store %arg20[%c0_124, %c608], %230 {strides = array<i32>} : memref<64x800xf32, #tpu.memory_space<vmem>>, vector<64x32xf32>,
    %c38 = arith.constant 38 : index
    %c0_125 = arith.constant 0 : index
    %232 = vector.load %arg19[%c38, %c0_125] : memref<112x32xf32, #tpu.memory_space<vmem>>, vector<64x32xf32>
    %233 = vector.broadcast %7 : vector<64x1xf32> to vector<64x32xf32>
    %234 = arith.mulf %232, %233 : vector<64x32xf32>
    %c0_126 = arith.constant 0 : index
    %c640 = arith.constant 640 : index
    %235 = vector.load %arg20[%c0_126, %c640] : memref<64x800xf32, #tpu.memory_space<vmem>>, vector<64x32xf32>
    tpu.vector_store %arg20[%c0_126, %c640], %234 {strides = array<i32>} : memref<64x800xf32, #tpu.memory_space<vmem>>, vector<64x32xf32>,
    %c39 = arith.constant 39 : index
    %c0_127 = arith.constant 0 : index
    %236 = vector.load %arg19[%c39, %c0_127] : memref<112x32xf32, #tpu.memory_space<vmem>>, vector<64x32xf32>
    %237 = vector.broadcast %9 : vector<64x1xf32> to vector<64x32xf32>
    %238 = arith.mulf %236, %237 : vector<64x32xf32>
    %c0_128 = arith.constant 0 : index
    %c672 = arith.constant 672 : index
    %239 = vector.load %arg20[%c0_128, %c672] : memref<64x800xf32, #tpu.memory_space<vmem>>, vector<64x32xf32>
    tpu.vector_store %arg20[%c0_128, %c672], %238 {strides = array<i32>} : memref<64x800xf32, #tpu.memory_space<vmem>>, vector<64x32xf32>,
    %c40 = arith.constant 40 : index
    %c0_129 = arith.constant 0 : index
    %240 = vector.load %arg19[%c40, %c0_129] : memref<112x32xf32, #tpu.memory_space<vmem>>, vector<64x32xf32>
    %241 = vector.broadcast %11 : vector<64x1xf32> to vector<64x32xf32>
    %242 = arith.mulf %240, %241 : vector<64x32xf32>
    %c0_130 = arith.constant 0 : index
    %c704 = arith.constant 704 : index
    %243 = vector.load %arg20[%c0_130, %c704] : memref<64x800xf32, #tpu.memory_space<vmem>>, vector<64x32xf32>
    tpu.vector_store %arg20[%c0_130, %c704], %242 {strides = array<i32>} : memref<64x800xf32, #tpu.memory_space<vmem>>, vector<64x32xf32>,
    %c41 = arith.constant 41 : index
    %c0_131 = arith.constant 0 : index
    %244 = vector.load %arg19[%c41, %c0_131] : memref<112x32xf32, #tpu.memory_space<vmem>>, vector<64x32xf32>
    %245 = vector.broadcast %13 : vector<64x1xf32> to vector<64x32xf32>
    %246 = arith.mulf %244, %245 : vector<64x32xf32>
    %c0_132 = arith.constant 0 : index
    %c736 = arith.constant 736 : index
    %247 = vector.load %arg20[%c0_132, %c736] : memref<64x800xf32, #tpu.memory_space<vmem>>, vector<64x32xf32>
    tpu.vector_store %arg20[%c0_132, %c736], %246 {strides = array<i32>} : memref<64x800xf32, #tpu.memory_space<vmem>>, vector<64x32xf32>,
    %c42 = arith.constant 42 : index
    %c0_133 = arith.constant 0 : index
    %248 = vector.load %arg19[%c42, %c0_133] : memref<112x32xf32, #tpu.memory_space<vmem>>, vector<64x32xf32>
    %249 = vector.broadcast %15 : vector<64x1xf32> to vector<64x32xf32>
    %250 = arith.mulf %248, %249 : vector<64x32xf32>
    %c0_134 = arith.constant 0 : index
    %c768 = arith.constant 768 : index
    %251 = vector.load %arg20[%c0_134, %c768] : memref<64x800xf32, #tpu.memory_space<vmem>>, vector<64x32xf32>
    tpu.vector_store %arg20[%c0_134, %c768], %250 {strides = array<i32>} : memref<64x800xf32, #tpu.memory_space<vmem>>, vector<64x32xf32>,
    %c0_135 = arith.constant 0 : index
    %c0_136 = arith.constant 0 : index
    %252 = vector.load %arg20[%c0_135, %c0_136] : memref<64x800xf32, #tpu.memory_space<vmem>>, vector<64x800xf32>
    %c0_137 = arith.constant 0 : index
    %c0_138 = arith.constant 0 : index
    %c0_139 = arith.constant 0 : index
    %253 = vector.load %arg12[%c0_137, %c0_138, %c0_139] : memref<2x800x32xf32, #tpu.memory_space<vmem>>, vector<1x800x32xf32>
    %254 = vector.shape_cast %253 : vector<1x800x32xf32> to vector<800x32xf32>
    %cst_140 = arith.constant dense<0.000000e+00> : vector<64x32xf32>
    %255 = tpu.matmul %252, %254, %cst_140 {dimension_numbers = #tpu.dot_dimension_numbers<[1], [0], [0], [1], [0, 0, 1, 1], [], []>} : vector<64x800xf32>, vector<800x32xf32>, vector<64x32xf32> -> vector<64x32xf32>
    %c0_141 = arith.constant 0 : index
    %c0_142 = arith.constant 0 : index
    %c0_143 = arith.constant 0 : index
    %256 = vector.load %arg13[%c0_141, %c0_142, %c0_143] : memref<2x1x32xf32, #tpu.memory_space<vmem>>, vector<1x1x32xf32>
    %257 = vector.shape_cast %256 : vector<1x1x32xf32> to vector<1x32xf32>
    %258 = vector.broadcast %257 : vector<1x32xf32> to vector<64x32xf32>
    %259 = arith.addf %255, %258 : vector<64x32xf32>
    %cst_144 = arith.constant 5.000000e-01 : f32
    %260 = vector.broadcast %cst_144 : f32 to vector<64x32xf32>
    %261 = arith.mulf %260, %259 : vector<64x32xf32>
    %cst_145 = arith.constant 0.707106769 : f32
    %262 = vector.broadcast %cst_145 : f32 to vector<64x32xf32>
    %263 = arith.mulf %259, %262 : vector<64x32xf32>
    %cst_146 = arith.constant 0.000000e+00 : f32
    %264 = vector.broadcast %cst_146 : f32 to vector<64x32xf32>
    %265 = arith.cmpf oge, %263, %264 : vector<64x32xf32>
    %cst_147 = arith.constant 1.000000e+00 : f32
    %cst_148 = arith.constant -1.000000e+00 : f32
    %266 = vector.broadcast %cst_147 : f32 to vector<64x32xf32>
    %267 = vector.broadcast %cst_148 : f32 to vector<64x32xf32>
    %268 = arith.select %265, %266, %267 : vector<64x32xi1>, vector<64x32xf32>
    %269 = math.absf %263 : vector<64x32xf32>
    %cst_149 = arith.constant 0.327591091 : f32
    %270 = vector.broadcast %cst_149 : f32 to vector<64x32xf32>
    %271 = arith.mulf %270, %269 : vector<64x32xf32>
    %cst_150 = arith.constant 1.000000e+00 : f32
    %272 = vector.broadcast %cst_150 : f32 to vector<64x32xf32>
    %273 = arith.addf %272, %271 : vector<64x32xf32>
    %cst_151 = arith.constant 1.000000e+00 : f32
    %274 = vector.broadcast %cst_151 : f32 to vector<64x32xf32>
    %275 = arith.divf %274, %273 : vector<64x32xf32>
    %cst_152 = arith.constant 1.06140542 : f32
    %276 = vector.broadcast %cst_152 : f32 to vector<64x32xf32>
    %277 = arith.mulf %276, %275 : vector<64x32xf32>
    %cst_153 = arith.constant -1.45315206 : f32
    %278 = vector.broadcast %cst_153 : f32 to vector<64x32xf32>
    %279 = arith.addf %277, %278 : vector<64x32xf32>
    %280 = arith.mulf %279, %275 : vector<64x32xf32>
    %cst_154 = arith.constant 1.42141378 : f32
    %281 = vector.broadcast %cst_154 : f32 to vector<64x32xf32>
    %282 = arith.addf %280, %281 : vector<64x32xf32>
    %283 = arith.mulf %282, %275 : vector<64x32xf32>
    %cst_155 = arith.constant -0.284496725 : f32
    %284 = vector.broadcast %cst_155 : f32 to vector<64x32xf32>
    %285 = arith.addf %283, %284 : vector<64x32xf32>
    %286 = arith.mulf %285, %275 : vector<64x32xf32>
    %cst_156 = arith.constant 0.254829586 : f32
    %287 = vector.broadcast %cst_156 : f32 to vector<64x32xf32>
    %288 = arith.addf %286, %287 : vector<64x32xf32>
    %289 = arith.mulf %288, %275 : vector<64x32xf32>
    %cst_157 = arith.constant 0.000000e+00 : f32
    %290 = vector.broadcast %cst_157 : f32 to vector<64x32xf32>
    %291 = arith.subf %290, %269 : vector<64x32xf32>
    %292 = arith.mulf %291, %269 : vector<64x32xf32>
    %293 = math.exp %292 : vector<64x32xf32>
    %294 = arith.mulf %289, %293 : vector<64x32xf32>
    %cst_158 = arith.constant 1.000000e+00 : f32
    %295 = vector.broadcast %cst_158 : f32 to vector<64x32xf32>
    %296 = arith.subf %295, %294 : vector<64x32xf32>
    %297 = arith.mulf %268, %296 : vector<64x32xf32>
    %cst_159 = arith.constant 1.000000e+00 : f32
    %298 = vector.broadcast %cst_159 : f32 to vector<64x32xf32>
    %299 = arith.addf %298, %297 : vector<64x32xf32>
    %300 = arith.mulf %261, %299 : vector<64x32xf32>
    %c0_160 = arith.constant 0 : index
    %c0_161 = arith.constant 0 : index
    %c0_162 = arith.constant 0 : index
    %301 = vector.load %arg14[%c0_160, %c0_161, %c0_162] : memref<2x32x32xf32, #tpu.memory_space<vmem>>, vector<1x32x32xf32>
    %302 = vector.shape_cast %301 : vector<1x32x32xf32> to vector<32x32xf32>
    %cst_163 = arith.constant dense<0.000000e+00> : vector<64x32xf32>
    %303 = tpu.matmul %300, %302, %cst_163 {dimension_numbers = #tpu.dot_dimension_numbers<[1], [0], [0], [1], [0, 0, 1, 1], [], []>} : vector<64x32xf32>, vector<32x32xf32>, vector<64x32xf32> -> vector<64x32xf32>
    %c0_164 = arith.constant 0 : index
    %c0_165 = arith.constant 0 : index
    %c0_166 = arith.constant 0 : index
    %304 = vector.load %arg15[%c0_164, %c0_165, %c0_166] : memref<2x1x32xf32, #tpu.memory_space<vmem>>, vector<1x1x32xf32>
    %305 = vector.shape_cast %304 : vector<1x1x32xf32> to vector<1x32xf32>
    %306 = vector.broadcast %305 : vector<1x32xf32> to vector<64x32xf32>
    %307 = arith.addf %303, %306 : vector<64x32xf32>
    %cst_167 = arith.constant 5.000000e-01 : f32
    %308 = vector.broadcast %cst_167 : f32 to vector<64x32xf32>
    %309 = arith.mulf %308, %307 : vector<64x32xf32>
    %cst_168 = arith.constant 0.707106769 : f32
    %310 = vector.broadcast %cst_168 : f32 to vector<64x32xf32>
    %311 = arith.mulf %307, %310 : vector<64x32xf32>
    %cst_169 = arith.constant 0.000000e+00 : f32
    %312 = vector.broadcast %cst_169 : f32 to vector<64x32xf32>
    %313 = arith.cmpf oge, %311, %312 : vector<64x32xf32>
    %cst_170 = arith.constant 1.000000e+00 : f32
    %cst_171 = arith.constant -1.000000e+00 : f32
    %314 = vector.broadcast %cst_170 : f32 to vector<64x32xf32>
    %315 = vector.broadcast %cst_171 : f32 to vector<64x32xf32>
    %316 = arith.select %313, %314, %315 : vector<64x32xi1>, vector<64x32xf32>
    %317 = math.absf %311 : vector<64x32xf32>
    %cst_172 = arith.constant 0.327591091 : f32
    %318 = vector.broadcast %cst_172 : f32 to vector<64x32xf32>
    %319 = arith.mulf %318, %317 : vector<64x32xf32>
    %cst_173 = arith.constant 1.000000e+00 : f32
    %320 = vector.broadcast %cst_173 : f32 to vector<64x32xf32>
    %321 = arith.addf %320, %319 : vector<64x32xf32>
    %cst_174 = arith.constant 1.000000e+00 : f32
    %322 = vector.broadcast %cst_174 : f32 to vector<64x32xf32>
    %323 = arith.divf %322, %321 : vector<64x32xf32>
    %cst_175 = arith.constant 1.06140542 : f32
    %324 = vector.broadcast %cst_175 : f32 to vector<64x32xf32>
    %325 = arith.mulf %324, %323 : vector<64x32xf32>
    %cst_176 = arith.constant -1.45315206 : f32
    %326 = vector.broadcast %cst_176 : f32 to vector<64x32xf32>
    %327 = arith.addf %325, %326 : vector<64x32xf32>
    %328 = arith.mulf %327, %323 : vector<64x32xf32>
    %cst_177 = arith.constant 1.42141378 : f32
    %329 = vector.broadcast %cst_177 : f32 to vector<64x32xf32>
    %330 = arith.addf %328, %329 : vector<64x32xf32>
    %331 = arith.mulf %330, %323 : vector<64x32xf32>
    %cst_178 = arith.constant -0.284496725 : f32
    %332 = vector.broadcast %cst_178 : f32 to vector<64x32xf32>
    %333 = arith.addf %331, %332 : vector<64x32xf32>
    %334 = arith.mulf %333, %323 : vector<64x32xf32>
    %cst_179 = arith.constant 0.254829586 : f32
    %335 = vector.broadcast %cst_179 : f32 to vector<64x32xf32>
    %336 = arith.addf %334, %335 : vector<64x32xf32>
    %337 = arith.mulf %336, %323 : vector<64x32xf32>
    %cst_180 = arith.constant 0.000000e+00 : f32
    %338 = vector.broadcast %cst_180 : f32 to vector<64x32xf32>
    %339 = arith.subf %338, %317 : vector<64x32xf32>
    %340 = arith.mulf %339, %317 : vector<64x32xf32>
    %341 = math.exp %340 : vector<64x32xf32>
    %342 = arith.mulf %337, %341 : vector<64x32xf32>
    %cst_181 = arith.constant 1.000000e+00 : f32
    %343 = vector.broadcast %cst_181 : f32 to vector<64x32xf32>
    %344 = arith.subf %343, %342 : vector<64x32xf32>
    %345 = arith.mulf %316, %344 : vector<64x32xf32>
    %cst_182 = arith.constant 1.000000e+00 : f32
    %346 = vector.broadcast %cst_182 : f32 to vector<64x32xf32>
    %347 = arith.addf %346, %345 : vector<64x32xf32>
    %348 = arith.mulf %309, %347 : vector<64x32xf32>
    %349 = arith.addf %63, %348 : vector<64x32xf32>
    %cst_183 = arith.constant dense<0.000000e+00> : vector<1x32xf32>
    %350 = tpu.matmul %102, %2, %cst_183 {dimension_numbers = #tpu.dot_dimension_numbers<[1], [0], [0], [1], [0, 0, 1, 1], [], []>} : vector<1x32xf32>, vector<32x32xf32>, vector<1x32xf32> -> vector<1x32xf32>
    %cst_184 = arith.constant dense<0.000000e+00> : vector<64x64xf32>
    %351 = tpu.matmul %349, %3, %cst_184 {dimension_numbers = #tpu.dot_dimension_numbers<[1], [0], [0], [1], [0, 0, 1, 1], [], []>} : vector<64x32xf32>, vector<32x64xf32>, vector<64x64xf32> -> vector<64x64xf32>
    %352 = vector.extract_strided_slice %351 {offsets = [0, 0], sizes = [64, 32], strides = [1, 1]} : vector<64x64xf32> to vector<64x32xf32>
    %353 = vector.extract_strided_slice %351 {offsets = [0, 32], sizes = [64, 32], strides = [1, 1]} : vector<64x64xf32> to vector<64x32xf32>
    %cst_185 = arith.constant dense<0.000000e+00> : vector<1x64xf32>
    %354 = tpu.matmul %350, %352, %cst_185 {dimension_numbers = #tpu.dot_dimension_numbers<[1], [1], [0], [0], [0, 0, 1, 0], [], []>} : vector<1x32xf32>, vector<64x32xf32>, vector<1x64xf32> -> vector<1x64xf32>
    %cst_186 = arith.constant 0.176776692 : f32
    %355 = vector.broadcast %cst_186 : f32 to vector<1x64xf32>
    %356 = arith.mulf %354, %355 : vector<1x64xf32>
    %cst_187 = arith.constant dense<0xFF800000> : vector<1xf32>
    %357 = vector.multi_reduction <maximumf>, %356, %cst_187 [1] : vector<1x64xf32> to vector<1xf32>
    %358 = vector.shape_cast %357 : vector<1xf32> to vector<1x1xf32>
    %359 = vector.broadcast %358 : vector<1x1xf32> to vector<1x64xf32>
    %360 = arith.subf %356, %359 : vector<1x64xf32>
    %361 = math.exp %360 : vector<1x64xf32>
    %cst_188 = arith.constant dense<0.000000e+00> : vector<1xf32>
    %362 = vector.multi_reduction <add>, %361, %cst_188 [1] : vector<1x64xf32> to vector<1xf32>
    %363 = vector.shape_cast %362 : vector<1xf32> to vector<1x1xf32>
    %364 = vector.broadcast %363 : vector<1x1xf32> to vector<1x64xf32>
    %365 = arith.divf %361, %364 : vector<1x64xf32>
    %cst_189 = arith.constant dense<0.000000e+00> : vector<1x32xf32>
    %366 = tpu.matmul %365, %353, %cst_189 {dimension_numbers = #tpu.dot_dimension_numbers<[1], [0], [0], [1], [0, 0, 1, 1], [], []>} : vector<1x64xf32>, vector<64x32xf32>, vector<1x32xf32> -> vector<1x32xf32>
    %367 = arith.addf %102, %366 : vector<1x32xf32>
    %cst_190 = arith.constant dense<0.000000e+00> : vector<1xf32>
    %368 = vector.multi_reduction <add>, %367, %cst_190 [1] : vector<1x32xf32> to vector<1xf32>
    %369 = vector.shape_cast %368 : vector<1xf32> to vector<1x1xf32>
    %cst_191 = arith.constant 3.200000e+01 : f32
    %370 = vector.broadcast %cst_191 : f32 to vector<1x1xf32>
    %371 = arith.divf %369, %370 : vector<1x1xf32>
    %372 = vector.broadcast %371 : vector<1x1xf32> to vector<1x32xf32>
    %373 = arith.subf %367, %372 : vector<1x32xf32>
    %374 = arith.mulf %373, %373 : vector<1x32xf32>
    %cst_192 = arith.constant dense<0.000000e+00> : vector<1xf32>
    %375 = vector.multi_reduction <add>, %374, %cst_192 [1] : vector<1x32xf32> to vector<1xf32>
    %376 = vector.shape_cast %375 : vector<1xf32> to vector<1x1xf32>
    %cst_193 = arith.constant 3.200000e+01 : f32
    %377 = vector.broadcast %cst_193 : f32 to vector<1x1xf32>
    %378 = arith.divf %376, %377 : vector<1x1xf32>
    %379 = vector.broadcast %371 : vector<1x1xf32> to vector<1x32xf32>
    %380 = arith.subf %367, %379 : vector<1x32xf32>
    %cst_194 = arith.constant 9.99999974E-6 : f32
    %381 = vector.broadcast %cst_194 : f32 to vector<1x1xf32>
    %382 = arith.addf %378, %381 : vector<1x1xf32>
    %383 = math.rsqrt %382 : vector<1x1xf32>
    %384 = vector.broadcast %383 : vector<1x1xf32> to vector<1x32xf32>
    %385 = arith.mulf %380, %384 : vector<1x32xf32>
    %386 = arith.mulf %385, %4 : vector<1x32xf32>
    %387 = arith.addf %386, %5 : vector<1x32xf32>
    %c1_195 = arith.constant 1 : index
    %c0_196 = arith.constant 0 : index
    %c0_197 = arith.constant 0 : index
    %388 = vector.load %arg10[%c1_195, %c0_196, %c0_197] : memref<2x32x32xf32, #tpu.memory_space<vmem>>, vector<1x32x32xf32>
    %389 = vector.shape_cast %388 : vector<1x32x32xf32> to vector<32x32xf32>
    %cst_198 = arith.constant dense<0.000000e+00> : vector<64x32xf32>
    %390 = tpu.matmul %349, %389, %cst_198 {dimension_numbers = #tpu.dot_dimension_numbers<[1], [0], [0], [1], [0, 0, 1, 1], [], []>} : vector<64x32xf32>, vector<32x32xf32>, vector<64x32xf32> -> vector<64x32xf32>
    %c1_199 = arith.constant 1 : index
    %c0_200 = arith.constant 0 : index
    %c0_201 = arith.constant 0 : index
    %391 = vector.load %arg11[%c1_199, %c0_200, %c0_201] : memref<2x1x32xf32, #tpu.memory_space<vmem>>, vector<1x1x32xf32>
    %392 = vector.shape_cast %391 : vector<1x1x32xf32> to vector<1x32xf32>
    %393 = vector.broadcast %392 : vector<1x32xf32> to vector<64x32xf32>
    %394 = arith.addf %390, %393 : vector<64x32xf32>
    %cst_202 = arith.constant 5.000000e-01 : f32
    %395 = vector.broadcast %cst_202 : f32 to vector<64x32xf32>
    %396 = arith.mulf %395, %394 : vector<64x32xf32>
    %cst_203 = arith.constant 0.707106769 : f32
    %397 = vector.broadcast %cst_203 : f32 to vector<64x32xf32>
    %398 = arith.mulf %394, %397 : vector<64x32xf32>
    %cst_204 = arith.constant 0.000000e+00 : f32
    %399 = vector.broadcast %cst_204 : f32 to vector<64x32xf32>
    %400 = arith.cmpf oge, %398, %399 : vector<64x32xf32>
    %cst_205 = arith.constant 1.000000e+00 : f32
    %cst_206 = arith.constant -1.000000e+00 : f32
    %401 = vector.broadcast %cst_205 : f32 to vector<64x32xf32>
    %402 = vector.broadcast %cst_206 : f32 to vector<64x32xf32>
    %403 = arith.select %400, %401, %402 : vector<64x32xi1>, vector<64x32xf32>
    %404 = math.absf %398 : vector<64x32xf32>
    %cst_207 = arith.constant 0.327591091 : f32
    %405 = vector.broadcast %cst_207 : f32 to vector<64x32xf32>
    %406 = arith.mulf %405, %404 : vector<64x32xf32>
    %cst_208 = arith.constant 1.000000e+00 : f32
    %407 = vector.broadcast %cst_208 : f32 to vector<64x32xf32>
    %408 = arith.addf %407, %406 : vector<64x32xf32>
    %cst_209 = arith.constant 1.000000e+00 : f32
    %409 = vector.broadcast %cst_209 : f32 to vector<64x32xf32>
    %410 = arith.divf %409, %408 : vector<64x32xf32>
    %cst_210 = arith.constant 1.06140542 : f32
    %411 = vector.broadcast %cst_210 : f32 to vector<64x32xf32>
    %412 = arith.mulf %411, %410 : vector<64x32xf32>
    %cst_211 = arith.constant -1.45315206 : f32
    %413 = vector.broadcast %cst_211 : f32 to vector<64x32xf32>
    %414 = arith.addf %412, %413 : vector<64x32xf32>
    %415 = arith.mulf %414, %410 : vector<64x32xf32>
    %cst_212 = arith.constant 1.42141378 : f32
    %416 = vector.broadcast %cst_212 : f32 to vector<64x32xf32>
    %417 = arith.addf %415, %416 : vector<64x32xf32>
    %418 = arith.mulf %417, %410 : vector<64x32xf32>
    %cst_213 = arith.constant -0.284496725 : f32
    %419 = vector.broadcast %cst_213 : f32 to vector<64x32xf32>
    %420 = arith.addf %418, %419 : vector<64x32xf32>
    %421 = arith.mulf %420, %410 : vector<64x32xf32>
    %cst_214 = arith.constant 0.254829586 : f32
    %422 = vector.broadcast %cst_214 : f32 to vector<64x32xf32>
    %423 = arith.addf %421, %422 : vector<64x32xf32>
    %424 = arith.mulf %423, %410 : vector<64x32xf32>
    %cst_215 = arith.constant 0.000000e+00 : f32
    %425 = vector.broadcast %cst_215 : f32 to vector<64x32xf32>
    %426 = arith.subf %425, %404 : vector<64x32xf32>
    %427 = arith.mulf %426, %404 : vector<64x32xf32>
    %428 = math.exp %427 : vector<64x32xf32>
    %429 = arith.mulf %424, %428 : vector<64x32xf32>
    %cst_216 = arith.constant 1.000000e+00 : f32
    %430 = vector.broadcast %cst_216 : f32 to vector<64x32xf32>
    %431 = arith.subf %430, %429 : vector<64x32xf32>
    %432 = arith.mulf %403, %431 : vector<64x32xf32>
    %cst_217 = arith.constant 1.000000e+00 : f32
    %433 = vector.broadcast %cst_217 : f32 to vector<64x32xf32>
    %434 = arith.addf %433, %432 : vector<64x32xf32>
    %435 = arith.mulf %396, %434 : vector<64x32xf32>
    %c24_218 = arith.constant 24 : index
    %c0_219 = arith.constant 0 : index
    %436 = vector.load %arg19[%c24_218, %c0_219] : memref<112x32xf32, #tpu.memory_space<vmem>>, vector<64x32xf32>
    tpu.vector_store %arg19[%c24_218, %c0_219], %435 {strides = array<i32>} : memref<112x32xf32, #tpu.memory_space<vmem>>, vector<64x32xf32>,
    %c6_220 = arith.constant 6 : index
    %c0_221 = arith.constant 0 : index
    %437 = vector.load %arg19[%c6_220, %c0_221] : memref<112x32xf32, #tpu.memory_space<vmem>>, vector<64x32xf32>
    %438 = vector.broadcast %7 : vector<64x1xf32> to vector<64x32xf32>
    %439 = arith.mulf %437, %438 : vector<64x32xf32>
    %c0_222 = arith.constant 0 : index
    %c0_223 = arith.constant 0 : index
    %440 = vector.load %arg20[%c0_222, %c0_223] : memref<64x800xf32, #tpu.memory_space<vmem>>, vector<64x32xf32>
    tpu.vector_store %arg20[%c0_222, %c0_223], %439 {strides = array<i32>} : memref<64x800xf32, #tpu.memory_space<vmem>>, vector<64x32xf32>,
    %c7_224 = arith.constant 7 : index
    %c0_225 = arith.constant 0 : index
    %441 = vector.load %arg19[%c7_224, %c0_225] : memref<112x32xf32, #tpu.memory_space<vmem>>, vector<64x32xf32>
    %442 = vector.broadcast %9 : vector<64x1xf32> to vector<64x32xf32>
    %443 = arith.mulf %441, %442 : vector<64x32xf32>
    %c0_226 = arith.constant 0 : index
    %c32_227 = arith.constant 32 : index
    %444 = vector.load %arg20[%c0_226, %c32_227] : memref<64x800xf32, #tpu.memory_space<vmem>>, vector<64x32xf32>
    tpu.vector_store %arg20[%c0_226, %c32_227], %443 {strides = array<i32>} : memref<64x800xf32, #tpu.memory_space<vmem>>, vector<64x32xf32>,
    %c8_228 = arith.constant 8 : index
    %c0_229 = arith.constant 0 : index
    %445 = vector.load %arg19[%c8_228, %c0_229] : memref<112x32xf32, #tpu.memory_space<vmem>>, vector<64x32xf32>
    %446 = vector.broadcast %11 : vector<64x1xf32> to vector<64x32xf32>
    %447 = arith.mulf %445, %446 : vector<64x32xf32>
    %c0_230 = arith.constant 0 : index
    %c64_231 = arith.constant 64 : index
    %448 = vector.load %arg20[%c0_230, %c64_231] : memref<64x800xf32, #tpu.memory_space<vmem>>, vector<64x32xf32>
    tpu.vector_store %arg20[%c0_230, %c64_231], %447 {strides = array<i32>} : memref<64x800xf32, #tpu.memory_space<vmem>>, vector<64x32xf32>,
    %c9_232 = arith.constant 9 : index
    %c0_233 = arith.constant 0 : index
    %449 = vector.load %arg19[%c9_232, %c0_233] : memref<112x32xf32, #tpu.memory_space<vmem>>, vector<64x32xf32>
    %450 = vector.broadcast %13 : vector<64x1xf32> to vector<64x32xf32>
    %451 = arith.mulf %449, %450 : vector<64x32xf32>
    %c0_234 = arith.constant 0 : index
    %c96_235 = arith.constant 96 : index
    %452 = vector.load %arg20[%c0_234, %c96_235] : memref<64x800xf32, #tpu.memory_space<vmem>>, vector<64x32xf32>
    tpu.vector_store %arg20[%c0_234, %c96_235], %451 {strides = array<i32>} : memref<64x800xf32, #tpu.memory_space<vmem>>, vector<64x32xf32>,
    %c10_236 = arith.constant 10 : index
    %c0_237 = arith.constant 0 : index
    %453 = vector.load %arg19[%c10_236, %c0_237] : memref<112x32xf32, #tpu.memory_space<vmem>>, vector<64x32xf32>
    %454 = vector.broadcast %15 : vector<64x1xf32> to vector<64x32xf32>
    %455 = arith.mulf %453, %454 : vector<64x32xf32>
    %c0_238 = arith.constant 0 : index
    %c128_239 = arith.constant 128 : index
    %456 = vector.load %arg20[%c0_238, %c128_239] : memref<64x800xf32, #tpu.memory_space<vmem>>, vector<64x32xf32>
    tpu.vector_store %arg20[%c0_238, %c128_239], %455 {strides = array<i32>} : memref<64x800xf32, #tpu.memory_space<vmem>>, vector<64x32xf32>,
    %c14_240 = arith.constant 14 : index
    %c0_241 = arith.constant 0 : index
    %457 = vector.load %arg19[%c14_240, %c0_241] : memref<112x32xf32, #tpu.memory_space<vmem>>, vector<64x32xf32>
    %458 = vector.broadcast %7 : vector<64x1xf32> to vector<64x32xf32>
    %459 = arith.mulf %457, %458 : vector<64x32xf32>
    %c0_242 = arith.constant 0 : index
    %c160_243 = arith.constant 160 : index
    %460 = vector.load %arg20[%c0_242, %c160_243] : memref<64x800xf32, #tpu.memory_space<vmem>>, vector<64x32xf32>
    tpu.vector_store %arg20[%c0_242, %c160_243], %459 {strides = array<i32>} : memref<64x800xf32, #tpu.memory_space<vmem>>, vector<64x32xf32>,
    %c15_244 = arith.constant 15 : index
    %c0_245 = arith.constant 0 : index
    %461 = vector.load %arg19[%c15_244, %c0_245] : memref<112x32xf32, #tpu.memory_space<vmem>>, vector<64x32xf32>
    %462 = vector.broadcast %9 : vector<64x1xf32> to vector<64x32xf32>
    %463 = arith.mulf %461, %462 : vector<64x32xf32>
    %c0_246 = arith.constant 0 : index
    %c192_247 = arith.constant 192 : index
    %464 = vector.load %arg20[%c0_246, %c192_247] : memref<64x800xf32, #tpu.memory_space<vmem>>, vector<64x32xf32>
    tpu.vector_store %arg20[%c0_246, %c192_247], %463 {strides = array<i32>} : memref<64x800xf32, #tpu.memory_space<vmem>>, vector<64x32xf32>,
    %c16_248 = arith.constant 16 : index
    %c0_249 = arith.constant 0 : index
    %465 = vector.load %arg19[%c16_248, %c0_249] : memref<112x32xf32, #tpu.memory_space<vmem>>, vector<64x32xf32>
    %466 = vector.broadcast %11 : vector<64x1xf32> to vector<64x32xf32>
    %467 = arith.mulf %465, %466 : vector<64x32xf32>
    %c0_250 = arith.constant 0 : index
    %c224_251 = arith.constant 224 : index
    %468 = vector.load %arg20[%c0_250, %c224_251] : memref<64x800xf32, #tpu.memory_space<vmem>>, vector<64x32xf32>
    tpu.vector_store %arg20[%c0_250, %c224_251], %467 {strides = array<i32>} : memref<64x800xf32, #tpu.memory_space<vmem>>, vector<64x32xf32>,
    %c17_252 = arith.constant 17 : index
    %c0_253 = arith.constant 0 : index
    %469 = vector.load %arg19[%c17_252, %c0_253] : memref<112x32xf32, #tpu.memory_space<vmem>>, vector<64x32xf32>
    %470 = vector.broadcast %13 : vector<64x1xf32> to vector<64x32xf32>
    %471 = arith.mulf %469, %470 : vector<64x32xf32>
    %c0_254 = arith.constant 0 : index
    %c256_255 = arith.constant 256 : index
    %472 = vector.load %arg20[%c0_254, %c256_255] : memref<64x800xf32, #tpu.memory_space<vmem>>, vector<64x32xf32>
    tpu.vector_store %arg20[%c0_254, %c256_255], %471 {strides = array<i32>} : memref<64x800xf32, #tpu.memory_space<vmem>>, vector<64x32xf32>,
    %c18_256 = arith.constant 18 : index
    %c0_257 = arith.constant 0 : index
    %473 = vector.load %arg19[%c18_256, %c0_257] : memref<112x32xf32, #tpu.memory_space<vmem>>, vector<64x32xf32>
    %474 = vector.broadcast %15 : vector<64x1xf32> to vector<64x32xf32>
    %475 = arith.mulf %473, %474 : vector<64x32xf32>
    %c0_258 = arith.constant 0 : index
    %c288_259 = arith.constant 288 : index
    %476 = vector.load %arg20[%c0_258, %c288_259] : memref<64x800xf32, #tpu.memory_space<vmem>>, vector<64x32xf32>
    tpu.vector_store %arg20[%c0_258, %c288_259], %475 {strides = array<i32>} : memref<64x800xf32, #tpu.memory_space<vmem>>, vector<64x32xf32>,
    %c22_260 = arith.constant 22 : index
    %c0_261 = arith.constant 0 : index
    %477 = vector.load %arg19[%c22_260, %c0_261] : memref<112x32xf32, #tpu.memory_space<vmem>>, vector<64x32xf32>
    %478 = vector.broadcast %7 : vector<64x1xf32> to vector<64x32xf32>
    %479 = arith.mulf %477, %478 : vector<64x32xf32>
    %c0_262 = arith.constant 0 : index
    %c320_263 = arith.constant 320 : index
    %480 = vector.load %arg20[%c0_262, %c320_263] : memref<64x800xf32, #tpu.memory_space<vmem>>, vector<64x32xf32>
    tpu.vector_store %arg20[%c0_262, %c320_263], %479 {strides = array<i32>} : memref<64x800xf32, #tpu.memory_space<vmem>>, vector<64x32xf32>,
    %c23_264 = arith.constant 23 : index
    %c0_265 = arith.constant 0 : index
    %481 = vector.load %arg19[%c23_264, %c0_265] : memref<112x32xf32, #tpu.memory_space<vmem>>, vector<64x32xf32>
    %482 = vector.broadcast %9 : vector<64x1xf32> to vector<64x32xf32>
    %483 = arith.mulf %481, %482 : vector<64x32xf32>
    %c0_266 = arith.constant 0 : index
    %c352_267 = arith.constant 352 : index
    %484 = vector.load %arg20[%c0_266, %c352_267] : memref<64x800xf32, #tpu.memory_space<vmem>>, vector<64x32xf32>
    tpu.vector_store %arg20[%c0_266, %c352_267], %483 {strides = array<i32>} : memref<64x800xf32, #tpu.memory_space<vmem>>, vector<64x32xf32>,
    %c24_268 = arith.constant 24 : index
    %c0_269 = arith.constant 0 : index
    %485 = vector.load %arg19[%c24_268, %c0_269] : memref<112x32xf32, #tpu.memory_space<vmem>>, vector<64x32xf32>
    %486 = vector.broadcast %11 : vector<64x1xf32> to vector<64x32xf32>
    %487 = arith.mulf %485, %486 : vector<64x32xf32>
    %c0_270 = arith.constant 0 : index
    %c384_271 = arith.constant 384 : index
    %488 = vector.load %arg20[%c0_270, %c384_271] : memref<64x800xf32, #tpu.memory_space<vmem>>, vector<64x32xf32>
    tpu.vector_store %arg20[%c0_270, %c384_271], %487 {strides = array<i32>} : memref<64x800xf32, #tpu.memory_space<vmem>>, vector<64x32xf32>,
    %c25_272 = arith.constant 25 : index
    %c0_273 = arith.constant 0 : index
    %489 = vector.load %arg19[%c25_272, %c0_273] : memref<112x32xf32, #tpu.memory_space<vmem>>, vector<64x32xf32>
    %490 = vector.broadcast %13 : vector<64x1xf32> to vector<64x32xf32>
    %491 = arith.mulf %489, %490 : vector<64x32xf32>
    %c0_274 = arith.constant 0 : index
    %c416_275 = arith.constant 416 : index
    %492 = vector.load %arg20[%c0_274, %c416_275] : memref<64x800xf32, #tpu.memory_space<vmem>>, vector<64x32xf32>
    tpu.vector_store %arg20[%c0_274, %c416_275], %491 {strides = array<i32>} : memref<64x800xf32, #tpu.memory_space<vmem>>, vector<64x32xf32>,
    %c26_276 = arith.constant 26 : index
    %c0_277 = arith.constant 0 : index
    %493 = vector.load %arg19[%c26_276, %c0_277] : memref<112x32xf32, #tpu.memory_space<vmem>>, vector<64x32xf32>
    %494 = vector.broadcast %15 : vector<64x1xf32> to vector<64x32xf32>
    %495 = arith.mulf %493, %494 : vector<64x32xf32>
    %c0_278 = arith.constant 0 : index
    %c448_279 = arith.constant 448 : index
    %496 = vector.load %arg20[%c0_278, %c448_279] : memref<64x800xf32, #tpu.memory_space<vmem>>, vector<64x32xf32>
    tpu.vector_store %arg20[%c0_278, %c448_279], %495 {strides = array<i32>} : memref<64x800xf32, #tpu.memory_space<vmem>>, vector<64x32xf32>,
    %c30_280 = arith.constant 30 : index
    %c0_281 = arith.constant 0 : index
    %497 = vector.load %arg19[%c30_280, %c0_281] : memref<112x32xf32, #tpu.memory_space<vmem>>, vector<64x32xf32>
    %498 = vector.broadcast %7 : vector<64x1xf32> to vector<64x32xf32>
    %499 = arith.mulf %497, %498 : vector<64x32xf32>
    %c0_282 = arith.constant 0 : index
    %c480_283 = arith.constant 480 : index
    %500 = vector.load %arg20[%c0_282, %c480_283] : memref<64x800xf32, #tpu.memory_space<vmem>>, vector<64x32xf32>
    tpu.vector_store %arg20[%c0_282, %c480_283], %499 {strides = array<i32>} : memref<64x800xf32, #tpu.memory_space<vmem>>, vector<64x32xf32>,
    %c31_284 = arith.constant 31 : index
    %c0_285 = arith.constant 0 : index
    %501 = vector.load %arg19[%c31_284, %c0_285] : memref<112x32xf32, #tpu.memory_space<vmem>>, vector<64x32xf32>
    %502 = vector.broadcast %9 : vector<64x1xf32> to vector<64x32xf32>
    %503 = arith.mulf %501, %502 : vector<64x32xf32>
    %c0_286 = arith.constant 0 : index
    %c512_287 = arith.constant 512 : index
    %504 = vector.load %arg20[%c0_286, %c512_287] : memref<64x800xf32, #tpu.memory_space<vmem>>, vector<64x32xf32>
    tpu.vector_store %arg20[%c0_286, %c512_287], %503 {strides = array<i32>} : memref<64x800xf32, #tpu.memory_space<vmem>>, vector<64x32xf32>,
    %c32_288 = arith.constant 32 : index
    %c0_289 = arith.constant 0 : index
    %505 = vector.load %arg19[%c32_288, %c0_289] : memref<112x32xf32, #tpu.memory_space<vmem>>, vector<64x32xf32>
    %506 = vector.broadcast %11 : vector<64x1xf32> to vector<64x32xf32>
    %507 = arith.mulf %505, %506 : vector<64x32xf32>
    %c0_290 = arith.constant 0 : index
    %c544_291 = arith.constant 544 : index
    %508 = vector.load %arg20[%c0_290, %c544_291] : memref<64x800xf32, #tpu.memory_space<vmem>>, vector<64x32xf32>
    tpu.vector_store %arg20[%c0_290, %c544_291], %507 {strides = array<i32>} : memref<64x800xf32, #tpu.memory_space<vmem>>, vector<64x32xf32>,
    %c33_292 = arith.constant 33 : index
    %c0_293 = arith.constant 0 : index
    %509 = vector.load %arg19[%c33_292, %c0_293] : memref<112x32xf32, #tpu.memory_space<vmem>>, vector<64x32xf32>
    %510 = vector.broadcast %13 : vector<64x1xf32> to vector<64x32xf32>
    %511 = arith.mulf %509, %510 : vector<64x32xf32>
    %c0_294 = arith.constant 0 : index
    %c576_295 = arith.constant 576 : index
    %512 = vector.load %arg20[%c0_294, %c576_295] : memref<64x800xf32, #tpu.memory_space<vmem>>, vector<64x32xf32>
    tpu.vector_store %arg20[%c0_294, %c576_295], %511 {strides = array<i32>} : memref<64x800xf32, #tpu.memory_space<vmem>>, vector<64x32xf32>,
    %c34_296 = arith.constant 34 : index
    %c0_297 = arith.constant 0 : index
    %513 = vector.load %arg19[%c34_296, %c0_297] : memref<112x32xf32, #tpu.memory_space<vmem>>, vector<64x32xf32>
    %514 = vector.broadcast %15 : vector<64x1xf32> to vector<64x32xf32>
    %515 = arith.mulf %513, %514 : vector<64x32xf32>
    %c0_298 = arith.constant 0 : index
    %c608_299 = arith.constant 608 : index
    %516 = vector.load %arg20[%c0_298, %c608_299] : memref<64x800xf32, #tpu.memory_space<vmem>>, vector<64x32xf32>
    tpu.vector_store %arg20[%c0_298, %c608_299], %515 {strides = array<i32>} : memref<64x800xf32, #tpu.memory_space<vmem>>, vector<64x32xf32>,
    %c38_300 = arith.constant 38 : index
    %c0_301 = arith.constant 0 : index
    %517 = vector.load %arg19[%c38_300, %c0_301] : memref<112x32xf32, #tpu.memory_space<vmem>>, vector<64x32xf32>
    %518 = vector.broadcast %7 : vector<64x1xf32> to vector<64x32xf32>
    %519 = arith.mulf %517, %518 : vector<64x32xf32>
    %c0_302 = arith.constant 0 : index
    %c640_303 = arith.constant 640 : index
    %520 = vector.load %arg20[%c0_302, %c640_303] : memref<64x800xf32, #tpu.memory_space<vmem>>, vector<64x32xf32>
    tpu.vector_store %arg20[%c0_302, %c640_303], %519 {strides = array<i32>} : memref<64x800xf32, #tpu.memory_space<vmem>>, vector<64x32xf32>,
    %c39_304 = arith.constant 39 : index
    %c0_305 = arith.constant 0 : index
    %521 = vector.load %arg19[%c39_304, %c0_305] : memref<112x32xf32, #tpu.memory_space<vmem>>, vector<64x32xf32>
    %522 = vector.broadcast %9 : vector<64x1xf32> to vector<64x32xf32>
    %523 = arith.mulf %521, %522 : vector<64x32xf32>
    %c0_306 = arith.constant 0 : index
    %c672_307 = arith.constant 672 : index
    %524 = vector.load %arg20[%c0_306, %c672_307] : memref<64x800xf32, #tpu.memory_space<vmem>>, vector<64x32xf32>
    tpu.vector_store %arg20[%c0_306, %c672_307], %523 {strides = array<i32>} : memref<64x800xf32, #tpu.memory_space<vmem>>, vector<64x32xf32>,
    %c40_308 = arith.constant 40 : index
    %c0_309 = arith.constant 0 : index
    %525 = vector.load %arg19[%c40_308, %c0_309] : memref<112x32xf32, #tpu.memory_space<vmem>>, vector<64x32xf32>
    %526 = vector.broadcast %11 : vector<64x1xf32> to vector<64x32xf32>
    %527 = arith.mulf %525, %526 : vector<64x32xf32>
    %c0_310 = arith.constant 0 : index
    %c704_311 = arith.constant 704 : index
    %528 = vector.load %arg20[%c0_310, %c704_311] : memref<64x800xf32, #tpu.memory_space<vmem>>, vector<64x32xf32>
    tpu.vector_store %arg20[%c0_310, %c704_311], %527 {strides = array<i32>} : memref<64x800xf32, #tpu.memory_space<vmem>>, vector<64x32xf32>,
    %c41_312 = arith.constant 41 : index
    %c0_313 = arith.constant 0 : index
    %529 = vector.load %arg19[%c41_312, %c0_313] : memref<112x32xf32, #tpu.memory_space<vmem>>, vector<64x32xf32>
    %530 = vector.broadcast %13 : vector<64x1xf32> to vector<64x32xf32>
    %531 = arith.mulf %529, %530 : vector<64x32xf32>
    %c0_314 = arith.constant 0 : index
    %c736_315 = arith.constant 736 : index
    %532 = vector.load %arg20[%c0_314, %c736_315] : memref<64x800xf32, #tpu.memory_space<vmem>>, vector<64x32xf32>
    tpu.vector_store %arg20[%c0_314, %c736_315], %531 {strides = array<i32>} : memref<64x800xf32, #tpu.memory_space<vmem>>, vector<64x32xf32>,
    %c42_316 = arith.constant 42 : index
    %c0_317 = arith.constant 0 : index
    %533 = vector.load %arg19[%c42_316, %c0_317] : memref<112x32xf32, #tpu.memory_space<vmem>>, vector<64x32xf32>
    %534 = vector.broadcast %15 : vector<64x1xf32> to vector<64x32xf32>
    %535 = arith.mulf %533, %534 : vector<64x32xf32>
    %c0_318 = arith.constant 0 : index
    %c768_319 = arith.constant 768 : index
    %536 = vector.load %arg20[%c0_318, %c768_319] : memref<64x800xf32, #tpu.memory_space<vmem>>, vector<64x32xf32>
    tpu.vector_store %arg20[%c0_318, %c768_319], %535 {strides = array<i32>} : memref<64x800xf32, #tpu.memory_space<vmem>>, vector<64x32xf32>,
    %c0_320 = arith.constant 0 : index
    %c0_321 = arith.constant 0 : index
    %537 = vector.load %arg20[%c0_320, %c0_321] : memref<64x800xf32, #tpu.memory_space<vmem>>, vector<64x800xf32>
    %c1_322 = arith.constant 1 : index
    %c0_323 = arith.constant 0 : index
    %c0_324 = arith.constant 0 : index
    %538 = vector.load %arg12[%c1_322, %c0_323, %c0_324] : memref<2x800x32xf32, #tpu.memory_space<vmem>>, vector<1x800x32xf32>
    %539 = vector.shape_cast %538 : vector<1x800x32xf32> to vector<800x32xf32>
    %cst_325 = arith.constant dense<0.000000e+00> : vector<64x32xf32>
    %540 = tpu.matmul %537, %539, %cst_325 {dimension_numbers = #tpu.dot_dimension_numbers<[1], [0], [0], [1], [0, 0, 1, 1], [], []>} : vector<64x800xf32>, vector<800x32xf32>, vector<64x32xf32> -> vector<64x32xf32>
    %c1_326 = arith.constant 1 : index
    %c0_327 = arith.constant 0 : index
    %c0_328 = arith.constant 0 : index
    %541 = vector.load %arg13[%c1_326, %c0_327, %c0_328] : memref<2x1x32xf32, #tpu.memory_space<vmem>>, vector<1x1x32xf32>
    %542 = vector.shape_cast %541 : vector<1x1x32xf32> to vector<1x32xf32>
    %543 = vector.broadcast %542 : vector<1x32xf32> to vector<64x32xf32>
    %544 = arith.addf %540, %543 : vector<64x32xf32>
    %cst_329 = arith.constant 5.000000e-01 : f32
    %545 = vector.broadcast %cst_329 : f32 to vector<64x32xf32>
    %546 = arith.mulf %545, %544 : vector<64x32xf32>
    %cst_330 = arith.constant 0.707106769 : f32
    %547 = vector.broadcast %cst_330 : f32 to vector<64x32xf32>
    %548 = arith.mulf %544, %547 : vector<64x32xf32>
    %cst_331 = arith.constant 0.000000e+00 : f32
    %549 = vector.broadcast %cst_331 : f32 to vector<64x32xf32>
    %550 = arith.cmpf oge, %548, %549 : vector<64x32xf32>
    %cst_332 = arith.constant 1.000000e+00 : f32
    %cst_333 = arith.constant -1.000000e+00 : f32
    %551 = vector.broadcast %cst_332 : f32 to vector<64x32xf32>
    %552 = vector.broadcast %cst_333 : f32 to vector<64x32xf32>
    %553 = arith.select %550, %551, %552 : vector<64x32xi1>, vector<64x32xf32>
    %554 = math.absf %548 : vector<64x32xf32>
    %cst_334 = arith.constant 0.327591091 : f32
    %555 = vector.broadcast %cst_334 : f32 to vector<64x32xf32>
    %556 = arith.mulf %555, %554 : vector<64x32xf32>
    %cst_335 = arith.constant 1.000000e+00 : f32
    %557 = vector.broadcast %cst_335 : f32 to vector<64x32xf32>
    %558 = arith.addf %557, %556 : vector<64x32xf32>
    %cst_336 = arith.constant 1.000000e+00 : f32
    %559 = vector.broadcast %cst_336 : f32 to vector<64x32xf32>
    %560 = arith.divf %559, %558 : vector<64x32xf32>
    %cst_337 = arith.constant 1.06140542 : f32
    %561 = vector.broadcast %cst_337 : f32 to vector<64x32xf32>
    %562 = arith.mulf %561, %560 : vector<64x32xf32>
    %cst_338 = arith.constant -1.45315206 : f32
    %563 = vector.broadcast %cst_338 : f32 to vector<64x32xf32>
    %564 = arith.addf %562, %563 : vector<64x32xf32>
    %565 = arith.mulf %564, %560 : vector<64x32xf32>
    %cst_339 = arith.constant 1.42141378 : f32
    %566 = vector.broadcast %cst_339 : f32 to vector<64x32xf32>
    %567 = arith.addf %565, %566 : vector<64x32xf32>
    %568 = arith.mulf %567, %560 : vector<64x32xf32>
    %cst_340 = arith.constant -0.284496725 : f32
    %569 = vector.broadcast %cst_340 : f32 to vector<64x32xf32>
    %570 = arith.addf %568, %569 : vector<64x32xf32>
    %571 = arith.mulf %570, %560 : vector<64x32xf32>
    %cst_341 = arith.constant 0.254829586 : f32
    %572 = vector.broadcast %cst_341 : f32 to vector<64x32xf32>
    %573 = arith.addf %571, %572 : vector<64x32xf32>
    %574 = arith.mulf %573, %560 : vector<64x32xf32>
    %cst_342 = arith.constant 0.000000e+00 : f32
    %575 = vector.broadcast %cst_342 : f32 to vector<64x32xf32>
    %576 = arith.subf %575, %554 : vector<64x32xf32>
    %577 = arith.mulf %576, %554 : vector<64x32xf32>
    %578 = math.exp %577 : vector<64x32xf32>
    %579 = arith.mulf %574, %578 : vector<64x32xf32>
    %cst_343 = arith.constant 1.000000e+00 : f32
    %580 = vector.broadcast %cst_343 : f32 to vector<64x32xf32>
    %581 = arith.subf %580, %579 : vector<64x32xf32>
    %582 = arith.mulf %553, %581 : vector<64x32xf32>
    %cst_344 = arith.constant 1.000000e+00 : f32
    %583 = vector.broadcast %cst_344 : f32 to vector<64x32xf32>
    %584 = arith.addf %583, %582 : vector<64x32xf32>
    %585 = arith.mulf %546, %584 : vector<64x32xf32>
    %c1_345 = arith.constant 1 : index
    %c0_346 = arith.constant 0 : index
    %c0_347 = arith.constant 0 : index
    %586 = vector.load %arg14[%c1_345, %c0_346, %c0_347] : memref<2x32x32xf32, #tpu.memory_space<vmem>>, vector<1x32x32xf32>
    %587 = vector.shape_cast %586 : vector<1x32x32xf32> to vector<32x32xf32>
    %cst_348 = arith.constant dense<0.000000e+00> : vector<64x32xf32>
    %588 = tpu.matmul %585, %587, %cst_348 {dimension_numbers = #tpu.dot_dimension_numbers<[1], [0], [0], [1], [0, 0, 1, 1], [], []>} : vector<64x32xf32>, vector<32x32xf32>, vector<64x32xf32> -> vector<64x32xf32>
    %c1_349 = arith.constant 1 : index
    %c0_350 = arith.constant 0 : index
    %c0_351 = arith.constant 0 : index
    %589 = vector.load %arg15[%c1_349, %c0_350, %c0_351] : memref<2x1x32xf32, #tpu.memory_space<vmem>>, vector<1x1x32xf32>
    %590 = vector.shape_cast %589 : vector<1x1x32xf32> to vector<1x32xf32>
    %591 = vector.broadcast %590 : vector<1x32xf32> to vector<64x32xf32>
    %592 = arith.addf %588, %591 : vector<64x32xf32>
    %cst_352 = arith.constant 5.000000e-01 : f32
    %593 = vector.broadcast %cst_352 : f32 to vector<64x32xf32>
    %594 = arith.mulf %593, %592 : vector<64x32xf32>
    %cst_353 = arith.constant 0.707106769 : f32
    %595 = vector.broadcast %cst_353 : f32 to vector<64x32xf32>
    %596 = arith.mulf %592, %595 : vector<64x32xf32>
    %cst_354 = arith.constant 0.000000e+00 : f32
    %597 = vector.broadcast %cst_354 : f32 to vector<64x32xf32>
    %598 = arith.cmpf oge, %596, %597 : vector<64x32xf32>
    %cst_355 = arith.constant 1.000000e+00 : f32
    %cst_356 = arith.constant -1.000000e+00 : f32
    %599 = vector.broadcast %cst_355 : f32 to vector<64x32xf32>
    %600 = vector.broadcast %cst_356 : f32 to vector<64x32xf32>
    %601 = arith.select %598, %599, %600 : vector<64x32xi1>, vector<64x32xf32>
    %602 = math.absf %596 : vector<64x32xf32>
    %cst_357 = arith.constant 0.327591091 : f32
    %603 = vector.broadcast %cst_357 : f32 to vector<64x32xf32>
    %604 = arith.mulf %603, %602 : vector<64x32xf32>
    %cst_358 = arith.constant 1.000000e+00 : f32
    %605 = vector.broadcast %cst_358 : f32 to vector<64x32xf32>
    %606 = arith.addf %605, %604 : vector<64x32xf32>
    %cst_359 = arith.constant 1.000000e+00 : f32
    %607 = vector.broadcast %cst_359 : f32 to vector<64x32xf32>
    %608 = arith.divf %607, %606 : vector<64x32xf32>
    %cst_360 = arith.constant 1.06140542 : f32
    %609 = vector.broadcast %cst_360 : f32 to vector<64x32xf32>
    %610 = arith.mulf %609, %608 : vector<64x32xf32>
    %cst_361 = arith.constant -1.45315206 : f32
    %611 = vector.broadcast %cst_361 : f32 to vector<64x32xf32>
    %612 = arith.addf %610, %611 : vector<64x32xf32>
    %613 = arith.mulf %612, %608 : vector<64x32xf32>
    %cst_362 = arith.constant 1.42141378 : f32
    %614 = vector.broadcast %cst_362 : f32 to vector<64x32xf32>
    %615 = arith.addf %613, %614 : vector<64x32xf32>
    %616 = arith.mulf %615, %608 : vector<64x32xf32>
    %cst_363 = arith.constant -0.284496725 : f32
    %617 = vector.broadcast %cst_363 : f32 to vector<64x32xf32>
    %618 = arith.addf %616, %617 : vector<64x32xf32>
    %619 = arith.mulf %618, %608 : vector<64x32xf32>
    %cst_364 = arith.constant 0.254829586 : f32
    %620 = vector.broadcast %cst_364 : f32 to vector<64x32xf32>
    %621 = arith.addf %619, %620 : vector<64x32xf32>
    %622 = arith.mulf %621, %608 : vector<64x32xf32>
    %cst_365 = arith.constant 0.000000e+00 : f32
    %623 = vector.broadcast %cst_365 : f32 to vector<64x32xf32>
    %624 = arith.subf %623, %602 : vector<64x32xf32>
    %625 = arith.mulf %624, %602 : vector<64x32xf32>
    %626 = math.exp %625 : vector<64x32xf32>
    %627 = arith.mulf %622, %626 : vector<64x32xf32>
    %cst_366 = arith.constant 1.000000e+00 : f32
    %628 = vector.broadcast %cst_366 : f32 to vector<64x32xf32>
    %629 = arith.subf %628, %627 : vector<64x32xf32>
    %630 = arith.mulf %601, %629 : vector<64x32xf32>
    %cst_367 = arith.constant 1.000000e+00 : f32
    %631 = vector.broadcast %cst_367 : f32 to vector<64x32xf32>
    %632 = arith.addf %631, %630 : vector<64x32xf32>
    %633 = arith.mulf %594, %632 : vector<64x32xf32>
    %634 = arith.addf %349, %633 : vector<64x32xf32>
    %cst_368 = arith.constant dense<0.000000e+00> : vector<1x32xf32>
    %635 = tpu.matmul %387, %2, %cst_368 {dimension_numbers = #tpu.dot_dimension_numbers<[1], [0], [0], [1], [0, 0, 1, 1], [], []>} : vector<1x32xf32>, vector<32x32xf32>, vector<1x32xf32> -> vector<1x32xf32>
    %cst_369 = arith.constant dense<0.000000e+00> : vector<64x64xf32>
    %636 = tpu.matmul %634, %3, %cst_369 {dimension_numbers = #tpu.dot_dimension_numbers<[1], [0], [0], [1], [0, 0, 1, 1], [], []>} : vector<64x32xf32>, vector<32x64xf32>, vector<64x64xf32> -> vector<64x64xf32>
    %637 = vector.extract_strided_slice %636 {offsets = [0, 0], sizes = [64, 32], strides = [1, 1]} : vector<64x64xf32> to vector<64x32xf32>
    %638 = vector.extract_strided_slice %636 {offsets = [0, 32], sizes = [64, 32], strides = [1, 1]} : vector<64x64xf32> to vector<64x32xf32>
    %cst_370 = arith.constant dense<0.000000e+00> : vector<1x64xf32>
    %639 = tpu.matmul %635, %637, %cst_370 {dimension_numbers = #tpu.dot_dimension_numbers<[1], [1], [0], [0], [0, 0, 1, 0], [], []>} : vector<1x32xf32>, vector<64x32xf32>, vector<1x64xf32> -> vector<1x64xf32>
    %cst_371 = arith.constant 0.176776692 : f32
    %640 = vector.broadcast %cst_371 : f32 to vector<1x64xf32>
    %641 = arith.mulf %639, %640 : vector<1x64xf32>
    %cst_372 = arith.constant dense<0xFF800000> : vector<1xf32>
    %642 = vector.multi_reduction <maximumf>, %641, %cst_372 [1] : vector<1x64xf32> to vector<1xf32>
    %643 = vector.shape_cast %642 : vector<1xf32> to vector<1x1xf32>
    %644 = vector.broadcast %643 : vector<1x1xf32> to vector<1x64xf32>
    %645 = arith.subf %641, %644 : vector<1x64xf32>
    %646 = math.exp %645 : vector<1x64xf32>
    %cst_373 = arith.constant dense<0.000000e+00> : vector<1xf32>
    %647 = vector.multi_reduction <add>, %646, %cst_373 [1] : vector<1x64xf32> to vector<1xf32>
    %648 = vector.shape_cast %647 : vector<1xf32> to vector<1x1xf32>
    %649 = vector.broadcast %648 : vector<1x1xf32> to vector<1x64xf32>
    %650 = arith.divf %646, %649 : vector<1x64xf32>
    %cst_374 = arith.constant dense<0.000000e+00> : vector<1x32xf32>
    %651 = tpu.matmul %650, %638, %cst_374 {dimension_numbers = #tpu.dot_dimension_numbers<[1], [0], [0], [1], [0, 0, 1, 1], [], []>} : vector<1x64xf32>, vector<64x32xf32>, vector<1x32xf32> -> vector<1x32xf32>
    %652 = arith.addf %387, %651 : vector<1x32xf32>
    %cst_375 = arith.constant dense<0.000000e+00> : vector<1xf32>
    %653 = vector.multi_reduction <add>, %652, %cst_375 [1] : vector<1x32xf32> to vector<1xf32>
    %654 = vector.shape_cast %653 : vector<1xf32> to vector<1x1xf32>
    %cst_376 = arith.constant 3.200000e+01 : f32
    %655 = vector.broadcast %cst_376 : f32 to vector<1x1xf32>
    %656 = arith.divf %654, %655 : vector<1x1xf32>
    %657 = vector.broadcast %656 : vector<1x1xf32> to vector<1x32xf32>
    %658 = arith.subf %652, %657 : vector<1x32xf32>
    %659 = arith.mulf %658, %658 : vector<1x32xf32>
    %cst_377 = arith.constant dense<0.000000e+00> : vector<1xf32>
    %660 = vector.multi_reduction <add>, %659, %cst_377 [1] : vector<1x32xf32> to vector<1xf32>
    %661 = vector.shape_cast %660 : vector<1xf32> to vector<1x1xf32>
    %cst_378 = arith.constant 3.200000e+01 : f32
    %662 = vector.broadcast %cst_378 : f32 to vector<1x1xf32>
    %663 = arith.divf %661, %662 : vector<1x1xf32>
    %664 = vector.broadcast %656 : vector<1x1xf32> to vector<1x32xf32>
    %665 = arith.subf %652, %664 : vector<1x32xf32>
    %cst_379 = arith.constant 9.99999974E-6 : f32
    %666 = vector.broadcast %cst_379 : f32 to vector<1x1xf32>
    %667 = arith.addf %663, %666 : vector<1x1xf32>
    %668 = math.rsqrt %667 : vector<1x1xf32>
    %669 = vector.broadcast %668 : vector<1x1xf32> to vector<1x32xf32>
    %670 = arith.mulf %665, %669 : vector<1x32xf32>
    %671 = arith.mulf %670, %4 : vector<1x32xf32>
    %672 = arith.addf %671, %5 : vector<1x32xf32>
    %c0_380 = arith.constant 0 : index
    %c0_381 = arith.constant 0 : index
    %673 = vector.load %arg16[%c0_380, %c0_381] : memref<32x10xf32, #tpu.memory_space<vmem>>, vector<32x10xf32>
    %cst_382 = arith.constant dense<0.000000e+00> : vector<1x10xf32>
    %674 = tpu.matmul %672, %673, %cst_382 {dimension_numbers = #tpu.dot_dimension_numbers<[1], [0], [0], [1], [0, 0, 1, 1], [], []>} : vector<1x32xf32>, vector<32x10xf32>, vector<1x10xf32> -> vector<1x10xf32>
    %c0_383 = arith.constant 0 : index
    %c0_384 = arith.constant 0 : index
    %675 = vector.load %arg17[%c0_383, %c0_384] : memref<1x10xf32, #tpu.memory_space<vmem>>, vector<1x10xf32>
    %676 = arith.addf %674, %675 : vector<1x10xf32>
    %c0_385 = arith.constant 0 : index
    %c0_386 = arith.constant 0 : index
    %c0_387 = arith.constant 0 : index
    %677 = vector.load %arg18[%c0_385, %c0_386, %c0_387] : memref<1x1x10xf32, #tpu.memory_space<vmem>>, vector<1x1x10xf32>
    %678 = vector.shape_cast %677 : vector<1x1x10xf32> to vector<1x10xf32>
    %679 = vector.shape_cast %676 : vector<1x10xf32> to vector<1x1x10xf32>
    tpu.vector_store %arg18[%c0_385, %c0_386, %c0_387], %679 {strides = array<i32>} : memref<1x1x10xf32, #tpu.memory_space<vmem>>, vector<1x1x10xf32>,
    return
  }
  func.func @transform_0(%arg0: i32) -> (i32, i32, i32) {
    %c0_i32 = arith.constant 0 : i32
    %c0_i32_0 = arith.constant 0 : i32
    %c0_i32_1 = arith.constant 0 : i32
    return %arg0, %c0_i32, %c0_i32_0 : i32, i32, i32
  }
  func.func @transform_1(%arg0: i32) -> (i32, i32) {
    %c0_i32 = arith.constant 0 : i32
    %c0_i32_0 = arith.constant 0 : i32
    %c0_i32_1 = arith.constant 0 : i32
    return %c0_i32, %c0_i32_0 : i32, i32
  }
  func.func @transform_2(%arg0: i32) -> (i32, i32, i32) {
    %c0_i32 = arith.constant 0 : i32
    %c0_i32_0 = arith.constant 0 : i32
    %c0_i32_1 = arith.constant 0 : i32
    %c0_i32_2 = arith.constant 0 : i32
    return %c0_i32, %c0_i32_0, %c0_i32_1 : i32, i32, i32
  }
  func.func @transform_3(%arg0: i32) -> (i32, i32) {
    %c0_i32 = arith.constant 0 : i32
    %c0_i32_0 = arith.constant 0 : i32
    %c0_i32_1 = arith.constant 0 : i32
    return %c0_i32, %c0_i32_0 : i32, i32
  }
  func.func @transform_4(%arg0: i32) -> (i32, i32) {
    %c0_i32 = arith.constant 0 : i32
    %c0_i32_0 = arith.constant 0 : i32
    %c0_i32_1 = arith.constant 0 : i32
    return %c0_i32, %c0_i32_0 : i32, i32
  }
  func.func @transform_5(%arg0: i32) -> (i32, i32) {
    %c0_i32 = arith.constant 0 : i32
    %c0_i32_0 = arith.constant 0 : i32
    %c0_i32_1 = arith.constant 0 : i32
    return %c0_i32, %c0_i32_0 : i32, i32
  }
  func.func @transform_6(%arg0: i32) -> (i32, i32) {
    %c0_i32 = arith.constant 0 : i32
    %c0_i32_0 = arith.constant 0 : i32
    %c0_i32_1 = arith.constant 0 : i32
    return %c0_i32, %c0_i32_0 : i32, i32
  }
  func.func @transform_7(%arg0: i32) -> (i32, i32) {
    %c0_i32 = arith.constant 0 : i32
    %c0_i32_0 = arith.constant 0 : i32
    %c0_i32_1 = arith.constant 0 : i32
    return %c0_i32, %c0_i32_0 : i32, i32
  }
  func.func @transform_8(%arg0: i32) -> (i32, i32) {
    %c0_i32 = arith.constant 0 : i32
    %c0_i32_0 = arith.constant 0 : i32
    %c0_i32_1 = arith.constant 0 : i32
    return %c0_i32, %c0_i32_0 : i32, i32
  }
  func.func @transform_9(%arg0: i32) -> (i32, i32, i32) {
    %c0_i32 = arith.constant 0 : i32
    %c0_i32_0 = arith.constant 0 : i32
    %c0_i32_1 = arith.constant 0 : i32
    %c0_i32_2 = arith.constant 0 : i32
    return %c0_i32, %c0_i32_0, %c0_i32_1 : i32, i32, i32
  }
  func.func @transform_10(%arg0: i32) -> (i32, i32, i32) {
    %c0_i32 = arith.constant 0 : i32
    %c0_i32_0 = arith.constant 0 : i32
    %c0_i32_1 = arith.constant 0 : i32
    %c0_i32_2 = arith.constant 0 : i32
    return %c0_i32, %c0_i32_0, %c0_i32_1 : i32, i32, i32
  }
  func.func @transform_11(%arg0: i32) -> (i32, i32, i32) {
    %c0_i32 = arith.constant 0 : i32
    %c0_i32_0 = arith.constant 0 : i32
    %c0_i32_1 = arith.constant 0 : i32
    %c0_i32_2 = arith.constant 0 : i32
    return %c0_i32, %c0_i32_0, %c0_i32_1 : i32, i32, i32
  }
  func.func @transform_12(%arg0: i32) -> (i32, i32, i32) {
    %c0_i32 = arith.constant 0 : i32
    %c0_i32_0 = arith.constant 0 : i32
    %c0_i32_1 = arith.constant 0 : i32
    %c0_i32_2 = arith.constant 0 : i32
    return %c0_i32, %c0_i32_0, %c0_i32_1 : i32, i32, i32
  }
  func.func @transform_13(%arg0: i32) -> (i32, i32, i32) {
    %c0_i32 = arith.constant 0 : i32
    %c0_i32_0 = arith.constant 0 : i32
    %c0_i32_1 = arith.constant 0 : i32
    %c0_i32_2 = arith.constant 0 : i32
    return %c0_i32, %c0_i32_0, %c0_i32_1 : i32, i32, i32
  }
  func.func @transform_14(%arg0: i32) -> (i32, i32, i32) {
    %c0_i32 = arith.constant 0 : i32
    %c0_i32_0 = arith.constant 0 : i32
    %c0_i32_1 = arith.constant 0 : i32
    %c0_i32_2 = arith.constant 0 : i32
    return %c0_i32, %c0_i32_0, %c0_i32_1 : i32, i32, i32
  }
  func.func @transform_15(%arg0: i32) -> (i32, i32) {
    %c0_i32 = arith.constant 0 : i32
    %c0_i32_0 = arith.constant 0 : i32
    %c0_i32_1 = arith.constant 0 : i32
    return %c0_i32, %c0_i32_0 : i32, i32
  }
  func.func @transform_16(%arg0: i32) -> (i32, i32) {
    %c0_i32 = arith.constant 0 : i32
    %c0_i32_0 = arith.constant 0 : i32
    %c0_i32_1 = arith.constant 0 : i32
    return %c0_i32, %c0_i32_0 : i32, i32
  }
  func.func @transform_17(%arg0: i32) -> (i32, i32, i32) {
    %c0_i32 = arith.constant 0 : i32
    %c0_i32_0 = arith.constant 0 : i32
    %c0_i32_1 = arith.constant 0 : i32
    return %arg0, %c0_i32, %c0_i32_0 : i32, i32, i32
  }
}

</mosaic_0001>

<llo_original>
// kernel: conformer_forward.1
$region0: #{conformer_forward.1}
  #allocation0 [shape = 'u32[]', space=smem, size = 0x4, offset = 0x4, fixed_abs, tag = 'smem constant byte address 0x4 - core index']
  #allocation1 [shape = 'u32[144,128]{1,0:T(1,128)}', space=vmem, size = 0x12000, scoped, tag = 'internal scratch']
  #allocation2 [shape = 'f32[112,32]{1,0:T(8,128)}', space=vmem, size = 0xe000, scoped, tag = 'scratch operand']
  #allocation3 [shape = 'f32[64,800]{1,0:T(8,128)}', space=vmem, size = 0x38000, scoped, tag = 'scratch operand']
  %s0 = inlined_call_operand.vmem [shape: f32[2,64,12], index: 0, kind: input, shape index: {}]
  %s1 = inlined_call_operand.vmem [shape: f32[1,32], index: 1, kind: input, shape index: {}]
  %s2 = inlined_call_operand.vmem [shape: f32[5,64,1], index: 2, kind: input, shape index: {}]
  %s3 = inlined_call_operand.vmem [shape: f32[12,32], index: 3, kind: input, shape index: {}]
  %s4 = inlined_call_operand.vmem [shape: f32[1,32], index: 4, kind: input, shape index: {}]
  %s5 = inlined_call_operand.vmem [shape: f32[32,32], index: 5, kind: input, shape index: {}]
  %s6 = inlined_call_operand.vmem [shape: f32[32,64], index: 6, kind: input, shape index: {}]
  %s7 = inlined_call_operand.vmem [shape: f32[1,32], index: 7, kind: input, shape index: {}]
  %s8 = inlined_call_operand.vmem [shape: f32[1,32], index: 8, kind: input, shape index: {}]
  %s9 = inlined_call_operand.vmem [shape: f32[2,32,32], index: 9, kind: input, shape index: {}]
  %s10 = inlined_call_operand.vmem [shape: f32[2,1,32], index: 10, kind: input, shape index: {}]
  %s11 = inlined_call_operand.vmem [shape: f32[2,800,32], index: 11, kind: input, shape index: {}]
  %s12 = inlined_call_operand.vmem [shape: f32[2,1,32], index: 12, kind: input, shape index: {}]
  %s13 = inlined_call_operand.vmem [shape: f32[2,32,32], index: 13, kind: input, shape index: {}]
  %s14 = inlined_call_operand.vmem [shape: f32[2,1,32], index: 14, kind: input, shape index: {}]
  %s15 = inlined_call_operand.vmem [shape: f32[32,10], index: 15, kind: input, shape index: {}]
  %s16 = inlined_call_operand.vmem [shape: f32[1,10], index: 16, kind: input, shape index: {}]
  %s17 = inlined_call_operand.hbm [shape: f32[2,1,10], index: 17, kind: output, shape index: {}]
  %s18 = sld [smem:[#allocation0]]
  $region101: #{conformer_forward.1} parent=0
    _
  %s20 = ssub.s32 1, %s18
  %s21 = scalar_select 0, %s20, %s18
  $region1: #{conformer_forward.1} parent=0
    #allocation4 [shape = 'u8[1024]{0}', space=vmem, size = 0x400, scoped, tag = 'output window, operand 0']
    #allocation5 [shape = 's32[2]{0}', space=sflag, size = 0x8, scoped, tag = 'scoped memory for conformer_forward.1']
    %22 = vsyncpa [#allocation5], 0
    %s23 = scalar_lea.sflag [#allocation5], 1
    %24 = vsyncpa %s23, 0
    loop: start=0, step=1, limit=4
    $region2: #{conformer_forward.1} parent=1 // loop_pre_header
      _
    $region3: #{conformer_forward.1} parent=1 // loop_header
      %s26 = sphi 0, %s30
      %p27 = scmp.ge.s32.totalorder %s26, 4
      %s36 = sphi 0, %s38
      %s39 = sphi 0, %s36
      %s40 = sphi 0, %s39
      %s56 = sphi 0, %s40
      %s60 = sphi 0, %s60
      %s62 = sphi 0, %s60
      %s63 = sphi 0, %s62
      %s77 = sphi 0, %s63
      %s81 = sphi 0, %s81
      %s83 = sphi 0, %s81
      %s84 = sphi 0, %s83
      %s98 = sphi 0, %s84
      %s102 = sphi 0, %s102
      %s104 = sphi 0, %s102
      %s105 = sphi 0, %s104
      %s119 = sphi 0, %s105
      %s123 = sphi 0, %s123
      %s125 = sphi 0, %s123
      %s126 = sphi 0, %s125
      %s140 = sphi 0, %s126
      %s144 = sphi 0, %s144
      %s146 = sphi 0, %s144
      %s147 = sphi 0, %s146
      %s161 = sphi 0, %s147
      %s165 = sphi 0, %s165
      %s167 = sphi 0, %s165
      %s168 = sphi 0, %s167
      %s182 = sphi 0, %s168
      %s186 = sphi 0, %s186
      %s188 = sphi 0, %s186
      %s189 = sphi 0, %s188
      %s203 = sphi 0, %s189
      %s207 = sphi 0, %s207
      %s209 = sphi 0, %s207
      %s210 = sphi 0, %s209
      %s224 = sphi 0, %s210
      %s228 = sphi 0, %s228
      %s230 = sphi 0, %s228
      %s231 = sphi 0, %s230
      %s245 = sphi 0, %s231
      %s249 = sphi 0, %s249
      %s251 = sphi 0, %s249
      %s252 = sphi 0, %s251
      %s266 = sphi 0, %s252
      %s270 = sphi 0, %s270
      %s272 = sphi 0, %s270
      %s273 = sphi 0, %s272
      %s287 = sphi 0, %s273
      %s291 = sphi 0, %s291
      %s293 = sphi 0, %s291
      %s294 = sphi 0, %s293
      %s308 = sphi 0, %s294
      %s312 = sphi 0, %s312
      %s314 = sphi 0, %s312
      %s315 = sphi 0, %s314
      %s329 = sphi 0, %s315
      %s333 = sphi 0, %s333
      %s335 = sphi 0, %s333
      %s336 = sphi 0, %s335
      %s350 = sphi 0, %s336
      %s354 = sphi 0, %s354
      %s356 = sphi 0, %s354
      %s357 = sphi 0, %s356
      %s371 = sphi 0, %s357
      %s375 = sphi 0, %s375
      %s377 = sphi 0, %s375
      %s378 = sphi 0, %s377
      %s392 = sphi 0, %s378
      %s398 = sphi 0, %s400
      %s401 = sphi 0, %s398
      %s402 = sphi 0, %s401
      %s418 = sphi 0, %s402
    $region4: #{conformer_forward.1} parent=1 // loop_header_branch
      %29 = sbr.rel (%p27) target = $region8
    $region5: #{conformer_forward.1} parent=1 // loop_body
      %s31 = ssub.s32 %s26, 1
      %s32 = ssub.s32 %s26, 2
      %s33 = sadd.s32 %s26, 1
      %s34 = ssub.s32 %s26, %s33
      %p35 = scmp.eq.s32.totalorder %s34, 0
      %s37 = sadd.s32 %s36, 1
      %s38 = scalar_select %p35, %s36, %s37
      %p41 = pneg %p35
      %p42 = scmp.eq.s32.totalorder %s26, 1
      %p43 = por %p41, %p42
      %p44 = scmp.ne.s32.totalorder %s36, %s39
      %p45 = scmp.eq.s32.totalorder %s26, 0
      %p46 = por %p44, %p45
      %p47 = scmp.ne.s32.totalorder %s36, %s39
      %p48 = scmp.eq.s32.totalorder %s31, 1
      %p49 = por %p47, %p48
      %p50 = scmp.ne.s32.totalorder %s39, %s40
      %p51 = scmp.eq.s32.totalorder %s31, 0
      %p52 = por %p50, %p51
      %p53 = scmp.ne.s32.totalorder %s39, %s40
      %p54 = scmp.eq.s32.totalorder %s32, 1
      %p55 = por %p53, %p54
      %p57 = scmp.ne.s32.totalorder %s40, %s56
      %p58 = scmp.eq.s32.totalorder %s32, 0
      %p59 = por %p57, %p58
      %s61 = sadd.s32 %s60, 1
      %p64 = scmp.eq.s32.totalorder %s26, 1
      %p65 = scmp.ne.s32.totalorder %s60, %s62
      %p66 = scmp.eq.s32.totalorder %s26, 0
      %p67 = por %p65, %p66
      %p68 = scmp.ne.s32.totalorder %s60, %s62
      %p69 = scmp.eq.s32.totalorder %s31, 1
      %p70 = por %p68, %p69
      %p71 = scmp.ne.s32.totalorder %s62, %s63
      %p72 = scmp.eq.s32.totalorder %s31, 0
      %p73 = por %p71, %p72
      %p74 = scmp.ne.s32.totalorder %s62, %s63
      %p75 = scmp.eq.s32.totalorder %s32, 1
      %p76 = por %p74, %p75
      %p78 = scmp.ne.s32.totalorder %s63, %s77
      %p79 = scmp.eq.s32.totalorder %s32, 0
      %p80 = por %p78, %p79
      %s82 = sadd.s32 %s81, 1
      %p85 = scmp.eq.s32.totalorder %s26, 1
      %p86 = scmp.ne.s32.totalorder %s81, %s83
      %p87 = scmp.eq.s32.totalorder %s26, 0
      %p88 = por %p86, %p87
      %p89 = scmp.ne.s32.totalorder %s81, %s83
      %p90 = scmp.eq.s32.totalorder %s31, 1
      %p91 = por %p89, %p90
      %p92 = scmp.ne.s32.totalorder %s83, %s84
      %p93 = scmp.eq.s32.totalorder %s31, 0
      %p94 = por %p92, %p93
      %p95 = scmp.ne.s32.totalorder %s83, %s84
      %p96 = scmp.eq.s32.totalorder %s32, 1
      %p97 = por %p95, %p96
      %p99 = scmp.ne.s32.totalorder %s84, %s98
      %p100 = scmp.eq.s32.totalorder %s32, 0
      %p101 = por %p99, %p100
      %s103 = sadd.s32 %s102, 1
      %p106 = scmp.eq.s32.totalorder %s26, 1
      %p107 = scmp.ne.s32.totalorder %s102, %s104
      %p108 = scmp.eq.s32.totalorder %s26, 0
      %p109 = por %p107, %p108
      %p110 = scmp.ne.s32.totalorder %s102, %s104
      %p111 = scmp.eq.s32.totalorder %s31, 1
      %p112 = por %p110, %p111
      %p113 = scmp.ne.s32.totalorder %s104, %s105
      %p114 = scmp.eq.s32.totalorder %s31, 0
      %p115 = por %p113, %p114
      %p116 = scmp.ne.s32.totalorder %s104, %s105
      %p117 = scmp.eq.s32.totalorder %s32, 1
      %p118 = por %p116, %p117
      %p120 = scmp.ne.s32.totalorder %s105, %s119
      %p121 = scmp.eq.s32.totalorder %s32, 0
      %p122 = por %p120, %p121
      %s124 = sadd.s32 %s123, 1
      %p127 = scmp.eq.s32.totalorder %s26, 1
      %p128 = scmp.ne.s32.totalorder %s123, %s125
      %p129 = scmp.eq.s32.totalorder %s26, 0
      %p130 = por %p128, %p129
      %p131 = scmp.ne.s32.totalorder %s123, %s125
      %p132 = scmp.eq.s32.totalorder %s31, 1
      %p133 = por %p131, %p132
      %p134 = scmp.ne.s32.totalorder %s125, %s126
      %p135 = scmp.eq.s32.totalorder %s31, 0
      %p136 = por %p134, %p135
      %p137 = scmp.ne.s32.totalorder %s125, %s126
      %p138 = scmp.eq.s32.totalorder %s32, 1
      %p139 = por %p137, %p138
      %p141 = scmp.ne.s32.totalorder %s126, %s140
      %p142 = scmp.eq.s32.totalorder %s32, 0
      %p143 = por %p141, %p142
      %s145 = sadd.s32 %s144, 1
      %p148 = scmp.eq.s32.totalorder %s26, 1
      %p149 = scmp.ne.s32.totalorder %s144, %s146
      %p150 = scmp.eq.s32.totalorder %s26, 0
      %p151 = por %p149, %p150
      %p152 = scmp.ne.s32.totalorder %s144, %s146
      %p153 = scmp.eq.s32.totalorder %s31, 1
      %p154 = por %p152, %p153
      %p155 = scmp.ne.s32.totalorder %s146, %s147
      %p156 = scmp.eq.s32.totalorder %s31, 0
      %p157 = por %p155, %p156
      %p158 = scmp.ne.s32.totalorder %s146, %s147
      %p159 = scmp.eq.s32.totalorder %s32, 1
      %p160 = por %p158, %p159
      %p162 = scmp.ne.s32.totalorder %s147, %s161
      %p163 = scmp.eq.s32.totalorder %s32, 0
      %p164 = por %p162, %p163
      %s166 = sadd.s32 %s165, 1
      %p169 = scmp.eq.s32.totalorder %s26, 1
      %p170 = scmp.ne.s32.totalorder %s165, %s167
      %p171 = scmp.eq.s32.totalorder %s26, 0
      %p172 = por %p170, %p171
      %p173 = scmp.ne.s32.totalorder %s165, %s167
      %p174 = scmp.eq.s32.totalorder %s31, 1
      %p175 = por %p173, %p174
      %p176 = scmp.ne.s32.totalorder %s167, %s168
      %p177 = scmp.eq.s32.totalorder %s31, 0
      %p178 = por %p176, %p177
      %p179 = scmp.ne.s32.totalorder %s167, %s168
      %p180 = scmp.eq.s32.totalorder %s32, 1
      %p181 = por %p179, %p180
      %p183 = scmp.ne.s32.totalorder %s168, %s182
      %p184 = scmp.eq.s32.totalorder %s32, 0
      %p185 = por %p183, %p184
      %s187 = sadd.s32 %s186, 1
      %p190 = scmp.eq.s32.totalorder %s26, 1
      %p191 = scmp.ne.s32.totalorder %s186, %s188
      %p192 = scmp.eq.s32.totalorder %s26, 0
      %p193 = por %p191, %p192
      %p194 = scmp.ne.s32.totalorder %s186, %s188
      %p195 = scmp.eq.s32.totalorder %s31, 1
      %p196 = por %p194, %p195
      %p197 = scmp.ne.s32.totalorder %s188, %s189
      %p198 = scmp.eq.s32.totalorder %s31, 0
      %p199 = por %p197, %p198
      %p200 = scmp.ne.s32.totalorder %s188, %s189
      %p201 = scmp.eq.s32.totalorder %s32, 1
      %p202 = por %p200, %p201
      %p204 = scmp.ne.s32.totalorder %s189, %s203
      %p205 = scmp.eq.s32.totalorder %s32, 0
      %p206 = por %p204, %p205
      %s208 = sadd.s32 %s207, 1
      %p211 = scmp.eq.s32.totalorder %s26, 1
      %p212 = scmp.ne.s32.totalorder %s207, %s209
      %p213 = scmp.eq.s32.totalorder %s26, 0
      %p214 = por %p212, %p213
      %p215 = scmp.ne.s32.totalorder %s207, %s209
      %p216 = scmp.eq.s32.totalorder %s31, 1
      %p217 = por %p215, %p216
      %p218 = scmp.ne.s32.totalorder %s209, %s210
      %p219 = scmp.eq.s32.totalorder %s31, 0
      %p220 = por %p218, %p219
      %p221 = scmp.ne.s32.totalorder %s209, %s210
      %p222 = scmp.eq.s32.totalorder %s32, 1
      %p223 = por %p221, %p222
      %p225 = scmp.ne.s32.totalorder %s210, %s224
      %p226 = scmp.eq.s32.totalorder %s32, 0
      %p227 = por %p225, %p226
      %s229 = sadd.s32 %s228, 1
      %p232 = scmp.eq.s32.totalorder %s26, 1
      %p233 = scmp.ne.s32.totalorder %s228, %s230
      %p234 = scmp.eq.s32.totalorder %s26, 0
      %p235 = por %p233, %p234
      %p236 = scmp.ne.s32.totalorder %s228, %s230
      %p237 = scmp.eq.s32.totalorder %s31, 1
      %p238 = por %p236, %p237
      %p239 = scmp.ne.s32.totalorder %s230, %s231
      %p240 = scmp.eq.s32.totalorder %s31, 0
      %p241 = por %p239, %p240
      %p242 = scmp.ne.s32.totalorder %s230, %s231
      %p243 = scmp.eq.s32.totalorder %s32, 1
      %p244 = por %p242, %p243
      %p246 = scmp.ne.s32.totalorder %s231, %s245
      %p247 = scmp.eq.s32.totalorder %s32, 0
      %p248 = por %p246, %p247
      %s250 = sadd.s32 %s249, 1
      %p253 = scmp.eq.s32.totalorder %s26, 1
      %p254 = scmp.ne.s32.totalorder %s249, %s251
      %p255 = scmp.eq.s32.totalorder %s26, 0
      %p256 = por %p254, %p255
      %p257 = scmp.ne.s32.totalorder %s249, %s251
      %p258 = scmp.eq.s32.totalorder %s31, 1
      %p259 = por %p257, %p258
      %p260 = scmp.ne.s32.totalorder %s251, %s252
      %p261 = scmp.eq.s32.totalorder %s31, 0
      %p262 = por %p260, %p261
      %p263 = scmp.ne.s32.totalorder %s251, %s252
      %p264 = scmp.eq.s32.totalorder %s32, 1
      %p265 = por %p263, %p264
      %p267 = scmp.ne.s32.totalorder %s252, %s266
      %p268 = scmp.eq.s32.totalorder %s32, 0
      %p269 = por %p267, %p268
      %s271 = sadd.s32 %s270, 1
      %p274 = scmp.eq.s32.totalorder %s26, 1
      %p275 = scmp.ne.s32.totalorder %s270, %s272
      %p276 = scmp.eq.s32.totalorder %s26, 0
      %p277 = por %p275, %p276
      %p278 = scmp.ne.s32.totalorder %s270, %s272
      %p279 = scmp.eq.s32.totalorder %s31, 1
      %p280 = por %p278, %p279
      %p281 = scmp.ne.s32.totalorder %s272, %s273
      %p282 = scmp.eq.s32.totalorder %s31, 0
      %p283 = por %p281, %p282
      %p284 = scmp.ne.s32.totalorder %s272, %s273
      %p285 = scmp.eq.s32.totalorder %s32, 1
      %p286 = por %p284, %p285
      %p288 = scmp.ne.s32.totalorder %s273, %s287
      %p289 = scmp.eq.s32.totalorder %s32, 0
      %p290 = por %p288, %p289
      %s292 = sadd.s32 %s291, 1
      %p295 = scmp.eq.s32.totalorder %s26, 1
      %p296 = scmp.ne.s32.totalorder %s291, %s293
      %p297 = scmp.eq.s32.totalorder %s26, 0
      %p298 = por %p296, %p297
      %p299 = scmp.ne.s32.totalorder %s291, %s293
      %p300 = scmp.eq.s32.totalorder %s31, 1
      %p301 = por %p299, %p300
      %p302 = scmp.ne.s32.totalorder %s293, %s294
      %p303 = scmp.eq.s32.totalorder %s31, 0
      %p304 = por %p302, %p303
      %p305 = scmp.ne.s32.totalorder %s293, %s294
      %p306 = scmp.eq.s32.totalorder %s32, 1
      %p307 = por %p305, %p306
      %p309 = scmp.ne.s32.totalorder %s294, %s308
      %p310 = scmp.eq.s32.totalorder %s32, 0
      %p311 = por %p309, %p310
      %s313 = sadd.s32 %s312, 1
      %p316 = scmp.eq.s32.totalorder %s26, 1
      %p317 = scmp.ne.s32.totalorder %s312, %s314
      %p318 = scmp.eq.s32.totalorder %s26, 0
      %p319 = por %p317, %p318
      %p320 = scmp.ne.s32.totalorder %s312, %s314
      %p321 = scmp.eq.s32.totalorder %s31, 1
      %p322 = por %p320, %p321
      %p323 = scmp.ne.s32.totalorder %s314, %s315
      %p324 = scmp.eq.s32.totalorder %s31, 0
      %p325 = por %p323, %p324
      %p326 = scmp.ne.s32.totalorder %s314, %s315
      %p327 = scmp.eq.s32.totalorder %s32, 1
      %p328 = por %p326, %p327
      %p330 = scmp.ne.s32.totalorder %s315, %s329
      %p331 = scmp.eq.s32.totalorder %s32, 0
      %p332 = por %p330, %p331
      %s334 = sadd.s32 %s333, 1
      %p337 = scmp.eq.s32.totalorder %s26, 1
      %p338 = scmp.ne.s32.totalorder %s333, %s335
      %p339 = scmp.eq.s32.totalorder %s26, 0
      %p340 = por %p338, %p339
      %p341 = scmp.ne.s32.totalorder %s333, %s335
      %p342 = scmp.eq.s32.totalorder %s31, 1
      %p343 = por %p341, %p342
      %p344 = scmp.ne.s32.totalorder %s335, %s336
      %p345 = scmp.eq.s32.totalorder %s31, 0
      %p346 = por %p344, %p345
      %p347 = scmp.ne.s32.totalorder %s335, %s336
      %p348 = scmp.eq.s32.totalorder %s32, 1
      %p349 = por %p347, %p348
      %p351 = scmp.ne.s32.totalorder %s336, %s350
      %p352 = scmp.eq.s32.totalorder %s32, 0
      %p353 = por %p351, %p352
      %s355 = sadd.s32 %s354, 1
      %p358 = scmp.eq.s32.totalorder %s26, 1
      %p359 = scmp.ne.s32.totalorder %s354, %s356
      %p360 = scmp.eq.s32.totalorder %s26, 0
      %p361 = por %p359, %p360
      %p362 = scmp.ne.s32.totalorder %s354, %s356
      %p363 = scmp.eq.s32.totalorder %s31, 1
      %p364 = por %p362, %p363
      %p365 = scmp.ne.s32.totalorder %s356, %s357
      %p366 = scmp.eq.s32.totalorder %s31, 0
      %p367 = por %p365, %p366
      %p368 = scmp.ne.s32.totalorder %s356, %s357
      %p369 = scmp.eq.s32.totalorder %s32, 1
      %p370 = por %p368, %p369
      %p372 = scmp.ne.s32.totalorder %s357, %s371
      %p373 = scmp.eq.s32.totalorder %s32, 0
      %p374 = por %p372, %p373
      %s376 = sadd.s32 %s375, 1
      %p379 = scmp.eq.s32.totalorder %s26, 1
      %p380 = scmp.ne.s32.totalorder %s375, %s377
      %p381 = scmp.eq.s32.totalorder %s26, 0
      %p382 = por %p380, %p381
      %p383 = scmp.ne.s32.totalorder %s375, %s377
      %p384 = scmp.eq.s32.totalorder %s31, 1
      %p385 = por %p383, %p384
      %p386 = scmp.ne.s32.totalorder %s377, %s378
      %p387 = scmp.eq.s32.totalorder %s31, 0
      %p388 = por %p386, %p387
      %p389 = scmp.ne.s32.totalorder %s377, %s378
      %p390 = scmp.eq.s32.totalorder %s32, 1
      %p391 = por %p389, %p390
      %p393 = scmp.ne.s32.totalorder %s378, %s392
      %p394 = scmp.eq.s32.totalorder %s32, 0
      %p395 = por %p393, %p394
      %s396 = ssub.s32 %s26, %s33
      %p397 = scmp.eq.s32.totalorder %s396, 0
      %s399 = sadd.s32 %s398, 1
      %s400 = scalar_select %p397, %s398, %s399
      %p403 = pneg %p397
      %p404 = scmp.eq.s32.totalorder %s26, 1
      %p405 = por %p403, %p404
      %p406 = scmp.ne.s32.totalorder %s398, %s401
      %p407 = scmp.eq.s32.totalorder %s26, 0
      %p408 = por %p406, %p407
      %p409 = scmp.ne.s32.totalorder %s398, %s401
      %p410 = scmp.eq.s32.totalorder %s31, 1
      %p411 = por %p409, %p410
      %p412 = scmp.ne.s32.totalorder %s401, %s402
      %p413 = scmp.eq.s32.totalorder %s31, 0
      %p414 = por %p412, %p413
      %p415 = scmp.ne.s32.totalorder %s401, %s402
      %p416 = scmp.eq.s32.totalorder %s32, 1
      %p417 = por %p415, %p416
      %p419 = scmp.ne.s32.totalorder %s402, %s418
      %p420 = scmp.eq.s32.totalorder %s32, 0
      %p421 = por %p419, %p420
      %p422 = scmp.le.s32.totalorder 1, %s26
      %p423 = scmp.lt.s32.totalorder %s26, 3
      %p424 = pnand %p422, %p423
      %p425 = pneg %p424
      // Predicated region
      $region9: #{conformer_forward.1} parent=5 // pred_check
        _
      $region10: #{conformer_forward.1} parent=5 // pred_check_branch
        %427 = sbr.rel (%p424) target = $region12
      $region11: #{conformer_forward.1} parent=5 // pred_region
        %s428 = ssub.s32 %s26, 1
        // Predicated region
        $region13: #{conformer_forward.1} parent=11 // pred_check
          %p429 = pneg %p73
        $region14: #{conformer_forward.1} parent=11 // pred_check_branch
          %431 = sbr.rel (%p429) target = $region16
        $region15: #{conformer_forward.1} parent=11 // pred_region
          _
        $region16: #{conformer_forward.1} parent=11 // pred_fallthru
          _
        // Predicated region
        $region17: #{conformer_forward.1} parent=11 // pred_check
          %p432 = pneg %p94
        $region18: #{conformer_forward.1} parent=11 // pred_check_branch
          %434 = sbr.rel (%p432) target = $region20
        $region19: #{conformer_forward.1} parent=11 // pred_region
          _
        $region20: #{conformer_forward.1} parent=11 // pred_fallthru
          _
        // Predicated region
        $region21: #{conformer_forward.1} parent=11 // pred_check
          %p435 = pneg %p115
        $region22: #{conformer_forward.1} parent=11 // pred_check_branch
          %437 = sbr.rel (%p435) target = $region24
        $region23: #{conformer_forward.1} parent=11 // pred_region
          _
        $region24: #{conformer_forward.1} parent=11 // pred_fallthru
          _
        // Predicated region
        $region25: #{conformer_forward.1} parent=11 // pred_check
          %p438 = pneg %p136
        $region26: #{conformer_forward.1} parent=11 // pred_check_branch
          %440 = sbr.rel (%p438) target = $region28
        $region27: #{conformer_forward.1} parent=11 // pred_region
          _
        $region28: #{conformer_forward.1} parent=11 // pred_fallthru
          _
        // Predicated region
        $region29: #{conformer_forward.1} parent=11 // pred_check
          %p441 = pneg %p157
        $region30: #{conformer_forward.1} parent=11 // pred_check_branch
          %443 = sbr.rel (%p441) target = $region32
        $region31: #{conformer_forward.1} parent=11 // pred_region
          _
        $region32: #{conformer_forward.1} parent=11 // pred_fallthru
          _
        // Predicated region
        $region33: #{conformer_forward.1} parent=11 // pred_check
          %p444 = pneg %p178
        $region34: #{conformer_forward.1} parent=11 // pred_check_branch
          %446 = sbr.rel (%p444) target = $region36
        $region35: #{conformer_forward.1} parent=11 // pred_region
          _
        $region36: #{conformer_forward.1} parent=11 // pred_fallthru
          _
        // Predicated region
        $region37: #{conformer_forward.1} parent=11 // pred_check
          %p447 = pneg %p199
        $region38: #{conformer_forward.1} parent=11 // pred_check_branch
          %449 = sbr.rel (%p447) target = $region40
        $region39: #{conformer_forward.1} parent=11 // pred_region
          _
        $region40: #{conformer_forward.1} parent=11 // pred_fallthru
          _
        // Predicated region
        $region41: #{conformer_forward.1} parent=11 // pred_check
          %p450 = pneg %p220
        $region42: #{conformer_forward.1} parent=11 // pred_check_branch
          %452 = sbr.rel (%p450) target = $region44
        $region43: #{conformer_forward.1} parent=11 // pred_region
          _
        $region44: #{conformer_forward.1} parent=11 // pred_fallthru
          _
        // Predicated region
        $region45: #{conformer_forward.1} parent=11 // pred_check
          %p453 = pneg %p241
        $region46: #{conformer_forward.1} parent=11 // pred_check_branch
          %455 = sbr.rel (%p453) target = $region48
        $region47: #{conformer_forward.1} parent=11 // pred_region
          _
        $region48: #{conformer_forward.1} parent=11 // pred_fallthru
          _
        // Predicated region
        $region49: #{conformer_forward.1} parent=11 // pred_check
          %p456 = pneg %p262
        $region50: #{conformer_forward.1} parent=11 // pred_check_branch
          %458 = sbr.rel (%p456) target = $region52
        $region51: #{conformer_forward.1} parent=11 // pred_region
          _
        $region52: #{conformer_forward.1} parent=11 // pred_fallthru
          _
        // Predicated region
        $region53: #{conformer_forward.1} parent=11 // pred_check
          %p459 = pneg %p283
        $region54: #{conformer_forward.1} parent=11 // pred_check_branch
          %461 = sbr.rel (%p459) target = $region56
        $region55: #{conformer_forward.1} parent=11 // pred_region
          _
        $region56: #{conformer_forward.1} parent=11 // pred_fallthru
          _
        // Predicated region
        $region57: #{conformer_forward.1} parent=11 // pred_check
          %p462 = pneg %p304
        $region58: #{conformer_forward.1} parent=11 // pred_check_branch
          %464 = sbr.rel (%p462) target = $region60
        $region59: #{conformer_forward.1} parent=11 // pred_region
          _
        $region60: #{conformer_forward.1} parent=11 // pred_fallthru
          _
        // Predicated region
        $region61: #{conformer_forward.1} parent=11 // pred_check
          %p465 = pneg %p325
        $region62: #{conformer_forward.1} parent=11 // pred_check_branch
          %467 = sbr.rel (%p465) target = $region64
        $region63: #{conformer_forward.1} parent=11 // pred_region
          _
        $region64: #{conformer_forward.1} parent=11 // pred_fallthru
          _
        // Predicated region
        $region65: #{conformer_forward.1} parent=11 // pred_check
          %p468 = pneg %p346
        $region66: #{conformer_forward.1} parent=11 // pred_check_branch
          %470 = sbr.rel (%p468) target = $region68
        $region67: #{conformer_forward.1} parent=11 // pred_region
          _
        $region68: #{conformer_forward.1} parent=11 // pred_fallthru
          _
        // Predicated region
        $region69: #{conformer_forward.1} parent=11 // pred_check
          %p471 = pneg %p367
        $region70: #{conformer_forward.1} parent=11 // pred_check_branch
          %473 = sbr.rel (%p471) target = $region72
        $region71: #{conformer_forward.1} parent=11 // pred_region
          _
        $region72: #{conformer_forward.1} parent=11 // pred_fallthru
          _
        // Predicated region
        $region73: #{conformer_forward.1} parent=11 // pred_check
          %p474 = pneg %p388
        $region74: #{conformer_forward.1} parent=11 // pred_check_branch
          %476 = sbr.rel (%p474) target = $region76
        $region75: #{conformer_forward.1} parent=11 // pred_region
          _
        $region76: #{conformer_forward.1} parent=11 // pred_fallthru
          _
      $region12: #{conformer_forward.1} parent=5 // pred_fallthru
        _
      %p477 = scmp.lt.s32.totalorder %s26, 2
      // Predicated region
      $region77: #{conformer_forward.1} parent=5 // pred_check
        %p478 = pneg %p477
      $region78: #{conformer_forward.1} parent=5 // pred_check_branch
        %480 = sbr.rel (%p478) target = $region80
      $region79: #{conformer_forward.1} parent=5 // pred_region
        // Predicated region
        $region81: #{conformer_forward.1} parent=79 // pred_check
          %p481 = pneg %p46
        $region82: #{conformer_forward.1} parent=79 // pred_check_branch
          %483 = sbr.rel (%p481) target = $region84
        $region83: #{conformer_forward.1} parent=79 // pred_region
          %p484 = scmp.lt.s32.totalorder %s26, 1
          %s485 = scalar_select %p484, %s26, 1
          %s486 = smul.addr %s485, 8
          %s487 = smul.addr %s486, 8
          %s488 = scalar_lea.vmem %s0, %s487
        $region84: #{conformer_forward.1} parent=79 // pred_fallthru
          _
      $region80: #{conformer_forward.1} parent=5 // pred_fallthru
        _
      %p489 = scmp.le.s32.totalorder 1, %s26
      %p490 = scmp.lt.s32.totalorder %s26, 3
      %p491 = pnand %p489, %p490
      %p492 = pneg %p491
      // Predicated region
      $region85: #{conformer_forward.1} parent=5 // pred_check
        _
      $region86: #{conformer_forward.1} parent=5 // pred_check_branch
        %494 = sbr.rel (%p491) target = $region88
      $region87: #{conformer_forward.1} parent=5 // pred_region
        %s495 = ssub.s32 %s26, 1
        %p496 = scmp.lt.s32.totalorder %s31, 1
        %s497 = scalar_select %p496, %s31, 1
        %s498 = smul.addr %s497, 8
        %s499 = smul.addr %s498, 8
        %s500 = scalar_lea.vmem %s0, %s499
        %p501 = pneg %p52
        %p502 = pneg %p49
        %p503 = pneg %p73
        %p504 = pneg %p70
        %p505 = pneg %p94
        %p506 = pneg %p91
        %p507 = pneg %p115
        %p508 = pneg %p112
        %p509 = pneg %p136
        %p510 = pneg %p133
        %p511 = pneg %p157
        %p512 = pneg %p154
        %p513 = pneg %p178
        %p514 = pneg %p175
        %p515 = pneg %p199
        %p516 = pneg %p196
        %p517 = pneg %p220
        %p518 = pneg %p217
        %p519 = pneg %p241
        %p520 = pneg %p238
        %p521 = pneg %p262
        %p522 = pneg %p259
        %p523 = pneg %p283
        %p524 = pneg %p280
        %p525 = pneg %p304
        %p526 = pneg %p301
        %p527 = pneg %p325
        %p528 = pneg %p322
        %p529 = pneg %p346
        %p530 = pneg %p343
        %p531 = pneg %p367
        %p532 = pneg %p364
        %p533 = pneg %p388
        %p534 = pneg %p385
        %p535 = pneg %p414
        %p536 = pneg %p411
        %s537 = sand.u32 %s401, 1
        %s538 = scalar_lea.sflag [#allocation5], %s537
        %s539 = sand.u32 %s401, 1
        %s540 = scalar_lea.vmem [#allocation4], %s539
        %p541 = scmp.lt.s32.totalorder %s31, 1
        %s542 = scalar_select %p541, %s31, 1
        %s543 = smul.addr %s542, 8
        %s544 = smul.addr %s543, 8
        %s545 = scalar_lea.vmem %s0, %s544
        %vm546 = vcmask 261120
        %547 = vst.msk [vmem:[#allocation2] sm:$0xff] %vm546, 0.0
        %548 = vst.msk [vmem:[#allocation2 + $0x8] sm:$0xff] %vm546, 0.0
        %549 = vst.msk [vmem:[#allocation2 + $0x10] sm:$0xff] %vm546, 0.0
        %550 = vst.msk [vmem:[#allocation2 + $0x18] sm:$0xff] %vm546, 0.0
        %551 = vst.msk [vmem:[#allocation2 + $0x20] sm:$0xff] %vm546, 0.0
        %552 = vst.msk [vmem:[#allocation2 + $0x28] sm:$0xff] %vm546, 0.0
        %553 = vst.msk [vmem:[#allocation2 + $0x30] sm:$0xff] %vm546, 0.0
        %554 = vst.msk [vmem:[#allocation2 + $0x38] sm:$0xff] %vm546, 0.0
        %555 = vst.msk [vmem:[#allocation2 + $0x40] sm:$0xff] %vm546, 0.0
        %556 = vst.msk [vmem:[#allocation2 + $0x48] sm:$0xff] %vm546, 0.0
        %557 = vst.msk [vmem:[#allocation2 + $0x50] sm:$0xff] %vm546, 0.0
        %558 = vst.msk [vmem:[#allocation2 + $0x58] sm:$0xff] %vm546, 0.0
        %559 = vst.msk [vmem:[#allocation2 + $0x60] sm:$0xff] %vm546, 0.0
        %560 = vst.msk [vmem:[#allocation2 + $0x68] sm:$0xff] %vm546, 0.0
        %v561 = vld [vmem:[%s5] sm:$0xff]
        %v562 = vld [vmem:[%s5 + $0x8] sm:$0xff]
        %v563 = vld [vmem:[%s5 + $0x10] sm:$0xff]
        %v564 = vld [vmem:[%s5 + $0x18] sm:$0xff]
        %v565 = vld [vmem:[%s6] sm:$0xff]
        %v566 = vld [vmem:[%s6 + $0x8] sm:$0xff]
        %v567 = vld [vmem:[%s6 + $0x10] sm:$0xff]
        %v568 = vld [vmem:[%s6 + $0x18] sm:$0xff]
        %v569 = vld [vmem:[%s7] sm:$0x1]
        %v570 = vld [vmem:[%s8] sm:$0x1]
        %v571 = vld [vmem:[%s2] sm:$0xff]
        %v572 = vld [vmem:[%s2 + $0x8] sm:$0xff]
        %v573 = vld [vmem:[%s2 + $0x10] sm:$0xff]
        %v574 = vld [vmem:[%s2 + $0x18] sm:$0xff]
        %v575 = vld [vmem:[%s2 + $0x20] sm:$0xff]
        %v576 = vld [vmem:[%s2 + $0x28] sm:$0xff]
        %v577 = vld [vmem:[%s2 + $0x30] sm:$0xff]
        %v578 = vld [vmem:[%s2 + $0x38] sm:$0xff]
        %s579 = scalar_lea.vmem %s2, 64
        %v580 = vld [vmem:[%s579] sm:$0xff]
        %v581 = vld [vmem:[%s579 + $0x8] sm:$0xff]
        %v582 = vld [vmem:[%s579 + $0x10] sm:$0xff]
        %v583 = vld [vmem:[%s579 + $0x18] sm:$0xff]
        %v584 = vld [vmem:[%s579 + $0x20] sm:$0xff]
        %v585 = vld [vmem:[%s579 + $0x28] sm:$0xff]
        %v586 = vld [vmem:[%s579 + $0x30] sm:$0xff]
        %v587 = vld [vmem:[%s579 + $0x38] sm:$0xff]
        %s588 = scalar_lea.vmem %s2, 128
        %v589 = vld [vmem:[%s588] sm:$0xff]
        %v590 = vld [vmem:[%s588 + $0x8] sm:$0xff]
        %v591 = vld [vmem:[%s588 + $0x10] sm:$0xff]
        %v592 = vld [vmem:[%s588 + $0x18] sm:$0xff]
        %v593 = vld [vmem:[%s588 + $0x20] sm:$0xff]
        %v594 = vld [vmem:[%s588 + $0x28] sm:$0xff]
        %v595 = vld [vmem:[%s588 + $0x30] sm:$0xff]
        %v596 = vld [vmem:[%s588 + $0x38] sm:$0xff]
        %s597 = scalar_lea.vmem %s2, 192
        %v598 = vld [vmem:[%s597] sm:$0xff]
        %v599 = vld [vmem:[%s597 + $0x8] sm:$0xff]
        %v600 = vld [vmem:[%s597 + $0x10] sm:$0xff]
        %v601 = vld [vmem:[%s597 + $0x18] sm:$0xff]
        %v602 = vld [vmem:[%s597 + $0x20] sm:$0xff]
        %v603 = vld [vmem:[%s597 + $0x28] sm:$0xff]
        %v604 = vld [vmem:[%s597 + $0x30] sm:$0xff]
        %v605 = vld [vmem:[%s597 + $0x38] sm:$0xff]
        %s606 = scalar_lea.vmem %s2, 256
        %v607 = vld [vmem:[%s606] sm:$0xff]
        %v608 = vld [vmem:[%s606 + $0x8] sm:$0xff]
        %v609 = vld [vmem:[%s606 + $0x10] sm:$0xff]
        %v610 = vld [vmem:[%s606 + $0x18] sm:$0xff]
        %v611 = vld [vmem:[%s606 + $0x20] sm:$0xff]
        %v612 = vld [vmem:[%s606 + $0x28] sm:$0xff]
        %v613 = vld [vmem:[%s606 + $0x30] sm:$0xff]
        %v614 = vld [vmem:[%s606 + $0x38] sm:$0xff]
        %v615 = vld [vmem:[%s545] sm:$0xff]
        %v616 = vld [vmem:[%s545 + $0x8] sm:$0xff]
        %v617 = vld [vmem:[%s545 + $0x10] sm:$0xff]
        %v618 = vld [vmem:[%s545 + $0x18] sm:$0xff]
        %v619 = vld [vmem:[%s545 + $0x20] sm:$0xff]
        %v620 = vld [vmem:[%s545 + $0x28] sm:$0xff]
        %v621 = vld [vmem:[%s545 + $0x30] sm:$0xff]
        %v622 = vld [vmem:[%s545 + $0x38] sm:$0xff]
        %v623 = vld [vmem:[%s3] sm:$0xff]
        %v624 = vld [vmem:[%s3 + $0x8] sm:$0xf]
        %v625 = vld [vmem:[%s4] sm:$0x1]
        %v627 = vlaneseq
        %v628 = vshrl.u32 %v627, 7
        %v629 = vsub.s32 0, %v628
        %v630 = vrot.slane %v625, %v629
        %vm632 = vcmask 97280
        %v634 = vsel %vm632, %v615, 0
        %v637 = vsel %vm632, %v616, 0
        %v640 = vsel %vm632, %v617, 0
        %v643 = vsel %vm632, %v618, 0
        %v646 = vsel %vm632, %v619, 0
        %v649 = vsel %vm632, %v620, 0
        %v652 = vsel %vm632, %v621, 0
        %v655 = vsel %vm632, %v622, 0
        %vm657 = vcmask 1043456
        %v659 = vsel %vm657, %v624, 0
        %661 = vmatprep.subr.mxu0 0.0
        %662 = vmatpush1.msra.mxu0 0.0
        %663 = vmatprep.subr.mxu0 0.0
        %664 = vmatpush1.msra.mxu0 0.0
        %665 = vmatprep.subr.mxu0 0.0
        %666 = vmatpush1.msra.mxu0 0.0
        %667 = vmatprep.subr.mxu0 0.0
        %668 = vmatpush1.msra.mxu0 0.0
        %669 = vmatprep.subr.mxu0 0.0
        %670 = vmatpush1.msra.mxu0 0.0
        %671 = vmatprep.subr.mxu0 0.0
        %672 = vmatpush1.msra.mxu0 0.0
        %673 = vmatprep.subr.mxu0 0.0
        %674 = vmatpush1.msra.mxu0 0.0
        %675 = vmatprep.subr.mxu0 0.0
        %676 = vmatpush1.msra.mxu0 0.0
        %677 = vmatprep.subr.mxu0 0.0
        %678 = vmatpush1.msra.mxu0 0.0
        %679 = vmatprep.subr.mxu0 0.0
        %680 = vmatpush1.msra.mxu0 0.0
        %681 = vmatprep.subr.mxu0 0.0
        %682 = vmatpush1.msra.mxu0 0.0
        %683 = vmatprep.subr.mxu0 0.0
        %684 = vmatpush1.msra.mxu0 0.0
        %685 = vmatprep.subr.mxu0 0.0
        %686 = vmatpush1.msra.mxu0 0.0
        %687 = vmatprep.subr.mxu0 0.0
        %688 = vmatpush1.msra.mxu0 0.0
        %689 = vmatprep.subr.mxu0 0.0
        %690 = vmatpush1.msra.mxu0 %v659
        %691 = vmatprep.subr.mxu0 0.0
        %692 = vmatpush1.msra.mxu0 %v623
        %693 = vmatprep.subr.mxu0 0.0
        %694 = vmatpush2.msra.mxu0 0.0
        %695 = vmatprep.subr.mxu0 0.0
        %696 = vmatpush2.msra.mxu0 0.0
        %697 = vmatprep.subr.mxu0 0.0
        %698 = vmatpush2.msra.mxu0 0.0
        %699 = vmatprep.subr.mxu0 0.0
        %700 = vmatpush2.msra.mxu0 0.0
        %701 = vmatprep.subr.mxu0 0.0
        %702 = vmatpush2.msra.mxu0 0.0
        %703 = vmatprep.subr.mxu0 0.0
        %704 = vmatpush2.msra.mxu0 0.0
        %705 = vmatprep.subr.mxu0 0.0
        %706 = vmatpush2.msra.mxu0 0.0
        %707 = vmatprep.subr.mxu0 0.0
        %708 = vmatpush2.msra.mxu0 0.0
        %709 = vmatprep.subr.mxu0 0.0
        %710 = vmatpush2.msra.mxu0 0.0
        %711 = vmatprep.subr.mxu0 0.0
        %712 = vmatpush2.msra.mxu0 0.0
        %713 = vmatprep.subr.mxu0 0.0
        %714 = vmatpush2.msra.mxu0 0.0
        %715 = vmatprep.subr.mxu0 0.0
        %716 = vmatpush2.msra.mxu0 0.0
        %717 = vmatprep.subr.mxu0 0.0
        %718 = vmatpush2.msra.mxu0 0.0
        %719 = vmatprep.subr.mxu0 0.0
        %720 = vmatpush2.msra.mxu0 0.0
        %721 = vmatprep.subr.mxu0 0.0
        %722 = vmatpush2.msra.mxu0 0.0
        %723 = vmatprep.subr.mxu0 0.0
        %724 = vmatpush2.msra.mxu0 0.0
        %725 = vmatprep.mubr.f32.mxu0 0.0
        %726 = vmatmul.mubr.f32.gmra.mxu0 %v634
        %v727 = vpop.f32.mrf.mxu0
        %v728 = vadd.f32 %v630, %v727
        %v729 = vpop.f32.mrf.mxu0
        %730 = vmatprep.mubr.f32.mxu0 0.0
        %731 = vmatmul.mubr.f32.gmra.mxu0 %v637
        %v732 = vpop.f32.mrf.mxu0
        %v733 = vadd.f32 %v630, %v732
        %v734 = vpop.f32.mrf.mxu0
        %735 = vmatprep.mubr.f32.mxu0 0.0
        %736 = vmatmul.mubr.f32.gmra.mxu0 %v640
        %v737 = vpop.f32.mrf.mxu0
        %v738 = vadd.f32 %v630, %v737
        %v739 = vpop.f32.mrf.mxu0
        %740 = vmatprep.mubr.f32.mxu0 0.0
        %741 = vmatmul.mubr.f32.gmra.mxu0 %v643
        %v742 = vpop.f32.mrf.mxu0
        %v743 = vadd.f32 %v630, %v742
        %v744 = vpop.f32.mrf.mxu0
        %745 = vmatprep.mubr.f32.mxu0 0.0
        %746 = vmatmul.mubr.f32.gmra.mxu0 %v646
        %v747 = vpop.f32.mrf.mxu0
        %v748 = vadd.f32 %v630, %v747
        %v749 = vpop.f32.mrf.mxu0
        %750 = vmatprep.mubr.f32.mxu0 0.0
        %751 = vmatmul.mubr.f32.gmra.mxu0 %v649
        %v752 = vpop.f32.mrf.mxu0
        %v753 = vadd.f32 %v630, %v752
        %v754 = vpop.f32.mrf.mxu0
        %755 = vmatprep.mubr.f32.mxu0 0.0
        %756 = vmatmul.mubr.f32.gmra.mxu0 %v652
        %v757 = vpop.f32.mrf.mxu0
        %v758 = vadd.f32 %v630, %v757
        %v759 = vpop.f32.mrf.mxu0
        %760 = vmatprep.mubr.f32.mxu0 0.0
        %761 = vmatmul.mubr.f32.gmra.mxu0 %v655
        %v762 = vpop.f32.mrf.mxu0
        %v763 = vadd.f32 %v630, %v762
        %v764 = vpop.f32.mrf.mxu0
        %765 = vdwg.mxu0
        %v766 = vmul.f32 %v728, 0.5
        %v767 = vmul.f32 %v733, 0.5
        %v768 = vmul.f32 %v738, 0.5
        %v769 = vmul.f32 %v743, 0.5
        %v770 = vmul.f32 %v748, 0.5
        %v771 = vmul.f32 %v753, 0.5
        %v772 = vmul.f32 %v758, 0.5
        %v773 = vmul.f32 %v763, 0.5
        %v774 = vmul.f32 %v728, 0.70710677
        %v775 = vmul.f32 %v733, 0.70710677
        %v776 = vmul.f32 %v738, 0.70710677
        %v777 = vmul.f32 %v743, 0.70710677
        %v778 = vmul.f32 %v748, 0.70710677
        %v779 = vmul.f32 %v753, 0.70710677
        %v780 = vmul.f32 %v758, 0.70710677
        %v781 = vmul.f32 %v763, 0.70710677
        %vm782 = vcmp.ge.f32.partialorder %v774, 0.0
        %vm783 = vcmp.ge.f32.partialorder %v775, 0.0
        %vm784 = vcmp.ge.f32.partialorder %v776, 0.0
        %vm785 = vcmp.ge.f32.partialorder %v777, 0.0
        %vm786 = vcmp.ge.f32.partialorder %v778, 0.0
        %vm787 = vcmp.ge.f32.partialorder %v779, 0.0
        %vm788 = vcmp.ge.f32.partialorder %v780, 0.0
        %vm789 = vcmp.ge.f32.partialorder %v781, 0.0
        %v790 = vsel %vm782, 1.0, -1.0
        %v791 = vsel %vm783, 1.0, -1.0
        %v792 = vsel %vm784, 1.0, -1.0
        %v793 = vsel %vm785, 1.0, -1.0
        %v794 = vsel %vm786, 1.0, -1.0
        %v795 = vsel %vm787, 1.0, -1.0
        %v796 = vsel %vm788, 1.0, -1.0
        %v797 = vsel %vm789, 1.0, -1.0
        %v798 = vand.u32 2147483647, %v774
        %v799 = vand.u32 2147483647, %v775
        %v800 = vand.u32 2147483647, %v776
        %v801 = vand.u32 2147483647, %v777
        %v802 = vand.u32 2147483647, %v778
        %v803 = vand.u32 2147483647, %v779
        %v804 = vand.u32 2147483647, %v780
        %v805 = vand.u32 2147483647, %v781
        %v806 = vmul.f32 %v798, 0.3275911
        %v807 = vmul.f32 %v799, 0.3275911
        %v808 = vmul.f32 %v800, 0.3275911
        %v809 = vmul.f32 %v801, 0.3275911
        %v810 = vmul.f32 %v802, 0.3275911
        %v811 = vmul.f32 %v803, 0.3275911
        %v812 = vmul.f32 %v804, 0.3275911
        %v813 = vmul.f32 %v805, 0.3275911
        %v814 = vadd.f32 %v806, 1.0
        %v815 = vadd.f32 %v807, 1.0
        %v816 = vadd.f32 %v808, 1.0
        %v817 = vadd.f32 %v809, 1.0
        %v818 = vadd.f32 %v810, 1.0
        %v819 = vadd.f32 %v811, 1.0
        %v820 = vadd.f32 %v812, 1.0
        %v821 = vadd.f32 %v813, 1.0
        %v822 = vrcp.pop %v814
        %v823 = vmul.f32 1.0, %v822
        %v824 = vrcp.pop %v815
        %v825 = vmul.f32 1.0, %v824
        %v826 = vrcp.pop %v816
        %v827 = vmul.f32 1.0, %v826
        %v828 = vrcp.pop %v817
        %v829 = vmul.f32 1.0, %v828
        %v830 = vrcp.pop %v818
        %v831 = vmul.f32 1.0, %v830
        %v832 = vrcp.pop %v819
        %v833 = vmul.f32 1.0, %v832
        %v834 = vrcp.pop %v820
        %v835 = vmul.f32 1.0, %v834
        %v836 = vrcp.pop %v821
        %v837 = vmul.f32 1.0, %v836
        %v838 = vmul.f32 %v823, 1.0614054
        %v839 = vmul.f32 %v825, 1.0614054
        %v840 = vmul.f32 %v827, 1.0614054
        %v841 = vmul.f32 %v829, 1.0614054
        %v842 = vmul.f32 %v831, 1.0614054
        %v843 = vmul.f32 %v833, 1.0614054
        %v844 = vmul.f32 %v835, 1.0614054
        %v845 = vmul.f32 %v837, 1.0614054
        %v846 = vadd.f32 %v838, -1.4531521
        %v847 = vadd.f32 %v839, -1.4531521
        %v848 = vadd.f32 %v840, -1.4531521
        %v849 = vadd.f32 %v841, -1.4531521
        %v850 = vadd.f32 %v842, -1.4531521
        %v851 = vadd.f32 %v843, -1.4531521
        %v852 = vadd.f32 %v844, -1.4531521
        %v853 = vadd.f32 %v845, -1.4531521
        %v854 = vmul.f32 %v846, %v823
        %v855 = vmul.f32 %v847, %v825
        %v856 = vmul.f32 %v848, %v827
        %v857 = vmul.f32 %v849, %v829
        %v858 = vmul.f32 %v850, %v831
        %v859 = vmul.f32 %v851, %v833
        %v860 = vmul.f32 %v852, %v835
        %v861 = vmul.f32 %v853, %v837
        %v862 = vadd.f32 %v854, 1.4214138
        %v863 = vadd.f32 %v855, 1.4214138
        %v864 = vadd.f32 %v856, 1.4214138
        %v865 = vadd.f32 %v857, 1.4214138
        %v866 = vadd.f32 %v858, 1.4214138
        %v867 = vadd.f32 %v859, 1.4214138
        %v868 = vadd.f32 %v860, 1.4214138
        %v869 = vadd.f32 %v861, 1.4214138
        %v870 = vmul.f32 %v862, %v823
        %v871 = vmul.f32 %v863, %v825
        %v872 = vmul.f32 %v864, %v827
        %v873 = vmul.f32 %v865, %v829
        %v874 = vmul.f32 %v866, %v831
        %v875 = vmul.f32 %v867, %v833
        %v876 = vmul.f32 %v868, %v835
        %v877 = vmul.f32 %v869, %v837
        %v878 = vadd.f32 %v870, -0.28449672
        %v879 = vadd.f32 %v871, -0.28449672
        %v880 = vadd.f32 %v872, -0.28449672
        %v881 = vadd.f32 %v873, -0.28449672
        %v882 = vadd.f32 %v874, -0.28449672
        %v883 = vadd.f32 %v875, -0.28449672
        %v884 = vadd.f32 %v876, -0.28449672
        %v885 = vadd.f32 %v877, -0.28449672
        %v886 = vmul.f32 %v878, %v823
        %v887 = vmul.f32 %v879, %v825
        %v888 = vmul.f32 %v880, %v827
        %v889 = vmul.f32 %v881, %v829
        %v890 = vmul.f32 %v882, %v831
        %v891 = vmul.f32 %v883, %v833
        %v892 = vmul.f32 %v884, %v835
        %v893 = vmul.f32 %v885, %v837
        %v894 = vadd.f32 %v886, 0.2548296
        %v895 = vadd.f32 %v887, 0.2548296
        %v896 = vadd.f32 %v888, 0.2548296
        %v897 = vadd.f32 %v889, 0.2548296
        %v898 = vadd.f32 %v890, 0.2548296
        %v899 = vadd.f32 %v891, 0.2548296
        %v900 = vadd.f32 %v892, 0.2548296
        %v901 = vadd.f32 %v893, 0.2548296
        %v902 = vmul.f32 %v894, %v823
        %v903 = vmul.f32 %v895, %v825
        %v904 = vmul.f32 %v896, %v827
        %v905 = vmul.f32 %v897, %v829
        %v906 = vmul.f32 %v898, %v831
        %v907 = vmul.f32 %v899, %v833
        %v908 = vmul.f32 %v900, %v835
        %v909 = vmul.f32 %v901, %v837
        %v910 = vsub.f32 0.0, %v798
        %v911 = vsub.f32 0.0, %v799
        %v912 = vsub.f32 0.0, %v800
        %v913 = vsub.f32 0.0, %v801
        %v914 = vsub.f32 0.0, %v802
        %v915 = vsub.f32 0.0, %v803
        %v916 = vsub.f32 0.0, %v804
        %v917 = vsub.f32 0.0, %v805
        %v918 = vmul.f32 %v910, %v798
        %v919 = vmul.f32 %v911, %v799
        %v920 = vmul.f32 %v912, %v800
        %v921 = vmul.f32 %v913, %v801
        %v922 = vmul.f32 %v914, %v802
        %v923 = vmul.f32 %v915, %v803
        %v924 = vmul.f32 %v916, %v804
        %v925 = vmul.f32 %v917, %v805
        %v926 = vmul.f32 %v918, 1.442695
        %v927 = vpow.pop %v926
        %v928 = vmul.f32 %v919, 1.442695
        %v929 = vpow.pop %v928
        %v930 = vmul.f32 %v920, 1.442695
        %v931 = vpow.pop %v930
        %v932 = vmul.f32 %v921, 1.442695
        %v933 = vpow.pop %v932
        %v934 = vmul.f32 %v922, 1.442695
        %v935 = vpow.pop %v934
        %v936 = vmul.f32 %v923, 1.442695
        %v937 = vpow.pop %v936
        %v938 = vmul.f32 %v924, 1.442695
        %v939 = vpow.pop %v938
        %v940 = vmul.f32 %v925, 1.442695
        %v941 = vpow.pop %v940
        %v942 = vmul.f32 %v902, %v927
        %v943 = vmul.f32 %v903, %v929
        %v944 = vmul.f32 %v904, %v931
        %v945 = vmul.f32 %v905, %v933
        %v946 = vmul.f32 %v906, %v935
        %v947 = vmul.f32 %v907, %v937
        %v948 = vmul.f32 %v908, %v939
        %v949 = vmul.f32 %v909, %v941
        %v950 = vsub.f32 1.0, %v942
        %v951 = vsub.f32 1.0, %v943
        %v952 = vsub.f32 1.0, %v944
        %v953 = vsub.f32 1.0, %v945
        %v954 = vsub.f32 1.0, %v946
        %v955 = vsub.f32 1.0, %v947
        %v956 = vsub.f32 1.0, %v948
        %v957 = vsub.f32 1.0, %v949
        %v958 = vmul.f32 %v790, %v950
        %v959 = vmul.f32 %v791, %v951
        %v960 = vmul.f32 %v792, %v952
        %v961 = vmul.f32 %v793, %v953
        %v962 = vmul.f32 %v794, %v954
        %v963 = vmul.f32 %v795, %v955
        %v964 = vmul.f32 %v796, %v956
        %v965 = vmul.f32 %v797, %v957
        %v966 = vadd.f32 %v958, 1.0
        %v967 = vadd.f32 %v959, 1.0
        %v968 = vadd.f32 %v960, 1.0
        %v969 = vadd.f32 %v961, 1.0
        %v970 = vadd.f32 %v962, 1.0
        %v971 = vadd.f32 %v963, 1.0
        %v972 = vadd.f32 %v964, 1.0
        %v973 = vadd.f32 %v965, 1.0
        %v974 = vmul.f32 %v766, %v966
        %v975 = vmul.f32 %v767, %v967
        %v976 = vmul.f32 %v768, %v968
        %v977 = vmul.f32 %v769, %v969
        %v978 = vmul.f32 %v770, %v970
        %v979 = vmul.f32 %v771, %v971
        %v980 = vmul.f32 %v772, %v972
        %v981 = vmul.f32 %v773, %v973
        %v982 = vld [vmem:[%s1] sm:$0x1]
        %v984 = vsel %vm546, %v982, 0
        %986 = vmatprep.subr.mxu0 0.0
        %987 = vmatpush1.msra.mxu0 0.0
        %988 = vmatprep.subr.mxu0 0.0
        %989 = vmatpush1.msra.mxu0 0.0
        %990 = vmatprep.subr.mxu0 0.0
        %991 = vmatpush1.msra.mxu0 0.0
        %992 = vmatprep.subr.mxu0 0.0
        %993 = vmatpush1.msra.mxu0 0.0
        %994 = vmatprep.subr.mxu0 0.0
        %995 = vmatpush1.msra.mxu0 0.0
        %996 = vmatprep.subr.mxu0 0.0
        %997 = vmatpush1.msra.mxu0 0.0
        %998 = vmatprep.subr.mxu0 0.0
        %999 = vmatpush1.msra.mxu0 0.0
        %1000 = vmatprep.subr.mxu0 0.0
        %1001 = vmatpush1.msra.mxu0 0.0
        %1002 = vmatprep.subr.mxu0 0.0
        %1003 = vmatpush1.msra.mxu0 0.0
        %1004 = vmatprep.subr.mxu0 0.0
        %1005 = vmatpush1.msra.mxu0 0.0
        %1006 = vmatprep.subr.mxu0 0.0
        %1007 = vmatpush1.msra.mxu0 0.0
        %1008 = vmatprep.subr.mxu0 0.0
        %1009 = vmatpush1.msra.mxu0 0.0
        %1010 = vmatprep.subr.mxu0 0.0
        %1011 = vmatpush1.msra.mxu0 %v564
        %1012 = vmatprep.subr.mxu0 0.0
        %1013 = vmatpush1.msra.mxu0 %v563
        %1014 = vmatprep.subr.mxu0 0.0
        %1015 = vmatpush1.msra.mxu0 %v562
        %1016 = vmatprep.subr.mxu0 0.0
        %1017 = vmatpush1.msra.mxu0 %v561
        %1018 = vmatprep.subr.mxu0 0.0
        %1019 = vmatpush2.msra.mxu0 0.0
        %1020 = vmatprep.subr.mxu0 0.0
        %1021 = vmatpush2.msra.mxu0 0.0
        %1022 = vmatprep.subr.mxu0 0.0
        %1023 = vmatpush2.msra.mxu0 0.0
        %1024 = vmatprep.subr.mxu0 0.0
        %1025 = vmatpush2.msra.mxu0 0.0
        %1026 = vmatprep.subr.mxu0 0.0
        %1027 = vmatpush2.msra.mxu0 0.0
        %1028 = vmatprep.subr.mxu0 0.0
        %1029 = vmatpush2.msra.mxu0 0.0
        %1030 = vmatprep.subr.mxu0 0.0
        %1031 = vmatpush2.msra.mxu0 0.0
        %1032 = vmatprep.subr.mxu0 0.0
        %1033 = vmatpush2.msra.mxu0 0.0
        %1034 = vmatprep.subr.mxu0 0.0
        %1035 = vmatpush2.msra.mxu0 0.0
        %1036 = vmatprep.subr.mxu0 0.0
        %1037 = vmatpush2.msra.mxu0 0.0
        %1038 = vmatprep.subr.mxu0 0.0
        %1039 = vmatpush2.msra.mxu0 0.0
        %1040 = vmatprep.subr.mxu0 0.0
        %1041 = vmatpush2.msra.mxu0 0.0
        %1042 = vmatprep.subr.mxu0 0.0
        %1043 = vmatpush2.msra.mxu0 0.0
        %1044 = vmatprep.subr.mxu0 0.0
        %1045 = vmatpush2.msra.mxu0 0.0
        %1046 = vmatprep.subr.mxu0 0.0
        %1047 = vmatpush2.msra.mxu0 0.0
        %1048 = vmatprep.subr.mxu0 0.0
        %1049 = vmatpush2.msra.mxu0 0.0
        %1050 = vmatprep.mubr.f32.mxu0 0.0
        %1051 = vmatmul.mubr.f32.gmra.mxu0 %v984
        %v1052 = vpop.f32.mrf.mxu0
        %v1053 = vadd.f32 0.0, %v1052
        %v1054 = vpop.f32.mrf.mxu0
        %1055 = vdwg.mxu0
        %v1057 = vsel %vm546, %v974, 0
        %v1060 = vsel %vm546, %v975, 0
        %v1063 = vsel %vm546, %v976, 0
        %v1066 = vsel %vm546, %v977, 0
        %v1069 = vsel %vm546, %v978, 0
        %v1072 = vsel %vm546, %v979, 0
        %v1075 = vsel %vm546, %v980, 0
        %v1078 = vsel %vm546, %v981, 0
        %1080 = vmatprep.subr.mxu0 0.0
        %1081 = vmatpush1.msra.mxu0 0.0
        %1082 = vmatprep.subr.mxu0 0.0
        %1083 = vmatpush1.msra.mxu0 0.0
        %1084 = vmatprep.subr.mxu0 0.0
        %1085 = vmatpush1.msra.mxu0 0.0
        %1086 = vmatprep.subr.mxu0 0.0
        %1087 = vmatpush1.msra.mxu0 0.0
        %1088 = vmatprep.subr.mxu0 0.0
        %1089 = vmatpush1.msra.mxu0 0.0
        %1090 = vmatprep.subr.mxu0 0.0
        %1091 = vmatpush1.msra.mxu0 0.0
        %1092 = vmatprep.subr.mxu0 0.0
        %1093 = vmatpush1.msra.mxu0 0.0
        %1094 = vmatprep.subr.mxu0 0.0
        %1095 = vmatpush1.msra.mxu0 0.0
        %1096 = vmatprep.subr.mxu0 0.0
        %1097 = vmatpush1.msra.mxu0 0.0
        %1098 = vmatprep.subr.mxu0 0.0
        %1099 = vmatpush1.msra.mxu0 0.0
        %1100 = vmatprep.subr.mxu0 0.0
        %1101 = vmatpush1.msra.mxu0 0.0
        %1102 = vmatprep.subr.mxu0 0.0
        %1103 = vmatpush1.msra.mxu0 0.0
        %1104 = vmatprep.subr.mxu0 0.0
        %1105 = vmatpush1.msra.mxu0 %v568
        %1106 = vmatprep.subr.mxu0 0.0
        %1107 = vmatpush1.msra.mxu0 %v567
        %1108 = vmatprep.subr.mxu0 0.0
        %1109 = vmatpush1.msra.mxu0 %v566
        %1110 = vmatprep.subr.mxu0 0.0
        %1111 = vmatpush1.msra.mxu0 %v565
        %1112 = vmatprep.subr.mxu0 0.0
        %1113 = vmatpush2.msra.mxu0 0.0
        %1114 = vmatprep.subr.mxu0 0.0
        %1115 = vmatpush2.msra.mxu0 0.0
        %1116 = vmatprep.subr.mxu0 0.0
        %1117 = vmatpush2.msra.mxu0 0.0
        %1118 = vmatprep.subr.mxu0 0.0
        %1119 = vmatpush2.msra.mxu0 0.0
        %1120 = vmatprep.subr.mxu0 0.0
        %1121 = vmatpush2.msra.mxu0 0.0
        %1122 = vmatprep.subr.mxu0 0.0
        %1123 = vmatpush2.msra.mxu0 0.0
        %1124 = vmatprep.subr.mxu0 0.0
        %1125 = vmatpush2.msra.mxu0 0.0
        %1126 = vmatprep.subr.mxu0 0.0
        %1127 = vmatpush2.msra.mxu0 0.0
        %1128 = vmatprep.subr.mxu0 0.0
        %1129 = vmatpush2.msra.mxu0 0.0
        %1130 = vmatprep.subr.mxu0 0.0
        %1131 = vmatpush2.msra.mxu0 0.0
        %1132 = vmatprep.subr.mxu0 0.0
        %1133 = vmatpush2.msra.mxu0 0.0
        %1134 = vmatprep.subr.mxu0 0.0
        %1135 = vmatpush2.msra.mxu0 0.0
        %1136 = vmatprep.subr.mxu0 0.0
        %1137 = vmatpush2.msra.mxu0 0.0
        %1138 = vmatprep.subr.mxu0 0.0
        %1139 = vmatpush2.msra.mxu0 0.0
        %1140 = vmatprep.subr.mxu0 0.0
        %1141 = vmatpush2.msra.mxu0 0.0
        %1142 = vmatprep.subr.mxu0 0.0
        %1143 = vmatpush2.msra.mxu0 0.0
        %1144 = vmatprep.mubr.f32.mxu0 0.0
        %1145 = vmatmul.mubr.f32.gmra.mxu0 %v1057
        %v1146 = vpop.f32.mrf.mxu0
        %v1147 = vadd.f32 0.0, %v1146
        %v1148 = vpop.f32.mrf.mxu0
        %1149 = vmatprep.mubr.f32.mxu0 0.0
        %1150 = vmatmul.mubr.f32.gmra.mxu0 %v1060
        %v1151 = vpop.f32.mrf.mxu0
        %v1152 = vadd.f32 0.0, %v1151
        %v1153 = vpop.f32.mrf.mxu0
        %1154 = vmatprep.mubr.f32.mxu0 0.0
        %1155 = vmatmul.mubr.f32.gmra.mxu0 %v1063
        %v1156 = vpop.f32.mrf.mxu0
        %v1157 = vadd.f32 0.0, %v1156
        %v1158 = vpop.f32.mrf.mxu0
        %1159 = vmatprep.mubr.f32.mxu0 0.0
        %1160 = vmatmul.mubr.f32.gmra.mxu0 %v1066
        %v1161 = vpop.f32.mrf.mxu0
        %v1162 = vadd.f32 0.0, %v1161
        %v1163 = vpop.f32.mrf.mxu0
        %1164 = vmatprep.mubr.f32.mxu0 0.0
        %1165 = vmatmul.mubr.f32.gmra.mxu0 %v1069
        %v1166 = vpop.f32.mrf.mxu0
        %v1167 = vadd.f32 0.0, %v1166
        %v1168 = vpop.f32.mrf.mxu0
        %1169 = vmatprep.mubr.f32.mxu0 0.0
        %1170 = vmatmul.mubr.f32.gmra.mxu0 %v1072
        %v1171 = vpop.f32.mrf.mxu0
        %v1172 = vadd.f32 0.0, %v1171
        %v1173 = vpop.f32.mrf.mxu0
        %1174 = vmatprep.mubr.f32.mxu0 0.0
        %1175 = vmatmul.mubr.f32.gmra.mxu0 %v1075
        %v1176 = vpop.f32.mrf.mxu0
        %v1177 = vadd.f32 0.0, %v1176
        %v1178 = vpop.f32.mrf.mxu0
        %1179 = vmatprep.mubr.f32.mxu0 0.0
        %1180 = vmatmul.mubr.f32.gmra.mxu0 %v1078
        %v1181 = vpop.f32.mrf.mxu0
        %v1182 = vadd.f32 0.0, %v1181
        %v1183 = vpop.f32.mrf.mxu0
        %1184 = vdwg.mxu0
        %v1186 = vsel %vm546, %v1053, 0
        %v1189 = vsel %vm546, %v1147, 0
        %v1192 = vsel %vm546, %v1152, 0
        %v1195 = vsel %vm546, %v1157, 0
        %v1198 = vsel %vm546, %v1162, 0
        %v1201 = vsel %vm546, %v1167, 0
        %v1204 = vsel %vm546, %v1172, 0
        %v1207 = vsel %vm546, %v1177, 0
        %v1210 = vsel %vm546, %v1182, 0
        %1212 = vmatprep.subr.mxu0 0.0
        %1213 = vmatpush1.xpose.msra.mxu0 0.0
        %1214 = vmatprep.subr.mxu0 0.0
        %1215 = vmatpush1.xpose.msra.mxu0 0.0
        %1216 = vmatprep.subr.mxu0 0.0
        %1217 = vmatpush1.xpose.msra.mxu0 0.0
        %1218 = vmatprep.subr.mxu0 0.0
        %1219 = vmatpush1.xpose.msra.mxu0 0.0
        %1220 = vmatprep.subr.mxu0 0.0
        %1221 = vmatpush1.xpose.msra.mxu0 0.0
        %1222 = vmatprep.subr.mxu0 0.0
        %1223 = vmatpush1.xpose.msra.mxu0 0.0
        %1224 = vmatprep.subr.mxu0 0.0
        %1225 = vmatpush1.xpose.msra.mxu0 0.0
        %1226 = vmatprep.subr.mxu0 0.0
        %1227 = vmatpush1.xpose.msra.mxu0 0.0
        %1228 = vmatprep.subr.mxu0 0.0
        %1229 = vmatpush1.xpose.msra.mxu0 %v1210
        %1230 = vmatprep.subr.mxu0 0.0
        %1231 = vmatpush1.xpose.msra.mxu0 %v1207
        %1232 = vmatprep.subr.mxu0 0.0
        %1233 = vmatpush1.xpose.msra.mxu0 %v1204
        %1234 = vmatprep.subr.mxu0 0.0
        %1235 = vmatpush1.xpose.msra.mxu0 %v1201
        %1236 = vmatprep.subr.mxu0 0.0
        %1237 = vmatpush1.xpose.msra.mxu0 %v1198
        %1238 = vmatprep.subr.mxu0 0.0
        %1239 = vmatpush1.xpose.msra.mxu0 %v1195
        %1240 = vmatprep.subr.mxu0 0.0
        %1241 = vmatpush1.xpose.msra.mxu0 %v1192
        %1242 = vmatprep.subr.mxu0 0.0
        %1243 = vmatpush1.xpose.msra.mxu0 %v1189
        %1244 = vmatprep.subr.mxu0 0.0
        %1245 = vmatpush2.xpose.msra.mxu0 0.0
        %1246 = vmatprep.subr.mxu0 0.0
        %1247 = vmatpush2.xpose.msra.mxu0 0.0
        %1248 = vmatprep.subr.mxu0 0.0
        %1249 = vmatpush2.xpose.msra.mxu0 0.0
        %1250 = vmatprep.subr.mxu0 0.0
        %1251 = vmatpush2.xpose.msra.mxu0 0.0
        %1252 = vmatprep.subr.mxu0 0.0
        %1253 = vmatpush2.xpose.msra.mxu0 0.0
        %1254 = vmatprep.subr.mxu0 0.0
        %1255 = vmatpush2.xpose.msra.mxu0 0.0
        %1256 = vmatprep.subr.mxu0 0.0
        %1257 = vmatpush2.xpose.msra.mxu0 0.0
        %1258 = vmatprep.subr.mxu0 0.0
        %1259 = vmatpush2.xpose.msra.mxu0 0.0
        %1260 = vmatprep.subr.mxu0 0.0
        %1261 = vmatpush2.xpose.msra.mxu0 0.0
        %1262 = vmatprep.subr.mxu0 0.0
        %1263 = vmatpush2.xpose.msra.mxu0 0.0
        %1264 = vmatprep.subr.mxu0 0.0
        %1265 = vmatpush2.xpose.msra.mxu0 0.0
        %1266 = vmatprep.subr.mxu0 0.0
        %1267 = vmatpush2.xpose.msra.mxu0 0.0
        %1268 = vmatprep.subr.mxu0 0.0
        %1269 = vmatpush2.xpose.msra.mxu0 0.0
        %1270 = vmatprep.subr.mxu0 0.0
        %1271 = vmatpush2.xpose.msra.mxu0 0.0
        %1272 = vmatprep.subr.mxu0 0.0
        %1273 = vmatpush2.xpose.msra.mxu0 0.0
        %1274 = vmatprep.subr.mxu0 0.0
        %1275 = vmatpush2.xpose.msra.mxu0 0.0
        %1276 = vmatprep.mubr.f32.mxu0 0.0
        %1277 = vmatmul.mubr.f32.gmra.mxu0 %v1186
        %v1278 = vpop.f32.mrf.mxu0
        %v1279 = vadd.f32 0.0, %v1278
        %v1280 = vpop.f32.mrf.mxu0
        %1281 = vdwg.mxu0
        %v1282 = vmul.f32 %v1279, 0.17677669
        %vm1283 = vcmask 516096
        %v1284 = vsel %vm1283, %v1282, -inf
        %1285 = vmax.xlane.f32.xlu0 %v1284
        %v1286 = vpop.xlane.xlu0 %1285
        %v1287 = vsub.f32 %v1282, %v1286
        %v1288 = vmul.f32 %v1287, 1.442695
        %v1289 = vpow.pop %v1288
        %v1290 = vsel %vm1283, %v1289, 0.0
        %1291 = vadd.xlane.f32.xlu0 %v1290
        %v1292 = vpop.xlane.xlu0 %1291
        %v1293 = vrcp.pop %v1292
        %v1294 = vmul.f32 %v1289, %v1293
        %1295 = vrot.lane.b32.xlu0 %v1147, 96
        %v1296 = vpop.permute.xlu0 %1295
        %1297 = vrot.lane.b32.xlu0 %v1152, 96
        %v1298 = vpop.permute.xlu0 %1297
        %1299 = vrot.lane.b32.xlu0 %v1157, 96
        %v1300 = vpop.permute.xlu0 %1299
        %1301 = vrot.lane.b32.xlu0 %v1162, 96
        %v1302 = vpop.permute.xlu0 %1301
        %1303 = vrot.lane.b32.xlu0 %v1167, 96
        %v1304 = vpop.permute.xlu0 %1303
        %1305 = vrot.lane.b32.xlu0 %v1172, 96
        %v1306 = vpop.permute.xlu0 %1305
        %1307 = vrot.lane.b32.xlu0 %v1177, 96
        %v1308 = vpop.permute.xlu0 %1307
        %1309 = vrot.lane.b32.xlu0 %v1182, 96
        %v1310 = vpop.permute.xlu0 %1309
        %vm1319 = vcmask 523264
        %v1321 = vsel %vm1319, %v1294, 0
        %1323 = vmatprep.subr.mxu0 0.0
        %1324 = vmatpush1.msra.mxu0 0.0
        %1325 = vmatprep.subr.mxu0 0.0
        %1326 = vmatpush1.msra.mxu0 0.0
        %1327 = vmatprep.subr.mxu0 0.0
        %1328 = vmatpush1.msra.mxu0 0.0
        %1329 = vmatprep.subr.mxu0 0.0
        %1330 = vmatpush1.msra.mxu0 0.0
        %1331 = vmatprep.subr.mxu0 0.0
        %1332 = vmatpush1.msra.mxu0 0.0
        %1333 = vmatprep.subr.mxu0 0.0
        %1334 = vmatpush1.msra.mxu0 0.0
        %1335 = vmatprep.subr.mxu0 0.0
        %1336 = vmatpush1.msra.mxu0 0.0
        %1337 = vmatprep.subr.mxu0 0.0
        %1338 = vmatpush1.msra.mxu0 0.0
        %1339 = vmatprep.subr.mxu0 0.0
        %1340 = vmatpush1.msra.mxu0 %v1310
        %1341 = vmatprep.subr.mxu0 0.0
        %1342 = vmatpush1.msra.mxu0 %v1308
        %1343 = vmatprep.subr.mxu0 0.0
        %1344 = vmatpush1.msra.mxu0 %v1306
        %1345 = vmatprep.subr.mxu0 0.0
        %1346 = vmatpush1.msra.mxu0 %v1304
        %1347 = vmatprep.subr.mxu0 0.0
        %1348 = vmatpush1.msra.mxu0 %v1302
        %1349 = vmatprep.subr.mxu0 0.0
        %1350 = vmatpush1.msra.mxu0 %v1300
        %1351 = vmatprep.subr.mxu0 0.0
        %1352 = vmatpush1.msra.mxu0 %v1298
        %1353 = vmatprep.subr.mxu0 0.0
        %1354 = vmatpush1.msra.mxu0 %v1296
        %1355 = vmatprep.subr.mxu0 0.0
        %1356 = vmatpush2.msra.mxu0 0.0
        %1357 = vmatprep.subr.mxu0 0.0
        %1358 = vmatpush2.msra.mxu0 0.0
        %1359 = vmatprep.subr.mxu0 0.0
        %1360 = vmatpush2.msra.mxu0 0.0
        %1361 = vmatprep.subr.mxu0 0.0
        %1362 = vmatpush2.msra.mxu0 0.0
        %1363 = vmatprep.subr.mxu0 0.0
        %1364 = vmatpush2.msra.mxu0 0.0
        %1365 = vmatprep.subr.mxu0 0.0
        %1366 = vmatpush2.msra.mxu0 0.0
        %1367 = vmatprep.subr.mxu0 0.0
        %1368 = vmatpush2.msra.mxu0 0.0
        %1369 = vmatprep.subr.mxu0 0.0
        %1370 = vmatpush2.msra.mxu0 0.0
        %1371 = vmatprep.subr.mxu0 0.0
        %1372 = vmatpush2.msra.mxu0 0.0
        %1373 = vmatprep.subr.mxu0 0.0
        %1374 = vmatpush2.msra.mxu0 0.0
        %1375 = vmatprep.subr.mxu0 0.0
        %1376 = vmatpush2.msra.mxu0 0.0
        %1377 = vmatprep.subr.mxu0 0.0
        %1378 = vmatpush2.msra.mxu0 0.0
        %1379 = vmatprep.subr.mxu0 0.0
        %1380 = vmatpush2.msra.mxu0 0.0
        %1381 = vmatprep.subr.mxu0 0.0
        %1382 = vmatpush2.msra.mxu0 0.0
        %1383 = vmatprep.subr.mxu0 0.0
        %1384 = vmatpush2.msra.mxu0 0.0
        %1385 = vmatprep.subr.mxu0 0.0
        %1386 = vmatpush2.msra.mxu0 0.0
        %1387 = vmatprep.mubr.f32.mxu0 0.0
        %1388 = vmatmul.mubr.f32.gmra.mxu0 %v1321
        %v1389 = vpop.f32.mrf.mxu0
        %v1390 = vadd.f32 0.0, %v1389
        %v1391 = vpop.f32.mrf.mxu0
        %1392 = vdwg.mxu0
        %v1393 = vadd.f32 %v982, %v1390
        %vm1394 = vcmask 253952
        %v1395 = vsel %vm1394, %v1393, 0.0
        %1396 = vadd.xlane.f32.xlu0 %v1395
        %v1397 = vpop.xlane.xlu0 %1396
        %v1398 = vrcp.pop 32.0
        %v1399 = vmul.f32 %v1397, %v1398
        %v1400 = vsub.f32 %v1393, %v1399
        %v1401 = vmul.f32 %v1400, %v1400
        %v1402 = vsel %vm1394, %v1401, 0.0
        %1403 = vadd.xlane.f32.xlu0 %v1402
        %v1404 = vpop.xlane.xlu0 %1403
        %v1405 = vmul.f32 %v1404, %v1398
        %v1406 = vadd.f32 %v1405, 1e-05
        %v1407 = vrsqrt.pop %v1406
        %v1408 = vmul.f32 %v1400, %v1407
        %v1409 = vmul.f32 %v1408, %v569
        %v1410 = vadd.f32 %v1409, %v570
        %v1411 = vld [vmem:[%s9] sm:$0xff]
        %v1412 = vld [vmem:[%s9 + $0x8] sm:$0xff]
        %v1413 = vld [vmem:[%s9 + $0x10] sm:$0xff]
        %v1414 = vld [vmem:[%s9 + $0x18] sm:$0xff]
        %v1415 = vld [vmem:[%s10] sm:$0x1]
        %v1417 = vlaneseq
        %v1418 = vshrl.u32 %v1417, 7
        %v1419 = vsub.s32 0, %v1418
        %v1420 = vrot.slane %v1415, %v1419
        %1422 = vmatprep.subr.mxu0 0.0
        %1423 = vmatpush1.msra.mxu0 0.0
        %1424 = vmatprep.subr.mxu0 0.0
        %1425 = vmatpush1.msra.mxu0 0.0
        %1426 = vmatprep.subr.mxu0 0.0
        %1427 = vmatpush1.msra.mxu0 0.0
        %1428 = vmatprep.subr.mxu0 0.0
        %1429 = vmatpush1.msra.mxu0 0.0
        %1430 = vmatprep.subr.mxu0 0.0
        %1431 = vmatpush1.msra.mxu0 0.0
        %1432 = vmatprep.subr.mxu0 0.0
        %1433 = vmatpush1.msra.mxu0 0.0
        %1434 = vmatprep.subr.mxu0 0.0
        %1435 = vmatpush1.msra.mxu0 0.0
        %1436 = vmatprep.subr.mxu0 0.0
        %1437 = vmatpush1.msra.mxu0 0.0
        %1438 = vmatprep.subr.mxu0 0.0
        %1439 = vmatpush1.msra.mxu0 0.0
        %1440 = vmatprep.subr.mxu0 0.0
        %1441 = vmatpush1.msra.mxu0 0.0
        %1442 = vmatprep.subr.mxu0 0.0
        %1443 = vmatpush1.msra.mxu0 0.0
        %1444 = vmatprep.subr.mxu0 0.0
        %1445 = vmatpush1.msra.mxu0 0.0
        %1446 = vmatprep.subr.mxu0 0.0
        %1447 = vmatpush1.msra.mxu0 %v1414
        %1448 = vmatprep.subr.mxu0 0.0
        %1449 = vmatpush1.msra.mxu0 %v1413
        %1450 = vmatprep.subr.mxu0 0.0
        %1451 = vmatpush1.msra.mxu0 %v1412
        %1452 = vmatprep.subr.mxu0 0.0
        %1453 = vmatpush1.msra.mxu0 %v1411
        %1454 = vmatprep.subr.mxu0 0.0
        %1455 = vmatpush2.msra.mxu0 0.0
        %1456 = vmatprep.subr.mxu0 0.0
        %1457 = vmatpush2.msra.mxu0 0.0
        %1458 = vmatprep.subr.mxu0 0.0
        %1459 = vmatpush2.msra.mxu0 0.0
        %1460 = vmatprep.subr.mxu0 0.0
        %1461 = vmatpush2.msra.mxu0 0.0
        %1462 = vmatprep.subr.mxu0 0.0
        %1463 = vmatpush2.msra.mxu0 0.0
        %1464 = vmatprep.subr.mxu0 0.0
        %1465 = vmatpush2.msra.mxu0 0.0
        %1466 = vmatprep.subr.mxu0 0.0
        %1467 = vmatpush2.msra.mxu0 0.0
        %1468 = vmatprep.subr.mxu0 0.0
        %1469 = vmatpush2.msra.mxu0 0.0
        %1470 = vmatprep.subr.mxu0 0.0
        %1471 = vmatpush2.msra.mxu0 0.0
        %1472 = vmatprep.subr.mxu0 0.0
        %1473 = vmatpush2.msra.mxu0 0.0
        %1474 = vmatprep.subr.mxu0 0.0
        %1475 = vmatpush2.msra.mxu0 0.0
        %1476 = vmatprep.subr.mxu0 0.0
        %1477 = vmatpush2.msra.mxu0 0.0
        %1478 = vmatprep.subr.mxu0 0.0
        %1479 = vmatpush2.msra.mxu0 0.0
        %1480 = vmatprep.subr.mxu0 0.0
        %1481 = vmatpush2.msra.mxu0 0.0
        %1482 = vmatprep.subr.mxu0 0.0
        %1483 = vmatpush2.msra.mxu0 0.0
        %1484 = vmatprep.subr.mxu0 0.0
        %1485 = vmatpush2.msra.mxu0 0.0
        %1486 = vmatprep.mubr.f32.mxu0 0.0
        %1487 = vmatmul.mubr.f32.gmra.mxu0 %v1057
        %v1488 = vpop.f32.mrf.mxu0
        %v1489 = vadd.f32 %v1420, %v1488
        %v1490 = vpop.f32.mrf.mxu0
        %1491 = vmatprep.mubr.f32.mxu0 0.0
        %1492 = vmatmul.mubr.f32.gmra.mxu0 %v1060
        %v1493 = vpop.f32.mrf.mxu0
        %v1494 = vadd.f32 %v1420, %v1493
        %v1495 = vpop.f32.mrf.mxu0
        %1496 = vmatprep.mubr.f32.mxu0 0.0
        %1497 = vmatmul.mubr.f32.gmra.mxu0 %v1063
        %v1498 = vpop.f32.mrf.mxu0
        %v1499 = vadd.f32 %v1420, %v1498
        %v1500 = vpop.f32.mrf.mxu0
        %1501 = vmatprep.mubr.f32.mxu0 0.0
        %1502 = vmatmul.mubr.f32.gmra.mxu0 %v1066
        %v1503 = vpop.f32.mrf.mxu0
        %v1504 = vadd.f32 %v1420, %v1503
        %v1505 = vpop.f32.mrf.mxu0
        %1506 = vmatprep.mubr.f32.mxu0 0.0
        %1507 = vmatmul.mubr.f32.gmra.mxu0 %v1069
        %v1508 = vpop.f32.mrf.mxu0
        %v1509 = vadd.f32 %v1420, %v1508
        %v1510 = vpop.f32.mrf.mxu0
        %1511 = vmatprep.mubr.f32.mxu0 0.0
        %1512 = vmatmul.mubr.f32.gmra.mxu0 %v1072
        %v1513 = vpop.f32.mrf.mxu0
        %v1514 = vadd.f32 %v1420, %v1513
        %v1515 = vpop.f32.mrf.mxu0
        %1516 = vmatprep.mubr.f32.mxu0 0.0
        %1517 = vmatmul.mubr.f32.gmra.mxu0 %v1075
        %v1518 = vpop.f32.mrf.mxu0
        %v1519 = vadd.f32 %v1420, %v1518
        %v1520 = vpop.f32.mrf.mxu0
        %1521 = vmatprep.mubr.f32.mxu0 0.0
        %1522 = vmatmul.mubr.f32.gmra.mxu0 %v1078
        %v1523 = vpop.f32.mrf.mxu0
        %v1524 = vadd.f32 %v1420, %v1523
        %v1525 = vpop.f32.mrf.mxu0
        %1526 = vdwg.mxu0
        %v1527 = vmul.f32 %v1489, 0.5
        %v1528 = vmul.f32 %v1494, 0.5
        %v1529 = vmul.f32 %v1499, 0.5
        %v1530 = vmul.f32 %v1504, 0.5
        %v1531 = vmul.f32 %v1509, 0.5
        %v1532 = vmul.f32 %v1514, 0.5
        %v1533 = vmul.f32 %v1519, 0.5
        %v1534 = vmul.f32 %v1524, 0.5
        %v1535 = vmul.f32 %v1489, 0.70710677
        %v1536 = vmul.f32 %v1494, 0.70710677
        %v1537 = vmul.f32 %v1499, 0.70710677
        %v1538 = vmul.f32 %v1504, 0.70710677
        %v1539 = vmul.f32 %v1509, 0.70710677
        %v1540 = vmul.f32 %v1514, 0.70710677
        %v1541 = vmul.f32 %v1519, 0.70710677
        %v1542 = vmul.f32 %v1524, 0.70710677
        %vm1543 = vcmp.ge.f32.partialorder %v1535, 0.0
        %vm1544 = vcmp.ge.f32.partialorder %v1536, 0.0
        %vm1545 = vcmp.ge.f32.partialorder %v1537, 0.0
        %vm1546 = vcmp.ge.f32.partialorder %v1538, 0.0
        %vm1547 = vcmp.ge.f32.partialorder %v1539, 0.0
        %vm1548 = vcmp.ge.f32.partialorder %v1540, 0.0
        %vm1549 = vcmp.ge.f32.partialorder %v1541, 0.0
        %vm1550 = vcmp.ge.f32.partialorder %v1542, 0.0
        %v1551 = vsel %vm1543, 1.0, -1.0
        %v1552 = vsel %vm1544, 1.0, -1.0
        %v1553 = vsel %vm1545, 1.0, -1.0
        %v1554 = vsel %vm1546, 1.0, -1.0
        %v1555 = vsel %vm1547, 1.0, -1.0
        %v1556 = vsel %vm1548, 1.0, -1.0
        %v1557 = vsel %vm1549, 1.0, -1.0
        %v1558 = vsel %vm1550, 1.0, -1.0
        %v1559 = vand.u32 2147483647, %v1535
        %v1560 = vand.u32 2147483647, %v1536
        %v1561 = vand.u32 2147483647, %v1537
        %v1562 = vand.u32 2147483647, %v1538
        %v1563 = vand.u32 2147483647, %v1539
        %v1564 = vand.u32 2147483647, %v1540
        %v1565 = vand.u32 2147483647, %v1541
        %v1566 = vand.u32 2147483647, %v1542
        %v1567 = vmul.f32 %v1559, 0.3275911
        %v1568 = vmul.f32 %v1560, 0.3275911
        %v1569 = vmul.f32 %v1561, 0.3275911
        %v1570 = vmul.f32 %v1562, 0.3275911
        %v1571 = vmul.f32 %v1563, 0.3275911
        %v1572 = vmul.f32 %v1564, 0.3275911
        %v1573 = vmul.f32 %v1565, 0.3275911
        %v1574 = vmul.f32 %v1566, 0.3275911
        %v1575 = vadd.f32 %v1567, 1.0
        %v1576 = vadd.f32 %v1568, 1.0
        %v1577 = vadd.f32 %v1569, 1.0
        %v1578 = vadd.f32 %v1570, 1.0
        %v1579 = vadd.f32 %v1571, 1.0
        %v1580 = vadd.f32 %v1572, 1.0
        %v1581 = vadd.f32 %v1573, 1.0
        %v1582 = vadd.f32 %v1574, 1.0
        %v1583 = vrcp.pop %v1575
        %v1584 = vmul.f32 1.0, %v1583
        %v1585 = vrcp.pop %v1576
        %v1586 = vmul.f32 1.0, %v1585
        %v1587 = vrcp.pop %v1577
        %v1588 = vmul.f32 1.0, %v1587
        %v1589 = vrcp.pop %v1578
        %v1590 = vmul.f32 1.0, %v1589
        %v1591 = vrcp.pop %v1579
        %v1592 = vmul.f32 1.0, %v1591
        %v1593 = vrcp.pop %v1580
        %v1594 = vmul.f32 1.0, %v1593
        %v1595 = vrcp.pop %v1581
        %v1596 = vmul.f32 1.0, %v1595
        %v1597 = vrcp.pop %v1582
        %v1598 = vmul.f32 1.0, %v1597
        %v1599 = vmul.f32 %v1584, 1.0614054
        %v1600 = vmul.f32 %v1586, 1.0614054
        %v1601 = vmul.f32 %v1588, 1.0614054
        %v1602 = vmul.f32 %v1590, 1.0614054
        %v1603 = vmul.f32 %v1592, 1.0614054
        %v1604 = vmul.f32 %v1594, 1.0614054
        %v1605 = vmul.f32 %v1596, 1.0614054
        %v1606 = vmul.f32 %v1598, 1.0614054
        %v1607 = vadd.f32 %v1599, -1.4531521
        %v1608 = vadd.f32 %v1600, -1.4531521
        %v1609 = vadd.f32 %v1601, -1.4531521
        %v1610 = vadd.f32 %v1602, -1.4531521
        %v1611 = vadd.f32 %v1603, -1.4531521
        %v1612 = vadd.f32 %v1604, -1.4531521
        %v1613 = vadd.f32 %v1605, -1.4531521
        %v1614 = vadd.f32 %v1606, -1.4531521
        %v1615 = vmul.f32 %v1607, %v1584
        %v1616 = vmul.f32 %v1608, %v1586
        %v1617 = vmul.f32 %v1609, %v1588
        %v1618 = vmul.f32 %v1610, %v1590
        %v1619 = vmul.f32 %v1611, %v1592
        %v1620 = vmul.f32 %v1612, %v1594
        %v1621 = vmul.f32 %v1613, %v1596
        %v1622 = vmul.f32 %v1614, %v1598
        %v1623 = vadd.f32 %v1615, 1.4214138
        %v1624 = vadd.f32 %v1616, 1.4214138
        %v1625 = vadd.f32 %v1617, 1.4214138
        %v1626 = vadd.f32 %v1618, 1.4214138
        %v1627 = vadd.f32 %v1619, 1.4214138
        %v1628 = vadd.f32 %v1620, 1.4214138
        %v1629 = vadd.f32 %v1621, 1.4214138
        %v1630 = vadd.f32 %v1622, 1.4214138
        %v1631 = vmul.f32 %v1623, %v1584
        %v1632 = vmul.f32 %v1624, %v1586
        %v1633 = vmul.f32 %v1625, %v1588
        %v1634 = vmul.f32 %v1626, %v1590
        %v1635 = vmul.f32 %v1627, %v1592
        %v1636 = vmul.f32 %v1628, %v1594
        %v1637 = vmul.f32 %v1629, %v1596
        %v1638 = vmul.f32 %v1630, %v1598
        %v1639 = vadd.f32 %v1631, -0.28449672
        %v1640 = vadd.f32 %v1632, -0.28449672
        %v1641 = vadd.f32 %v1633, -0.28449672
        %v1642 = vadd.f32 %v1634, -0.28449672
        %v1643 = vadd.f32 %v1635, -0.28449672
        %v1644 = vadd.f32 %v1636, -0.28449672
        %v1645 = vadd.f32 %v1637, -0.28449672
        %v1646 = vadd.f32 %v1638, -0.28449672
        %v1647 = vmul.f32 %v1639, %v1584
        %v1648 = vmul.f32 %v1640, %v1586
        %v1649 = vmul.f32 %v1641, %v1588
        %v1650 = vmul.f32 %v1642, %v1590
        %v1651 = vmul.f32 %v1643, %v1592
        %v1652 = vmul.f32 %v1644, %v1594
        %v1653 = vmul.f32 %v1645, %v1596
        %v1654 = vmul.f32 %v1646, %v1598
        %v1655 = vadd.f32 %v1647, 0.2548296
        %v1656 = vadd.f32 %v1648, 0.2548296
        %v1657 = vadd.f32 %v1649, 0.2548296
        %v1658 = vadd.f32 %v1650, 0.2548296
        %v1659 = vadd.f32 %v1651, 0.2548296
        %v1660 = vadd.f32 %v1652, 0.2548296
        %v1661 = vadd.f32 %v1653, 0.2548296
        %v1662 = vadd.f32 %v1654, 0.2548296
        %v1663 = vmul.f32 %v1655, %v1584
        %v1664 = vmul.f32 %v1656, %v1586
        %v1665 = vmul.f32 %v1657, %v1588
        %v1666 = vmul.f32 %v1658, %v1590
        %v1667 = vmul.f32 %v1659, %v1592
        %v1668 = vmul.f32 %v1660, %v1594
        %v1669 = vmul.f32 %v1661, %v1596
        %v1670 = vmul.f32 %v1662, %v1598
        %v1671 = vsub.f32 0.0, %v1559
        %v1672 = vsub.f32 0.0, %v1560
        %v1673 = vsub.f32 0.0, %v1561
        %v1674 = vsub.f32 0.0, %v1562
        %v1675 = vsub.f32 0.0, %v1563
        %v1676 = vsub.f32 0.0, %v1564
        %v1677 = vsub.f32 0.0, %v1565
        %v1678 = vsub.f32 0.0, %v1566
        %v1679 = vmul.f32 %v1671, %v1559
        %v1680 = vmul.f32 %v1672, %v1560
        %v1681 = vmul.f32 %v1673, %v1561
        %v1682 = vmul.f32 %v1674, %v1562
        %v1683 = vmul.f32 %v1675, %v1563
        %v1684 = vmul.f32 %v1676, %v1564
        %v1685 = vmul.f32 %v1677, %v1565
        %v1686 = vmul.f32 %v1678, %v1566
        %v1687 = vmul.f32 %v1679, 1.442695
        %v1688 = vpow.pop %v1687
        %v1689 = vmul.f32 %v1680, 1.442695
        %v1690 = vpow.pop %v1689
        %v1691 = vmul.f32 %v1681, 1.442695
        %v1692 = vpow.pop %v1691
        %v1693 = vmul.f32 %v1682, 1.442695
        %v1694 = vpow.pop %v1693
        %v1695 = vmul.f32 %v1683, 1.442695
        %v1696 = vpow.pop %v1695
        %v1697 = vmul.f32 %v1684, 1.442695
        %v1698 = vpow.pop %v1697
        %v1699 = vmul.f32 %v1685, 1.442695
        %v1700 = vpow.pop %v1699
        %v1701 = vmul.f32 %v1686, 1.442695
        %v1702 = vpow.pop %v1701
        %v1703 = vmul.f32 %v1663, %v1688
        %v1704 = vmul.f32 %v1664, %v1690
        %v1705 = vmul.f32 %v1665, %v1692
        %v1706 = vmul.f32 %v1666, %v1694
        %v1707 = vmul.f32 %v1667, %v1696
        %v1708 = vmul.f32 %v1668, %v1698
        %v1709 = vmul.f32 %v1669, %v1700
        %v1710 = vmul.f32 %v1670, %v1702
        %v1711 = vsub.f32 1.0, %v1703
        %v1712 = vsub.f32 1.0, %v1704
        %v1713 = vsub.f32 1.0, %v1705
        %v1714 = vsub.f32 1.0, %v1706
        %v1715 = vsub.f32 1.0, %v1707
        %v1716 = vsub.f32 1.0, %v1708
        %v1717 = vsub.f32 1.0, %v1709
        %v1718 = vsub.f32 1.0, %v1710
        %v1719 = vmul.f32 %v1551, %v1711
        %v1720 = vmul.f32 %v1552, %v1712
        %v1721 = vmul.f32 %v1553, %v1713
        %v1722 = vmul.f32 %v1554, %v1714
        %v1723 = vmul.f32 %v1555, %v1715
        %v1724 = vmul.f32 %v1556, %v1716
        %v1725 = vmul.f32 %v1557, %v1717
        %v1726 = vmul.f32 %v1558, %v1718
        %v1727 = vadd.f32 %v1719, 1.0
        %v1728 = vadd.f32 %v1720, 1.0
        %v1729 = vadd.f32 %v1721, 1.0
        %v1730 = vadd.f32 %v1722, 1.0
        %v1731 = vadd.f32 %v1723, 1.0
        %v1732 = vadd.f32 %v1724, 1.0
        %v1733 = vadd.f32 %v1725, 1.0
        %v1734 = vadd.f32 %v1726, 1.0
        %v1735 = vmul.f32 %v1527, %v1727
        %v1736 = vmul.f32 %v1528, %v1728
        %v1737 = vmul.f32 %v1529, %v1729
        %v1738 = vmul.f32 %v1530, %v1730
        %v1739 = vmul.f32 %v1531, %v1731
        %v1740 = vmul.f32 %v1532, %v1732
        %v1741 = vmul.f32 %v1533, %v1733
        %v1742 = vmul.f32 %v1534, %v1734
        %1743 = vst.msk [vmem:[#allocation2 + $0x18] sm:$0xff] %vm546, %v1735
        %1744 = vst.msk [vmem:[#allocation2 + $0x20] sm:$0xff] %vm546, %v1736
        %1745 = vst.msk [vmem:[#allocation2 + $0x28] sm:$0xff] %vm546, %v1737
        %1746 = vst.msk [vmem:[#allocation2 + $0x30] sm:$0xff] %vm546, %v1738
        %1747 = vst.msk [vmem:[#allocation2 + $0x38] sm:$0xff] %vm546, %v1739
        %1748 = vst.msk [vmem:[#allocation2 + $0x40] sm:$0xff] %vm546, %v1740
        %1749 = vst.msk [vmem:[#allocation2 + $0x48] sm:$0xff] %vm546, %v1741
        %1750 = vst.msk [vmem:[#allocation2 + $0x50] sm:$0xff] %vm546, %v1742
        %v1751 = vld [vmem:[#allocation2 + $0x6] sm:$0xff]
        %v1752 = vld [vmem:[#allocation2 + $0xe] sm:$0xff]
        %v1753 = vld [vmem:[#allocation2 + $0x16] sm:$0xff]
        %v1754 = vld [vmem:[#allocation2 + $0x1e] sm:$0xff]
        %v1755 = vld [vmem:[#allocation2 + $0x26] sm:$0xff]
        %v1756 = vld [vmem:[#allocation2 + $0x2e] sm:$0xff]
        %v1757 = vld [vmem:[#allocation2 + $0x36] sm:$0xff]
        %v1758 = vld [vmem:[#allocation2 + $0x3e] sm:$0xff]
        %1760 = vset.pattern.permute.xlu0 0
        %1761 = vperm.xlu0 %1760, %v571
        %v1762 = vpop.permute.xlu0 %1761
        %1765 = vset.pattern.permute.xlu0 0
        %1766 = vperm.xlu0 %1765, %v572
        %v1767 = vpop.permute.xlu0 %1766
        %1770 = vset.pattern.permute.xlu0 0
        %1771 = vperm.xlu0 %1770, %v573
        %v1772 = vpop.permute.xlu0 %1771
        %1775 = vset.pattern.permute.xlu0 0
        %1776 = vperm.xlu0 %1775, %v574
        %v1777 = vpop.permute.xlu0 %1776
        %1780 = vset.pattern.permute.xlu0 0
        %1781 = vperm.xlu0 %1780, %v575
        %v1782 = vpop.permute.xlu0 %1781
        %1785 = vset.pattern.permute.xlu0 0
        %1786 = vperm.xlu0 %1785, %v576
        %v1787 = vpop.permute.xlu0 %1786
        %1790 = vset.pattern.permute.xlu0 0
        %1791 = vperm.xlu0 %1790, %v577
        %v1792 = vpop.permute.xlu0 %1791
        %1795 = vset.pattern.permute.xlu0 0
        %1796 = vperm.xlu0 %1795, %v578
        %v1797 = vpop.permute.xlu0 %1796
        %v1799 = vmul.f32 %v1751, %v1762
        %v1800 = vmul.f32 %v1752, %v1767
        %v1801 = vmul.f32 %v1753, %v1772
        %v1802 = vmul.f32 %v1754, %v1777
        %v1803 = vmul.f32 %v1755, %v1782
        %v1804 = vmul.f32 %v1756, %v1787
        %v1805 = vmul.f32 %v1757, %v1792
        %v1806 = vmul.f32 %v1758, %v1797
        %1807 = vst.msk [vmem:[#allocation3] sm:$0xff] %vm546, %v1799
        %1808 = vst.msk [vmem:[#allocation3 + $0x38] sm:$0xff] %vm546, %v1800
        %1809 = vst.msk [vmem:[#allocation3 + $0x70] sm:$0xff] %vm546, %v1801
        %1810 = vst.msk [vmem:[#allocation3 + $0xa8] sm:$0xff] %vm546, %v1802
        %1811 = vst.msk [vmem:[#allocation3 + $0xe0] sm:$0xff] %vm546, %v1803
        %1812 = vst.msk [vmem:[#allocation3 + $0x118] sm:$0xff] %vm546, %v1804
        %1813 = vst.msk [vmem:[#allocation3 + $0x150] sm:$0xff] %vm546, %v1805
        %1814 = vst.msk [vmem:[#allocation3 + $0x188] sm:$0xff] %vm546, %v1806
        %v1815 = vld [vmem:[#allocation2 + $0x7] sm:$0xff]
        %v1816 = vld [vmem:[#allocation2 + $0xf] sm:$0xff]
        %v1817 = vld [vmem:[#allocation2 + $0x17] sm:$0xff]
        %v1818 = vld [vmem:[#allocation2 + $0x1f] sm:$0xff]
        %v1819 = vld [vmem:[#allocation2 + $0x27] sm:$0xff]
        %v1820 = vld [vmem:[#allocation2 + $0x2f] sm:$0xff]
        %v1821 = vld [vmem:[#allocation2 + $0x37] sm:$0xff]
        %v1822 = vld [vmem:[#allocation2 + $0x3f] sm:$0xff]
        %1824 = vset.pattern.permute.xlu0 0
        %1825 = vperm.xlu0 %1824, %v580
        %v1826 = vpop.permute.xlu0 %1825
        %1829 = vset.pattern.permute.xlu0 0
        %1830 = vperm.xlu0 %1829, %v581
        %v1831 = vpop.permute.xlu0 %1830
        %1834 = vset.pattern.permute.xlu0 0
        %1835 = vperm.xlu0 %1834, %v582
        %v1836 = vpop.permute.xlu0 %1835
        %1839 = vset.pattern.permute.xlu0 0
        %1840 = vperm.xlu0 %1839, %v583
        %v1841 = vpop.permute.xlu0 %1840
        %1844 = vset.pattern.permute.xlu0 0
        %1845 = vperm.xlu0 %1844, %v584
        %v1846 = vpop.permute.xlu0 %1845
        %1849 = vset.pattern.permute.xlu0 0
        %1850 = vperm.xlu0 %1849, %v585
        %v1851 = vpop.permute.xlu0 %1850
        %1854 = vset.pattern.permute.xlu0 0
        %1855 = vperm.xlu0 %1854, %v586
        %v1856 = vpop.permute.xlu0 %1855
        %1859 = vset.pattern.permute.xlu0 0
        %1860 = vperm.xlu0 %1859, %v587
        %v1861 = vpop.permute.xlu0 %1860
        %v1863 = vmul.f32 %v1815, %v1826
        %v1864 = vmul.f32 %v1816, %v1831
        %v1865 = vmul.f32 %v1817, %v1836
        %v1866 = vmul.f32 %v1818, %v1841
        %v1867 = vmul.f32 %v1819, %v1846
        %v1868 = vmul.f32 %v1820, %v1851
        %v1869 = vmul.f32 %v1821, %v1856
        %v1870 = vmul.f32 %v1822, %v1861
        %1879 = vrot.lane.b32.xlu0 %v1863, 32
        %v1880 = vpop.permute.xlu0 %1879
        %1881 = vrot.lane.b32.xlu0 %v1864, 32
        %v1882 = vpop.permute.xlu0 %1881
        %1883 = vrot.lane.b32.xlu0 %v1865, 32
        %v1884 = vpop.permute.xlu0 %1883
        %1885 = vrot.lane.b32.xlu0 %v1866, 32
        %v1886 = vpop.permute.xlu0 %1885
        %1887 = vrot.lane.b32.xlu0 %v1867, 32
        %v1888 = vpop.permute.xlu0 %1887
        %1889 = vrot.lane.b32.xlu0 %v1868, 32
        %v1890 = vpop.permute.xlu0 %1889
        %1891 = vrot.lane.b32.xlu0 %v1869, 32
        %v1892 = vpop.permute.xlu0 %1891
        %1893 = vrot.lane.b32.xlu0 %v1870, 32
        %v1894 = vpop.permute.xlu0 %1893
        %vm1903 = vcmask 523520
        %1904 = vst.msk [vmem:[#allocation3] sm:$0xff] %vm1903, %v1880
        %1905 = vst.msk [vmem:[#allocation3 + $0x38] sm:$0xff] %vm1903, %v1882
        %1906 = vst.msk [vmem:[#allocation3 + $0x70] sm:$0xff] %vm1903, %v1884
        %1907 = vst.msk [vmem:[#allocation3 + $0xa8] sm:$0xff] %vm1903, %v1886
        %1908 = vst.msk [vmem:[#allocation3 + $0xe0] sm:$0xff] %vm1903, %v1888
        %1909 = vst.msk [vmem:[#allocation3 + $0x118] sm:$0xff] %vm1903, %v1890
        %1910 = vst.msk [vmem:[#allocation3 + $0x150] sm:$0xff] %vm1903, %v1892
        %1911 = vst.msk [vmem:[#allocation3 + $0x188] sm:$0xff] %vm1903, %v1894
        %v1912 = vld [vmem:[#allocation2 + $0x8] sm:$0xff]
        %v1913 = vld [vmem:[#allocation2 + $0x10] sm:$0xff]
        %v1914 = vld [vmem:[#allocation2 + $0x18] sm:$0xff]
        %v1915 = vld [vmem:[#allocation2 + $0x20] sm:$0xff]
        %v1916 = vld [vmem:[#allocation2 + $0x28] sm:$0xff]
        %v1917 = vld [vmem:[#allocation2 + $0x30] sm:$0xff]
        %v1918 = vld [vmem:[#allocation2 + $0x38] sm:$0xff]
        %v1919 = vld [vmem:[#allocation2 + $0x40] sm:$0xff]
        %1921 = vset.pattern.permute.xlu0 0
        %1922 = vperm.xlu0 %1921, %v589
        %v1923 = vpop.permute.xlu0 %1922
        %1926 = vset.pattern.permute.xlu0 0
        %1927 = vperm.xlu0 %1926, %v590
        %v1928 = vpop.permute.xlu0 %1927
        %1931 = vset.pattern.permute.xlu0 0
        %1932 = vperm.xlu0 %1931, %v591
        %v1933 = vpop.permute.xlu0 %1932
        %1936 = vset.pattern.permute.xlu0 0
        %1937 = vperm.xlu0 %1936, %v592
        %v1938 = vpop.permute.xlu0 %1937
        %1941 = vset.pattern.permute.xlu0 0
        %1942 = vperm.xlu0 %1941, %v593
        %v1943 = vpop.permute.xlu0 %1942
        %1946 = vset.pattern.permute.xlu0 0
        %1947 = vperm.xlu0 %1946, %v594
        %v1948 = vpop.permute.xlu0 %1947
        %1951 = vset.pattern.permute.xlu0 0
        %1952 = vperm.xlu0 %1951, %v595
        %v1953 = vpop.permute.xlu0 %1952
        %1956 = vset.pattern.permute.xlu0 0
        %1957 = vperm.xlu0 %1956, %v596
        %v1958 = vpop.permute.xlu0 %1957
        %v1960 = vmul.f32 %v1912, %v1923
        %v1961 = vmul.f32 %v1913, %v1928
        %v1962 = vmul.f32 %v1914, %v1933
        %v1963 = vmul.f32 %v1915, %v1938
        %v1964 = vmul.f32 %v1916, %v1943
        %v1965 = vmul.f32 %v1917, %v1948
        %v1966 = vmul.f32 %v1918, %v1953
        %v1967 = vmul.f32 %v1919, %v1958
        %1976 = vrot.lane.b32.xlu0 %v1960, 64
        %v1977 = vpop.permute.xlu0 %1976
        %1978 = vrot.lane.b32.xlu0 %v1961, 64
        %v1979 = vpop.permute.xlu0 %1978
        %1980 = vrot.lane.b32.xlu0 %v1962, 64
        %v1981 = vpop.permute.xlu0 %1980
        %1982 = vrot.lane.b32.xlu0 %v1963, 64
        %v1983 = vpop.permute.xlu0 %1982
        %1984 = vrot.lane.b32.xlu0 %v1964, 64
        %v1985 = vpop.permute.xlu0 %1984
        %1986 = vrot.lane.b32.xlu0 %v1965, 64
        %v1987 = vpop.permute.xlu0 %1986
        %1988 = vrot.lane.b32.xlu0 %v1966, 64
        %v1989 = vpop.permute.xlu0 %1988
        %1990 = vrot.lane.b32.xlu0 %v1967, 64
        %v1991 = vpop.permute.xlu0 %1990
        %vm2000 = vcmask 785920
        %2001 = vst.msk [vmem:[#allocation3] sm:$0xff] %vm2000, %v1977
        %2002 = vst.msk [vmem:[#allocation3 + $0x38] sm:$0xff] %vm2000, %v1979
        %2003 = vst.msk [vmem:[#allocation3 + $0x70] sm:$0xff] %vm2000, %v1981
        %2004 = vst.msk [vmem:[#allocation3 + $0xa8] sm:$0xff] %vm2000, %v1983
        %2005 = vst.msk [vmem:[#allocation3 + $0xe0] sm:$0xff] %vm2000, %v1985
        %2006 = vst.msk [vmem:[#allocation3 + $0x118] sm:$0xff] %vm2000, %v1987
        %2007 = vst.msk [vmem:[#allocation3 + $0x150] sm:$0xff] %vm2000, %v1989
        %2008 = vst.msk [vmem:[#allocation3 + $0x188] sm:$0xff] %vm2000, %v1991
        %v2009 = vld [vmem:[#allocation2 + $0x9] sm:$0xff]
        %v2010 = vld [vmem:[#allocation2 + $0x11] sm:$0xff]
        %v2011 = vld [vmem:[#allocation2 + $0x19] sm:$0xff]
        %v2012 = vld [vmem:[#allocation2 + $0x21] sm:$0xff]
        %v2013 = vld [vmem:[#allocation2 + $0x29] sm:$0xff]
        %v2014 = vld [vmem:[#allocation2 + $0x31] sm:$0xff]
        %v2015 = vld [vmem:[#allocation2 + $0x39] sm:$0xff]
        %v2016 = vld [vmem:[#allocation2 + $0x41] sm:$0xff]
        %2018 = vset.pattern.permute.xlu0 0
        %2019 = vperm.xlu0 %2018, %v598
        %v2020 = vpop.permute.xlu0 %2019
        %2023 = vset.pattern.permute.xlu0 0
        %2024 = vperm.xlu0 %2023, %v599
        %v2025 = vpop.permute.xlu0 %2024
        %2028 = vset.pattern.permute.xlu0 0
        %2029 = vperm.xlu0 %2028, %v600
        %v2030 = vpop.permute.xlu0 %2029
        %2033 = vset.pattern.permute.xlu0 0
        %2034 = vperm.xlu0 %2033, %v601
        %v2035 = vpop.permute.xlu0 %2034
        %2038 = vset.pattern.permute.xlu0 0
        %2039 = vperm.xlu0 %2038, %v602
        %v2040 = vpop.permute.xlu0 %2039
        %2043 = vset.pattern.permute.xlu0 0
        %2044 = vperm.xlu0 %2043, %v603
        %v2045 = vpop.permute.xlu0 %2044
        %2048 = vset.pattern.permute.xlu0 0
        %2049 = vperm.xlu0 %2048, %v604
        %v2050 = vpop.permute.xlu0 %2049
        %2053 = vset.pattern.permute.xlu0 0
        %2054 = vperm.xlu0 %2053, %v605
        %v2055 = vpop.permute.xlu0 %2054
        %v2057 = vmul.f32 %v2009, %v2020
        %v2058 = vmul.f32 %v2010, %v2025
        %v2059 = vmul.f32 %v2011, %v2030
        %v2060 = vmul.f32 %v2012, %v2035
        %v2061 = vmul.f32 %v2013, %v2040
        %v2062 = vmul.f32 %v2014, %v2045
        %v2063 = vmul.f32 %v2015, %v2050
        %v2064 = vmul.f32 %v2016, %v2055
        %2073 = vrot.lane.b32.xlu0 %v2057, 96
        %v2074 = vpop.permute.xlu0 %2073
        %2075 = vrot.lane.b32.xlu0 %v2058, 96
        %v2076 = vpop.permute.xlu0 %2075
        %2077 = vrot.lane.b32.xlu0 %v2059, 96
        %v2078 = vpop.permute.xlu0 %2077
        %2079 = vrot.lane.b32.xlu0 %v2060, 96
        %v2080 = vpop.permute.xlu0 %2079
        %2081 = vrot.lane.b32.xlu0 %v2061, 96
        %v2082 = vpop.permute.xlu0 %2081
        %2083 = vrot.lane.b32.xlu0 %v2062, 96
        %v2084 = vpop.permute.xlu0 %2083
        %2085 = vrot.lane.b32.xlu0 %v2063, 96
        %v2086 = vpop.permute.xlu0 %2085
        %2087 = vrot.lane.b32.xlu0 %v2064, 96
        %v2088 = vpop.permute.xlu0 %2087
        %vm2097 = vcmask 1048320
        %2098 = vst.msk [vmem:[#allocation3] sm:$0xff] %vm2097, %v2074
        %2099 = vst.msk [vmem:[#allocation3 + $0x38] sm:$0xff] %vm2097, %v2076
        %2100 = vst.msk [vmem:[#allocation3 + $0x70] sm:$0xff] %vm2097, %v2078
        %2101 = vst.msk [vmem:[#allocation3 + $0xa8] sm:$0xff] %vm2097, %v2080
        %2102 = vst.msk [vmem:[#allocation3 + $0xe0] sm:$0xff] %vm2097, %v2082
        %2103 = vst.msk [vmem:[#allocation3 + $0x118] sm:$0xff] %vm2097, %v2084
        %2104 = vst.msk [vmem:[#allocation3 + $0x150] sm:$0xff] %vm2097, %v2086
        %2105 = vst.msk [vmem:[#allocation3 + $0x188] sm:$0xff] %vm2097, %v2088
        %v2106 = vld [vmem:[#allocation2 + $0xa] sm:$0xff]
        %v2107 = vld [vmem:[#allocation2 + $0x12] sm:$0xff]
        %v2108 = vld [vmem:[#allocation2 + $0x1a] sm:$0xff]
        %v2109 = vld [vmem:[#allocation2 + $0x22] sm:$0xff]
        %v2110 = vld [vmem:[#allocation2 + $0x2a] sm:$0xff]
        %v2111 = vld [vmem:[#allocation2 + $0x32] sm:$0xff]
        %v2112 = vld [vmem:[#allocation2 + $0x3a] sm:$0xff]
        %v2113 = vld [vmem:[#allocation2 + $0x42] sm:$0xff]
        %2115 = vset.pattern.permute.xlu0 0
        %2116 = vperm.xlu0 %2115, %v607
        %v2117 = vpop.permute.xlu0 %2116
        %2120 = vset.pattern.permute.xlu0 0
        %2121 = vperm.xlu0 %2120, %v608
        %v2122 = vpop.permute.xlu0 %2121
        %2125 = vset.pattern.permute.xlu0 0
        %2126 = vperm.xlu0 %2125, %v609
        %v2127 = vpop.permute.xlu0 %2126
        %2130 = vset.pattern.permute.xlu0 0
        %2131 = vperm.xlu0 %2130, %v610
        %v2132 = vpop.permute.xlu0 %2131
        %2135 = vset.pattern.permute.xlu0 0
        %2136 = vperm.xlu0 %2135, %v611
        %v2137 = vpop.permute.xlu0 %2136
        %2140 = vset.pattern.permute.xlu0 0
        %2141 = vperm.xlu0 %2140, %v612
        %v2142 = vpop.permute.xlu0 %2141
        %2145 = vset.pattern.permute.xlu0 0
        %2146 = vperm.xlu0 %2145, %v613
        %v2147 = vpop.permute.xlu0 %2146
        %2150 = vset.pattern.permute.xlu0 0
        %2151 = vperm.xlu0 %2150, %v614
        %v2152 = vpop.permute.xlu0 %2151
        %v2154 = vmul.f32 %v2106, %v2117
        %v2155 = vmul.f32 %v2107, %v2122
        %v2156 = vmul.f32 %v2108, %v2127
        %v2157 = vmul.f32 %v2109, %v2132
        %v2158 = vmul.f32 %v2110, %v2137
        %v2159 = vmul.f32 %v2111, %v2142
        %v2160 = vmul.f32 %v2112, %v2147
        %v2161 = vmul.f32 %v2113, %v2152
        %2162 = vst.msk [vmem:[#allocation3 + $0x8] sm:$0xff] %vm546, %v2154
        %2163 = vst.msk [vmem:[#allocation3 + $0x40] sm:$0xff] %vm546, %v2155
        %2164 = vst.msk [vmem:[#allocation3 + $0x78] sm:$0xff] %vm546, %v2156
        %2165 = vst.msk [vmem:[#allocation3 + $0xb0] sm:$0xff] %vm546, %v2157
        %2166 = vst.msk [vmem:[#allocation3 + $0xe8] sm:$0xff] %vm546, %v2158
        %2167 = vst.msk [vmem:[#allocation3 + $0x120] sm:$0xff] %vm546, %v2159
        %2168 = vst.msk [vmem:[#allocation3 + $0x158] sm:$0xff] %vm546, %v2160
        %2169 = vst.msk [vmem:[#allocation3 + $0x190] sm:$0xff] %vm546, %v2161
        %v2170 = vld [vmem:[#allocation2 + $0xe] sm:$0xff]
        %v2171 = vld [vmem:[#allocation2 + $0x16] sm:$0xff]
        %v2172 = vld [vmem:[#allocation2 + $0x1e] sm:$0xff]
        %v2173 = vld [vmem:[#allocation2 + $0x26] sm:$0xff]
        %v2174 = vld [vmem:[#allocation2 + $0x2e] sm:$0xff]
        %v2175 = vld [vmem:[#allocation2 + $0x36] sm:$0xff]
        %v2176 = vld [vmem:[#allocation2 + $0x3e] sm:$0xff]
        %v2177 = vld [vmem:[#allocation2 + $0x46] sm:$0xff]
        %v2178 = vmul.f32 %v2170, %v1762
        %v2179 = vmul.f32 %v2171, %v1767
        %v2180 = vmul.f32 %v2172, %v1772
        %v2181 = vmul.f32 %v2173, %v1777
        %v2182 = vmul.f32 %v2174, %v1782
        %v2183 = vmul.f32 %v2175, %v1787
        %v2184 = vmul.f32 %v2176, %v1792
        %v2185 = vmul.f32 %v2177, %v1797
        %2194 = vrot.lane.b32.xlu0 %v2178, 32
        %v2195 = vpop.permute.xlu0 %2194
        %2196 = vrot.lane.b32.xlu0 %v2179, 32
        %v2197 = vpop.permute.xlu0 %2196
        %2198 = vrot.lane.b32.xlu0 %v2180, 32
        %v2199 = vpop.permute.xlu0 %2198
        %2200 = vrot.lane.b32.xlu0 %v2181, 32
        %v2201 = vpop.permute.xlu0 %2200
        %2202 = vrot.lane.b32.xlu0 %v2182, 32
        %v2203 = vpop.permute.xlu0 %2202
        %2204 = vrot.lane.b32.xlu0 %v2183, 32
        %v2205 = vpop.permute.xlu0 %2204
        %2206 = vrot.lane.b32.xlu0 %v2184, 32
        %v2207 = vpop.permute.xlu0 %2206
        %2208 = vrot.lane.b32.xlu0 %v2185, 32
        %v2209 = vpop.permute.xlu0 %2208
        %2218 = vst.msk [vmem:[#allocation3 + $0x8] sm:$0xff] %vm1903, %v2195
        %2219 = vst.msk [vmem:[#allocation3 + $0x40] sm:$0xff] %vm1903, %v2197
        %2220 = vst.msk [vmem:[#allocation3 + $0x78] sm:$0xff] %vm1903, %v2199
        %2221 = vst.msk [vmem:[#allocation3 + $0xb0] sm:$0xff] %vm1903, %v2201
        %2222 = vst.msk [vmem:[#allocation3 + $0xe8] sm:$0xff] %vm1903, %v2203
        %2223 = vst.msk [vmem:[#allocation3 + $0x120] sm:$0xff] %vm1903, %v2205
        %2224 = vst.msk [vmem:[#allocation3 + $0x158] sm:$0xff] %vm1903, %v2207
        %2225 = vst.msk [vmem:[#allocation3 + $0x190] sm:$0xff] %vm1903, %v2209
        %v2226 = vld [vmem:[#allocation2 + $0xf] sm:$0xff]
        %v2227 = vld [vmem:[#allocation2 + $0x17] sm:$0xff]
        %v2228 = vld [vmem:[#allocation2 + $0x1f] sm:$0xff]
        %v2229 = vld [vmem:[#allocation2 + $0x27] sm:$0xff]
        %v2230 = vld [vmem:[#allocation2 + $0x2f] sm:$0xff]
        %v2231 = vld [vmem:[#allocation2 + $0x37] sm:$0xff]
        %v2232 = vld [vmem:[#allocation2 + $0x3f] sm:$0xff]
        %v2233 = vld [vmem:[#allocation2 + $0x47] sm:$0xff]
        %v2234 = vmul.f32 %v2226, %v1826
        %v2235 = vmul.f32 %v2227, %v1831
        %v2236 = vmul.f32 %v2228, %v1836
        %v2237 = vmul.f32 %v2229, %v1841
        %v2238 = vmul.f32 %v2230, %v1846
        %v2239 = vmul.f32 %v2231, %v1851
        %v2240 = vmul.f32 %v2232, %v1856
        %v2241 = vmul.f32 %v2233, %v1861
        %2250 = vrot.lane.b32.xlu0 %v2234, 64
        %v2251 = vpop.permute.xlu0 %2250
        %2252 = vrot.lane.b32.xlu0 %v2235, 64
        %v2253 = vpop.permute.xlu0 %2252
        %2254 = vrot.lane.b32.xlu0 %v2236, 64
        %v2255 = vpop.permute.xlu0 %2254
        %2256 = vrot.lane.b32.xlu0 %v2237, 64
        %v2257 = vpop.permute.xlu0 %2256
        %2258 = vrot.lane.b32.xlu0 %v2238, 64
        %v2259 = vpop.permute.xlu0 %2258
        %2260 = vrot.lane.b32.xlu0 %v2239, 64
        %v2261 = vpop.permute.xlu0 %2260
        %2262 = vrot.lane.b32.xlu0 %v2240, 64
        %v2263 = vpop.permute.xlu0 %2262
        %2264 = vrot.lane.b32.xlu0 %v2241, 64
        %v2265 = vpop.permute.xlu0 %2264
        %2274 = vst.msk [vmem:[#allocation3 + $0x8] sm:$0xff] %vm2000, %v2251
        %2275 = vst.msk [vmem:[#allocation3 + $0x40] sm:$0xff] %vm2000, %v2253
        %2276 = vst.msk [vmem:[#allocation3 + $0x78] sm:$0xff] %vm2000, %v2255
        %2277 = vst.msk [vmem:[#allocation3 + $0xb0] sm:$0xff] %vm2000, %v2257
        %2278 = vst.msk [vmem:[#allocation3 + $0xe8] sm:$0xff] %vm2000, %v2259
        %2279 = vst.msk [vmem:[#allocation3 + $0x120] sm:$0xff] %vm2000, %v2261
        %2280 = vst.msk [vmem:[#allocation3 + $0x158] sm:$0xff] %vm2000, %v2263
        %2281 = vst.msk [vmem:[#allocation3 + $0x190] sm:$0xff] %vm2000, %v2265
        %v2282 = vld [vmem:[#allocation2 + $0x10] sm:$0xff]
        %v2283 = vld [vmem:[#allocation2 + $0x18] sm:$0xff]
        %v2284 = vld [vmem:[#allocation2 + $0x20] sm:$0xff]
        %v2285 = vld [vmem:[#allocation2 + $0x28] sm:$0xff]
        %v2286 = vld [vmem:[#allocation2 + $0x30] sm:$0xff]
        %v2287 = vld [vmem:[#allocation2 + $0x38] sm:$0xff]
        %v2288 = vld [vmem:[#allocation2 + $0x40] sm:$0xff]
        %v2289 = vld [vmem:[#allocation2 + $0x48] sm:$0xff]
        %v2290 = vmul.f32 %v2282, %v1923
        %v2291 = vmul.f32 %v2283, %v1928
        %v2292 = vmul.f32 %v2284, %v1933
        %v2293 = vmul.f32 %v2285, %v1938
        %v2294 = vmul.f32 %v2286, %v1943
        %v2295 = vmul.f32 %v2287, %v1948
        %v2296 = vmul.f32 %v2288, %v1953
        %v2297 = vmul.f32 %v2289, %v1958
        %2306 = vrot.lane.b32.xlu0 %v2290, 96
        %v2307 = vpop.permute.xlu0 %2306
        %2308 = vrot.lane.b32.xlu0 %v2291, 96
        %v2309 = vpop.permute.xlu0 %2308
        %2310 = vrot.lane.b32.xlu0 %v2292, 96
        %v2311 = vpop.permute.xlu0 %2310
        %2312 = vrot.lane.b32.xlu0 %v2293, 96
        %v2313 = vpop.permute.xlu0 %2312
        %2314 = vrot.lane.b32.xlu0 %v2294, 96
        %v2315 = vpop.permute.xlu0 %2314
        %2316 = vrot.lane.b32.xlu0 %v2295, 96
        %v2317 = vpop.permute.xlu0 %2316
        %2318 = vrot.lane.b32.xlu0 %v2296, 96
        %v2319 = vpop.permute.xlu0 %2318
        %2320 = vrot.lane.b32.xlu0 %v2297, 96
        %v2321 = vpop.permute.xlu0 %2320
        %2330 = vst.msk [vmem:[#allocation3 + $0x8] sm:$0xff] %vm2097, %v2307
        %2331 = vst.msk [vmem:[#allocation3 + $0x40] sm:$0xff] %vm2097, %v2309
        %2332 = vst.msk [vmem:[#allocation3 + $0x78] sm:$0xff] %vm2097, %v2311
        %2333 = vst.msk [vmem:[#allocation3 + $0xb0] sm:$0xff] %vm2097, %v2313
        %2334 = vst.msk [vmem:[#allocation3 + $0xe8] sm:$0xff] %vm2097, %v2315
        %2335 = vst.msk [vmem:[#allocation3 + $0x120] sm:$0xff] %vm2097, %v2317
        %2336 = vst.msk [vmem:[#allocation3 + $0x158] sm:$0xff] %vm2097, %v2319
        %2337 = vst.msk [vmem:[#allocation3 + $0x190] sm:$0xff] %vm2097, %v2321
        %v2338 = vld [vmem:[#allocation2 + $0x11] sm:$0xff]
        %v2339 = vld [vmem:[#allocation2 + $0x19] sm:$0xff]
        %v2340 = vld [vmem:[#allocation2 + $0x21] sm:$0xff]
        %v2341 = vld [vmem:[#allocation2 + $0x29] sm:$0xff]
        %v2342 = vld [vmem:[#allocation2 + $0x31] sm:$0xff]
        %v2343 = vld [vmem:[#allocation2 + $0x39] sm:$0xff]
        %v2344 = vld [vmem:[#allocation2 + $0x41] sm:$0xff]
        %v2345 = vld [vmem:[#allocation2 + $0x49] sm:$0xff]
        %v2346 = vmul.f32 %v2338, %v2020
        %v2347 = vmul.f32 %v2339, %v2025
        %v2348 = vmul.f32 %v2340, %v2030
        %v2349 = vmul.f32 %v2341, %v2035
        %v2350 = vmul.f32 %v2342, %v2040
        %v2351 = vmul.f32 %v2343, %v2045
        %v2352 = vmul.f32 %v2344, %v2050
        %v2353 = vmul.f32 %v2345, %v2055
        %2354 = vst.msk [vmem:[#allocation3 + $0x10] sm:$0xff] %vm546, %v2346
        %2355 = vst.msk [vmem:[#allocation3 + $0x48] sm:$0xff] %vm546, %v2347
        %2356 = vst.msk [vmem:[#allocation3 + $0x80] sm:$0xff] %vm546, %v2348
        %2357 = vst.msk [vmem:[#allocation3 + $0xb8] sm:$0xff] %vm546, %v2349
        %2358 = vst.msk [vmem:[#allocation3 + $0xf0] sm:$0xff] %vm546, %v2350
        %2359 = vst.msk [vmem:[#allocation3 + $0x128] sm:$0xff] %vm546, %v2351
        %2360 = vst.msk [vmem:[#allocation3 + $0x160] sm:$0xff] %vm546, %v2352
        %2361 = vst.msk [vmem:[#allocation3 + $0x198] sm:$0xff] %vm546, %v2353
        %v2362 = vld [vmem:[#allocation2 + $0x12] sm:$0xff]
        %v2363 = vld [vmem:[#allocation2 + $0x1a] sm:$0xff]
        %v2364 = vld [vmem:[#allocation2 + $0x22] sm:$0xff]
        %v2365 = vld [vmem:[#allocation2 + $0x2a] sm:$0xff]
        %v2366 = vld [vmem:[#allocation2 + $0x32] sm:$0xff]
        %v2367 = vld [vmem:[#allocation2 + $0x3a] sm:$0xff]
        %v2368 = vld [vmem:[#allocation2 + $0x42] sm:$0xff]
        %v2369 = vld [vmem:[#allocation2 + $0x4a] sm:$0xff]
        %v2370 = vmul.f32 %v2362, %v2117
        %v2371 = vmul.f32 %v2363, %v2122
        %v2372 = vmul.f32 %v2364, %v2127
        %v2373 = vmul.f32 %v2365, %v2132
        %v2374 = vmul.f32 %v2366, %v2137
        %v2375 = vmul.f32 %v2367, %v2142
        %v2376 = vmul.f32 %v2368, %v2147
        %v2377 = vmul.f32 %v2369, %v2152
        %2386 = vrot.lane.b32.xlu0 %v2370, 32
        %v2387 = vpop.permute.xlu0 %2386
        %2388 = vrot.lane.b32.xlu0 %v2371, 32
        %v2389 = vpop.permute.xlu0 %2388
        %2390 = vrot.lane.b32.xlu0 %v2372, 32
        %v2391 = vpop.permute.xlu0 %2390
        %2392 = vrot.lane.b32.xlu0 %v2373, 32
        %v2393 = vpop.permute.xlu0 %2392
        %2394 = vrot.lane.b32.xlu0 %v2374, 32
        %v2395 = vpop.permute.xlu0 %2394
        %2396 = vrot.lane.b32.xlu0 %v2375, 32
        %v2397 = vpop.permute.xlu0 %2396
        %2398 = vrot.lane.b32.xlu0 %v2376, 32
        %v2399 = vpop.permute.xlu0 %2398
        %2400 = vrot.lane.b32.xlu0 %v2377, 32
        %v2401 = vpop.permute.xlu0 %2400
        %2410 = vst.msk [vmem:[#allocation3 + $0x10] sm:$0xff] %vm1903, %v2387
        %2411 = vst.msk [vmem:[#allocation3 + $0x48] sm:$0xff] %vm1903, %v2389
        %2412 = vst.msk [vmem:[#allocation3 + $0x80] sm:$0xff] %vm1903, %v2391
        %2413 = vst.msk [vmem:[#allocation3 + $0xb8] sm:$0xff] %vm1903, %v2393
        %2414 = vst.msk [vmem:[#allocation3 + $0xf0] sm:$0xff] %vm1903, %v2395
        %2415 = vst.msk [vmem:[#allocation3 + $0x128] sm:$0xff] %vm1903, %v2397
        %2416 = vst.msk [vmem:[#allocation3 + $0x160] sm:$0xff] %vm1903, %v2399
        %2417 = vst.msk [vmem:[#allocation3 + $0x198] sm:$0xff] %vm1903, %v2401
        %v2418 = vld [vmem:[#allocation2 + $0x16] sm:$0xff]
        %v2419 = vld [vmem:[#allocation2 + $0x1e] sm:$0xff]
        %v2420 = vld [vmem:[#allocation2 + $0x26] sm:$0xff]
        %v2421 = vld [vmem:[#allocation2 + $0x2e] sm:$0xff]
        %v2422 = vld [vmem:[#allocation2 + $0x36] sm:$0xff]
        %v2423 = vld [vmem:[#allocation2 + $0x3e] sm:$0xff]
        %v2424 = vld [vmem:[#allocation2 + $0x46] sm:$0xff]
        %v2425 = vld [vmem:[#allocation2 + $0x4e] sm:$0xff]
        %v2426 = vmul.f32 %v2418, %v1762
        %v2427 = vmul.f32 %v2419, %v1767
        %v2428 = vmul.f32 %v2420, %v1772
        %v2429 = vmul.f32 %v2421, %v1777
        %v2430 = vmul.f32 %v2422, %v1782
        %v2431 = vmul.f32 %v2423, %v1787
        %v2432 = vmul.f32 %v2424, %v1792
        %v2433 = vmul.f32 %v2425, %v1797
        %2442 = vrot.lane.b32.xlu0 %v2426, 64
        %v2443 = vpop.permute.xlu0 %2442
        %2444 = vrot.lane.b32.xlu0 %v2427, 64
        %v2445 = vpop.permute.xlu0 %2444
        %2446 = vrot.lane.b32.xlu0 %v2428, 64
        %v2447 = vpop.permute.xlu0 %2446
        %2448 = vrot.lane.b32.xlu0 %v2429, 64
        %v2449 = vpop.permute.xlu0 %2448
        %2450 = vrot.lane.b32.xlu0 %v2430, 64
        %v2451 = vpop.permute.xlu0 %2450
        %2452 = vrot.lane.b32.xlu0 %v2431, 64
        %v2453 = vpop.permute.xlu0 %2452
        %2454 = vrot.lane.b32.xlu0 %v2432, 64
        %v2455 = vpop.permute.xlu0 %2454
        %2456 = vrot.lane.b32.xlu0 %v2433, 64
        %v2457 = vpop.permute.xlu0 %2456
        %2466 = vst.msk [vmem:[#allocation3 + $0x10] sm:$0xff] %vm2000, %v2443
        %2467 = vst.msk [vmem:[#allocation3 + $0x48] sm:$0xff] %vm2000, %v2445
        %2468 = vst.msk [vmem:[#allocation3 + $0x80] sm:$0xff] %vm2000, %v2447
        %2469 = vst.msk [vmem:[#allocation3 + $0xb8] sm:$0xff] %vm2000, %v2449
        %2470 = vst.msk [vmem:[#allocation3 + $0xf0] sm:$0xff] %vm2000, %v2451
        %2471 = vst.msk [vmem:[#allocation3 + $0x128] sm:$0xff] %vm2000, %v2453
        %2472 = vst.msk [vmem:[#allocation3 + $0x160] sm:$0xff] %vm2000, %v2455
        %2473 = vst.msk [vmem:[#allocation3 + $0x198] sm:$0xff] %vm2000, %v2457
        %v2474 = vld [vmem:[#allocation2 + $0x17] sm:$0xff]
        %v2475 = vld [vmem:[#allocation2 + $0x1f] sm:$0xff]
        %v2476 = vld [vmem:[#allocation2 + $0x27] sm:$0xff]
        %v2477 = vld [vmem:[#allocation2 + $0x2f] sm:$0xff]
        %v2478 = vld [vmem:[#allocation2 + $0x37] sm:$0xff]
        %v2479 = vld [vmem:[#allocation2 + $0x3f] sm:$0xff]
        %v2480 = vld [vmem:[#allocation2 + $0x47] sm:$0xff]
        %v2481 = vld [vmem:[#allocation2 + $0x4f] sm:$0xff]
        %v2482 = vmul.f32 %v2474, %v1826
        %v2483 = vmul.f32 %v2475, %v1831
        %v2484 = vmul.f32 %v2476, %v1836
        %v2485 = vmul.f32 %v2477, %v1841
        %v2486 = vmul.f32 %v2478, %v1846
        %v2487 = vmul.f32 %v2479, %v1851
        %v2488 = vmul.f32 %v2480, %v1856
        %v2489 = vmul.f32 %v2481, %v1861
        %2498 = vrot.lane.b32.xlu0 %v2482, 96
        %v2499 = vpop.permute.xlu0 %2498
        %2500 = vrot.lane.b32.xlu0 %v2483, 96
        %v2501 = vpop.permute.xlu0 %2500
        %2502 = vrot.lane.b32.xlu0 %v2484, 96
        %v2503 = vpop.permute.xlu0 %2502
        %2504 = vrot.lane.b32.xlu0 %v2485, 96
        %v2505 = vpop.permute.xlu0 %2504
        %2506 = vrot.lane.b32.xlu0 %v2486, 96
        %v2507 = vpop.permute.xlu0 %2506
        %2508 = vrot.lane.b32.xlu0 %v2487, 96
        %v2509 = vpop.permute.xlu0 %2508
        %2510 = vrot.lane.b32.xlu0 %v2488, 96
        %v2511 = vpop.permute.xlu0 %2510
        %2512 = vrot.lane.b32.xlu0 %v2489, 96
        %v2513 = vpop.permute.xlu0 %2512
        %2522 = vst.msk [vmem:[#allocation3 + $0x10] sm:$0xff] %vm2097, %v2499
        %2523 = vst.msk [vmem:[#allocation3 + $0x48] sm:$0xff] %vm2097, %v2501
        %2524 = vst.msk [vmem:[#allocation3 + $0x80] sm:$0xff] %vm2097, %v2503
        %2525 = vst.msk [vmem:[#allocation3 + $0xb8] sm:$0xff] %vm2097, %v2505
        %2526 = vst.msk [vmem:[#allocation3 + $0xf0] sm:$0xff] %vm2097, %v2507
        %2527 = vst.msk [vmem:[#allocation3 + $0x128] sm:$0xff] %vm2097, %v2509
        %2528 = vst.msk [vmem:[#allocation3 + $0x160] sm:$0xff] %vm2097, %v2511
        %2529 = vst.msk [vmem:[#allocation3 + $0x198] sm:$0xff] %vm2097, %v2513
        %v2530 = vld [vmem:[#allocation2 + $0x18] sm:$0xff]
        %v2531 = vld [vmem:[#allocation2 + $0x20] sm:$0xff]
        %v2532 = vld [vmem:[#allocation2 + $0x28] sm:$0xff]
        %v2533 = vld [vmem:[#allocation2 + $0x30] sm:$0xff]
        %v2534 = vld [vmem:[#allocation2 + $0x38] sm:$0xff]
        %v2535 = vld [vmem:[#allocation2 + $0x40] sm:$0xff]
        %v2536 = vld [vmem:[#allocation2 + $0x48] sm:$0xff]
        %v2537 = vld [vmem:[#allocation2 + $0x50] sm:$0xff]
        %v2538 = vmul.f32 %v2530, %v1923
        %v2539 = vmul.f32 %v2531, %v1928
        %v2540 = vmul.f32 %v2532, %v1933
        %v2541 = vmul.f32 %v2533, %v1938
        %v2542 = vmul.f32 %v2534, %v1943
        %v2543 = vmul.f32 %v2535, %v1948
        %v2544 = vmul.f32 %v2536, %v1953
        %v2545 = vmul.f32 %v2537, %v1958
        %2546 = vst.msk [vmem:[#allocation3 + $0x18] sm:$0xff] %vm546, %v2538
        %2547 = vst.msk [vmem:[#allocation3 + $0x50] sm:$0xff] %vm546, %v2539
        %2548 = vst.msk [vmem:[#allocation3 + $0x88] sm:$0xff] %vm546, %v2540
        %2549 = vst.msk [vmem:[#allocation3 + $0xc0] sm:$0xff] %vm546, %v2541
        %2550 = vst.msk [vmem:[#allocation3 + $0xf8] sm:$0xff] %vm546, %v2542
        %2551 = vst.msk [vmem:[#allocation3 + $0x130] sm:$0xff] %vm546, %v2543
        %2552 = vst.msk [vmem:[#allocation3 + $0x168] sm:$0xff] %vm546, %v2544
        %2553 = vst.msk [vmem:[#allocation3 + $0x1a0] sm:$0xff] %vm546, %v2545
        %v2554 = vld [vmem:[#allocation2 + $0x19] sm:$0xff]
        %v2555 = vld [vmem:[#allocation2 + $0x21] sm:$0xff]
        %v2556 = vld [vmem:[#allocation2 + $0x29] sm:$0xff]
        %v2557 = vld [vmem:[#allocation2 + $0x31] sm:$0xff]
        %v2558 = vld [vmem:[#allocation2 + $0x39] sm:$0xff]
        %v2559 = vld [vmem:[#allocation2 + $0x41] sm:$0xff]
        %v2560 = vld [vmem:[#allocation2 + $0x49] sm:$0xff]
        %v2561 = vld [vmem:[#allocation2 + $0x51] sm:$0xff]
        %v2562 = vmul.f32 %v2554, %v2020
        %v2563 = vmul.f32 %v2555, %v2025
        %v2564 = vmul.f32 %v2556, %v2030
        %v2565 = vmul.f32 %v2557, %v2035
        %v2566 = vmul.f32 %v2558, %v2040
        %v2567 = vmul.f32 %v2559, %v2045
        %v2568 = vmul.f32 %v2560, %v2050
        %v2569 = vmul.f32 %v2561, %v2055
        %2578 = vrot.lane.b32.xlu0 %v2562, 32
        %v2579 = vpop.permute.xlu0 %2578
        %2580 = vrot.lane.b32.xlu0 %v2563, 32
        %v2581 = vpop.permute.xlu0 %2580
        %2582 = vrot.lane.b32.xlu0 %v2564, 32
        %v2583 = vpop.permute.xlu0 %2582
        %2584 = vrot.lane.b32.xlu0 %v2565, 32
        %v2585 = vpop.permute.xlu0 %2584
        %2586 = vrot.lane.b32.xlu0 %v2566, 32
        %v2587 = vpop.permute.xlu0 %2586
        %2588 = vrot.lane.b32.xlu0 %v2567, 32
        %v2589 = vpop.permute.xlu0 %2588
        %2590 = vrot.lane.b32.xlu0 %v2568, 32
        %v2591 = vpop.permute.xlu0 %2590
        %2592 = vrot.lane.b32.xlu0 %v2569, 32
        %v2593 = vpop.permute.xlu0 %2592
        %2602 = vst.msk [vmem:[#allocation3 + $0x18] sm:$0xff] %vm1903, %v2579
        %2603 = vst.msk [vmem:[#allocation3 + $0x50] sm:$0xff] %vm1903, %v2581
        %2604 = vst.msk [vmem:[#allocation3 + $0x88] sm:$0xff] %vm1903, %v2583
        %2605 = vst.msk [vmem:[#allocation3 + $0xc0] sm:$0xff] %vm1903, %v2585
        %2606 = vst.msk [vmem:[#allocation3 + $0xf8] sm:$0xff] %vm1903, %v2587
        %2607 = vst.msk [vmem:[#allocation3 + $0x130] sm:$0xff] %vm1903, %v2589
        %2608 = vst.msk [vmem:[#allocation3 + $0x168] sm:$0xff] %vm1903, %v2591
        %2609 = vst.msk [vmem:[#allocation3 + $0x1a0] sm:$0xff] %vm1903, %v2593
        %v2610 = vld [vmem:[#allocation2 + $0x1a] sm:$0xff]
        %v2611 = vld [vmem:[#allocation2 + $0x22] sm:$0xff]
        %v2612 = vld [vmem:[#allocation2 + $0x2a] sm:$0xff]
        %v2613 = vld [vmem:[#allocation2 + $0x32] sm:$0xff]
        %v2614 = vld [vmem:[#allocation2 + $0x3a] sm:$0xff]
        %v2615 = vld [vmem:[#allocation2 + $0x42] sm:$0xff]
        %v2616 = vld [vmem:[#allocation2 + $0x4a] sm:$0xff]
        %v2617 = vld [vmem:[#allocation2 + $0x52] sm:$0xff]
        %v2618 = vmul.f32 %v2610, %v2117
        %v2619 = vmul.f32 %v2611, %v2122
        %v2620 = vmul.f32 %v2612, %v2127
        %v2621 = vmul.f32 %v2613, %v2132
        %v2622 = vmul.f32 %v2614, %v2137
        %v2623 = vmul.f32 %v2615, %v2142
        %v2624 = vmul.f32 %v2616, %v2147
        %v2625 = vmul.f32 %v2617, %v2152
        %2634 = vrot.lane.b32.xlu0 %v2618, 64
        %v2635 = vpop.permute.xlu0 %2634
        %2636 = vrot.lane.b32.xlu0 %v2619, 64
        %v2637 = vpop.permute.xlu0 %2636
        %2638 = vrot.lane.b32.xlu0 %v2620, 64
        %v2639 = vpop.permute.xlu0 %2638
        %2640 = vrot.lane.b32.xlu0 %v2621, 64
        %v2641 = vpop.permute.xlu0 %2640
        %2642 = vrot.lane.b32.xlu0 %v2622, 64
        %v2643 = vpop.permute.xlu0 %2642
        %2644 = vrot.lane.b32.xlu0 %v2623, 64
        %v2645 = vpop.permute.xlu0 %2644
        %2646 = vrot.lane.b32.xlu0 %v2624, 64
        %v2647 = vpop.permute.xlu0 %2646
        %2648 = vrot.lane.b32.xlu0 %v2625, 64
        %v2649 = vpop.permute.xlu0 %2648
        %2658 = vst.msk [vmem:[#allocation3 + $0x18] sm:$0xff] %vm2000, %v2635
        %2659 = vst.msk [vmem:[#allocation3 + $0x50] sm:$0xff] %vm2000, %v2637
        %2660 = vst.msk [vmem:[#allocation3 + $0x88] sm:$0xff] %vm2000, %v2639
        %2661 = vst.msk [vmem:[#allocation3 + $0xc0] sm:$0xff] %vm2000, %v2641
        %2662 = vst.msk [vmem:[#allocation3 + $0xf8] sm:$0xff] %vm2000, %v2643
        %2663 = vst.msk [vmem:[#allocation3 + $0x130] sm:$0xff] %vm2000, %v2645
        %2664 = vst.msk [vmem:[#allocation3 + $0x168] sm:$0xff] %vm2000, %v2647
        %2665 = vst.msk [vmem:[#allocation3 + $0x1a0] sm:$0xff] %vm2000, %v2649
        %v2666 = vld [vmem:[#allocation2 + $0x1e] sm:$0xff]
        %v2667 = vld [vmem:[#allocation2 + $0x26] sm:$0xff]
        %v2668 = vld [vmem:[#allocation2 + $0x2e] sm:$0xff]
        %v2669 = vld [vmem:[#allocation2 + $0x36] sm:$0xff]
        %v2670 = vld [vmem:[#allocation2 + $0x3e] sm:$0xff]
        %v2671 = vld [vmem:[#allocation2 + $0x46] sm:$0xff]
        %v2672 = vld [vmem:[#allocation2 + $0x4e] sm:$0xff]
        %v2673 = vld [vmem:[#allocation2 + $0x56] sm:$0xff]
        %v2674 = vmul.f32 %v2666, %v1762
        %v2675 = vmul.f32 %v2667, %v1767
        %v2676 = vmul.f32 %v2668, %v1772
        %v2677 = vmul.f32 %v2669, %v1777
        %v2678 = vmul.f32 %v2670, %v1782
        %v2679 = vmul.f32 %v2671, %v1787
        %v2680 = vmul.f32 %v2672, %v1792
        %v2681 = vmul.f32 %v2673, %v1797
        %2690 = vrot.lane.b32.xlu0 %v2674, 96
        %v2691 = vpop.permute.xlu0 %2690
        %2692 = vrot.lane.b32.xlu0 %v2675, 96
        %v2693 = vpop.permute.xlu0 %2692
        %2694 = vrot.lane.b32.xlu0 %v2676, 96
        %v2695 = vpop.permute.xlu0 %2694
        %2696 = vrot.lane.b32.xlu0 %v2677, 96
        %v2697 = vpop.permute.xlu0 %2696
        %2698 = vrot.lane.b32.xlu0 %v2678, 96
        %v2699 = vpop.permute.xlu0 %2698
        %2700 = vrot.lane.b32.xlu0 %v2679, 96
        %v2701 = vpop.permute.xlu0 %2700
        %2702 = vrot.lane.b32.xlu0 %v2680, 96
        %v2703 = vpop.permute.xlu0 %2702
        %2704 = vrot.lane.b32.xlu0 %v2681, 96
        %v2705 = vpop.permute.xlu0 %2704
        %2714 = vst.msk [vmem:[#allocation3 + $0x18] sm:$0xff] %vm2097, %v2691
        %2715 = vst.msk [vmem:[#allocation3 + $0x50] sm:$0xff] %vm2097, %v2693
        %2716 = vst.msk [vmem:[#allocation3 + $0x88] sm:$0xff] %vm2097, %v2695
        %2717 = vst.msk [vmem:[#allocation3 + $0xc0] sm:$0xff] %vm2097, %v2697
        %2718 = vst.msk [vmem:[#allocation3 + $0xf8] sm:$0xff] %vm2097, %v2699
        %2719 = vst.msk [vmem:[#allocation3 + $0x130] sm:$0xff] %vm2097, %v2701
        %2720 = vst.msk [vmem:[#allocation3 + $0x168] sm:$0xff] %vm2097, %v2703
        %2721 = vst.msk [vmem:[#allocation3 + $0x1a0] sm:$0xff] %vm2097, %v2705
        %v2722 = vld [vmem:[#allocation2 + $0x1f] sm:$0xff]
        %v2723 = vld [vmem:[#allocation2 + $0x27] sm:$0xff]
        %v2724 = vld [vmem:[#allocation2 + $0x2f] sm:$0xff]
        %v2725 = vld [vmem:[#allocation2 + $0x37] sm:$0xff]
        %v2726 = vld [vmem:[#allocation2 + $0x3f] sm:$0xff]
        %v2727 = vld [vmem:[#allocation2 + $0x47] sm:$0xff]
        %v2728 = vld [vmem:[#allocation2 + $0x4f] sm:$0xff]
        %v2729 = vld [vmem:[#allocation2 + $0x57] sm:$0xff]
        %v2730 = vmul.f32 %v2722, %v1826
        %v2731 = vmul.f32 %v2723, %v1831
        %v2732 = vmul.f32 %v2724, %v1836
        %v2733 = vmul.f32 %v2725, %v1841
        %v2734 = vmul.f32 %v2726, %v1846
        %v2735 = vmul.f32 %v2727, %v1851
        %v2736 = vmul.f32 %v2728, %v1856
        %v2737 = vmul.f32 %v2729, %v1861
        %2738 = vst.msk [vmem:[#allocation3 + $0x20] sm:$0xff] %vm546, %v2730
        %2739 = vst.msk [vmem:[#allocation3 + $0x58] sm:$0xff] %vm546, %v2731
        %2740 = vst.msk [vmem:[#allocation3 + $0x90] sm:$0xff] %vm546, %v2732
        %2741 = vst.msk [vmem:[#allocation3 + $0xc8] sm:$0xff] %vm546, %v2733
        %2742 = vst.msk [vmem:[#allocation3 + $0x100] sm:$0xff] %vm546, %v2734
        %2743 = vst.msk [vmem:[#allocation3 + $0x138] sm:$0xff] %vm546, %v2735
        %2744 = vst.msk [vmem:[#allocation3 + $0x170] sm:$0xff] %vm546, %v2736
        %2745 = vst.msk [vmem:[#allocation3 + $0x1a8] sm:$0xff] %vm546, %v2737
        %v2746 = vld [vmem:[#allocation2 + $0x20] sm:$0xff]
        %v2747 = vld [vmem:[#allocation2 + $0x28] sm:$0xff]
        %v2748 = vld [vmem:[#allocation2 + $0x30] sm:$0xff]
        %v2749 = vld [vmem:[#allocation2 + $0x38] sm:$0xff]
        %v2750 = vld [vmem:[#allocation2 + $0x40] sm:$0xff]
        %v2751 = vld [vmem:[#allocation2 + $0x48] sm:$0xff]
        %v2752 = vld [vmem:[#allocation2 + $0x50] sm:$0xff]
        %v2753 = vld [vmem:[#allocation2 + $0x58] sm:$0xff]
        %v2754 = vmul.f32 %v2746, %v1923
        %v2755 = vmul.f32 %v2747, %v1928
        %v2756 = vmul.f32 %v2748, %v1933
        %v2757 = vmul.f32 %v2749, %v1938
        %v2758 = vmul.f32 %v2750, %v1943
        %v2759 = vmul.f32 %v2751, %v1948
        %v2760 = vmul.f32 %v2752, %v1953
        %v2761 = vmul.f32 %v2753, %v1958
        %2770 = vrot.lane.b32.xlu0 %v2754, 32
        %v2771 = vpop.permute.xlu0 %2770
        %2772 = vrot.lane.b32.xlu0 %v2755, 32
        %v2773 = vpop.permute.xlu0 %2772
        %2774 = vrot.lane.b32.xlu0 %v2756, 32
        %v2775 = vpop.permute.xlu0 %2774
        %2776 = vrot.lane.b32.xlu0 %v2757, 32
        %v2777 = vpop.permute.xlu0 %2776
        %2778 = vrot.lane.b32.xlu0 %v2758, 32
        %v2779 = vpop.permute.xlu0 %2778
        %2780 = vrot.lane.b32.xlu0 %v2759, 32
        %v2781 = vpop.permute.xlu0 %2780
        %2782 = vrot.lane.b32.xlu0 %v2760, 32
        %v2783 = vpop.permute.xlu0 %2782
        %2784 = vrot.lane.b32.xlu0 %v2761, 32
        %v2785 = vpop.permute.xlu0 %2784
        %2794 = vst.msk [vmem:[#allocation3 + $0x20] sm:$0xff] %vm1903, %v2771
        %2795 = vst.msk [vmem:[#allocation3 + $0x58] sm:$0xff] %vm1903, %v2773
        %2796 = vst.msk [vmem:[#allocation3 + $0x90] sm:$0xff] %vm1903, %v2775
        %2797 = vst.msk [vmem:[#allocation3 + $0xc8] sm:$0xff] %vm1903, %v2777
        %2798 = vst.msk [vmem:[#allocation3 + $0x100] sm:$0xff] %vm1903, %v2779
        %2799 = vst.msk [vmem:[#allocation3 + $0x138] sm:$0xff] %vm1903, %v2781
        %2800 = vst.msk [vmem:[#allocation3 + $0x170] sm:$0xff] %vm1903, %v2783
        %2801 = vst.msk [vmem:[#allocation3 + $0x1a8] sm:$0xff] %vm1903, %v2785
        %v2802 = vld [vmem:[#allocation2 + $0x21] sm:$0xff]
        %v2803 = vld [vmem:[#allocation2 + $0x29] sm:$0xff]
        %v2804 = vld [vmem:[#allocation2 + $0x31] sm:$0xff]
        %v2805 = vld [vmem:[#allocation2 + $0x39] sm:$0xff]
        %v2806 = vld [vmem:[#allocation2 + $0x41] sm:$0xff]
        %v2807 = vld [vmem:[#allocation2 + $0x49] sm:$0xff]
        %v2808 = vld [vmem:[#allocation2 + $0x51] sm:$0xff]
        %v2809 = vld [vmem:[#allocation2 + $0x59] sm:$0xff]
        %v2810 = vmul.f32 %v2802, %v2020
        %v2811 = vmul.f32 %v2803, %v2025
        %v2812 = vmul.f32 %v2804, %v2030
        %v2813 = vmul.f32 %v2805, %v2035
        %v2814 = vmul.f32 %v2806, %v2040
        %v2815 = vmul.f32 %v2807, %v2045
        %v2816 = vmul.f32 %v2808, %v2050
        %v2817 = vmul.f32 %v2809, %v2055
        %2826 = vrot.lane.b32.xlu0 %v2810, 64
        %v2827 = vpop.permute.xlu0 %2826
        %2828 = vrot.lane.b32.xlu0 %v2811, 64
        %v2829 = vpop.permute.xlu0 %2828
        %2830 = vrot.lane.b32.xlu0 %v2812, 64
        %v2831 = vpop.permute.xlu0 %2830
        %2832 = vrot.lane.b32.xlu0 %v2813, 64
        %v2833 = vpop.permute.xlu0 %2832
        %2834 = vrot.lane.b32.xlu0 %v2814, 64
        %v2835 = vpop.permute.xlu0 %2834
        %2836 = vrot.lane.b32.xlu0 %v2815, 64
        %v2837 = vpop.permute.xlu0 %2836
        %2838 = vrot.lane.b32.xlu0 %v2816, 64
        %v2839 = vpop.permute.xlu0 %2838
        %2840 = vrot.lane.b32.xlu0 %v2817, 64
        %v2841 = vpop.permute.xlu0 %2840
        %2850 = vst.msk [vmem:[#allocation3 + $0x20] sm:$0xff] %vm2000, %v2827
        %2851 = vst.msk [vmem:[#allocation3 + $0x58] sm:$0xff] %vm2000, %v2829
        %2852 = vst.msk [vmem:[#allocation3 + $0x90] sm:$0xff] %vm2000, %v2831
        %2853 = vst.msk [vmem:[#allocation3 + $0xc8] sm:$0xff] %vm2000, %v2833
        %2854 = vst.msk [vmem:[#allocation3 + $0x100] sm:$0xff] %vm2000, %v2835
        %2855 = vst.msk [vmem:[#allocation3 + $0x138] sm:$0xff] %vm2000, %v2837
        %2856 = vst.msk [vmem:[#allocation3 + $0x170] sm:$0xff] %vm2000, %v2839
        %2857 = vst.msk [vmem:[#allocation3 + $0x1a8] sm:$0xff] %vm2000, %v2841
        %v2858 = vld [vmem:[#allocation2 + $0x22] sm:$0xff]
        %v2859 = vld [vmem:[#allocation2 + $0x2a] sm:$0xff]
        %v2860 = vld [vmem:[#allocation2 + $0x32] sm:$0xff]
        %v2861 = vld [vmem:[#allocation2 + $0x3a] sm:$0xff]
        %v2862 = vld [vmem:[#allocation2 + $0x42] sm:$0xff]
        %v2863 = vld [vmem:[#allocation2 + $0x4a] sm:$0xff]
        %v2864 = vld [vmem:[#allocation2 + $0x52] sm:$0xff]
        %v2865 = vld [vmem:[#allocation2 + $0x5a] sm:$0xff]
        %v2866 = vmul.f32 %v2858, %v2117
        %v2867 = vmul.f32 %v2859, %v2122
        %v2868 = vmul.f32 %v2860, %v2127
        %v2869 = vmul.f32 %v2861, %v2132
        %v2870 = vmul.f32 %v2862, %v2137
        %v2871 = vmul.f32 %v2863, %v2142
        %v2872 = vmul.f32 %v2864, %v2147
        %v2873 = vmul.f32 %v2865, %v2152
        %2882 = vrot.lane.b32.xlu0 %v2866, 96
        %v2883 = vpop.permute.xlu0 %2882
        %2884 = vrot.lane.b32.xlu0 %v2867, 96
        %v2885 = vpop.permute.xlu0 %2884
        %2886 = vrot.lane.b32.xlu0 %v2868, 96
        %v2887 = vpop.permute.xlu0 %2886
        %2888 = vrot.lane.b32.xlu0 %v2869, 96
        %v2889 = vpop.permute.xlu0 %2888
        %2890 = vrot.lane.b32.xlu0 %v2870, 96
        %v2891 = vpop.permute.xlu0 %2890
        %2892 = vrot.lane.b32.xlu0 %v2871, 96
        %v2893 = vpop.permute.xlu0 %2892
        %2894 = vrot.lane.b32.xlu0 %v2872, 96
        %v2895 = vpop.permute.xlu0 %2894
        %2896 = vrot.lane.b32.xlu0 %v2873, 96
        %v2897 = vpop.permute.xlu0 %2896
        %2906 = vst.msk [vmem:[#allocation3 + $0x20] sm:$0xff] %vm2097, %v2883
        %2907 = vst.msk [vmem:[#allocation3 + $0x58] sm:$0xff] %vm2097, %v2885
        %2908 = vst.msk [vmem:[#allocation3 + $0x90] sm:$0xff] %vm2097, %v2887
        %2909 = vst.msk [vmem:[#allocation3 + $0xc8] sm:$0xff] %vm2097, %v2889
        %2910 = vst.msk [vmem:[#allocation3 + $0x100] sm:$0xff] %vm2097, %v2891
        %2911 = vst.msk [vmem:[#allocation3 + $0x138] sm:$0xff] %vm2097, %v2893
        %2912 = vst.msk [vmem:[#allocation3 + $0x170] sm:$0xff] %vm2097, %v2895
        %2913 = vst.msk [vmem:[#allocation3 + $0x1a8] sm:$0xff] %vm2097, %v2897
        %v2914 = vld [vmem:[#allocation2 + $0x26] sm:$0xff]
        %v2915 = vld [vmem:[#allocation2 + $0x2e] sm:$0xff]
        %v2916 = vld [vmem:[#allocation2 + $0x36] sm:$0xff]
        %v2917 = vld [vmem:[#allocation2 + $0x3e] sm:$0xff]
        %v2918 = vld [vmem:[#allocation2 + $0x46] sm:$0xff]
        %v2919 = vld [vmem:[#allocation2 + $0x4e] sm:$0xff]
        %v2920 = vld [vmem:[#allocation2 + $0x56] sm:$0xff]
        %v2921 = vld [vmem:[#allocation2 + $0x5e] sm:$0xff]
        %v2922 = vmul.f32 %v2914, %v1762
        %v2923 = vmul.f32 %v2915, %v1767
        %v2924 = vmul.f32 %v2916, %v1772
        %v2925 = vmul.f32 %v2917, %v1777
        %v2926 = vmul.f32 %v2918, %v1782
        %v2927 = vmul.f32 %v2919, %v1787
        %v2928 = vmul.f32 %v2920, %v1792
        %v2929 = vmul.f32 %v2921, %v1797
        %2930 = vst.msk [vmem:[#allocation3 + $0x28] sm:$0xff] %vm546, %v2922
        %2931 = vst.msk [vmem:[#allocation3 + $0x60] sm:$0xff] %vm546, %v2923
        %2932 = vst.msk [vmem:[#allocation3 + $0x98] sm:$0xff] %vm546, %v2924
        %2933 = vst.msk [vmem:[#allocation3 + $0xd0] sm:$0xff] %vm546, %v2925
        %2934 = vst.msk [vmem:[#allocation3 + $0x108] sm:$0xff] %vm546, %v2926
        %2935 = vst.msk [vmem:[#allocation3 + $0x140] sm:$0xff] %vm546, %v2927
        %2936 = vst.msk [vmem:[#allocation3 + $0x178] sm:$0xff] %vm546, %v2928
        %2937 = vst.msk [vmem:[#allocation3 + $0x1b0] sm:$0xff] %vm546, %v2929
        %v2938 = vld [vmem:[#allocation2 + $0x27] sm:$0xff]
        %v2939 = vld [vmem:[#allocation2 + $0x2f] sm:$0xff]
        %v2940 = vld [vmem:[#allocation2 + $0x37] sm:$0xff]
        %v2941 = vld [vmem:[#allocation2 + $0x3f] sm:$0xff]
        %v2942 = vld [vmem:[#allocation2 + $0x47] sm:$0xff]
        %v2943 = vld [vmem:[#allocation2 + $0x4f] sm:$0xff]
        %v2944 = vld [vmem:[#allocation2 + $0x57] sm:$0xff]
        %v2945 = vld [vmem:[#allocation2 + $0x5f] sm:$0xff]
        %v2946 = vmul.f32 %v2938, %v1826
        %v2947 = vmul.f32 %v2939, %v1831
        %v2948 = vmul.f32 %v2940, %v1836
        %v2949 = vmul.f32 %v2941, %v1841
        %v2950 = vmul.f32 %v2942, %v1846
        %v2951 = vmul.f32 %v2943, %v1851
        %v2952 = vmul.f32 %v2944, %v1856
        %v2953 = vmul.f32 %v2945, %v1861
        %2962 = vrot.lane.b32.xlu0 %v2946, 32
        %v2963 = vpop.permute.xlu0 %2962
        %2964 = vrot.lane.b32.xlu0 %v2947, 32
        %v2965 = vpop.permute.xlu0 %2964
        %2966 = vrot.lane.b32.xlu0 %v2948, 32
        %v2967 = vpop.permute.xlu0 %2966
        %2968 = vrot.lane.b32.xlu0 %v2949, 32
        %v2969 = vpop.permute.xlu0 %2968
        %2970 = vrot.lane.b32.xlu0 %v2950, 32
        %v2971 = vpop.permute.xlu0 %2970
        %2972 = vrot.lane.b32.xlu0 %v2951, 32
        %v2973 = vpop.permute.xlu0 %2972
        %2974 = vrot.lane.b32.xlu0 %v2952, 32
        %v2975 = vpop.permute.xlu0 %2974
        %2976 = vrot.lane.b32.xlu0 %v2953, 32
        %v2977 = vpop.permute.xlu0 %2976
        %2986 = vst.msk [vmem:[#allocation3 + $0x28] sm:$0xff] %vm1903, %v2963
        %2987 = vst.msk [vmem:[#allocation3 + $0x60] sm:$0xff] %vm1903, %v2965
        %2988 = vst.msk [vmem:[#allocation3 + $0x98] sm:$0xff] %vm1903, %v2967
        %2989 = vst.msk [vmem:[#allocation3 + $0xd0] sm:$0xff] %vm1903, %v2969
        %2990 = vst.msk [vmem:[#allocation3 + $0x108] sm:$0xff] %vm1903, %v2971
        %2991 = vst.msk [vmem:[#allocation3 + $0x140] sm:$0xff] %vm1903, %v2973
        %2992 = vst.msk [vmem:[#allocation3 + $0x178] sm:$0xff] %vm1903, %v2975
        %2993 = vst.msk [vmem:[#allocation3 + $0x1b0] sm:$0xff] %vm1903, %v2977
        %v2994 = vld [vmem:[#allocation2 + $0x28] sm:$0xff]
        %v2995 = vld [vmem:[#allocation2 + $0x30] sm:$0xff]
        %v2996 = vld [vmem:[#allocation2 + $0x38] sm:$0xff]
        %v2997 = vld [vmem:[#allocation2 + $0x40] sm:$0xff]
        %v2998 = vld [vmem:[#allocation2 + $0x48] sm:$0xff]
        %v2999 = vld [vmem:[#allocation2 + $0x50] sm:$0xff]
        %v3000 = vld [vmem:[#allocation2 + $0x58] sm:$0xff]
        %v3001 = vld [vmem:[#allocation2 + $0x60] sm:$0xff]
        %v3002 = vmul.f32 %v2994, %v1923
        %v3003 = vmul.f32 %v2995, %v1928
        %v3004 = vmul.f32 %v2996, %v1933
        %v3005 = vmul.f32 %v2997, %v1938
        %v3006 = vmul.f32 %v2998, %v1943
        %v3007 = vmul.f32 %v2999, %v1948
        %v3008 = vmul.f32 %v3000, %v1953
        %v3009 = vmul.f32 %v3001, %v1958
        %3018 = vrot.lane.b32.xlu0 %v3002, 64
        %v3019 = vpop.permute.xlu0 %3018
        %3020 = vrot.lane.b32.xlu0 %v3003, 64
        %v3021 = vpop.permute.xlu0 %3020
        %3022 = vrot.lane.b32.xlu0 %v3004, 64
        %v3023 = vpop.permute.xlu0 %3022
        %3024 = vrot.lane.b32.xlu0 %v3005, 64
        %v3025 = vpop.permute.xlu0 %3024
        %3026 = vrot.lane.b32.xlu0 %v3006, 64
        %v3027 = vpop.permute.xlu0 %3026
        %3028 = vrot.lane.b32.xlu0 %v3007, 64
        %v3029 = vpop.permute.xlu0 %3028
        %3030 = vrot.lane.b32.xlu0 %v3008, 64
        %v3031 = vpop.permute.xlu0 %3030
        %3032 = vrot.lane.b32.xlu0 %v3009, 64
        %v3033 = vpop.permute.xlu0 %3032
        %3042 = vst.msk [vmem:[#allocation3 + $0x28] sm:$0xff] %vm2000, %v3019
        %3043 = vst.msk [vmem:[#allocation3 + $0x60] sm:$0xff] %vm2000, %v3021
        %3044 = vst.msk [vmem:[#allocation3 + $0x98] sm:$0xff] %vm2000, %v3023
        %3045 = vst.msk [vmem:[#allocation3 + $0xd0] sm:$0xff] %vm2000, %v3025
        %3046 = vst.msk [vmem:[#allocation3 + $0x108] sm:$0xff] %vm2000, %v3027
        %3047 = vst.msk [vmem:[#allocation3 + $0x140] sm:$0xff] %vm2000, %v3029
        %3048 = vst.msk [vmem:[#allocation3 + $0x178] sm:$0xff] %vm2000, %v3031
        %3049 = vst.msk [vmem:[#allocation3 + $0x1b0] sm:$0xff] %vm2000, %v3033
        %v3050 = vld [vmem:[#allocation2 + $0x29] sm:$0xff]
        %v3051 = vld [vmem:[#allocation2 + $0x31] sm:$0xff]
        %v3052 = vld [vmem:[#allocation2 + $0x39] sm:$0xff]
        %v3053 = vld [vmem:[#allocation2 + $0x41] sm:$0xff]
        %v3054 = vld [vmem:[#allocation2 + $0x49] sm:$0xff]
        %v3055 = vld [vmem:[#allocation2 + $0x51] sm:$0xff]
        %v3056 = vld [vmem:[#allocation2 + $0x59] sm:$0xff]
        %v3057 = vld [vmem:[#allocation2 + $0x61] sm:$0xff]
        %v3058 = vmul.f32 %v3050, %v2020
        %v3059 = vmul.f32 %v3051, %v2025
        %v3060 = vmul.f32 %v3052, %v2030
        %v3061 = vmul.f32 %v3053, %v2035
        %v3062 = vmul.f32 %v3054, %v2040
        %v3063 = vmul.f32 %v3055, %v2045
        %v3064 = vmul.f32 %v3056, %v2050
        %v3065 = vmul.f32 %v3057, %v2055
        %3074 = vrot.lane.b32.xlu0 %v3058, 96
        %v3075 = vpop.permute.xlu0 %3074
        %3076 = vrot.lane.b32.xlu0 %v3059, 96
        %v3077 = vpop.permute.xlu0 %3076
        %3078 = vrot.lane.b32.xlu0 %v3060, 96
        %v3079 = vpop.permute.xlu0 %3078
        %3080 = vrot.lane.b32.xlu0 %v3061, 96
        %v3081 = vpop.permute.xlu0 %3080
        %3082 = vrot.lane.b32.xlu0 %v3062, 96
        %v3083 = vpop.permute.xlu0 %3082
        %3084 = vrot.lane.b32.xlu0 %v3063, 96
        %v3085 = vpop.permute.xlu0 %3084
        %3086 = vrot.lane.b32.xlu0 %v3064, 96
        %v3087 = vpop.permute.xlu0 %3086
        %3088 = vrot.lane.b32.xlu0 %v3065, 96
        %v3089 = vpop.permute.xlu0 %3088
        %3098 = vst.msk [vmem:[#allocation3 + $0x28] sm:$0xff] %vm2097, %v3075
        %3099 = vst.msk [vmem:[#allocation3 + $0x60] sm:$0xff] %vm2097, %v3077
        %3100 = vst.msk [vmem:[#allocation3 + $0x98] sm:$0xff] %vm2097, %v3079
        %3101 = vst.msk [vmem:[#allocation3 + $0xd0] sm:$0xff] %vm2097, %v3081
        %3102 = vst.msk [vmem:[#allocation3 + $0x108] sm:$0xff] %vm2097, %v3083
        %3103 = vst.msk [vmem:[#allocation3 + $0x140] sm:$0xff] %vm2097, %v3085
        %3104 = vst.msk [vmem:[#allocation3 + $0x178] sm:$0xff] %vm2097, %v3087
        %3105 = vst.msk [vmem:[#allocation3 + $0x1b0] sm:$0xff] %vm2097, %v3089
        %v3106 = vld [vmem:[#allocation2 + $0x2a] sm:$0xff]
        %v3107 = vld [vmem:[#allocation2 + $0x32] sm:$0xff]
        %v3108 = vld [vmem:[#allocation2 + $0x3a] sm:$0xff]
        %v3109 = vld [vmem:[#allocation2 + $0x42] sm:$0xff]
        %v3110 = vld [vmem:[#allocation2 + $0x4a] sm:$0xff]
        %v3111 = vld [vmem:[#allocation2 + $0x52] sm:$0xff]
        %v3112 = vld [vmem:[#allocation2 + $0x5a] sm:$0xff]
        %v3113 = vld [vmem:[#allocation2 + $0x62] sm:$0xff]
        %v3114 = vmul.f32 %v3106, %v2117
        %v3115 = vmul.f32 %v3107, %v2122
        %v3116 = vmul.f32 %v3108, %v2127
        %v3117 = vmul.f32 %v3109, %v2132
        %v3118 = vmul.f32 %v3110, %v2137
        %v3119 = vmul.f32 %v3111, %v2142
        %v3120 = vmul.f32 %v3112, %v2147
        %v3121 = vmul.f32 %v3113, %v2152
        %3122 = vst.msk [vmem:[#allocation3 + $0x30] sm:$0xff] %vm546, %v3114
        %3123 = vst.msk [vmem:[#allocation3 + $0x68] sm:$0xff] %vm546, %v3115
        %3124 = vst.msk [vmem:[#allocation3 + $0xa0] sm:$0xff] %vm546, %v3116
        %3125 = vst.msk [vmem:[#allocation3 + $0xd8] sm:$0xff] %vm546, %v3117
        %3126 = vst.msk [vmem:[#allocation3 + $0x110] sm:$0xff] %vm546, %v3118
        %3127 = vst.msk [vmem:[#allocation3 + $0x148] sm:$0xff] %vm546, %v3119
        %3128 = vst.msk [vmem:[#allocation3 + $0x180] sm:$0xff] %vm546, %v3120
        %3129 = vst.msk [vmem:[#allocation3 + $0x1b8] sm:$0xff] %vm546, %v3121
        %v3130 = vld [vmem:[#allocation3] sm:$0xff]
        %v3131 = vld [vmem:[#allocation3 + $0x8] sm:$0xff]
        %v3132 = vld [vmem:[#allocation3 + $0x10] sm:$0xff]
        %v3133 = vld [vmem:[#allocation3 + $0x18] sm:$0xff]
        %v3134 = vld [vmem:[#allocation3 + $0x20] sm:$0xff]
        %v3135 = vld [vmem:[#allocation3 + $0x28] sm:$0xff]
        %v3136 = vld [vmem:[#allocation3 + $0x30] sm:$0xff]
        %v3137 = vld [vmem:[#allocation3 + $0x38] sm:$0xff]
        %v3138 = vld [vmem:[#allocation3 + $0x40] sm:$0xff]
        %v3139 = vld [vmem:[#allocation3 + $0x48] sm:$0xff]
        %v3140 = vld [vmem:[#allocation3 + $0x50] sm:$0xff]
        %v3141 = vld [vmem:[#allocation3 + $0x58] sm:$0xff]
        %v3142 = vld [vmem:[#allocation3 + $0x60] sm:$0xff]
        %v3143 = vld [vmem:[#allocation3 + $0x68] sm:$0xff]
        %v3144 = vld [vmem:[#allocation3 + $0x70] sm:$0xff]
        %v3145 = vld [vmem:[#allocation3 + $0x78] sm:$0xff]
        %v3146 = vld [vmem:[#allocation3 + $0x80] sm:$0xff]
        %v3147 = vld [vmem:[#allocation3 + $0x88] sm:$0xff]
        %v3148 = vld [vmem:[#allocation3 + $0x90] sm:$0xff]
        %v3149 = vld [vmem:[#allocation3 + $0x98] sm:$0xff]
        %v3150 = vld [vmem:[#allocation3 + $0xa0] sm:$0xff]
        %v3151 = vld [vmem:[#allocation3 + $0xa8] sm:$0xff]
        %v3152 = vld [vmem:[#allocation3 + $0xb0] sm:$0xff]
        %v3153 = vld [vmem:[#allocation3 + $0xb8] sm:$0xff]
        %v3154 = vld [vmem:[#allocation3 + $0xc0] sm:$0xff]
        %v3155 = vld [vmem:[#allocation3 + $0xc8] sm:$0xff]
        %v3156 = vld [vmem:[#allocation3 + $0xd0] sm:$0xff]
        %v3157 = vld [vmem:[#allocation3 + $0xd8] sm:$0xff]
        %v3158 = vld [vmem:[#allocation3 + $0xe0] sm:$0xff]
        %v3159 = vld [vmem:[#allocation3 + $0xe8] sm:$0xff]
        %v3160 = vld [vmem:[#allocation3 + $0xf0] sm:$0xff]
        %v3161 = vld [vmem:[#allocation3 + $0xf8] sm:$0xff]
        %v3162 = vld [vmem:[#allocation3 + $0x100] sm:$0xff]
        %v3163 = vld [vmem:[#allocation3 + $0x108] sm:$0xff]
        %v3164 = vld [vmem:[#allocation3 + $0x110] sm:$0xff]
        %v3165 = vld [vmem:[#allocation3 + $0x118] sm:$0xff]
        %v3166 = vld [vmem:[#allocation3 + $0x120] sm:$0xff]
        %v3167 = vld [vmem:[#allocation3 + $0x128] sm:$0xff]
        %v3168 = vld [vmem:[#allocation3 + $0x130] sm:$0xff]
        %v3169 = vld [vmem:[#allocation3 + $0x138] sm:$0xff]
        %v3170 = vld [vmem:[#allocation3 + $0x140] sm:$0xff]
        %v3171 = vld [vmem:[#allocation3 + $0x148] sm:$0xff]
        %v3172 = vld [vmem:[#allocation3 + $0x150] sm:$0xff]
        %v3173 = vld [vmem:[#allocation3 + $0x158] sm:$0xff]
        %v3174 = vld [vmem:[#allocation3 + $0x160] sm:$0xff]
        %v3175 = vld [vmem:[#allocation3 + $0x168] sm:$0xff]
        %v3176 = vld [vmem:[#allocation3 + $0x170] sm:$0xff]
        %v3177 = vld [vmem:[#allocation3 + $0x178] sm:$0xff]
        %v3178 = vld [vmem:[#allocation3 + $0x180] sm:$0xff]
        %v3179 = vld [vmem:[#allocation3 + $0x188] sm:$0xff]
        %v3180 = vld [vmem:[#allocation3 + $0x190] sm:$0xff]
        %v3181 = vld [vmem:[#allocation3 + $0x198] sm:$0xff]
        %v3182 = vld [vmem:[#allocation3 + $0x1a0] sm:$0xff]
        %v3183 = vld [vmem:[#allocation3 + $0x1a8] sm:$0xff]
        %v3184 = vld [vmem:[#allocation3 + $0x1b0] sm:$0xff]
        %v3185 = vld [vmem:[#allocation3 + $0x1b8] sm:$0xff]
        %v3186 = vld [vmem:[%s11] sm:$0xff]
        %v3187 = vld [vmem:[%s11 + $0x8] sm:$0xff]
        %v3188 = vld [vmem:[%s11 + $0x10] sm:$0xff]
        %v3189 = vld [vmem:[%s11 + $0x18] sm:$0xff]
        %v3190 = vld [vmem:[%s11 + $0x20] sm:$0xff]
        %v3191 = vld [vmem:[%s11 + $0x28] sm:$0xff]
        %v3192 = vld [vmem:[%s11 + $0x30] sm:$0xff]
        %v3193 = vld [vmem:[%s11 + $0x38] sm:$0xff]
        %v3194 = vld [vmem:[%s11 + $0x40] sm:$0xff]
        %v3195 = vld [vmem:[%s11 + $0x48] sm:$0xff]
        %v3196 = vld [vmem:[%s11 + $0x50] sm:$0xff]
        %v3197 = vld [vmem:[%s11 + $0x58] sm:$0xff]
        %v3198 = vld [vmem:[%s11 + $0x60] sm:$0xff]
        %v3199 = vld [vmem:[%s11 + $0x68] sm:$0xff]
        %v3200 = vld [vmem:[%s11 + $0x70] sm:$0xff]
        %v3201 = vld [vmem:[%s11 + $0x78] sm:$0xff]
        %v3202 = vld [vmem:[%s11 + $0x80] sm:$0xff]
        %v3203 = vld [vmem:[%s11 + $0x88] sm:$0xff]
        %v3204 = vld [vmem:[%s11 + $0x90] sm:$0xff]
        %v3205 = vld [vmem:[%s11 + $0x98] sm:$0xff]
        %v3206 = vld [vmem:[%s11 + $0xa0] sm:$0xff]
        %v3207 = vld [vmem:[%s11 + $0xa8] sm:$0xff]
        %v3208 = vld [vmem:[%s11 + $0xb0] sm:$0xff]
        %v3209 = vld [vmem:[%s11 + $0xb8] sm:$0xff]
        %v3210 = vld [vmem:[%s11 + $0xc0] sm:$0xff]
        %v3211 = vld [vmem:[%s11 + $0xc8] sm:$0xff]
        %v3212 = vld [vmem:[%s11 + $0xd0] sm:$0xff]
        %v3213 = vld [vmem:[%s11 + $0xd8] sm:$0xff]
        %v3214 = vld [vmem:[%s11 + $0xe0] sm:$0xff]
        %v3215 = vld [vmem:[%s11 + $0xe8] sm:$0xff]
        %v3216 = vld [vmem:[%s11 + $0xf0] sm:$0xff]
        %v3217 = vld [vmem:[%s11 + $0xf8] sm:$0xff]
        %v3218 = vld [vmem:[%s11 + $0x100] sm:$0xff]
        %v3219 = vld [vmem:[%s11 + $0x108] sm:$0xff]
        %v3220 = vld [vmem:[%s11 + $0x110] sm:$0xff]
        %v3221 = vld [vmem:[%s11 + $0x118] sm:$0xff]
        %v3222 = vld [vmem:[%s11 + $0x120] sm:$0xff]
        %v3223 = vld [vmem:[%s11 + $0x128] sm:$0xff]
        %v3224 = vld [vmem:[%s11 + $0x130] sm:$0xff]
        %v3225 = vld [vmem:[%s11 + $0x138] sm:$0xff]
        %v3226 = vld [vmem:[%s11 + $0x140] sm:$0xff]
        %v3227 = vld [vmem:[%s11 + $0x148] sm:$0xff]
        %v3228 = vld [vmem:[%s11 + $0x150] sm:$0xff]
        %v3229 = vld [vmem:[%s11 + $0x158] sm:$0xff]
        %v3230 = vld [vmem:[%s11 + $0x160] sm:$0xff]
        %v3231 = vld [vmem:[%s11 + $0x168] sm:$0xff]
        %v3232 = vld [vmem:[%s11 + $0x170] sm:$0xff]
        %v3233 = vld [vmem:[%s11 + $0x178] sm:$0xff]
        %v3234 = vld [vmem:[%s11 + $0x180] sm:$0xff]
        %v3235 = vld [vmem:[%s11 + $0x188] sm:$0xff]
        %v3236 = vld [vmem:[%s11 + $0x190] sm:$0xff]
        %v3237 = vld [vmem:[%s11 + $0x198] sm:$0xff]
        %v3238 = vld [vmem:[%s11 + $0x1a0] sm:$0xff]
        %v3239 = vld [vmem:[%s11 + $0x1a8] sm:$0xff]
        %v3240 = vld [vmem:[%s11 + $0x1b0] sm:$0xff]
        %v3241 = vld [vmem:[%s11 + $0x1b8] sm:$0xff]
        %v3242 = vld [vmem:[%s11 + $0x1c0] sm:$0xff]
        %v3243 = vld [vmem:[%s11 + $0x1c8] sm:$0xff]
        %v3244 = vld [vmem:[%s11 + $0x1d0] sm:$0xff]
        %v3245 = vld [vmem:[%s11 + $0x1d8] sm:$0xff]
        %v3246 = vld [vmem:[%s11 + $0x1e0] sm:$0xff]
        %v3247 = vld [vmem:[%s11 + $0x1e8] sm:$0xff]
        %v3248 = vld [vmem:[%s11 + $0x1f0] sm:$0xff]
        %v3249 = vld [vmem:[%s11 + $0x1f8] sm:$0xff]
        %v3250 = vld [vmem:[%s11 + $0x200] sm:$0xff]
        %v3251 = vld [vmem:[%s11 + $0x208] sm:$0xff]
        %v3252 = vld [vmem:[%s11 + $0x210] sm:$0xff]
        %v3253 = vld [vmem:[%s11 + $0x218] sm:$0xff]
        %v3254 = vld [vmem:[%s11 + $0x220] sm:$0xff]
        %v3255 = vld [vmem:[%s11 + $0x228] sm:$0xff]
        %v3256 = vld [vmem:[%s11 + $0x230] sm:$0xff]
        %v3257 = vld [vmem:[%s11 + $0x238] sm:$0xff]
        %v3258 = vld [vmem:[%s11 + $0x240] sm:$0xff]
        %v3259 = vld [vmem:[%s11 + $0x248] sm:$0xff]
        %v3260 = vld [vmem:[%s11 + $0x250] sm:$0xff]
        %v3261 = vld [vmem:[%s11 + $0x258] sm:$0xff]
        %v3262 = vld [vmem:[%s11 + $0x260] sm:$0xff]
        %v3263 = vld [vmem:[%s11 + $0x268] sm:$0xff]
        %v3264 = vld [vmem:[%s11 + $0x270] sm:$0xff]
        %v3265 = vld [vmem:[%s11 + $0x278] sm:$0xff]
        %v3266 = vld [vmem:[%s11 + $0x280] sm:$0xff]
        %v3267 = vld [vmem:[%s11 + $0x288] sm:$0xff]
        %v3268 = vld [vmem:[%s11 + $0x290] sm:$0xff]
        %v3269 = vld [vmem:[%s11 + $0x298] sm:$0xff]
        %v3270 = vld [vmem:[%s11 + $0x2a0] sm:$0xff]
        %v3271 = vld [vmem:[%s11 + $0x2a8] sm:$0xff]
        %v3272 = vld [vmem:[%s11 + $0x2b0] sm:$0xff]
        %v3273 = vld [vmem:[%s11 + $0x2b8] sm:$0xff]
        %v3274 = vld [vmem:[%s11 + $0x2c0] sm:$0xff]
        %v3275 = vld [vmem:[%s11 + $0x2c8] sm:$0xff]
        %v3276 = vld [vmem:[%s11 + $0x2d0] sm:$0xff]
        %v3277 = vld [vmem:[%s11 + $0x2d8] sm:$0xff]
        %v3278 = vld [vmem:[%s11 + $0x2e0] sm:$0xff]
        %v3279 = vld [vmem:[%s11 + $0x2e8] sm:$0xff]
        %v3280 = vld [vmem:[%s11 + $0x2f0] sm:$0xff]
        %v3281 = vld [vmem:[%s11 + $0x2f8] sm:$0xff]
        %v3282 = vld [vmem:[%s11 + $0x300] sm:$0xff]
        %v3283 = vld [vmem:[%s11 + $0x308] sm:$0xff]
        %v3284 = vld [vmem:[%s11 + $0x310] sm:$0xff]
        %v3285 = vld [vmem:[%s11 + $0x318] sm:$0xff]
        %v3286 = vld [vmem:[%s12] sm:$0x1]
        %v3288 = vlaneseq
        %v3289 = vshrl.u32 %v3288, 7
        %v3290 = vsub.s32 0, %v3289
        %v3291 = vrot.slane %v3286, %v3290
        %v3294 = vsel %vm546, %v3136, 0
        %v3297 = vsel %vm546, %v3143, 0
        %v3300 = vsel %vm546, %v3150, 0
        %v3303 = vsel %vm546, %v3157, 0
        %v3306 = vsel %vm546, %v3164, 0
        %v3309 = vsel %vm546, %v3171, 0
        %v3312 = vsel %vm546, %v3178, 0
        %v3315 = vsel %vm546, %v3185, 0
        %3317 = vmatprep.subr.mxu0 0.0
        %3318 = vmatpush1.msra.mxu0 %v3201
        %3319 = vmatprep.subr.mxu0 0.0
        %3320 = vmatpush1.msra.mxu0 %v3200
        %3321 = vmatprep.subr.mxu0 0.0
        %3322 = vmatpush1.msra.mxu0 %v3199
        %3323 = vmatprep.subr.mxu0 0.0
        %3324 = vmatpush1.msra.mxu0 %v3198
        %3325 = vmatprep.subr.mxu0 0.0
        %3326 = vmatpush1.msra.mxu0 %v3197
        %3327 = vmatprep.subr.mxu0 0.0
        %3328 = vmatpush1.msra.mxu0 %v3196
        %3329 = vmatprep.subr.mxu0 0.0
        %3330 = vmatpush1.msra.mxu0 %v3195
        %3331 = vmatprep.subr.mxu0 0.0
        %3332 = vmatpush1.msra.mxu0 %v3194
        %3333 = vmatprep.subr.mxu0 0.0
        %3334 = vmatpush1.msra.mxu0 %v3193
        %3335 = vmatprep.subr.mxu0 0.0
        %3336 = vmatpush1.msra.mxu0 %v3192
        %3337 = vmatprep.subr.mxu0 0.0
        %3338 = vmatpush1.msra.mxu0 %v3191
        %3339 = vmatprep.subr.mxu0 0.0
        %3340 = vmatpush1.msra.mxu0 %v3190
        %3341 = vmatprep.subr.mxu0 0.0
        %3342 = vmatpush1.msra.mxu0 %v3189
        %3343 = vmatprep.subr.mxu0 0.0
        %3344 = vmatpush1.msra.mxu0 %v3188
        %3345 = vmatprep.subr.mxu0 0.0
        %3346 = vmatpush1.msra.mxu0 %v3187
        %3347 = vmatprep.subr.mxu0 0.0
        %3348 = vmatpush1.msra.mxu0 %v3186
        %3349 = vmatprep.subr.mxu0 0.0
        %3350 = vmatpush2.msra.mxu0 %v3217
        %3351 = vmatprep.subr.mxu0 0.0
        %3352 = vmatpush2.msra.mxu0 %v3216
        %3353 = vmatprep.subr.mxu0 0.0
        %3354 = vmatpush2.msra.mxu0 %v3215
        %3355 = vmatprep.subr.mxu0 0.0
        %3356 = vmatpush2.msra.mxu0 %v3214
        %3357 = vmatprep.subr.mxu0 0.0
        %3358 = vmatpush2.msra.mxu0 %v3213
        %3359 = vmatprep.subr.mxu0 0.0
        %3360 = vmatpush2.msra.mxu0 %v3212
        %3361 = vmatprep.subr.mxu0 0.0
        %3362 = vmatpush2.msra.mxu0 %v3211
        %3363 = vmatprep.subr.mxu0 0.0
        %3364 = vmatpush2.msra.mxu0 %v3210
        %3365 = vmatprep.subr.mxu0 0.0
        %3366 = vmatpush2.msra.mxu0 %v3209
        %3367 = vmatprep.subr.mxu0 0.0
        %3368 = vmatpush2.msra.mxu0 %v3208
        %3369 = vmatprep.subr.mxu0 0.0
        %3370 = vmatpush2.msra.mxu0 %v3207
        %3371 = vmatprep.subr.mxu0 0.0
        %3372 = vmatpush2.msra.mxu0 %v3206
        %3373 = vmatprep.subr.mxu0 0.0
        %3374 = vmatpush2.msra.mxu0 %v3205
        %3375 = vmatprep.subr.mxu0 0.0
        %3376 = vmatpush2.msra.mxu0 %v3204
        %3377 = vmatprep.subr.mxu0 0.0
        %3378 = vmatpush2.msra.mxu0 %v3203
        %3379 = vmatprep.subr.mxu0 0.0
        %3380 = vmatpush2.msra.mxu0 %v3202
        %3381 = vmatprep.mubr.f32.mxu0 %v3131
        %3382 = vmatmul.mubr.f32.gmra.mxu0 %v3130
        %v3383 = vpop.f32.mrf.mxu0
        %v3384 = vadd.f32 %v3291, %v3383
        %v3385 = vpop.f32.mrf.mxu0
        %3386 = vmatprep.mubr.f32.mxu0 %v3138
        %3387 = vmatmul.mubr.f32.gmra.mxu0 %v3137
        %v3388 = vpop.f32.mrf.mxu0
        %v3389 = vadd.f32 %v3291, %v3388
        %v3390 = vpop.f32.mrf.mxu0
        %3391 = vmatprep.mubr.f32.mxu0 %v3145
        %3392 = vmatmul.mubr.f32.gmra.mxu0 %v3144
        %v3393 = vpop.f32.mrf.mxu0
        %v3394 = vadd.f32 %v3291, %v3393
        %v3395 = vpop.f32.mrf.mxu0
        %3396 = vmatprep.mubr.f32.mxu0 %v3152
        %3397 = vmatmul.mubr.f32.gmra.mxu0 %v3151
        %v3398 = vpop.f32.mrf.mxu0
        %v3399 = vadd.f32 %v3291, %v3398
        %v3400 = vpop.f32.mrf.mxu0
        %3401 = vmatprep.mubr.f32.mxu0 %v3159
        %3402 = vmatmul.mubr.f32.gmra.mxu0 %v3158
        %v3403 = vpop.f32.mrf.mxu0
        %v3404 = vadd.f32 %v3291, %v3403
        %v3405 = vpop.f32.mrf.mxu0
        %3406 = vmatprep.mubr.f32.mxu0 %v3166
        %3407 = vmatmul.mubr.f32.gmra.mxu0 %v3165
        %v3408 = vpop.f32.mrf.mxu0
        %v3409 = vadd.f32 %v3291, %v3408
        %v3410 = vpop.f32.mrf.mxu0
        %3411 = vmatprep.mubr.f32.mxu0 %v3173
        %3412 = vmatmul.mubr.f32.gmra.mxu0 %v3172
        %v3413 = vpop.f32.mrf.mxu0
        %v3414 = vadd.f32 %v3291, %v3413
        %v3415 = vpop.f32.mrf.mxu0
        %3416 = vmatprep.mubr.f32.mxu0 %v3180
        %3417 = vmatmul.mubr.f32.gmra.mxu0 %v3179
        %v3418 = vpop.f32.mrf.mxu0
        %v3419 = vadd.f32 %v3291, %v3418
        %v3420 = vpop.f32.mrf.mxu0
        %3421 = vdwg.mxu0
        %3422 = vmatprep.subr.mxu0 0.0
        %3423 = vmatpush1.msra.mxu0 %v3233
        %3424 = vmatprep.subr.mxu0 0.0
        %3425 = vmatpush1.msra.mxu0 %v3232
        %3426 = vmatprep.subr.mxu0 0.0
        %3427 = vmatpush1.msra.mxu0 %v3231
        %3428 = vmatprep.subr.mxu0 0.0
        %3429 = vmatpush1.msra.mxu0 %v3230
        %3430 = vmatprep.subr.mxu0 0.0
        %3431 = vmatpush1.msra.mxu0 %v3229
        %3432 = vmatprep.subr.mxu0 0.0
        %3433 = vmatpush1.msra.mxu0 %v3228
        %3434 = vmatprep.subr.mxu0 0.0
        %3435 = vmatpush1.msra.mxu0 %v3227
        %3436 = vmatprep.subr.mxu0 0.0
        %3437 = vmatpush1.msra.mxu0 %v3226
        %3438 = vmatprep.subr.mxu0 0.0
        %3439 = vmatpush1.msra.mxu0 %v3225
        %3440 = vmatprep.subr.mxu0 0.0
        %3441 = vmatpush1.msra.mxu0 %v3224
        %3442 = vmatprep.subr.mxu0 0.0
        %3443 = vmatpush1.msra.mxu0 %v3223
        %3444 = vmatprep.subr.mxu0 0.0
        %3445 = vmatpush1.msra.mxu0 %v3222
        %3446 = vmatprep.subr.mxu0 0.0
        %3447 = vmatpush1.msra.mxu0 %v3221
        %3448 = vmatprep.subr.mxu0 0.0
        %3449 = vmatpush1.msra.mxu0 %v3220
        %3450 = vmatprep.subr.mxu0 0.0
        %3451 = vmatpush1.msra.mxu0 %v3219
        %3452 = vmatprep.subr.mxu0 0.0
        %3453 = vmatpush1.msra.mxu0 %v3218
        %3454 = vmatprep.subr.mxu0 0.0
        %3455 = vmatpush2.msra.mxu0 %v3249
        %3456 = vmatprep.subr.mxu0 0.0
        %3457 = vmatpush2.msra.mxu0 %v3248
        %3458 = vmatprep.subr.mxu0 0.0
        %3459 = vmatpush2.msra.mxu0 %v3247
        %3460 = vmatprep.subr.mxu0 0.0
        %3461 = vmatpush2.msra.mxu0 %v3246
        %3462 = vmatprep.subr.mxu0 0.0
        %3463 = vmatpush2.msra.mxu0 %v3245
        %3464 = vmatprep.subr.mxu0 0.0
        %3465 = vmatpush2.msra.mxu0 %v3244
        %3466 = vmatprep.subr.mxu0 0.0
        %3467 = vmatpush2.msra.mxu0 %v3243
        %3468 = vmatprep.subr.mxu0 0.0
        %3469 = vmatpush2.msra.mxu0 %v3242
        %3470 = vmatprep.subr.mxu0 0.0
        %3471 = vmatpush2.msra.mxu0 %v3241
        %3472 = vmatprep.subr.mxu0 0.0
        %3473 = vmatpush2.msra.mxu0 %v3240
        %3474 = vmatprep.subr.mxu0 0.0
        %3475 = vmatpush2.msra.mxu0 %v3239
        %3476 = vmatprep.subr.mxu0 0.0
        %3477 = vmatpush2.msra.mxu0 %v3238
        %3478 = vmatprep.subr.mxu0 0.0
        %3479 = vmatpush2.msra.mxu0 %v3237
        %3480 = vmatprep.subr.mxu0 0.0
        %3481 = vmatpush2.msra.mxu0 %v3236
        %3482 = vmatprep.subr.mxu0 0.0
        %3483 = vmatpush2.msra.mxu0 %v3235
        %3484 = vmatprep.subr.mxu0 0.0
        %3485 = vmatpush2.msra.mxu0 %v3234
        %3486 = vmatprep.mubr.f32.mxu0 %v3133
        %3487 = vmatmul.mubr.f32.gmra.mxu0 %v3132
        %v3488 = vpop.f32.mrf.mxu0
        %v3489 = vadd.f32 %v3384, %v3488
        %v3490 = vpop.f32.mrf.mxu0
        %3491 = vmatprep.mubr.f32.mxu0 %v3140
        %3492 = vmatmul.mubr.f32.gmra.mxu0 %v3139
        %v3493 = vpop.f32.mrf.mxu0
        %v3494 = vadd.f32 %v3389, %v3493
        %v3495 = vpop.f32.mrf.mxu0
        %3496 = vmatprep.mubr.f32.mxu0 %v3147
        %3497 = vmatmul.mubr.f32.gmra.mxu0 %v3146
        %v3498 = vpop.f32.mrf.mxu0
        %v3499 = vadd.f32 %v3394, %v3498
        %v3500 = vpop.f32.mrf.mxu0
        %3501 = vmatprep.mubr.f32.mxu0 %v3154
        %3502 = vmatmul.mubr.f32.gmra.mxu0 %v3153
        %v3503 = vpop.f32.mrf.mxu0
        %v3504 = vadd.f32 %v3399, %v3503
        %v3505 = vpop.f32.mrf.mxu0
        %3506 = vmatprep.mubr.f32.mxu0 %v3161
        %3507 = vmatmul.mubr.f32.gmra.mxu0 %v3160
        %v3508 = vpop.f32.mrf.mxu0
        %v3509 = vadd.f32 %v3404, %v3508
        %v3510 = vpop.f32.mrf.mxu0
        %3511 = vmatprep.mubr.f32.mxu0 %v3168
        %3512 = vmatmul.mubr.f32.gmra.mxu0 %v3167
        %v3513 = vpop.f32.mrf.mxu0
        %v3514 = vadd.f32 %v3409, %v3513
        %v3515 = vpop.f32.mrf.mxu0
        %3516 = vmatprep.mubr.f32.mxu0 %v3175
        %3517 = vmatmul.mubr.f32.gmra.mxu0 %v3174
        %v3518 = vpop.f32.mrf.mxu0
        %v3519 = vadd.f32 %v3414, %v3518
        %v3520 = vpop.f32.mrf.mxu0
        %3521 = vmatprep.mubr.f32.mxu0 %v3182
        %3522 = vmatmul.mubr.f32.gmra.mxu0 %v3181
        %v3523 = vpop.f32.mrf.mxu0
        %v3524 = vadd.f32 %v3419, %v3523
        %v3525 = vpop.f32.mrf.mxu0
        %3526 = vdwg.mxu0
        %3527 = vmatprep.subr.mxu0 0.0
        %3528 = vmatpush1.msra.mxu0 %v3265
        %3529 = vmatprep.subr.mxu0 0.0
        %3530 = vmatpush1.msra.mxu0 %v3264
        %3531 = vmatprep.subr.mxu0 0.0
        %3532 = vmatpush1.msra.mxu0 %v3263
        %3533 = vmatprep.subr.mxu0 0.0
        %3534 = vmatpush1.msra.mxu0 %v3262
        %3535 = vmatprep.subr.mxu0 0.0
        %3536 = vmatpush1.msra.mxu0 %v3261
        %3537 = vmatprep.subr.mxu0 0.0
        %3538 = vmatpush1.msra.mxu0 %v3260
        %3539 = vmatprep.subr.mxu0 0.0
        %3540 = vmatpush1.msra.mxu0 %v3259
        %3541 = vmatprep.subr.mxu0 0.0
        %3542 = vmatpush1.msra.mxu0 %v3258
        %3543 = vmatprep.subr.mxu0 0.0
        %3544 = vmatpush1.msra.mxu0 %v3257
        %3545 = vmatprep.subr.mxu0 0.0
        %3546 = vmatpush1.msra.mxu0 %v3256
        %3547 = vmatprep.subr.mxu0 0.0
        %3548 = vmatpush1.msra.mxu0 %v3255
        %3549 = vmatprep.subr.mxu0 0.0
        %3550 = vmatpush1.msra.mxu0 %v3254
        %3551 = vmatprep.subr.mxu0 0.0
        %3552 = vmatpush1.msra.mxu0 %v3253
        %3553 = vmatprep.subr.mxu0 0.0
        %3554 = vmatpush1.msra.mxu0 %v3252
        %3555 = vmatprep.subr.mxu0 0.0
        %3556 = vmatpush1.msra.mxu0 %v3251
        %3557 = vmatprep.subr.mxu0 0.0
        %3558 = vmatpush1.msra.mxu0 %v3250
        %3559 = vmatprep.subr.mxu0 0.0
        %3560 = vmatpush2.msra.mxu0 %v3281
        %3561 = vmatprep.subr.mxu0 0.0
        %3562 = vmatpush2.msra.mxu0 %v3280
        %3563 = vmatprep.subr.mxu0 0.0
        %3564 = vmatpush2.msra.mxu0 %v3279
        %3565 = vmatprep.subr.mxu0 0.0
        %3566 = vmatpush2.msra.mxu0 %v3278
        %3567 = vmatprep.subr.mxu0 0.0
        %3568 = vmatpush2.msra.mxu0 %v3277
        %3569 = vmatprep.subr.mxu0 0.0
        %3570 = vmatpush2.msra.mxu0 %v3276
        %3571 = vmatprep.subr.mxu0 0.0
        %3572 = vmatpush2.msra.mxu0 %v3275
        %3573 = vmatprep.subr.mxu0 0.0
        %3574 = vmatpush2.msra.mxu0 %v3274
        %3575 = vmatprep.subr.mxu0 0.0
        %3576 = vmatpush2.msra.mxu0 %v3273
        %3577 = vmatprep.subr.mxu0 0.0
        %3578 = vmatpush2.msra.mxu0 %v3272
        %3579 = vmatprep.subr.mxu0 0.0
        %3580 = vmatpush2.msra.mxu0 %v3271
        %3581 = vmatprep.subr.mxu0 0.0
        %3582 = vmatpush2.msra.mxu0 %v3270
        %3583 = vmatprep.subr.mxu0 0.0
        %3584 = vmatpush2.msra.mxu0 %v3269
        %3585 = vmatprep.subr.mxu0 0.0
        %3586 = vmatpush2.msra.mxu0 %v3268
        %3587 = vmatprep.subr.mxu0 0.0
        %3588 = vmatpush2.msra.mxu0 %v3267
        %3589 = vmatprep.subr.mxu0 0.0
        %3590 = vmatpush2.msra.mxu0 %v3266
        %3591 = vmatprep.mubr.f32.mxu0 %v3135
        %3592 = vmatmul.mubr.f32.gmra.mxu0 %v3134
        %v3593 = vpop.f32.mrf.mxu0
        %v3594 = vadd.f32 %v3489, %v3593
        %v3595 = vpop.f32.mrf.mxu0
        %3596 = vmatprep.mubr.f32.mxu0 %v3142
        %3597 = vmatmul.mubr.f32.gmra.mxu0 %v3141
        %v3598 = vpop.f32.mrf.mxu0
        %v3599 = vadd.f32 %v3494, %v3598
        %v3600 = vpop.f32.mrf.mxu0
        %3601 = vmatprep.mubr.f32.mxu0 %v3149
        %3602 = vmatmul.mubr.f32.gmra.mxu0 %v3148
        %v3603 = vpop.f32.mrf.mxu0
        %v3604 = vadd.f32 %v3499, %v3603
        %v3605 = vpop.f32.mrf.mxu0
        %3606 = vmatprep.mubr.f32.mxu0 %v3156
        %3607 = vmatmul.mubr.f32.gmra.mxu0 %v3155
        %v3608 = vpop.f32.mrf.mxu0
        %v3609 = vadd.f32 %v3504, %v3608
        %v3610 = vpop.f32.mrf.mxu0
        %3611 = vmatprep.mubr.f32.mxu0 %v3163
        %3612 = vmatmul.mubr.f32.gmra.mxu0 %v3162
        %v3613 = vpop.f32.mrf.mxu0
        %v3614 = vadd.f32 %v3509, %v3613
        %v3615 = vpop.f32.mrf.mxu0
        %3616 = vmatprep.mubr.f32.mxu0 %v3170
        %3617 = vmatmul.mubr.f32.gmra.mxu0 %v3169
        %v3618 = vpop.f32.mrf.mxu0
        %v3619 = vadd.f32 %v3514, %v3618
        %v3620 = vpop.f32.mrf.mxu0
        %3621 = vmatprep.mubr.f32.mxu0 %v3177
        %3622 = vmatmul.mubr.f32.gmra.mxu0 %v3176
        %v3623 = vpop.f32.mrf.mxu0
        %v3624 = vadd.f32 %v3519, %v3623
        %v3625 = vpop.f32.mrf.mxu0
        %3626 = vmatprep.mubr.f32.mxu0 %v3184
        %3627 = vmatmul.mubr.f32.gmra.mxu0 %v3183
        %v3628 = vpop.f32.mrf.mxu0
        %v3629 = vadd.f32 %v3524, %v3628
        %v3630 = vpop.f32.mrf.mxu0
        %3631 = vdwg.mxu0
        %3632 = vmatprep.subr.mxu0 0.0
        %3633 = vmatpush1.msra.mxu0 0.0
        %3634 = vmatprep.subr.mxu0 0.0
        %3635 = vmatpush1.msra.mxu0 0.0
        %3636 = vmatprep.subr.mxu0 0.0
        %3637 = vmatpush1.msra.mxu0 0.0
        %3638 = vmatprep.subr.mxu0 0.0
        %3639 = vmatpush1.msra.mxu0 0.0
        %3640 = vmatprep.subr.mxu0 0.0
        %3641 = vmatpush1.msra.mxu0 0.0
        %3642 = vmatprep.subr.mxu0 0.0
        %3643 = vmatpush1.msra.mxu0 0.0
        %3644 = vmatprep.subr.mxu0 0.0
        %3645 = vmatpush1.msra.mxu0 0.0
        %3646 = vmatprep.subr.mxu0 0.0
        %3647 = vmatpush1.msra.mxu0 0.0
        %3648 = vmatprep.subr.mxu0 0.0
        %3649 = vmatpush1.msra.mxu0 0.0
        %3650 = vmatprep.subr.mxu0 0.0
        %3651 = vmatpush1.msra.mxu0 0.0
        %3652 = vmatprep.subr.mxu0 0.0
        %3653 = vmatpush1.msra.mxu0 0.0
        %3654 = vmatprep.subr.mxu0 0.0
        %3655 = vmatpush1.msra.mxu0 0.0
        %3656 = vmatprep.subr.mxu0 0.0
        %3657 = vmatpush1.msra.mxu0 %v3285
        %3658 = vmatprep.subr.mxu0 0.0
        %3659 = vmatpush1.msra.mxu0 %v3284
        %3660 = vmatprep.subr.mxu0 0.0
        %3661 = vmatpush1.msra.mxu0 %v3283
        %3662 = vmatprep.subr.mxu0 0.0
        %3663 = vmatpush1.msra.mxu0 %v3282
        %3664 = vmatprep.subr.mxu0 0.0
        %3665 = vmatpush2.msra.mxu0 0.0
        %3666 = vmatprep.subr.mxu0 0.0
        %3667 = vmatpush2.msra.mxu0 0.0
        %3668 = vmatprep.subr.mxu0 0.0
        %3669 = vmatpush2.msra.mxu0 0.0
        %3670 = vmatprep.subr.mxu0 0.0
        %3671 = vmatpush2.msra.mxu0 0.0
        %3672 = vmatprep.subr.mxu0 0.0
        %3673 = vmatpush2.msra.mxu0 0.0
        %3674 = vmatprep.subr.mxu0 0.0
        %3675 = vmatpush2.msra.mxu0 0.0
        %3676 = vmatprep.subr.mxu0 0.0
        %3677 = vmatpush2.msra.mxu0 0.0
        %3678 = vmatprep.subr.mxu0 0.0
        %3679 = vmatpush2.msra.mxu0 0.0
        %3680 = vmatprep.subr.mxu0 0.0
        %3681 = vmatpush2.msra.mxu0 0.0
        %3682 = vmatprep.subr.mxu0 0.0
        %3683 = vmatpush2.msra.mxu0 0.0
        %3684 = vmatprep.subr.mxu0 0.0
        %3685 = vmatpush2.msra.mxu0 0.0
        %3686 = vmatprep.subr.mxu0 0.0
        %3687 = vmatpush2.msra.mxu0 0.0
        %3688 = vmatprep.subr.mxu0 0.0
        %3689 = vmatpush2.msra.mxu0 0.0
        %3690 = vmatprep.subr.mxu0 0.0
        %3691 = vmatpush2.msra.mxu0 0.0
        %3692 = vmatprep.subr.mxu0 0.0
        %3693 = vmatpush2.msra.mxu0 0.0
        %3694 = vmatprep.subr.mxu0 0.0
        %3695 = vmatpush2.msra.mxu0 0.0
        %3696 = vmatprep.mubr.f32.mxu0 0.0
        %3697 = vmatmul.mubr.f32.gmra.mxu0 %v3294
        %v3698 = vpop.f32.mrf.mxu0
        %v3699 = vadd.f32 %v3594, %v3698
        %v3700 = vpop.f32.mrf.mxu0
        %3701 = vmatprep.mubr.f32.mxu0 0.0
        %3702 = vmatmul.mubr.f32.gmra.mxu0 %v3297
        %v3703 = vpop.f32.mrf.mxu0
        %v3704 = vadd.f32 %v3599, %v3703
        %v3705 = vpop.f32.mrf.mxu0
        %3706 = vmatprep.mubr.f32.mxu0 0.0
        %3707 = vmatmul.mubr.f32.gmra.mxu0 %v3300
        %v3708 = vpop.f32.mrf.mxu0
        %v3709 = vadd.f32 %v3604, %v3708
        %v3710 = vpop.f32.mrf.mxu0
        %3711 = vmatprep.mubr.f32.mxu0 0.0
        %3712 = vmatmul.mubr.f32.gmra.mxu0 %v3303
        %v3713 = vpop.f32.mrf.mxu0
        %v3714 = vadd.f32 %v3609, %v3713
        %v3715 = vpop.f32.mrf.mxu0
        %3716 = vmatprep.mubr.f32.mxu0 0.0
        %3717 = vmatmul.mubr.f32.gmra.mxu0 %v3306
        %v3718 = vpop.f32.mrf.mxu0
        %v3719 = vadd.f32 %v3614, %v3718
        %v3720 = vpop.f32.mrf.mxu0
        %3721 = vmatprep.mubr.f32.mxu0 0.0
        %3722 = vmatmul.mubr.f32.gmra.mxu0 %v3309
        %v3723 = vpop.f32.mrf.mxu0
        %v3724 = vadd.f32 %v3619, %v3723
        %v3725 = vpop.f32.mrf.mxu0
        %3726 = vmatprep.mubr.f32.mxu0 0.0
        %3727 = vmatmul.mubr.f32.gmra.mxu0 %v3312
        %v3728 = vpop.f32.mrf.mxu0
        %v3729 = vadd.f32 %v3624, %v3728
        %v3730 = vpop.f32.mrf.mxu0
        %3731 = vmatprep.mubr.f32.mxu0 0.0
        %3732 = vmatmul.mubr.f32.gmra.mxu0 %v3315
        %v3733 = vpop.f32.mrf.mxu0
        %v3734 = vadd.f32 %v3629, %v3733
        %v3735 = vpop.f32.mrf.mxu0
        %3736 = vdwg.mxu0
        %v3737 = vmul.f32 %v3699, 0.5
        %v3738 = vmul.f32 %v3704, 0.5
        %v3739 = vmul.f32 %v3709, 0.5
        %v3740 = vmul.f32 %v3714, 0.5
        %v3741 = vmul.f32 %v3719, 0.5
        %v3742 = vmul.f32 %v3724, 0.5
        %v3743 = vmul.f32 %v3729, 0.5
        %v3744 = vmul.f32 %v3734, 0.5
        %v3745 = vmul.f32 %v3699, 0.70710677
        %v3746 = vmul.f32 %v3704, 0.70710677
        %v3747 = vmul.f32 %v3709, 0.70710677
        %v3748 = vmul.f32 %v3714, 0.70710677
        %v3749 = vmul.f32 %v3719, 0.70710677
        %v3750 = vmul.f32 %v3724, 0.70710677
        %v3751 = vmul.f32 %v3729, 0.70710677
        %v3752 = vmul.f32 %v3734, 0.70710677
        %vm3753 = vcmp.ge.f32.partialorder %v3745, 0.0
        %vm3754 = vcmp.ge.f32.partialorder %v3746, 0.0
        %vm3755 = vcmp.ge.f32.partialorder %v3747, 0.0
        %vm3756 = vcmp.ge.f32.partialorder %v3748, 0.0
        %vm3757 = vcmp.ge.f32.partialorder %v3749, 0.0
        %vm3758 = vcmp.ge.f32.partialorder %v3750, 0.0
        %vm3759 = vcmp.ge.f32.partialorder %v3751, 0.0
        %vm3760 = vcmp.ge.f32.partialorder %v3752, 0.0
        %v3761 = vsel %vm3753, 1.0, -1.0
        %v3762 = vsel %vm3754, 1.0, -1.0
        %v3763 = vsel %vm3755, 1.0, -1.0
        %v3764 = vsel %vm3756, 1.0, -1.0
        %v3765 = vsel %vm3757, 1.0, -1.0
        %v3766 = vsel %vm3758, 1.0, -1.0
        %v3767 = vsel %vm3759, 1.0, -1.0
        %v3768 = vsel %vm3760, 1.0, -1.0
        %v3769 = vand.u32 2147483647, %v3745
        %v3770 = vand.u32 2147483647, %v3746
        %v3771 = vand.u32 2147483647, %v3747
        %v3772 = vand.u32 2147483647, %v3748
        %v3773 = vand.u32 2147483647, %v3749
        %v3774 = vand.u32 2147483647, %v3750
        %v3775 = vand.u32 2147483647, %v3751
        %v3776 = vand.u32 2147483647, %v3752
        %v3777 = vmul.f32 %v3769, 0.3275911
        %v3778 = vmul.f32 %v3770, 0.3275911
        %v3779 = vmul.f32 %v3771, 0.3275911
        %v3780 = vmul.f32 %v3772, 0.3275911
        %v3781 = vmul.f32 %v3773, 0.3275911
        %v3782 = vmul.f32 %v3774, 0.3275911
        %v3783 = vmul.f32 %v3775, 0.3275911
        %v3784 = vmul.f32 %v3776, 0.3275911
        %v3785 = vadd.f32 %v3777, 1.0
        %v3786 = vadd.f32 %v3778, 1.0
        %v3787 = vadd.f32 %v3779, 1.0
        %v3788 = vadd.f32 %v3780, 1.0
        %v3789 = vadd.f32 %v3781, 1.0
        %v3790 = vadd.f32 %v3782, 1.0
        %v3791 = vadd.f32 %v3783, 1.0
        %v3792 = vadd.f32 %v3784, 1.0
        %v3793 = vrcp.pop %v3785
        %v3794 = vmul.f32 1.0, %v3793
        %v3795 = vrcp.pop %v3786
        %v3796 = vmul.f32 1.0, %v3795
        %v3797 = vrcp.pop %v3787
        %v3798 = vmul.f32 1.0, %v3797
        %v3799 = vrcp.pop %v3788
        %v3800 = vmul.f32 1.0, %v3799
        %v3801 = vrcp.pop %v3789
        %v3802 = vmul.f32 1.0, %v3801
        %v3803 = vrcp.pop %v3790
        %v3804 = vmul.f32 1.0, %v3803
        %v3805 = vrcp.pop %v3791
        %v3806 = vmul.f32 1.0, %v3805
        %v3807 = vrcp.pop %v3792
        %v3808 = vmul.f32 1.0, %v3807
        %v3809 = vmul.f32 %v3794, 1.0614054
        %v3810 = vmul.f32 %v3796, 1.0614054
        %v3811 = vmul.f32 %v3798, 1.0614054
        %v3812 = vmul.f32 %v3800, 1.0614054
        %v3813 = vmul.f32 %v3802, 1.0614054
        %v3814 = vmul.f32 %v3804, 1.0614054
        %v3815 = vmul.f32 %v3806, 1.0614054
        %v3816 = vmul.f32 %v3808, 1.0614054
        %v3817 = vadd.f32 %v3809, -1.4531521
        %v3818 = vadd.f32 %v3810, -1.4531521
        %v3819 = vadd.f32 %v3811, -1.4531521
        %v3820 = vadd.f32 %v3812, -1.4531521
        %v3821 = vadd.f32 %v3813, -1.4531521
        %v3822 = vadd.f32 %v3814, -1.4531521
        %v3823 = vadd.f32 %v3815, -1.4531521
        %v3824 = vadd.f32 %v3816, -1.4531521
        %v3825 = vmul.f32 %v3817, %v3794
        %v3826 = vmul.f32 %v3818, %v3796
        %v3827 = vmul.f32 %v3819, %v3798
        %v3828 = vmul.f32 %v3820, %v3800
        %v3829 = vmul.f32 %v3821, %v3802
        %v3830 = vmul.f32 %v3822, %v3804
        %v3831 = vmul.f32 %v3823, %v3806
        %v3832 = vmul.f32 %v3824, %v3808
        %v3833 = vadd.f32 %v3825, 1.4214138
        %v3834 = vadd.f32 %v3826, 1.4214138
        %v3835 = vadd.f32 %v3827, 1.4214138
        %v3836 = vadd.f32 %v3828, 1.4214138
        %v3837 = vadd.f32 %v3829, 1.4214138
        %v3838 = vadd.f32 %v3830, 1.4214138
        %v3839 = vadd.f32 %v3831, 1.4214138
        %v3840 = vadd.f32 %v3832, 1.4214138
        %v3841 = vmul.f32 %v3833, %v3794
        %v3842 = vmul.f32 %v3834, %v3796
        %v3843 = vmul.f32 %v3835, %v3798
        %v3844 = vmul.f32 %v3836, %v3800
        %v3845 = vmul.f32 %v3837, %v3802
        %v3846 = vmul.f32 %v3838, %v3804
        %v3847 = vmul.f32 %v3839, %v3806
        %v3848 = vmul.f32 %v3840, %v3808
        %v3849 = vadd.f32 %v3841, -0.28449672
        %v3850 = vadd.f32 %v3842, -0.28449672
        %v3851 = vadd.f32 %v3843, -0.28449672
        %v3852 = vadd.f32 %v3844, -0.28449672
        %v3853 = vadd.f32 %v3845, -0.28449672
        %v3854 = vadd.f32 %v3846, -0.28449672
        %v3855 = vadd.f32 %v3847, -0.28449672
        %v3856 = vadd.f32 %v3848, -0.28449672
        %v3857 = vmul.f32 %v3849, %v3794
        %v3858 = vmul.f32 %v3850, %v3796
        %v3859 = vmul.f32 %v3851, %v3798
        %v3860 = vmul.f32 %v3852, %v3800
        %v3861 = vmul.f32 %v3853, %v3802
        %v3862 = vmul.f32 %v3854, %v3804
        %v3863 = vmul.f32 %v3855, %v3806
        %v3864 = vmul.f32 %v3856, %v3808
        %v3865 = vadd.f32 %v3857, 0.2548296
        %v3866 = vadd.f32 %v3858, 0.2548296
        %v3867 = vadd.f32 %v3859, 0.2548296
        %v3868 = vadd.f32 %v3860, 0.2548296
        %v3869 = vadd.f32 %v3861, 0.2548296
        %v3870 = vadd.f32 %v3862, 0.2548296
        %v3871 = vadd.f32 %v3863, 0.2548296
        %v3872 = vadd.f32 %v3864, 0.2548296
        %v3873 = vmul.f32 %v3865, %v3794
        %v3874 = vmul.f32 %v3866, %v3796
        %v3875 = vmul.f32 %v3867, %v3798
        %v3876 = vmul.f32 %v3868, %v3800
        %v3877 = vmul.f32 %v3869, %v3802
        %v3878 = vmul.f32 %v3870, %v3804
        %v3879 = vmul.f32 %v3871, %v3806
        %v3880 = vmul.f32 %v3872, %v3808
        %v3881 = vsub.f32 0.0, %v3769
        %v3882 = vsub.f32 0.0, %v3770
        %v3883 = vsub.f32 0.0, %v3771
        %v3884 = vsub.f32 0.0, %v3772
        %v3885 = vsub.f32 0.0, %v3773
        %v3886 = vsub.f32 0.0, %v3774
        %v3887 = vsub.f32 0.0, %v3775
        %v3888 = vsub.f32 0.0, %v3776
        %v3889 = vmul.f32 %v3881, %v3769
        %v3890 = vmul.f32 %v3882, %v3770
        %v3891 = vmul.f32 %v3883, %v3771
        %v3892 = vmul.f32 %v3884, %v3772
        %v3893 = vmul.f32 %v3885, %v3773
        %v3894 = vmul.f32 %v3886, %v3774
        %v3895 = vmul.f32 %v3887, %v3775
        %v3896 = vmul.f32 %v3888, %v3776
        %v3897 = vmul.f32 %v3889, 1.442695
        %v3898 = vpow.pop %v3897
        %v3899 = vmul.f32 %v3890, 1.442695
        %v3900 = vpow.pop %v3899
        %v3901 = vmul.f32 %v3891, 1.442695
        %v3902 = vpow.pop %v3901
        %v3903 = vmul.f32 %v3892, 1.442695
        %v3904 = vpow.pop %v3903
        %v3905 = vmul.f32 %v3893, 1.442695
        %v3906 = vpow.pop %v3905
        %v3907 = vmul.f32 %v3894, 1.442695
        %v3908 = vpow.pop %v3907
        %v3909 = vmul.f32 %v3895, 1.442695
        %v3910 = vpow.pop %v3909
        %v3911 = vmul.f32 %v3896, 1.442695
        %v3912 = vpow.pop %v3911
        %v3913 = vmul.f32 %v3873, %v3898
        %v3914 = vmul.f32 %v3874, %v3900
        %v3915 = vmul.f32 %v3875, %v3902
        %v3916 = vmul.f32 %v3876, %v3904
        %v3917 = vmul.f32 %v3877, %v3906
        %v3918 = vmul.f32 %v3878, %v3908
        %v3919 = vmul.f32 %v3879, %v3910
        %v3920 = vmul.f32 %v3880, %v3912
        %v3921 = vsub.f32 1.0, %v3913
        %v3922 = vsub.f32 1.0, %v3914
        %v3923 = vsub.f32 1.0, %v3915
        %v3924 = vsub.f32 1.0, %v3916
        %v3925 = vsub.f32 1.0, %v3917
        %v3926 = vsub.f32 1.0, %v3918
        %v3927 = vsub.f32 1.0, %v3919
        %v3928 = vsub.f32 1.0, %v3920
        %v3929 = vmul.f32 %v3761, %v3921
        %v3930 = vmul.f32 %v3762, %v3922
        %v3931 = vmul.f32 %v3763, %v3923
        %v3932 = vmul.f32 %v3764, %v3924
        %v3933 = vmul.f32 %v3765, %v3925
        %v3934 = vmul.f32 %v3766, %v3926
        %v3935 = vmul.f32 %v3767, %v3927
        %v3936 = vmul.f32 %v3768, %v3928
        %v3937 = vadd.f32 %v3929, 1.0
        %v3938 = vadd.f32 %v3930, 1.0
        %v3939 = vadd.f32 %v3931, 1.0
        %v3940 = vadd.f32 %v3932, 1.0
        %v3941 = vadd.f32 %v3933, 1.0
        %v3942 = vadd.f32 %v3934, 1.0
        %v3943 = vadd.f32 %v3935, 1.0
        %v3944 = vadd.f32 %v3936, 1.0
        %v3945 = vmul.f32 %v3737, %v3937
        %v3946 = vmul.f32 %v3738, %v3938
        %v3947 = vmul.f32 %v3739, %v3939
        %v3948 = vmul.f32 %v3740, %v3940
        %v3949 = vmul.f32 %v3741, %v3941
        %v3950 = vmul.f32 %v3742, %v3942
        %v3951 = vmul.f32 %v3743, %v3943
        %v3952 = vmul.f32 %v3744, %v3944
        %v3953 = vld [vmem:[%s13] sm:$0xff]
        %v3954 = vld [vmem:[%s13 + $0x8] sm:$0xff]
        %v3955 = vld [vmem:[%s13 + $0x10] sm:$0xff]
        %v3956 = vld [vmem:[%s13 + $0x18] sm:$0xff]
        %v3957 = vld [vmem:[%s14] sm:$0x1]
        %v3959 = vlaneseq
        %v3960 = vshrl.u32 %v3959, 7
        %v3961 = vsub.s32 0, %v3960
        %v3962 = vrot.slane %v3957, %v3961
        %v3965 = vsel %vm546, %v3945, 0
        %v3968 = vsel %vm546, %v3946, 0
        %v3971 = vsel %vm546, %v3947, 0
        %v3974 = vsel %vm546, %v3948, 0
        %v3977 = vsel %vm546, %v3949, 0
        %v3980 = vsel %vm546, %v3950, 0
        %v3983 = vsel %vm546, %v3951, 0
        %v3986 = vsel %vm546, %v3952, 0
        %3988 = vmatprep.subr.mxu0 0.0
        %3989 = vmatpush1.msra.mxu0 0.0
        %3990 = vmatprep.subr.mxu0 0.0
        %3991 = vmatpush1.msra.mxu0 0.0
        %3992 = vmatprep.subr.mxu0 0.0
        %3993 = vmatpush1.msra.mxu0 0.0
        %3994 = vmatprep.subr.mxu0 0.0
        %3995 = vmatpush1.msra.mxu0 0.0
        %3996 = vmatprep.subr.mxu0 0.0
        %3997 = vmatpush1.msra.mxu0 0.0
        %3998 = vmatprep.subr.mxu0 0.0
        %3999 = vmatpush1.msra.mxu0 0.0
        %4000 = vmatprep.subr.mxu0 0.0
        %4001 = vmatpush1.msra.mxu0 0.0
        %4002 = vmatprep.subr.mxu0 0.0
        %4003 = vmatpush1.msra.mxu0 0.0
        %4004 = vmatprep.subr.mxu0 0.0
        %4005 = vmatpush1.msra.mxu0 0.0
        %4006 = vmatprep.subr.mxu0 0.0
        %4007 = vmatpush1.msra.mxu0 0.0
        %4008 = vmatprep.subr.mxu0 0.0
        %4009 = vmatpush1.msra.mxu0 0.0
        %4010 = vmatprep.subr.mxu0 0.0
        %4011 = vmatpush1.msra.mxu0 0.0
        %4012 = vmatprep.subr.mxu0 0.0
        %4013 = vmatpush1.msra.mxu0 %v3956
        %4014 = vmatprep.subr.mxu0 0.0
        %4015 = vmatpush1.msra.mxu0 %v3955
        %4016 = vmatprep.subr.mxu0 0.0
        %4017 = vmatpush1.msra.mxu0 %v3954
        %4018 = vmatprep.subr.mxu0 0.0
        %4019 = vmatpush1.msra.mxu0 %v3953
        %4020 = vmatprep.subr.mxu0 0.0
        %4021 = vmatpush2.msra.mxu0 0.0
        %4022 = vmatprep.subr.mxu0 0.0
        %4023 = vmatpush2.msra.mxu0 0.0
        %4024 = vmatprep.subr.mxu0 0.0
        %4025 = vmatpush2.msra.mxu0 0.0
        %4026 = vmatprep.subr.mxu0 0.0
        %4027 = vmatpush2.msra.mxu0 0.0
        %4028 = vmatprep.subr.mxu0 0.0
        %4029 = vmatpush2.msra.mxu0 0.0
        %4030 = vmatprep.subr.mxu0 0.0
        %4031 = vmatpush2.msra.mxu0 0.0
        %4032 = vmatprep.subr.mxu0 0.0
        %4033 = vmatpush2.msra.mxu0 0.0
        %4034 = vmatprep.subr.mxu0 0.0
        %4035 = vmatpush2.msra.mxu0 0.0
        %4036 = vmatprep.subr.mxu0 0.0
        %4037 = vmatpush2.msra.mxu0 0.0
        %4038 = vmatprep.subr.mxu0 0.0
        %4039 = vmatpush2.msra.mxu0 0.0
        %4040 = vmatprep.subr.mxu0 0.0
        %4041 = vmatpush2.msra.mxu0 0.0
        %4042 = vmatprep.subr.mxu0 0.0
        %4043 = vmatpush2.msra.mxu0 0.0
        %4044 = vmatprep.subr.mxu0 0.0
        %4045 = vmatpush2.msra.mxu0 0.0
        %4046 = vmatprep.subr.mxu0 0.0
        %4047 = vmatpush2.msra.mxu0 0.0
        %4048 = vmatprep.subr.mxu0 0.0
        %4049 = vmatpush2.msra.mxu0 0.0
        %4050 = vmatprep.subr.mxu0 0.0
        %4051 = vmatpush2.msra.mxu0 0.0
        %4052 = vmatprep.mubr.f32.mxu0 0.0
        %4053 = vmatmul.mubr.f32.gmra.mxu0 %v3965
        %v4054 = vpop.f32.mrf.mxu0
        %v4055 = vadd.f32 %v3962, %v4054
        %v4056 = vpop.f32.mrf.mxu0
        %4057 = vmatprep.mubr.f32.mxu0 0.0
        %4058 = vmatmul.mubr.f32.gmra.mxu0 %v3968
        %v4059 = vpop.f32.mrf.mxu0
        %v4060 = vadd.f32 %v3962, %v4059
        %v4061 = vpop.f32.mrf.mxu0
        %4062 = vmatprep.mubr.f32.mxu0 0.0
        %4063 = vmatmul.mubr.f32.gmra.mxu0 %v3971
        %v4064 = vpop.f32.mrf.mxu0
        %v4065 = vadd.f32 %v3962, %v4064
        %v4066 = vpop.f32.mrf.mxu0
        %4067 = vmatprep.mubr.f32.mxu0 0.0
        %4068 = vmatmul.mubr.f32.gmra.mxu0 %v3974
        %v4069 = vpop.f32.mrf.mxu0
        %v4070 = vadd.f32 %v3962, %v4069
        %v4071 = vpop.f32.mrf.mxu0
        %4072 = vmatprep.mubr.f32.mxu0 0.0
        %4073 = vmatmul.mubr.f32.gmra.mxu0 %v3977
        %v4074 = vpop.f32.mrf.mxu0
        %v4075 = vadd.f32 %v3962, %v4074
        %v4076 = vpop.f32.mrf.mxu0
        %4077 = vmatprep.mubr.f32.mxu0 0.0
        %4078 = vmatmul.mubr.f32.gmra.mxu0 %v3980
        %v4079 = vpop.f32.mrf.mxu0
        %v4080 = vadd.f32 %v3962, %v4079
        %v4081 = vpop.f32.mrf.mxu0
        %4082 = vmatprep.mubr.f32.mxu0 0.0
        %4083 = vmatmul.mubr.f32.gmra.mxu0 %v3983
        %v4084 = vpop.f32.mrf.mxu0
        %v4085 = vadd.f32 %v3962, %v4084
        %v4086 = vpop.f32.mrf.mxu0
        %4087 = vmatprep.mubr.f32.mxu0 0.0
        %4088 = vmatmul.mubr.f32.gmra.mxu0 %v3986
        %v4089 = vpop.f32.mrf.mxu0
        %v4090 = vadd.f32 %v3962, %v4089
        %v4091 = vpop.f32.mrf.mxu0
        %4092 = vdwg.mxu0
        %v4093 = vmul.f32 %v4055, 0.5
        %v4094 = vmul.f32 %v4060, 0.5
        %v4095 = vmul.f32 %v4065, 0.5
        %v4096 = vmul.f32 %v4070, 0.5
        %v4097 = vmul.f32 %v4075, 0.5
        %v4098 = vmul.f32 %v4080, 0.5
        %v4099 = vmul.f32 %v4085, 0.5
        %v4100 = vmul.f32 %v4090, 0.5
        %v4101 = vmul.f32 %v4055, 0.70710677
        %v4102 = vmul.f32 %v4060, 0.70710677
        %v4103 = vmul.f32 %v4065, 0.70710677
        %v4104 = vmul.f32 %v4070, 0.70710677
        %v4105 = vmul.f32 %v4075, 0.70710677
        %v4106 = vmul.f32 %v4080, 0.70710677
        %v4107 = vmul.f32 %v4085, 0.70710677
        %v4108 = vmul.f32 %v4090, 0.70710677
        %vm4109 = vcmp.ge.f32.partialorder %v4101, 0.0
        %vm4110 = vcmp.ge.f32.partialorder %v4102, 0.0
        %vm4111 = vcmp.ge.f32.partialorder %v4103, 0.0
        %vm4112 = vcmp.ge.f32.partialorder %v4104, 0.0
        %vm4113 = vcmp.ge.f32.partialorder %v4105, 0.0
        %vm4114 = vcmp.ge.f32.partialorder %v4106, 0.0
        %vm4115 = vcmp.ge.f32.partialorder %v4107, 0.0
        %vm4116 = vcmp.ge.f32.partialorder %v4108, 0.0
        %v4117 = vsel %vm4109, 1.0, -1.0
        %v4118 = vsel %vm4110, 1.0, -1.0
        %v4119 = vsel %vm4111, 1.0, -1.0
        %v4120 = vsel %vm4112, 1.0, -1.0
        %v4121 = vsel %vm4113, 1.0, -1.0
        %v4122 = vsel %vm4114, 1.0, -1.0
        %v4123 = vsel %vm4115, 1.0, -1.0
        %v4124 = vsel %vm4116, 1.0, -1.0
        %v4125 = vand.u32 2147483647, %v4101
        %v4126 = vand.u32 2147483647, %v4102
        %v4127 = vand.u32 2147483647, %v4103
        %v4128 = vand.u32 2147483647, %v4104
        %v4129 = vand.u32 2147483647, %v4105
        %v4130 = vand.u32 2147483647, %v4106
        %v4131 = vand.u32 2147483647, %v4107
        %v4132 = vand.u32 2147483647, %v4108
        %v4133 = vmul.f32 %v4125, 0.3275911
        %v4134 = vmul.f32 %v4126, 0.3275911
        %v4135 = vmul.f32 %v4127, 0.3275911
        %v4136 = vmul.f32 %v4128, 0.3275911
        %v4137 = vmul.f32 %v4129, 0.3275911
        %v4138 = vmul.f32 %v4130, 0.3275911
        %v4139 = vmul.f32 %v4131, 0.3275911
        %v4140 = vmul.f32 %v4132, 0.3275911
        %v4141 = vadd.f32 %v4133, 1.0
        %v4142 = vadd.f32 %v4134, 1.0
        %v4143 = vadd.f32 %v4135, 1.0
        %v4144 = vadd.f32 %v4136, 1.0
        %v4145 = vadd.f32 %v4137, 1.0
        %v4146 = vadd.f32 %v4138, 1.0
        %v4147 = vadd.f32 %v4139, 1.0
        %v4148 = vadd.f32 %v4140, 1.0
        %v4149 = vrcp.pop %v4141
        %v4150 = vmul.f32 1.0, %v4149
        %v4151 = vrcp.pop %v4142
        %v4152 = vmul.f32 1.0, %v4151
        %v4153 = vrcp.pop %v4143
        %v4154 = vmul.f32 1.0, %v4153
        %v4155 = vrcp.pop %v4144
        %v4156 = vmul.f32 1.0, %v4155
        %v4157 = vrcp.pop %v4145
        %v4158 = vmul.f32 1.0, %v4157
        %v4159 = vrcp.pop %v4146
        %v4160 = vmul.f32 1.0, %v4159
        %v4161 = vrcp.pop %v4147
        %v4162 = vmul.f32 1.0, %v4161
        %v4163 = vrcp.pop %v4148
        %v4164 = vmul.f32 1.0, %v4163
        %v4165 = vmul.f32 %v4150, 1.0614054
        %v4166 = vmul.f32 %v4152, 1.0614054
        %v4167 = vmul.f32 %v4154, 1.0614054
        %v4168 = vmul.f32 %v4156, 1.0614054
        %v4169 = vmul.f32 %v4158, 1.0614054
        %v4170 = vmul.f32 %v4160, 1.0614054
        %v4171 = vmul.f32 %v4162, 1.0614054
        %v4172 = vmul.f32 %v4164, 1.0614054
        %v4173 = vadd.f32 %v4165, -1.4531521
        %v4174 = vadd.f32 %v4166, -1.4531521
        %v4175 = vadd.f32 %v4167, -1.4531521
        %v4176 = vadd.f32 %v4168, -1.4531521
        %v4177 = vadd.f32 %v4169, -1.4531521
        %v4178 = vadd.f32 %v4170, -1.4531521
        %v4179 = vadd.f32 %v4171, -1.4531521
        %v4180 = vadd.f32 %v4172, -1.4531521
        %v4181 = vmul.f32 %v4173, %v4150
        %v4182 = vmul.f32 %v4174, %v4152
        %v4183 = vmul.f32 %v4175, %v4154
        %v4184 = vmul.f32 %v4176, %v4156
        %v4185 = vmul.f32 %v4177, %v4158
        %v4186 = vmul.f32 %v4178, %v4160
        %v4187 = vmul.f32 %v4179, %v4162
        %v4188 = vmul.f32 %v4180, %v4164
        %v4189 = vadd.f32 %v4181, 1.4214138
        %v4190 = vadd.f32 %v4182, 1.4214138
        %v4191 = vadd.f32 %v4183, 1.4214138
        %v4192 = vadd.f32 %v4184, 1.4214138
        %v4193 = vadd.f32 %v4185, 1.4214138
        %v4194 = vadd.f32 %v4186, 1.4214138
        %v4195 = vadd.f32 %v4187, 1.4214138
        %v4196 = vadd.f32 %v4188, 1.4214138
        %v4197 = vmul.f32 %v4189, %v4150
        %v4198 = vmul.f32 %v4190, %v4152
        %v4199 = vmul.f32 %v4191, %v4154
        %v4200 = vmul.f32 %v4192, %v4156
        %v4201 = vmul.f32 %v4193, %v4158
        %v4202 = vmul.f32 %v4194, %v4160
        %v4203 = vmul.f32 %v4195, %v4162
        %v4204 = vmul.f32 %v4196, %v4164
        %v4205 = vadd.f32 %v4197, -0.28449672
        %v4206 = vadd.f32 %v4198, -0.28449672
        %v4207 = vadd.f32 %v4199, -0.28449672
        %v4208 = vadd.f32 %v4200, -0.28449672
        %v4209 = vadd.f32 %v4201, -0.28449672
        %v4210 = vadd.f32 %v4202, -0.28449672
        %v4211 = vadd.f32 %v4203, -0.28449672
        %v4212 = vadd.f32 %v4204, -0.28449672
        %v4213 = vmul.f32 %v4205, %v4150
        %v4214 = vmul.f32 %v4206, %v4152
        %v4215 = vmul.f32 %v4207, %v4154
        %v4216 = vmul.f32 %v4208, %v4156
        %v4217 = vmul.f32 %v4209, %v4158
        %v4218 = vmul.f32 %v4210, %v4160
        %v4219 = vmul.f32 %v4211, %v4162
        %v4220 = vmul.f32 %v4212, %v4164
        %v4221 = vadd.f32 %v4213, 0.2548296
        %v4222 = vadd.f32 %v4214, 0.2548296
        %v4223 = vadd.f32 %v4215, 0.2548296
        %v4224 = vadd.f32 %v4216, 0.2548296
        %v4225 = vadd.f32 %v4217, 0.2548296
        %v4226 = vadd.f32 %v4218, 0.2548296
        %v4227 = vadd.f32 %v4219, 0.2548296
        %v4228 = vadd.f32 %v4220, 0.2548296
        %v4229 = vmul.f32 %v4221, %v4150
        %v4230 = vmul.f32 %v4222, %v4152
        %v4231 = vmul.f32 %v4223, %v4154
        %v4232 = vmul.f32 %v4224, %v4156
        %v4233 = vmul.f32 %v4225, %v4158
        %v4234 = vmul.f32 %v4226, %v4160
        %v4235 = vmul.f32 %v4227, %v4162
        %v4236 = vmul.f32 %v4228, %v4164
        %v4237 = vsub.f32 0.0, %v4125
        %v4238 = vsub.f32 0.0, %v4126
        %v4239 = vsub.f32 0.0, %v4127
        %v4240 = vsub.f32 0.0, %v4128
        %v4241 = vsub.f32 0.0, %v4129
        %v4242 = vsub.f32 0.0, %v4130
        %v4243 = vsub.f32 0.0, %v4131
        %v4244 = vsub.f32 0.0, %v4132
        %v4245 = vmul.f32 %v4237, %v4125
        %v4246 = vmul.f32 %v4238, %v4126
        %v4247 = vmul.f32 %v4239, %v4127
        %v4248 = vmul.f32 %v4240, %v4128
        %v4249 = vmul.f32 %v4241, %v4129
        %v4250 = vmul.f32 %v4242, %v4130
        %v4251 = vmul.f32 %v4243, %v4131
        %v4252 = vmul.f32 %v4244, %v4132
        %v4253 = vmul.f32 %v4245, 1.442695
        %v4254 = vpow.pop %v4253
        %v4255 = vmul.f32 %v4246, 1.442695
        %v4256 = vpow.pop %v4255
        %v4257 = vmul.f32 %v4247, 1.442695
        %v4258 = vpow.pop %v4257
        %v4259 = vmul.f32 %v4248, 1.442695
        %v4260 = vpow.pop %v4259
        %v4261 = vmul.f32 %v4249, 1.442695
        %v4262 = vpow.pop %v4261
        %v4263 = vmul.f32 %v4250, 1.442695
        %v4264 = vpow.pop %v4263
        %v4265 = vmul.f32 %v4251, 1.442695
        %v4266 = vpow.pop %v4265
        %v4267 = vmul.f32 %v4252, 1.442695
        %v4268 = vpow.pop %v4267
        %v4269 = vmul.f32 %v4229, %v4254
        %v4270 = vmul.f32 %v4230, %v4256
        %v4271 = vmul.f32 %v4231, %v4258
        %v4272 = vmul.f32 %v4232, %v4260
        %v4273 = vmul.f32 %v4233, %v4262
        %v4274 = vmul.f32 %v4234, %v4264
        %v4275 = vmul.f32 %v4235, %v4266
        %v4276 = vmul.f32 %v4236, %v4268
        %v4277 = vsub.f32 1.0, %v4269
        %v4278 = vsub.f32 1.0, %v4270
        %v4279 = vsub.f32 1.0, %v4271
        %v4280 = vsub.f32 1.0, %v4272
        %v4281 = vsub.f32 1.0, %v4273
        %v4282 = vsub.f32 1.0, %v4274
        %v4283 = vsub.f32 1.0, %v4275
        %v4284 = vsub.f32 1.0, %v4276
        %v4285 = vmul.f32 %v4117, %v4277
        %v4286 = vmul.f32 %v4118, %v4278
        %v4287 = vmul.f32 %v4119, %v4279
        %v4288 = vmul.f32 %v4120, %v4280
        %v4289 = vmul.f32 %v4121, %v4281
        %v4290 = vmul.f32 %v4122, %v4282
        %v4291 = vmul.f32 %v4123, %v4283
        %v4292 = vmul.f32 %v4124, %v4284
        %v4293 = vadd.f32 %v4285, 1.0
        %v4294 = vadd.f32 %v4286, 1.0
        %v4295 = vadd.f32 %v4287, 1.0
        %v4296 = vadd.f32 %v4288, 1.0
        %v4297 = vadd.f32 %v4289, 1.0
        %v4298 = vadd.f32 %v4290, 1.0
        %v4299 = vadd.f32 %v4291, 1.0
        %v4300 = vadd.f32 %v4292, 1.0
        %v4301 = vmul.f32 %v4093, %v4293
        %v4302 = vmul.f32 %v4094, %v4294
        %v4303 = vmul.f32 %v4095, %v4295
        %v4304 = vmul.f32 %v4096, %v4296
        %v4305 = vmul.f32 %v4097, %v4297
        %v4306 = vmul.f32 %v4098, %v4298
        %v4307 = vmul.f32 %v4099, %v4299
        %v4308 = vmul.f32 %v4100, %v4300
        %v4309 = vadd.f32 %v974, %v4301
        %v4310 = vadd.f32 %v975, %v4302
        %v4311 = vadd.f32 %v976, %v4303
        %v4312 = vadd.f32 %v977, %v4304
        %v4313 = vadd.f32 %v978, %v4305
        %v4314 = vadd.f32 %v979, %v4306
        %v4315 = vadd.f32 %v980, %v4307
        %v4316 = vadd.f32 %v981, %v4308
        %v4318 = vsel %vm546, %v1410, 0
        %4320 = vmatprep.subr.mxu0 0.0
        %4321 = vmatpush1.msra.mxu0 0.0
        %4322 = vmatprep.subr.mxu0 0.0
        %4323 = vmatpush1.msra.mxu0 0.0
        %4324 = vmatprep.subr.mxu0 0.0
        %4325 = vmatpush1.msra.mxu0 0.0
        %4326 = vmatprep.subr.mxu0 0.0
        %4327 = vmatpush1.msra.mxu0 0.0
        %4328 = vmatprep.subr.mxu0 0.0
        %4329 = vmatpush1.msra.mxu0 0.0
        %4330 = vmatprep.subr.mxu0 0.0
        %4331 = vmatpush1.msra.mxu0 0.0
        %4332 = vmatprep.subr.mxu0 0.0
        %4333 = vmatpush1.msra.mxu0 0.0
        %4334 = vmatprep.subr.mxu0 0.0
        %4335 = vmatpush1.msra.mxu0 0.0
        %4336 = vmatprep.subr.mxu0 0.0
        %4337 = vmatpush1.msra.mxu0 0.0
        %4338 = vmatprep.subr.mxu0 0.0
        %4339 = vmatpush1.msra.mxu0 0.0
        %4340 = vmatprep.subr.mxu0 0.0
        %4341 = vmatpush1.msra.mxu0 0.0
        %4342 = vmatprep.subr.mxu0 0.0
        %4343 = vmatpush1.msra.mxu0 0.0
        %4344 = vmatprep.subr.mxu0 0.0
        %4345 = vmatpush1.msra.mxu0 %v564
        %4346 = vmatprep.subr.mxu0 0.0
        %4347 = vmatpush1.msra.mxu0 %v563
        %4348 = vmatprep.subr.mxu0 0.0
        %4349 = vmatpush1.msra.mxu0 %v562
        %4350 = vmatprep.subr.mxu0 0.0
        %4351 = vmatpush1.msra.mxu0 %v561
        %4352 = vmatprep.subr.mxu0 0.0
        %4353 = vmatpush2.msra.mxu0 0.0
        %4354 = vmatprep.subr.mxu0 0.0
        %4355 = vmatpush2.msra.mxu0 0.0
        %4356 = vmatprep.subr.mxu0 0.0
        %4357 = vmatpush2.msra.mxu0 0.0
        %4358 = vmatprep.subr.mxu0 0.0
        %4359 = vmatpush2.msra.mxu0 0.0
        %4360 = vmatprep.subr.mxu0 0.0
        %4361 = vmatpush2.msra.mxu0 0.0
        %4362 = vmatprep.subr.mxu0 0.0
        %4363 = vmatpush2.msra.mxu0 0.0
        %4364 = vmatprep.subr.mxu0 0.0
        %4365 = vmatpush2.msra.mxu0 0.0
        %4366 = vmatprep.subr.mxu0 0.0
        %4367 = vmatpush2.msra.mxu0 0.0
        %4368 = vmatprep.subr.mxu0 0.0
        %4369 = vmatpush2.msra.mxu0 0.0
        %4370 = vmatprep.subr.mxu0 0.0
        %4371 = vmatpush2.msra.mxu0 0.0
        %4372 = vmatprep.subr.mxu0 0.0
        %4373 = vmatpush2.msra.mxu0 0.0
        %4374 = vmatprep.subr.mxu0 0.0
        %4375 = vmatpush2.msra.mxu0 0.0
        %4376 = vmatprep.subr.mxu0 0.0
        %4377 = vmatpush2.msra.mxu0 0.0
        %4378 = vmatprep.subr.mxu0 0.0
        %4379 = vmatpush2.msra.mxu0 0.0
        %4380 = vmatprep.subr.mxu0 0.0
        %4381 = vmatpush2.msra.mxu0 0.0
        %4382 = vmatprep.subr.mxu0 0.0
        %4383 = vmatpush2.msra.mxu0 0.0
        %4384 = vmatprep.mubr.f32.mxu0 0.0
        %4385 = vmatmul.mubr.f32.gmra.mxu0 %v4318
        %v4386 = vpop.f32.mrf.mxu0
        %v4387 = vadd.f32 0.0, %v4386
        %v4388 = vpop.f32.mrf.mxu0
        %4389 = vdwg.mxu0
        %v4391 = vsel %vm546, %v4309, 0
        %v4394 = vsel %vm546, %v4310, 0
        %v4397 = vsel %vm546, %v4311, 0
        %v4400 = vsel %vm546, %v4312, 0
        %v4403 = vsel %vm546, %v4313, 0
        %v4406 = vsel %vm546, %v4314, 0
        %v4409 = vsel %vm546, %v4315, 0
        %v4412 = vsel %vm546, %v4316, 0
        %4414 = vmatprep.subr.mxu0 0.0
        %4415 = vmatpush1.msra.mxu0 0.0
        %4416 = vmatprep.subr.mxu0 0.0
        %4417 = vmatpush1.msra.mxu0 0.0
        %4418 = vmatprep.subr.mxu0 0.0
        %4419 = vmatpush1.msra.mxu0 0.0
        %4420 = vmatprep.subr.mxu0 0.0
        %4421 = vmatpush1.msra.mxu0 0.0
        %4422 = vmatprep.subr.mxu0 0.0
        %4423 = vmatpush1.msra.mxu0 0.0
        %4424 = vmatprep.subr.mxu0 0.0
        %4425 = vmatpush1.msra.mxu0 0.0
        %4426 = vmatprep.subr.mxu0 0.0
        %4427 = vmatpush1.msra.mxu0 0.0
        %4428 = vmatprep.subr.mxu0 0.0
        %4429 = vmatpush1.msra.mxu0 0.0
        %4430 = vmatprep.subr.mxu0 0.0
        %4431 = vmatpush1.msra.mxu0 0.0
        %4432 = vmatprep.subr.mxu0 0.0
        %4433 = vmatpush1.msra.mxu0 0.0
        %4434 = vmatprep.subr.mxu0 0.0
        %4435 = vmatpush1.msra.mxu0 0.0
        %4436 = vmatprep.subr.mxu0 0.0
        %4437 = vmatpush1.msra.mxu0 0.0
        %4438 = vmatprep.subr.mxu0 0.0
        %4439 = vmatpush1.msra.mxu0 %v568
        %4440 = vmatprep.subr.mxu0 0.0
        %4441 = vmatpush1.msra.mxu0 %v567
        %4442 = vmatprep.subr.mxu0 0.0
        %4443 = vmatpush1.msra.mxu0 %v566
        %4444 = vmatprep.subr.mxu0 0.0
        %4445 = vmatpush1.msra.mxu0 %v565
        %4446 = vmatprep.subr.mxu0 0.0
        %4447 = vmatpush2.msra.mxu0 0.0
        %4448 = vmatprep.subr.mxu0 0.0
        %4449 = vmatpush2.msra.mxu0 0.0
        %4450 = vmatprep.subr.mxu0 0.0
        %4451 = vmatpush2.msra.mxu0 0.0
        %4452 = vmatprep.subr.mxu0 0.0
        %4453 = vmatpush2.msra.mxu0 0.0
        %4454 = vmatprep.subr.mxu0 0.0
        %4455 = vmatpush2.msra.mxu0 0.0
        %4456 = vmatprep.subr.mxu0 0.0
        %4457 = vmatpush2.msra.mxu0 0.0
        %4458 = vmatprep.subr.mxu0 0.0
        %4459 = vmatpush2.msra.mxu0 0.0
        %4460 = vmatprep.subr.mxu0 0.0
        %4461 = vmatpush2.msra.mxu0 0.0
        %4462 = vmatprep.subr.mxu0 0.0
        %4463 = vmatpush2.msra.mxu0 0.0
        %4464 = vmatprep.subr.mxu0 0.0
        %4465 = vmatpush2.msra.mxu0 0.0
        %4466 = vmatprep.subr.mxu0 0.0
        %4467 = vmatpush2.msra.mxu0 0.0
        %4468 = vmatprep.subr.mxu0 0.0
        %4469 = vmatpush2.msra.mxu0 0.0
        %4470 = vmatprep.subr.mxu0 0.0
        %4471 = vmatpush2.msra.mxu0 0.0
        %4472 = vmatprep.subr.mxu0 0.0
        %4473 = vmatpush2.msra.mxu0 0.0
        %4474 = vmatprep.subr.mxu0 0.0
        %4475 = vmatpush2.msra.mxu0 0.0
        %4476 = vmatprep.subr.mxu0 0.0
        %4477 = vmatpush2.msra.mxu0 0.0
        %4478 = vmatprep.mubr.f32.mxu0 0.0
        %4479 = vmatmul.mubr.f32.gmra.mxu0 %v4391
        %v4480 = vpop.f32.mrf.mxu0
        %v4481 = vadd.f32 0.0, %v4480
        %v4482 = vpop.f32.mrf.mxu0
        %4483 = vmatprep.mubr.f32.mxu0 0.0
        %4484 = vmatmul.mubr.f32.gmra.mxu0 %v4394
        %v4485 = vpop.f32.mrf.mxu0
        %v4486 = vadd.f32 0.0, %v4485
        %v4487 = vpop.f32.mrf.mxu0
        %4488 = vmatprep.mubr.f32.mxu0 0.0
        %4489 = vmatmul.mubr.f32.gmra.mxu0 %v4397
        %v4490 = vpop.f32.mrf.mxu0
        %v4491 = vadd.f32 0.0, %v4490
        %v4492 = vpop.f32.mrf.mxu0
        %4493 = vmatprep.mubr.f32.mxu0 0.0
        %4494 = vmatmul.mubr.f32.gmra.mxu0 %v4400
        %v4495 = vpop.f32.mrf.mxu0
        %v4496 = vadd.f32 0.0, %v4495
        %v4497 = vpop.f32.mrf.mxu0
        %4498 = vmatprep.mubr.f32.mxu0 0.0
        %4499 = vmatmul.mubr.f32.gmra.mxu0 %v4403
        %v4500 = vpop.f32.mrf.mxu0
        %v4501 = vadd.f32 0.0, %v4500
        %v4502 = vpop.f32.mrf.mxu0
        %4503 = vmatprep.mubr.f32.mxu0 0.0
        %4504 = vmatmul.mubr.f32.gmra.mxu0 %v4406
        %v4505 = vpop.f32.mrf.mxu0
        %v4506 = vadd.f32 0.0, %v4505
        %v4507 = vpop.f32.mrf.mxu0
        %4508 = vmatprep.mubr.f32.mxu0 0.0
        %4509 = vmatmul.mubr.f32.gmra.mxu0 %v4409
        %v4510 = vpop.f32.mrf.mxu0
        %v4511 = vadd.f32 0.0, %v4510
        %v4512 = vpop.f32.mrf.mxu0
        %4513 = vmatprep.mubr.f32.mxu0 0.0
        %4514 = vmatmul.mubr.f32.gmra.mxu0 %v4412
        %v4515 = vpop.f32.mrf.mxu0
        %v4516 = vadd.f32 0.0, %v4515
        %v4517 = vpop.f32.mrf.mxu0
        %4518 = vdwg.mxu0
        %v4520 = vsel %vm546, %v4387, 0
        %v4523 = vsel %vm546, %v4481, 0
        %v4526 = vsel %vm546, %v4486, 0
        %v4529 = vsel %vm546, %v4491, 0
        %v4532 = vsel %vm546, %v4496, 0
        %v4535 = vsel %vm546, %v4501, 0
        %v4538 = vsel %vm546, %v4506, 0
        %v4541 = vsel %vm546, %v4511, 0
        %v4544 = vsel %vm546, %v4516, 0
        %4546 = vmatprep.subr.mxu0 0.0
        %4547 = vmatpush1.xpose.msra.mxu0 0.0
        %4548 = vmatprep.subr.mxu0 0.0
        %4549 = vmatpush1.xpose.msra.mxu0 0.0
        %4550 = vmatprep.subr.mxu0 0.0
        %4551 = vmatpush1.xpose.msra.mxu0 0.0
        %4552 = vmatprep.subr.mxu0 0.0
        %4553 = vmatpush1.xpose.msra.mxu0 0.0
        %4554 = vmatprep.subr.mxu0 0.0
        %4555 = vmatpush1.xpose.msra.mxu0 0.0
        %4556 = vmatprep.subr.mxu0 0.0
        %4557 = vmatpush1.xpose.msra.mxu0 0.0
        %4558 = vmatprep.subr.mxu0 0.0
        %4559 = vmatpush1.xpose.msra.mxu0 0.0
        %4560 = vmatprep.subr.mxu0 0.0
        %4561 = vmatpush1.xpose.msra.mxu0 0.0
        %4562 = vmatprep.subr.mxu0 0.0
        %4563 = vmatpush1.xpose.msra.mxu0 %v4544
        %4564 = vmatprep.subr.mxu0 0.0
        %4565 = vmatpush1.xpose.msra.mxu0 %v4541
        %4566 = vmatprep.subr.mxu0 0.0
        %4567 = vmatpush1.xpose.msra.mxu0 %v4538
        %4568 = vmatprep.subr.mxu0 0.0
        %4569 = vmatpush1.xpose.msra.mxu0 %v4535
        %4570 = vmatprep.subr.mxu0 0.0
        %4571 = vmatpush1.xpose.msra.mxu0 %v4532
        %4572 = vmatprep.subr.mxu0 0.0
        %4573 = vmatpush1.xpose.msra.mxu0 %v4529
        %4574 = vmatprep.subr.mxu0 0.0
        %4575 = vmatpush1.xpose.msra.mxu0 %v4526
        %4576 = vmatprep.subr.mxu0 0.0
        %4577 = vmatpush1.xpose.msra.mxu0 %v4523
        %4578 = vmatprep.subr.mxu0 0.0
        %4579 = vmatpush2.xpose.msra.mxu0 0.0
        %4580 = vmatprep.subr.mxu0 0.0
        %4581 = vmatpush2.xpose.msra.mxu0 0.0
        %4582 = vmatprep.subr.mxu0 0.0
        %4583 = vmatpush2.xpose.msra.mxu0 0.0
        %4584 = vmatprep.subr.mxu0 0.0
        %4585 = vmatpush2.xpose.msra.mxu0 0.0
        %4586 = vmatprep.subr.mxu0 0.0
        %4587 = vmatpush2.xpose.msra.mxu0 0.0
        %4588 = vmatprep.subr.mxu0 0.0
        %4589 = vmatpush2.xpose.msra.mxu0 0.0
        %4590 = vmatprep.subr.mxu0 0.0
        %4591 = vmatpush2.xpose.msra.mxu0 0.0
        %4592 = vmatprep.subr.mxu0 0.0
        %4593 = vmatpush2.xpose.msra.mxu0 0.0
        %4594 = vmatprep.subr.mxu0 0.0
        %4595 = vmatpush2.xpose.msra.mxu0 0.0
        %4596 = vmatprep.subr.mxu0 0.0
        %4597 = vmatpush2.xpose.msra.mxu0 0.0
        %4598 = vmatprep.subr.mxu0 0.0
        %4599 = vmatpush2.xpose.msra.mxu0 0.0
        %4600 = vmatprep.subr.mxu0 0.0
        %4601 = vmatpush2.xpose.msra.mxu0 0.0
        %4602 = vmatprep.subr.mxu0 0.0
        %4603 = vmatpush2.xpose.msra.mxu0 0.0
        %4604 = vmatprep.subr.mxu0 0.0
        %4605 = vmatpush2.xpose.msra.mxu0 0.0
        %4606 = vmatprep.subr.mxu0 0.0
        %4607 = vmatpush2.xpose.msra.mxu0 0.0
        %4608 = vmatprep.subr.mxu0 0.0
        %4609 = vmatpush2.xpose.msra.mxu0 0.0
        %4610 = vmatprep.mubr.f32.mxu0 0.0
        %4611 = vmatmul.mubr.f32.gmra.mxu0 %v4520
        %v4612 = vpop.f32.mrf.mxu0
        %v4613 = vadd.f32 0.0, %v4612
        %v4614 = vpop.f32.mrf.mxu0
        %4615 = vdwg.mxu0
        %v4616 = vmul.f32 %v4613, 0.17677669
        %v4617 = vsel %vm1283, %v4616, -inf
        %4618 = vmax.xlane.f32.xlu0 %v4617
        %v4619 = vpop.xlane.xlu0 %4618
        %v4620 = vsub.f32 %v4616, %v4619
        %v4621 = vmul.f32 %v4620, 1.442695
        %v4622 = vpow.pop %v4621
        %v4623 = vsel %vm1283, %v4622, 0.0
        %4624 = vadd.xlane.f32.xlu0 %v4623
        %v4625 = vpop.xlane.xlu0 %4624
        %v4626 = vrcp.pop %v4625
        %v4627 = vmul.f32 %v4622, %v4626
        %4628 = vrot.lane.b32.xlu0 %v4481, 96
        %v4629 = vpop.permute.xlu0 %4628
        %4630 = vrot.lane.b32.xlu0 %v4486, 96
        %v4631 = vpop.permute.xlu0 %4630
        %4632 = vrot.lane.b32.xlu0 %v4491, 96
        %v4633 = vpop.permute.xlu0 %4632
        %4634 = vrot.lane.b32.xlu0 %v4496, 96
        %v4635 = vpop.permute.xlu0 %4634
        %4636 = vrot.lane.b32.xlu0 %v4501, 96
        %v4637 = vpop.permute.xlu0 %4636
        %4638 = vrot.lane.b32.xlu0 %v4506, 96
        %v4639 = vpop.permute.xlu0 %4638
        %4640 = vrot.lane.b32.xlu0 %v4511, 96
        %v4641 = vpop.permute.xlu0 %4640
        %4642 = vrot.lane.b32.xlu0 %v4516, 96
        %v4643 = vpop.permute.xlu0 %4642
        %v4653 = vsel %vm1319, %v4627, 0
        %4655 = vmatprep.subr.mxu0 0.0
        %4656 = vmatpush1.msra.mxu0 0.0
        %4657 = vmatprep.subr.mxu0 0.0
        %4658 = vmatpush1.msra.mxu0 0.0
        %4659 = vmatprep.subr.mxu0 0.0
        %4660 = vmatpush1.msra.mxu0 0.0
        %4661 = vmatprep.subr.mxu0 0.0
        %4662 = vmatpush1.msra.mxu0 0.0
        %4663 = vmatprep.subr.mxu0 0.0
        %4664 = vmatpush1.msra.mxu0 0.0
        %4665 = vmatprep.subr.mxu0 0.0
        %4666 = vmatpush1.msra.mxu0 0.0
        %4667 = vmatprep.subr.mxu0 0.0
        %4668 = vmatpush1.msra.mxu0 0.0
        %4669 = vmatprep.subr.mxu0 0.0
        %4670 = vmatpush1.msra.mxu0 0.0
        %4671 = vmatprep.subr.mxu0 0.0
        %4672 = vmatpush1.msra.mxu0 %v4643
        %4673 = vmatprep.subr.mxu0 0.0
        %4674 = vmatpush1.msra.mxu0 %v4641
        %4675 = vmatprep.subr.mxu0 0.0
        %4676 = vmatpush1.msra.mxu0 %v4639
        %4677 = vmatprep.subr.mxu0 0.0
        %4678 = vmatpush1.msra.mxu0 %v4637
        %4679 = vmatprep.subr.mxu0 0.0
        %4680 = vmatpush1.msra.mxu0 %v4635
        %4681 = vmatprep.subr.mxu0 0.0
        %4682 = vmatpush1.msra.mxu0 %v4633
        %4683 = vmatprep.subr.mxu0 0.0
        %4684 = vmatpush1.msra.mxu0 %v4631
        %4685 = vmatprep.subr.mxu0 0.0
        %4686 = vmatpush1.msra.mxu0 %v4629
        %4687 = vmatprep.subr.mxu0 0.0
        %4688 = vmatpush2.msra.mxu0 0.0
        %4689 = vmatprep.subr.mxu0 0.0
        %4690 = vmatpush2.msra.mxu0 0.0
        %4691 = vmatprep.subr.mxu0 0.0
        %4692 = vmatpush2.msra.mxu0 0.0
        %4693 = vmatprep.subr.mxu0 0.0
        %4694 = vmatpush2.msra.mxu0 0.0
        %4695 = vmatprep.subr.mxu0 0.0
        %4696 = vmatpush2.msra.mxu0 0.0
        %4697 = vmatprep.subr.mxu0 0.0
        %4698 = vmatpush2.msra.mxu0 0.0
        %4699 = vmatprep.subr.mxu0 0.0
        %4700 = vmatpush2.msra.mxu0 0.0
        %4701 = vmatprep.subr.mxu0 0.0
        %4702 = vmatpush2.msra.mxu0 0.0
        %4703 = vmatprep.subr.mxu0 0.0
        %4704 = vmatpush2.msra.mxu0 0.0
        %4705 = vmatprep.subr.mxu0 0.0
        %4706 = vmatpush2.msra.mxu0 0.0
        %4707 = vmatprep.subr.mxu0 0.0
        %4708 = vmatpush2.msra.mxu0 0.0
        %4709 = vmatprep.subr.mxu0 0.0
        %4710 = vmatpush2.msra.mxu0 0.0
        %4711 = vmatprep.subr.mxu0 0.0
        %4712 = vmatpush2.msra.mxu0 0.0
        %4713 = vmatprep.subr.mxu0 0.0
        %4714 = vmatpush2.msra.mxu0 0.0
        %4715 = vmatprep.subr.mxu0 0.0
        %4716 = vmatpush2.msra.mxu0 0.0
        %4717 = vmatprep.subr.mxu0 0.0
        %4718 = vmatpush2.msra.mxu0 0.0
        %4719 = vmatprep.mubr.f32.mxu0 0.0
        %4720 = vmatmul.mubr.f32.gmra.mxu0 %v4653
        %v4721 = vpop.f32.mrf.mxu0
        %v4722 = vadd.f32 0.0, %v4721
        %v4723 = vpop.f32.mrf.mxu0
        %4724 = vdwg.mxu0
        %v4725 = vadd.f32 %v1410, %v4722
        %v4726 = vsel %vm1394, %v4725, 0.0
        %4727 = vadd.xlane.f32.xlu0 %v4726
        %v4728 = vpop.xlane.xlu0 %4727
        %v4729 = vmul.f32 %v4728, %v1398
        %v4730 = vsub.f32 %v4725, %v4729
        %v4731 = vmul.f32 %v4730, %v4730
        %v4732 = vsel %vm1394, %v4731, 0.0
        %4733 = vadd.xlane.f32.xlu0 %v4732
        %v4734 = vpop.xlane.xlu0 %4733
        %v4735 = vmul.f32 %v4734, %v1398
        %v4736 = vadd.f32 %v4735, 1e-05
        %v4737 = vrsqrt.pop %v4736
        %v4738 = vmul.f32 %v4730, %v4737
        %v4739 = vmul.f32 %v4738, %v569
        %v4740 = vadd.f32 %v4739, %v570
        %s4741 = scalar_lea.vmem %s9, 32
        %v4742 = vld [vmem:[%s4741] sm:$0xff]
        %v4743 = vld [vmem:[%s4741 + $0x8] sm:$0xff]
        %v4744 = vld [vmem:[%s4741 + $0x10] sm:$0xff]
        %v4745 = vld [vmem:[%s4741 + $0x18] sm:$0xff]
        %s4746 = scalar_lea.vmem %s10, 1
        %v4747 = vld [vmem:[%s4746] sm:$0x1]
        %v4749 = vlaneseq
        %v4750 = vshrl.u32 %v4749, 7
        %v4751 = vsub.s32 0, %v4750
        %v4752 = vrot.slane %v4747, %v4751
        %4754 = vmatprep.subr.mxu0 0.0
        %4755 = vmatpush1.msra.mxu0 0.0
        %4756 = vmatprep.subr.mxu0 0.0
        %4757 = vmatpush1.msra.mxu0 0.0
        %4758 = vmatprep.subr.mxu0 0.0
        %4759 = vmatpush1.msra.mxu0 0.0
        %4760 = vmatprep.subr.mxu0 0.0
        %4761 = vmatpush1.msra.mxu0 0.0
        %4762 = vmatprep.subr.mxu0 0.0
        %4763 = vmatpush1.msra.mxu0 0.0
        %4764 = vmatprep.subr.mxu0 0.0
        %4765 = vmatpush1.msra.mxu0 0.0
        %4766 = vmatprep.subr.mxu0 0.0
        %4767 = vmatpush1.msra.mxu0 0.0
        %4768 = vmatprep.subr.mxu0 0.0
        %4769 = vmatpush1.msra.mxu0 0.0
        %4770 = vmatprep.subr.mxu0 0.0
        %4771 = vmatpush1.msra.mxu0 0.0
        %4772 = vmatprep.subr.mxu0 0.0
        %4773 = vmatpush1.msra.mxu0 0.0
        %4774 = vmatprep.subr.mxu0 0.0
        %4775 = vmatpush1.msra.mxu0 0.0
        %4776 = vmatprep.subr.mxu0 0.0
        %4777 = vmatpush1.msra.mxu0 0.0
        %4778 = vmatprep.subr.mxu0 0.0
        %4779 = vmatpush1.msra.mxu0 %v4745
        %4780 = vmatprep.subr.mxu0 0.0
        %4781 = vmatpush1.msra.mxu0 %v4744
        %4782 = vmatprep.subr.mxu0 0.0
        %4783 = vmatpush1.msra.mxu0 %v4743
        %4784 = vmatprep.subr.mxu0 0.0
        %4785 = vmatpush1.msra.mxu0 %v4742
        %4786 = vmatprep.subr.mxu0 0.0
        %4787 = vmatpush2.msra.mxu0 0.0
        %4788 = vmatprep.subr.mxu0 0.0
        %4789 = vmatpush2.msra.mxu0 0.0
        %4790 = vmatprep.subr.mxu0 0.0
        %4791 = vmatpush2.msra.mxu0 0.0
        %4792 = vmatprep.subr.mxu0 0.0
        %4793 = vmatpush2.msra.mxu0 0.0
        %4794 = vmatprep.subr.mxu0 0.0
        %4795 = vmatpush2.msra.mxu0 0.0
        %4796 = vmatprep.subr.mxu0 0.0
        %4797 = vmatpush2.msra.mxu0 0.0
        %4798 = vmatprep.subr.mxu0 0.0
        %4799 = vmatpush2.msra.mxu0 0.0
        %4800 = vmatprep.subr.mxu0 0.0
        %4801 = vmatpush2.msra.mxu0 0.0
        %4802 = vmatprep.subr.mxu0 0.0
        %4803 = vmatpush2.msra.mxu0 0.0
        %4804 = vmatprep.subr.mxu0 0.0
        %4805 = vmatpush2.msra.mxu0 0.0
        %4806 = vmatprep.subr.mxu0 0.0
        %4807 = vmatpush2.msra.mxu0 0.0
        %4808 = vmatprep.subr.mxu0 0.0
        %4809 = vmatpush2.msra.mxu0 0.0
        %4810 = vmatprep.subr.mxu0 0.0
        %4811 = vmatpush2.msra.mxu0 0.0
        %4812 = vmatprep.subr.mxu0 0.0
        %4813 = vmatpush2.msra.mxu0 0.0
        %4814 = vmatprep.subr.mxu0 0.0
        %4815 = vmatpush2.msra.mxu0 0.0
        %4816 = vmatprep.subr.mxu0 0.0
        %4817 = vmatpush2.msra.mxu0 0.0
        %4818 = vmatprep.mubr.f32.mxu0 0.0
        %4819 = vmatmul.mubr.f32.gmra.mxu0 %v4391
        %v4820 = vpop.f32.mrf.mxu0
        %v4821 = vadd.f32 %v4752, %v4820
        %v4822 = vpop.f32.mrf.mxu0
        %4823 = vmatprep.mubr.f32.mxu0 0.0
        %4824 = vmatmul.mubr.f32.gmra.mxu0 %v4394
        %v4825 = vpop.f32.mrf.mxu0
        %v4826 = vadd.f32 %v4752, %v4825
        %v4827 = vpop.f32.mrf.mxu0
        %4828 = vmatprep.mubr.f32.mxu0 0.0
        %4829 = vmatmul.mubr.f32.gmra.mxu0 %v4397
        %v4830 = vpop.f32.mrf.mxu0
        %v4831 = vadd.f32 %v4752, %v4830
        %v4832 = vpop.f32.mrf.mxu0
        %4833 = vmatprep.mubr.f32.mxu0 0.0
        %4834 = vmatmul.mubr.f32.gmra.mxu0 %v4400
        %v4835 = vpop.f32.mrf.mxu0
        %v4836 = vadd.f32 %v4752, %v4835
        %v4837 = vpop.f32.mrf.mxu0
        %4838 = vmatprep.mubr.f32.mxu0 0.0
        %4839 = vmatmul.mubr.f32.gmra.mxu0 %v4403
        %v4840 = vpop.f32.mrf.mxu0
        %v4841 = vadd.f32 %v4752, %v4840
        %v4842 = vpop.f32.mrf.mxu0
        %4843 = vmatprep.mubr.f32.mxu0 0.0
        %4844 = vmatmul.mubr.f32.gmra.mxu0 %v4406
        %v4845 = vpop.f32.mrf.mxu0
        %v4846 = vadd.f32 %v4752, %v4845
        %v4847 = vpop.f32.mrf.mxu0
        %4848 = vmatprep.mubr.f32.mxu0 0.0
        %4849 = vmatmul.mubr.f32.gmra.mxu0 %v4409
        %v4850 = vpop.f32.mrf.mxu0
        %v4851 = vadd.f32 %v4752, %v4850
        %v4852 = vpop.f32.mrf.mxu0
        %4853 = vmatprep.mubr.f32.mxu0 0.0
        %4854 = vmatmul.mubr.f32.gmra.mxu0 %v4412
        %v4855 = vpop.f32.mrf.mxu0
        %v4856 = vadd.f32 %v4752, %v4855
        %v4857 = vpop.f32.mrf.mxu0
        %4858 = vdwg.mxu0
        %v4859 = vmul.f32 %v4821, 0.5
        %v4860 = vmul.f32 %v4826, 0.5
        %v4861 = vmul.f32 %v4831, 0.5
        %v4862 = vmul.f32 %v4836, 0.5
        %v4863 = vmul.f32 %v4841, 0.5
        %v4864 = vmul.f32 %v4846, 0.5
        %v4865 = vmul.f32 %v4851, 0.5
        %v4866 = vmul.f32 %v4856, 0.5
        %v4867 = vmul.f32 %v4821, 0.70710677
        %v4868 = vmul.f32 %v4826, 0.70710677
        %v4869 = vmul.f32 %v4831, 0.70710677
        %v4870 = vmul.f32 %v4836, 0.70710677
        %v4871 = vmul.f32 %v4841, 0.70710677
        %v4872 = vmul.f32 %v4846, 0.70710677
        %v4873 = vmul.f32 %v4851, 0.70710677
        %v4874 = vmul.f32 %v4856, 0.70710677
        %vm4875 = vcmp.ge.f32.partialorder %v4867, 0.0
        %vm4876 = vcmp.ge.f32.partialorder %v4868, 0.0
        %vm4877 = vcmp.ge.f32.partialorder %v4869, 0.0
        %vm4878 = vcmp.ge.f32.partialorder %v4870, 0.0
        %vm4879 = vcmp.ge.f32.partialorder %v4871, 0.0
        %vm4880 = vcmp.ge.f32.partialorder %v4872, 0.0
        %vm4881 = vcmp.ge.f32.partialorder %v4873, 0.0
        %vm4882 = vcmp.ge.f32.partialorder %v4874, 0.0
        %v4883 = vsel %vm4875, 1.0, -1.0
        %v4884 = vsel %vm4876, 1.0, -1.0
        %v4885 = vsel %vm4877, 1.0, -1.0
        %v4886 = vsel %vm4878, 1.0, -1.0
        %v4887 = vsel %vm4879, 1.0, -1.0
        %v4888 = vsel %vm4880, 1.0, -1.0
        %v4889 = vsel %vm4881, 1.0, -1.0
        %v4890 = vsel %vm4882, 1.0, -1.0
        %v4891 = vand.u32 2147483647, %v4867
        %v4892 = vand.u32 2147483647, %v4868
        %v4893 = vand.u32 2147483647, %v4869
        %v4894 = vand.u32 2147483647, %v4870
        %v4895 = vand.u32 2147483647, %v4871
        %v4896 = vand.u32 2147483647, %v4872
        %v4897 = vand.u32 2147483647, %v4873
        %v4898 = vand.u32 2147483647, %v4874
        %v4899 = vmul.f32 %v4891, 0.3275911
        %v4900 = vmul.f32 %v4892, 0.3275911
        %v4901 = vmul.f32 %v4893, 0.3275911
        %v4902 = vmul.f32 %v4894, 0.3275911
        %v4903 = vmul.f32 %v4895, 0.3275911
        %v4904 = vmul.f32 %v4896, 0.3275911
        %v4905 = vmul.f32 %v4897, 0.3275911
        %v4906 = vmul.f32 %v4898, 0.3275911
        %v4907 = vadd.f32 %v4899, 1.0
        %v4908 = vadd.f32 %v4900, 1.0
        %v4909 = vadd.f32 %v4901, 1.0
        %v4910 = vadd.f32 %v4902, 1.0
        %v4911 = vadd.f32 %v4903, 1.0
        %v4912 = vadd.f32 %v4904, 1.0
        %v4913 = vadd.f32 %v4905, 1.0
        %v4914 = vadd.f32 %v4906, 1.0
        %v4915 = vrcp.pop %v4907
        %v4916 = vmul.f32 1.0, %v4915
        %v4917 = vrcp.pop %v4908
        %v4918 = vmul.f32 1.0, %v4917
        %v4919 = vrcp.pop %v4909
        %v4920 = vmul.f32 1.0, %v4919
        %v4921 = vrcp.pop %v4910
        %v4922 = vmul.f32 1.0, %v4921
        %v4923 = vrcp.pop %v4911
        %v4924 = vmul.f32 1.0, %v4923
        %v4925 = vrcp.pop %v4912
        %v4926 = vmul.f32 1.0, %v4925
        %v4927 = vrcp.pop %v4913
        %v4928 = vmul.f32 1.0, %v4927
        %v4929 = vrcp.pop %v4914
        %v4930 = vmul.f32 1.0, %v4929
        %v4931 = vmul.f32 %v4916, 1.0614054
        %v4932 = vmul.f32 %v4918, 1.0614054
        %v4933 = vmul.f32 %v4920, 1.0614054
        %v4934 = vmul.f32 %v4922, 1.0614054
        %v4935 = vmul.f32 %v4924, 1.0614054
        %v4936 = vmul.f32 %v4926, 1.0614054
        %v4937 = vmul.f32 %v4928, 1.0614054
        %v4938 = vmul.f32 %v4930, 1.0614054
        %v4939 = vadd.f32 %v4931, -1.4531521
        %v4940 = vadd.f32 %v4932, -1.4531521
        %v4941 = vadd.f32 %v4933, -1.4531521
        %v4942 = vadd.f32 %v4934, -1.4531521
        %v4943 = vadd.f32 %v4935, -1.4531521
        %v4944 = vadd.f32 %v4936, -1.4531521
        %v4945 = vadd.f32 %v4937, -1.4531521
        %v4946 = vadd.f32 %v4938, -1.4531521
        %v4947 = vmul.f32 %v4939, %v4916
        %v4948 = vmul.f32 %v4940, %v4918
        %v4949 = vmul.f32 %v4941, %v4920
        %v4950 = vmul.f32 %v4942, %v4922
        %v4951 = vmul.f32 %v4943, %v4924
        %v4952 = vmul.f32 %v4944, %v4926
        %v4953 = vmul.f32 %v4945, %v4928
        %v4954 = vmul.f32 %v4946, %v4930
        %v4955 = vadd.f32 %v4947, 1.4214138
        %v4956 = vadd.f32 %v4948, 1.4214138
        %v4957 = vadd.f32 %v4949, 1.4214138
        %v4958 = vadd.f32 %v4950, 1.4214138
        %v4959 = vadd.f32 %v4951, 1.4214138
        %v4960 = vadd.f32 %v4952, 1.4214138
        %v4961 = vadd.f32 %v4953, 1.4214138
        %v4962 = vadd.f32 %v4954, 1.4214138
        %v4963 = vmul.f32 %v4955, %v4916
        %v4964 = vmul.f32 %v4956, %v4918
        %v4965 = vmul.f32 %v4957, %v4920
        %v4966 = vmul.f32 %v4958, %v4922
        %v4967 = vmul.f32 %v4959, %v4924
        %v4968 = vmul.f32 %v4960, %v4926
        %v4969 = vmul.f32 %v4961, %v4928
        %v4970 = vmul.f32 %v4962, %v4930
        %v4971 = vadd.f32 %v4963, -0.28449672
        %v4972 = vadd.f32 %v4964, -0.28449672
        %v4973 = vadd.f32 %v4965, -0.28449672
        %v4974 = vadd.f32 %v4966, -0.28449672
        %v4975 = vadd.f32 %v4967, -0.28449672
        %v4976 = vadd.f32 %v4968, -0.28449672
        %v4977 = vadd.f32 %v4969, -0.28449672
        %v4978 = vadd.f32 %v4970, -0.28449672
        %v4979 = vmul.f32 %v4971, %v4916
        %v4980 = vmul.f32 %v4972, %v4918
        %v4981 = vmul.f32 %v4973, %v4920
        %v4982 = vmul.f32 %v4974, %v4922
        %v4983 = vmul.f32 %v4975, %v4924
        %v4984 = vmul.f32 %v4976, %v4926
        %v4985 = vmul.f32 %v4977, %v4928
        %v4986 = vmul.f32 %v4978, %v4930
        %v4987 = vadd.f32 %v4979, 0.2548296
        %v4988 = vadd.f32 %v4980, 0.2548296
        %v4989 = vadd.f32 %v4981, 0.2548296
        %v4990 = vadd.f32 %v4982, 0.2548296
        %v4991 = vadd.f32 %v4983, 0.2548296
        %v4992 = vadd.f32 %v4984, 0.2548296
        %v4993 = vadd.f32 %v4985, 0.2548296
        %v4994 = vadd.f32 %v4986, 0.2548296
        %v4995 = vmul.f32 %v4987, %v4916
        %v4996 = vmul.f32 %v4988, %v4918
        %v4997 = vmul.f32 %v4989, %v4920
        %v4998 = vmul.f32 %v4990, %v4922
        %v4999 = vmul.f32 %v4991, %v4924
        %v5000 = vmul.f32 %v4992, %v4926
        %v5001 = vmul.f32 %v4993, %v4928
        %v5002 = vmul.f32 %v4994, %v4930
        %v5003 = vsub.f32 0.0, %v4891
        %v5004 = vsub.f32 0.0, %v4892
        %v5005 = vsub.f32 0.0, %v4893
        %v5006 = vsub.f32 0.0, %v4894
        %v5007 = vsub.f32 0.0, %v4895
        %v5008 = vsub.f32 0.0, %v4896
        %v5009 = vsub.f32 0.0, %v4897
        %v5010 = vsub.f32 0.0, %v4898
        %v5011 = vmul.f32 %v5003, %v4891
        %v5012 = vmul.f32 %v5004, %v4892
        %v5013 = vmul.f32 %v5005, %v4893
        %v5014 = vmul.f32 %v5006, %v4894
        %v5015 = vmul.f32 %v5007, %v4895
        %v5016 = vmul.f32 %v5008, %v4896
        %v5017 = vmul.f32 %v5009, %v4897
        %v5018 = vmul.f32 %v5010, %v4898
        %v5019 = vmul.f32 %v5011, 1.442695
        %v5020 = vpow.pop %v5019
        %v5021 = vmul.f32 %v5012, 1.442695
        %v5022 = vpow.pop %v5021
        %v5023 = vmul.f32 %v5013, 1.442695
        %v5024 = vpow.pop %v5023
        %v5025 = vmul.f32 %v5014, 1.442695
        %v5026 = vpow.pop %v5025
        %v5027 = vmul.f32 %v5015, 1.442695
        %v5028 = vpow.pop %v5027
        %v5029 = vmul.f32 %v5016, 1.442695
        %v5030 = vpow.pop %v5029
        %v5031 = vmul.f32 %v5017, 1.442695
        %v5032 = vpow.pop %v5031
        %v5033 = vmul.f32 %v5018, 1.442695
        %v5034 = vpow.pop %v5033
        %v5035 = vmul.f32 %v4995, %v5020
        %v5036 = vmul.f32 %v4996, %v5022
        %v5037 = vmul.f32 %v4997, %v5024
        %v5038 = vmul.f32 %v4998, %v5026
        %v5039 = vmul.f32 %v4999, %v5028
        %v5040 = vmul.f32 %v5000, %v5030
        %v5041 = vmul.f32 %v5001, %v5032
        %v5042 = vmul.f32 %v5002, %v5034
        %v5043 = vsub.f32 1.0, %v5035
        %v5044 = vsub.f32 1.0, %v5036
        %v5045 = vsub.f32 1.0, %v5037
        %v5046 = vsub.f32 1.0, %v5038
        %v5047 = vsub.f32 1.0, %v5039
        %v5048 = vsub.f32 1.0, %v5040
        %v5049 = vsub.f32 1.0, %v5041
        %v5050 = vsub.f32 1.0, %v5042
        %v5051 = vmul.f32 %v4883, %v5043
        %v5052 = vmul.f32 %v4884, %v5044
        %v5053 = vmul.f32 %v4885, %v5045
        %v5054 = vmul.f32 %v4886, %v5046
        %v5055 = vmul.f32 %v4887, %v5047
        %v5056 = vmul.f32 %v4888, %v5048
        %v5057 = vmul.f32 %v4889, %v5049
        %v5058 = vmul.f32 %v4890, %v5050
        %v5059 = vadd.f32 %v5051, 1.0
        %v5060 = vadd.f32 %v5052, 1.0
        %v5061 = vadd.f32 %v5053, 1.0
        %v5062 = vadd.f32 %v5054, 1.0
        %v5063 = vadd.f32 %v5055, 1.0
        %v5064 = vadd.f32 %v5056, 1.0
        %v5065 = vadd.f32 %v5057, 1.0
        %v5066 = vadd.f32 %v5058, 1.0
        %v5067 = vmul.f32 %v4859, %v5059
        %v5068 = vmul.f32 %v4860, %v5060
        %v5069 = vmul.f32 %v4861, %v5061
        %v5070 = vmul.f32 %v4862, %v5062
        %v5071 = vmul.f32 %v4863, %v5063
        %v5072 = vmul.f32 %v4864, %v5064
        %v5073 = vmul.f32 %v4865, %v5065
        %v5074 = vmul.f32 %v4866, %v5066
        %5075 = vst.msk [vmem:[#allocation2 + $0x18] sm:$0xff] %vm546, %v5067
        %5076 = vst.msk [vmem:[#allocation2 + $0x20] sm:$0xff] %vm546, %v5068
        %5077 = vst.msk [vmem:[#allocation2 + $0x28] sm:$0xff] %vm546, %v5069
        %5078 = vst.msk [vmem:[#allocation2 + $0x30] sm:$0xff] %vm546, %v5070
        %5079 = vst.msk [vmem:[#allocation2 + $0x38] sm:$0xff] %vm546, %v5071
        %5080 = vst.msk [vmem:[#allocation2 + $0x40] sm:$0xff] %vm546, %v5072
        %5081 = vst.msk [vmem:[#allocation2 + $0x48] sm:$0xff] %vm546, %v5073
        %5082 = vst.msk [vmem:[#allocation2 + $0x50] sm:$0xff] %vm546, %v5074
        %v5083 = vld [vmem:[#allocation2 + $0x6] sm:$0xff]
        %v5084 = vld [vmem:[#allocation2 + $0xe] sm:$0xff]
        %v5085 = vld [vmem:[#allocation2 + $0x16] sm:$0xff]
        %v5086 = vld [vmem:[#allocation2 + $0x1e] sm:$0xff]
        %v5087 = vld [vmem:[#allocation2 + $0x26] sm:$0xff]
        %v5088 = vld [vmem:[#allocation2 + $0x2e] sm:$0xff]
        %v5089 = vld [vmem:[#allocation2 + $0x36] sm:$0xff]
        %v5090 = vld [vmem:[#allocation2 + $0x3e] sm:$0xff]
        %v5091 = vmul.f32 %v5083, %v1762
        %v5092 = vmul.f32 %v5084, %v1767
        %v5093 = vmul.f32 %v5085, %v1772
        %v5094 = vmul.f32 %v5086, %v1777
        %v5095 = vmul.f32 %v5087, %v1782
        %v5096 = vmul.f32 %v5088, %v1787
        %v5097 = vmul.f32 %v5089, %v1792
        %v5098 = vmul.f32 %v5090, %v1797
        %5099 = vst.msk [vmem:[#allocation3] sm:$0xff] %vm546, %v5091
        %5100 = vst.msk [vmem:[#allocation3 + $0x38] sm:$0xff] %vm546, %v5092
        %5101 = vst.msk [vmem:[#allocation3 + $0x70] sm:$0xff] %vm546, %v5093
        %5102 = vst.msk [vmem:[#allocation3 + $0xa8] sm:$0xff] %vm546, %v5094
        %5103 = vst.msk [vmem:[#allocation3 + $0xe0] sm:$0xff] %vm546, %v5095
        %5104 = vst.msk [vmem:[#allocation3 + $0x118] sm:$0xff] %vm546, %v5096
        %5105 = vst.msk [vmem:[#allocation3 + $0x150] sm:$0xff] %vm546, %v5097
        %5106 = vst.msk [vmem:[#allocation3 + $0x188] sm:$0xff] %vm546, %v5098
        %v5107 = vld [vmem:[#allocation2 + $0x7] sm:$0xff]
        %v5108 = vld [vmem:[#allocation2 + $0xf] sm:$0xff]
        %v5109 = vld [vmem:[#allocation2 + $0x17] sm:$0xff]
        %v5110 = vld [vmem:[#allocation2 + $0x1f] sm:$0xff]
        %v5111 = vld [vmem:[#allocation2 + $0x27] sm:$0xff]
        %v5112 = vld [vmem:[#allocation2 + $0x2f] sm:$0xff]
        %v5113 = vld [vmem:[#allocation2 + $0x37] sm:$0xff]
        %v5114 = vld [vmem:[#allocation2 + $0x3f] sm:$0xff]
        %v5115 = vmul.f32 %v5107, %v1826
        %v5116 = vmul.f32 %v5108, %v1831
        %v5117 = vmul.f32 %v5109, %v1836
        %v5118 = vmul.f32 %v5110, %v1841
        %v5119 = vmul.f32 %v5111, %v1846
        %v5120 = vmul.f32 %v5112, %v1851
        %v5121 = vmul.f32 %v5113, %v1856
        %v5122 = vmul.f32 %v5114, %v1861
        %5131 = vrot.lane.b32.xlu0 %v5115, 32
        %v5132 = vpop.permute.xlu0 %5131
        %5133 = vrot.lane.b32.xlu0 %v5116, 32
        %v5134 = vpop.permute.xlu0 %5133
        %5135 = vrot.lane.b32.xlu0 %v5117, 32
        %v5136 = vpop.permute.xlu0 %5135
        %5137 = vrot.lane.b32.xlu0 %v5118, 32
        %v5138 = vpop.permute.xlu0 %5137
        %5139 = vrot.lane.b32.xlu0 %v5119, 32
        %v5140 = vpop.permute.xlu0 %5139
        %5141 = vrot.lane.b32.xlu0 %v5120, 32
        %v5142 = vpop.permute.xlu0 %5141
        %5143 = vrot.lane.b32.xlu0 %v5121, 32
        %v5144 = vpop.permute.xlu0 %5143
        %5145 = vrot.lane.b32.xlu0 %v5122, 32
        %v5146 = vpop.permute.xlu0 %5145
        %5155 = vst.msk [vmem:[#allocation3] sm:$0xff] %vm1903, %v5132
        %5156 = vst.msk [vmem:[#allocation3 + $0x38] sm:$0xff] %vm1903, %v5134
        %5157 = vst.msk [vmem:[#allocation3 + $0x70] sm:$0xff] %vm1903, %v5136
        %5158 = vst.msk [vmem:[#allocation3 + $0xa8] sm:$0xff] %vm1903, %v5138
        %5159 = vst.msk [vmem:[#allocation3 + $0xe0] sm:$0xff] %vm1903, %v5140
        %5160 = vst.msk [vmem:[#allocation3 + $0x118] sm:$0xff] %vm1903, %v5142
        %5161 = vst.msk [vmem:[#allocation3 + $0x150] sm:$0xff] %vm1903, %v5144
        %5162 = vst.msk [vmem:[#allocation3 + $0x188] sm:$0xff] %vm1903, %v5146
        %v5163 = vld [vmem:[#allocation2 + $0x8] sm:$0xff]
        %v5164 = vld [vmem:[#allocation2 + $0x10] sm:$0xff]
        %v5165 = vld [vmem:[#allocation2 + $0x18] sm:$0xff]
        %v5166 = vld [vmem:[#allocation2 + $0x20] sm:$0xff]
        %v5167 = vld [vmem:[#allocation2 + $0x28] sm:$0xff]
        %v5168 = vld [vmem:[#allocation2 + $0x30] sm:$0xff]
        %v5169 = vld [vmem:[#allocation2 + $0x38] sm:$0xff]
        %v5170 = vld [vmem:[#allocation2 + $0x40] sm:$0xff]
        %v5171 = vmul.f32 %v5163, %v1923
        %v5172 = vmul.f32 %v5164, %v1928
        %v5173 = vmul.f32 %v5165, %v1933
        %v5174 = vmul.f32 %v5166, %v1938
        %v5175 = vmul.f32 %v5167, %v1943
        %v5176 = vmul.f32 %v5168, %v1948
        %v5177 = vmul.f32 %v5169, %v1953
        %v5178 = vmul.f32 %v5170, %v1958
        %5187 = vrot.lane.b32.xlu0 %v5171, 64
        %v5188 = vpop.permute.xlu0 %5187
        %5189 = vrot.lane.b32.xlu0 %v5172, 64
        %v5190 = vpop.permute.xlu0 %5189
        %5191 = vrot.lane.b32.xlu0 %v5173, 64
        %v5192 = vpop.permute.xlu0 %5191
        %5193 = vrot.lane.b32.xlu0 %v5174, 64
        %v5194 = vpop.permute.xlu0 %5193
        %5195 = vrot.lane.b32.xlu0 %v5175, 64
        %v5196 = vpop.permute.xlu0 %5195
        %5197 = vrot.lane.b32.xlu0 %v5176, 64
        %v5198 = vpop.permute.xlu0 %5197
        %5199 = vrot.lane.b32.xlu0 %v5177, 64
        %v5200 = vpop.permute.xlu0 %5199
        %5201 = vrot.lane.b32.xlu0 %v5178, 64
        %v5202 = vpop.permute.xlu0 %5201
        %5211 = vst.msk [vmem:[#allocation3] sm:$0xff] %vm2000, %v5188
        %5212 = vst.msk [vmem:[#allocation3 + $0x38] sm:$0xff] %vm2000, %v5190
        %5213 = vst.msk [vmem:[#allocation3 + $0x70] sm:$0xff] %vm2000, %v5192
        %5214 = vst.msk [vmem:[#allocation3 + $0xa8] sm:$0xff] %vm2000, %v5194
        %5215 = vst.msk [vmem:[#allocation3 + $0xe0] sm:$0xff] %vm2000, %v5196
        %5216 = vst.msk [vmem:[#allocation3 + $0x118] sm:$0xff] %vm2000, %v5198
        %5217 = vst.msk [vmem:[#allocation3 + $0x150] sm:$0xff] %vm2000, %v5200
        %5218 = vst.msk [vmem:[#allocation3 + $0x188] sm:$0xff] %vm2000, %v5202
        %v5219 = vld [vmem:[#allocation2 + $0x9] sm:$0xff]
        %v5220 = vld [vmem:[#allocation2 + $0x11] sm:$0xff]
        %v5221 = vld [vmem:[#allocation2 + $0x19] sm:$0xff]
        %v5222 = vld [vmem:[#allocation2 + $0x21] sm:$0xff]
        %v5223 = vld [vmem:[#allocation2 + $0x29] sm:$0xff]
        %v5224 = vld [vmem:[#allocation2 + $0x31] sm:$0xff]
        %v5225 = vld [vmem:[#allocation2 + $0x39] sm:$0xff]
        %v5226 = vld [vmem:[#allocation2 + $0x41] sm:$0xff]
        %v5227 = vmul.f32 %v5219, %v2020
        %v5228 = vmul.f32 %v5220, %v2025
        %v5229 = vmul.f32 %v5221, %v2030
        %v5230 = vmul.f32 %v5222, %v2035
        %v5231 = vmul.f32 %v5223, %v2040
        %v5232 = vmul.f32 %v5224, %v2045
        %v5233 = vmul.f32 %v5225, %v2050
        %v5234 = vmul.f32 %v5226, %v2055
        %5243 = vrot.lane.b32.xlu0 %v5227, 96
        %v5244 = vpop.permute.xlu0 %5243
        %5245 = vrot.lane.b32.xlu0 %v5228, 96
        %v5246 = vpop.permute.xlu0 %5245
        %5247 = vrot.lane.b32.xlu0 %v5229, 96
        %v5248 = vpop.permute.xlu0 %5247
        %5249 = vrot.lane.b32.xlu0 %v5230, 96
        %v5250 = vpop.permute.xlu0 %5249
        %5251 = vrot.lane.b32.xlu0 %v5231, 96
        %v5252 = vpop.permute.xlu0 %5251
        %5253 = vrot.lane.b32.xlu0 %v5232, 96
        %v5254 = vpop.permute.xlu0 %5253
        %5255 = vrot.lane.b32.xlu0 %v5233, 96
        %v5256 = vpop.permute.xlu0 %5255
        %5257 = vrot.lane.b32.xlu0 %v5234, 96
        %v5258 = vpop.permute.xlu0 %5257
        %5267 = vst.msk [vmem:[#allocation3] sm:$0xff] %vm2097, %v5244
        %5268 = vst.msk [vmem:[#allocation3 + $0x38] sm:$0xff] %vm2097, %v5246
        %5269 = vst.msk [vmem:[#allocation3 + $0x70] sm:$0xff] %vm2097, %v5248
        %5270 = vst.msk [vmem:[#allocation3 + $0xa8] sm:$0xff] %vm2097, %v5250
        %5271 = vst.msk [vmem:[#allocation3 + $0xe0] sm:$0xff] %vm2097, %v5252
        %5272 = vst.msk [vmem:[#allocation3 + $0x118] sm:$0xff] %vm2097, %v5254
        %5273 = vst.msk [vmem:[#allocation3 + $0x150] sm:$0xff] %vm2097, %v5256
        %5274 = vst.msk [vmem:[#allocation3 + $0x188] sm:$0xff] %vm2097, %v5258
        %v5275 = vld [vmem:[#allocation2 + $0xa] sm:$0xff]
        %v5276 = vld [vmem:[#allocation2 + $0x12] sm:$0xff]
        %v5277 = vld [vmem:[#allocation2 + $0x1a] sm:$0xff]
        %v5278 = vld [vmem:[#allocation2 + $0x22] sm:$0xff]
        %v5279 = vld [vmem:[#allocation2 + $0x2a] sm:$0xff]
        %v5280 = vld [vmem:[#allocation2 + $0x32] sm:$0xff]
        %v5281 = vld [vmem:[#allocation2 + $0x3a] sm:$0xff]
        %v5282 = vld [vmem:[#allocation2 + $0x42] sm:$0xff]
        %v5283 = vmul.f32 %v5275, %v2117
        %v5284 = vmul.f32 %v5276, %v2122
        %v5285 = vmul.f32 %v5277, %v2127
        %v5286 = vmul.f32 %v5278, %v2132
        %v5287 = vmul.f32 %v5279, %v2137
        %v5288 = vmul.f32 %v5280, %v2142
        %v5289 = vmul.f32 %v5281, %v2147
        %v5290 = vmul.f32 %v5282, %v2152
        %5291 = vst.msk [vmem:[#allocation3 + $0x8] sm:$0xff] %vm546, %v5283
        %5292 = vst.msk [vmem:[#allocation3 + $0x40] sm:$0xff] %vm546, %v5284
        %5293 = vst.msk [vmem:[#allocation3 + $0x78] sm:$0xff] %vm546, %v5285
        %5294 = vst.msk [vmem:[#allocation3 + $0xb0] sm:$0xff] %vm546, %v5286
        %5295 = vst.msk [vmem:[#allocation3 + $0xe8] sm:$0xff] %vm546, %v5287
        %5296 = vst.msk [vmem:[#allocation3 + $0x120] sm:$0xff] %vm546, %v5288
        %5297 = vst.msk [vmem:[#allocation3 + $0x158] sm:$0xff] %vm546, %v5289
        %5298 = vst.msk [vmem:[#allocation3 + $0x190] sm:$0xff] %vm546, %v5290
        %v5299 = vld [vmem:[#allocation2 + $0xe] sm:$0xff]
        %v5300 = vld [vmem:[#allocation2 + $0x16] sm:$0xff]
        %v5301 = vld [vmem:[#allocation2 + $0x1e] sm:$0xff]
        %v5302 = vld [vmem:[#allocation2 + $0x26] sm:$0xff]
        %v5303 = vld [vmem:[#allocation2 + $0x2e] sm:$0xff]
        %v5304 = vld [vmem:[#allocation2 + $0x36] sm:$0xff]
        %v5305 = vld [vmem:[#allocation2 + $0x3e] sm:$0xff]
        %v5306 = vld [vmem:[#allocation2 + $0x46] sm:$0xff]
        %v5307 = vmul.f32 %v5299, %v1762
        %v5308 = vmul.f32 %v5300, %v1767
        %v5309 = vmul.f32 %v5301, %v1772
        %v5310 = vmul.f32 %v5302, %v1777
        %v5311 = vmul.f32 %v5303, %v1782
        %v5312 = vmul.f32 %v5304, %v1787
        %v5313 = vmul.f32 %v5305, %v1792
        %v5314 = vmul.f32 %v5306, %v1797
        %5323 = vrot.lane.b32.xlu0 %v5307, 32
        %v5324 = vpop.permute.xlu0 %5323
        %5325 = vrot.lane.b32.xlu0 %v5308, 32
        %v5326 = vpop.permute.xlu0 %5325
        %5327 = vrot.lane.b32.xlu0 %v5309, 32
        %v5328 = vpop.permute.xlu0 %5327
        %5329 = vrot.lane.b32.xlu0 %v5310, 32
        %v5330 = vpop.permute.xlu0 %5329
        %5331 = vrot.lane.b32.xlu0 %v5311, 32
        %v5332 = vpop.permute.xlu0 %5331
        %5333 = vrot.lane.b32.xlu0 %v5312, 32
        %v5334 = vpop.permute.xlu0 %5333
        %5335 = vrot.lane.b32.xlu0 %v5313, 32
        %v5336 = vpop.permute.xlu0 %5335
        %5337 = vrot.lane.b32.xlu0 %v5314, 32
        %v5338 = vpop.permute.xlu0 %5337
        %5347 = vst.msk [vmem:[#allocation3 + $0x8] sm:$0xff] %vm1903, %v5324
        %5348 = vst.msk [vmem:[#allocation3 + $0x40] sm:$0xff] %vm1903, %v5326
        %5349 = vst.msk [vmem:[#allocation3 + $0x78] sm:$0xff] %vm1903, %v5328
        %5350 = vst.msk [vmem:[#allocation3 + $0xb0] sm:$0xff] %vm1903, %v5330
        %5351 = vst.msk [vmem:[#allocation3 + $0xe8] sm:$0xff] %vm1903, %v5332
        %5352 = vst.msk [vmem:[#allocation3 + $0x120] sm:$0xff] %vm1903, %v5334
        %5353 = vst.msk [vmem:[#allocation3 + $0x158] sm:$0xff] %vm1903, %v5336
        %5354 = vst.msk [vmem:[#allocation3 + $0x190] sm:$0xff] %vm1903, %v5338
        %v5355 = vld [vmem:[#allocation2 + $0xf] sm:$0xff]
        %v5356 = vld [vmem:[#allocation2 + $0x17] sm:$0xff]
        %v5357 = vld [vmem:[#allocation2 + $0x1f] sm:$0xff]
        %v5358 = vld [vmem:[#allocation2 + $0x27] sm:$0xff]
        %v5359 = vld [vmem:[#allocation2 + $0x2f] sm:$0xff]
        %v5360 = vld [vmem:[#allocation2 + $0x37] sm:$0xff]
        %v5361 = vld [vmem:[#allocation2 + $0x3f] sm:$0xff]
        %v5362 = vld [vmem:[#allocation2 + $0x47] sm:$0xff]
        %v5363 = vmul.f32 %v5355, %v1826
        %v5364 = vmul.f32 %v5356, %v1831
        %v5365 = vmul.f32 %v5357, %v1836
        %v5366 = vmul.f32 %v5358, %v1841
        %v5367 = vmul.f32 %v5359, %v1846
        %v5368 = vmul.f32 %v5360, %v1851
        %v5369 = vmul.f32 %v5361, %v1856
        %v5370 = vmul.f32 %v5362, %v1861
        %5379 = vrot.lane.b32.xlu0 %v5363, 64
        %v5380 = vpop.permute.xlu0 %5379
        %5381 = vrot.lane.b32.xlu0 %v5364, 64
        %v5382 = vpop.permute.xlu0 %5381
        %5383 = vrot.lane.b32.xlu0 %v5365, 64
        %v5384 = vpop.permute.xlu0 %5383
        %5385 = vrot.lane.b32.xlu0 %v5366, 64
        %v5386 = vpop.permute.xlu0 %5385
        %5387 = vrot.lane.b32.xlu0 %v5367, 64
        %v5388 = vpop.permute.xlu0 %5387
        %5389 = vrot.lane.b32.xlu0 %v5368, 64
        %v5390 = vpop.permute.xlu0 %5389
        %5391 = vrot.lane.b32.xlu0 %v5369, 64
        %v5392 = vpop.permute.xlu0 %5391
        %5393 = vrot.lane.b32.xlu0 %v5370, 64
        %v5394 = vpop.permute.xlu0 %5393
        %5403 = vst.msk [vmem:[#allocation3 + $0x8] sm:$0xff] %vm2000, %v5380
        %5404 = vst.msk [vmem:[#allocation3 + $0x40] sm:$0xff] %vm2000, %v5382
        %5405 = vst.msk [vmem:[#allocation3 + $0x78] sm:$0xff] %vm2000, %v5384
        %5406 = vst.msk [vmem:[#allocation3 + $0xb0] sm:$0xff] %vm2000, %v5386
        %5407 = vst.msk [vmem:[#allocation3 + $0xe8] sm:$0xff] %vm2000, %v5388
        %5408 = vst.msk [vmem:[#allocation3 + $0x120] sm:$0xff] %vm2000, %v5390
        %5409 = vst.msk [vmem:[#allocation3 + $0x158] sm:$0xff] %vm2000, %v5392
        %5410 = vst.msk [vmem:[#allocation3 + $0x190] sm:$0xff] %vm2000, %v5394
        %v5411 = vld [vmem:[#allocation2 + $0x10] sm:$0xff]
        %v5412 = vld [vmem:[#allocation2 + $0x18] sm:$0xff]
        %v5413 = vld [vmem:[#allocation2 + $0x20] sm:$0xff]
        %v5414 = vld [vmem:[#allocation2 + $0x28] sm:$0xff]
        %v5415 = vld [vmem:[#allocation2 + $0x30] sm:$0xff]
        %v5416 = vld [vmem:[#allocation2 + $0x38] sm:$0xff]
        %v5417 = vld [vmem:[#allocation2 + $0x40] sm:$0xff]
        %v5418 = vld [vmem:[#allocation2 + $0x48] sm:$0xff]
        %v5419 = vmul.f32 %v5411, %v1923
        %v5420 = vmul.f32 %v5412, %v1928
        %v5421 = vmul.f32 %v5413, %v1933
        %v5422 = vmul.f32 %v5414, %v1938
        %v5423 = vmul.f32 %v5415, %v1943
        %v5424 = vmul.f32 %v5416, %v1948
        %v5425 = vmul.f32 %v5417, %v1953
        %v5426 = vmul.f32 %v5418, %v1958
        %5435 = vrot.lane.b32.xlu0 %v5419, 96
        %v5436 = vpop.permute.xlu0 %5435
        %5437 = vrot.lane.b32.xlu0 %v5420, 96
        %v5438 = vpop.permute.xlu0 %5437
        %5439 = vrot.lane.b32.xlu0 %v5421, 96
        %v5440 = vpop.permute.xlu0 %5439
        %5441 = vrot.lane.b32.xlu0 %v5422, 96
        %v5442 = vpop.permute.xlu0 %5441
        %5443 = vrot.lane.b32.xlu0 %v5423, 96
        %v5444 = vpop.permute.xlu0 %5443
        %5445 = vrot.lane.b32.xlu0 %v5424, 96
        %v5446 = vpop.permute.xlu0 %5445
        %5447 = vrot.lane.b32.xlu0 %v5425, 96
        %v5448 = vpop.permute.xlu0 %5447
        %5449 = vrot.lane.b32.xlu0 %v5426, 96
        %v5450 = vpop.permute.xlu0 %5449
        %5459 = vst.msk [vmem:[#allocation3 + $0x8] sm:$0xff] %vm2097, %v5436
        %5460 = vst.msk [vmem:[#allocation3 + $0x40] sm:$0xff] %vm2097, %v5438
        %5461 = vst.msk [vmem:[#allocation3 + $0x78] sm:$0xff] %vm2097, %v5440
        %5462 = vst.msk [vmem:[#allocation3 + $0xb0] sm:$0xff] %vm2097, %v5442
        %5463 = vst.msk [vmem:[#allocation3 + $0xe8] sm:$0xff] %vm2097, %v5444
        %5464 = vst.msk [vmem:[#allocation3 + $0x120] sm:$0xff] %vm2097, %v5446
        %5465 = vst.msk [vmem:[#allocation3 + $0x158] sm:$0xff] %vm2097, %v5448
        %5466 = vst.msk [vmem:[#allocation3 + $0x190] sm:$0xff] %vm2097, %v5450
        %v5467 = vld [vmem:[#allocation2 + $0x11] sm:$0xff]
        %v5468 = vld [vmem:[#allocation2 + $0x19] sm:$0xff]
        %v5469 = vld [vmem:[#allocation2 + $0x21] sm:$0xff]
        %v5470 = vld [vmem:[#allocation2 + $0x29] sm:$0xff]
        %v5471 = vld [vmem:[#allocation2 + $0x31] sm:$0xff]
        %v5472 = vld [vmem:[#allocation2 + $0x39] sm:$0xff]
        %v5473 = vld [vmem:[#allocation2 + $0x41] sm:$0xff]
        %v5474 = vld [vmem:[#allocation2 + $0x49] sm:$0xff]
        %v5475 = vmul.f32 %v5467, %v2020
        %v5476 = vmul.f32 %v5468, %v2025
        %v5477 = vmul.f32 %v5469, %v2030
        %v5478 = vmul.f32 %v5470, %v2035
        %v5479 = vmul.f32 %v5471, %v2040
        %v5480 = vmul.f32 %v5472, %v2045
        %v5481 = vmul.f32 %v5473, %v2050
        %v5482 = vmul.f32 %v5474, %v2055
        %5483 = vst.msk [vmem:[#allocation3 + $0x10] sm:$0xff] %vm546, %v5475
        %5484 = vst.msk [vmem:[#allocation3 + $0x48] sm:$0xff] %vm546, %v5476
        %5485 = vst.msk [vmem:[#allocation3 + $0x80] sm:$0xff] %vm546, %v5477
        %5486 = vst.msk [vmem:[#allocation3 + $0xb8] sm:$0xff] %vm546, %v5478
        %5487 = vst.msk [vmem:[#allocation3 + $0xf0] sm:$0xff] %vm546, %v5479
        %5488 = vst.msk [vmem:[#allocation3 + $0x128] sm:$0xff] %vm546, %v5480
        %5489 = vst.msk [vmem:[#allocation3 + $0x160] sm:$0xff] %vm546, %v5481
        %5490 = vst.msk [vmem:[#allocation3 + $0x198] sm:$0xff] %vm546, %v5482
        %v5491 = vld [vmem:[#allocation2 + $0x12] sm:$0xff]
        %v5492 = vld [vmem:[#allocation2 + $0x1a] sm:$0xff]
        %v5493 = vld [vmem:[#allocation2 + $0x22] sm:$0xff]
        %v5494 = vld [vmem:[#allocation2 + $0x2a] sm:$0xff]
        %v5495 = vld [vmem:[#allocation2 + $0x32] sm:$0xff]
        %v5496 = vld [vmem:[#allocation2 + $0x3a] sm:$0xff]
        %v5497 = vld [vmem:[#allocation2 + $0x42] sm:$0xff]
        %v5498 = vld [vmem:[#allocation2 + $0x4a] sm:$0xff]
        %v5499 = vmul.f32 %v5491, %v2117
        %v5500 = vmul.f32 %v5492, %v2122
        %v5501 = vmul.f32 %v5493, %v2127
        %v5502 = vmul.f32 %v5494, %v2132
        %v5503 = vmul.f32 %v5495, %v2137
        %v5504 = vmul.f32 %v5496, %v2142
        %v5505 = vmul.f32 %v5497, %v2147
        %v5506 = vmul.f32 %v5498, %v2152
        %5515 = vrot.lane.b32.xlu0 %v5499, 32
        %v5516 = vpop.permute.xlu0 %5515
        %5517 = vrot.lane.b32.xlu0 %v5500, 32
        %v5518 = vpop.permute.xlu0 %5517
        %5519 = vrot.lane.b32.xlu0 %v5501, 32
        %v5520 = vpop.permute.xlu0 %5519
        %5521 = vrot.lane.b32.xlu0 %v5502, 32
        %v5522 = vpop.permute.xlu0 %5521
        %5523 = vrot.lane.b32.xlu0 %v5503, 32
        %v5524 = vpop.permute.xlu0 %5523
        %5525 = vrot.lane.b32.xlu0 %v5504, 32
        %v5526 = vpop.permute.xlu0 %5525
        %5527 = vrot.lane.b32.xlu0 %v5505, 32
        %v5528 = vpop.permute.xlu0 %5527
        %5529 = vrot.lane.b32.xlu0 %v5506, 32
        %v5530 = vpop.permute.xlu0 %5529
        %5539 = vst.msk [vmem:[#allocation3 + $0x10] sm:$0xff] %vm1903, %v5516
        %5540 = vst.msk [vmem:[#allocation3 + $0x48] sm:$0xff] %vm1903, %v5518
        %5541 = vst.msk [vmem:[#allocation3 + $0x80] sm:$0xff] %vm1903, %v5520
        %5542 = vst.msk [vmem:[#allocation3 + $0xb8] sm:$0xff] %vm1903, %v5522
        %5543 = vst.msk [vmem:[#allocation3 + $0xf0] sm:$0xff] %vm1903, %v5524
        %5544 = vst.msk [vmem:[#allocation3 + $0x128] sm:$0xff] %vm1903, %v5526
        %5545 = vst.msk [vmem:[#allocation3 + $0x160] sm:$0xff] %vm1903, %v5528
        %5546 = vst.msk [vmem:[#allocation3 + $0x198] sm:$0xff] %vm1903, %v5530
        %v5547 = vld [vmem:[#allocation2 + $0x16] sm:$0xff]
        %v5548 = vld [vmem:[#allocation2 + $0x1e] sm:$0xff]
        %v5549 = vld [vmem:[#allocation2 + $0x26] sm:$0xff]
        %v5550 = vld [vmem:[#allocation2 + $0x2e] sm:$0xff]
        %v5551 = vld [vmem:[#allocation2 + $0x36] sm:$0xff]
        %v5552 = vld [vmem:[#allocation2 + $0x3e] sm:$0xff]
        %v5553 = vld [vmem:[#allocation2 + $0x46] sm:$0xff]
        %v5554 = vld [vmem:[#allocation2 + $0x4e] sm:$0xff]
        %v5555 = vmul.f32 %v5547, %v1762
        %v5556 = vmul.f32 %v5548, %v1767
        %v5557 = vmul.f32 %v5549, %v1772
        %v5558 = vmul.f32 %v5550, %v1777
        %v5559 = vmul.f32 %v5551, %v1782
        %v5560 = vmul.f32 %v5552, %v1787
        %v5561 = vmul.f32 %v5553, %v1792
        %v5562 = vmul.f32 %v5554, %v1797
        %5571 = vrot.lane.b32.xlu0 %v5555, 64
        %v5572 = vpop.permute.xlu0 %5571
        %5573 = vrot.lane.b32.xlu0 %v5556, 64
        %v5574 = vpop.permute.xlu0 %5573
        %5575 = vrot.lane.b32.xlu0 %v5557, 64
        %v5576 = vpop.permute.xlu0 %5575
        %5577 = vrot.lane.b32.xlu0 %v5558, 64
        %v5578 = vpop.permute.xlu0 %5577
        %5579 = vrot.lane.b32.xlu0 %v5559, 64
        %v5580 = vpop.permute.xlu0 %5579
        %5581 = vrot.lane.b32.xlu0 %v5560, 64
        %v5582 = vpop.permute.xlu0 %5581
        %5583 = vrot.lane.b32.xlu0 %v5561, 64
        %v5584 = vpop.permute.xlu0 %5583
        %5585 = vrot.lane.b32.xlu0 %v5562, 64
        %v5586 = vpop.permute.xlu0 %5585
        %5595 = vst.msk [vmem:[#allocation3 + $0x10] sm:$0xff] %vm2000, %v5572
        %5596 = vst.msk [vmem:[#allocation3 + $0x48] sm:$0xff] %vm2000, %v5574
        %5597 = vst.msk [vmem:[#allocation3 + $0x80] sm:$0xff] %vm2000, %v5576
        %5598 = vst.msk [vmem:[#allocation3 + $0xb8] sm:$0xff] %vm2000, %v5578
        %5599 = vst.msk [vmem:[#allocation3 + $0xf0] sm:$0xff] %vm2000, %v5580
        %5600 = vst.msk [vmem:[#allocation3 + $0x128] sm:$0xff] %vm2000, %v5582
        %5601 = vst.msk [vmem:[#allocation3 + $0x160] sm:$0xff] %vm2000, %v5584
        %5602 = vst.msk [vmem:[#allocation3 + $0x198] sm:$0xff] %vm2000, %v5586
        %v5603 = vld [vmem:[#allocation2 + $0x17] sm:$0xff]
        %v5604 = vld [vmem:[#allocation2 + $0x1f] sm:$0xff]
        %v5605 = vld [vmem:[#allocation2 + $0x27] sm:$0xff]
        %v5606 = vld [vmem:[#allocation2 + $0x2f] sm:$0xff]
        %v5607 = vld [vmem:[#allocation2 + $0x37] sm:$0xff]
        %v5608 = vld [vmem:[#allocation2 + $0x3f] sm:$0xff]
        %v5609 = vld [vmem:[#allocation2 + $0x47] sm:$0xff]
        %v5610 = vld [vmem:[#allocation2 + $0x4f] sm:$0xff]
        %v5611 = vmul.f32 %v5603, %v1826
        %v5612 = vmul.f32 %v5604, %v1831
        %v5613 = vmul.f32 %v5605, %v1836
        %v5614 = vmul.f32 %v5606, %v1841
        %v5615 = vmul.f32 %v5607, %v1846
        %v5616 = vmul.f32 %v5608, %v1851
        %v5617 = vmul.f32 %v5609, %v1856
        %v5618 = vmul.f32 %v5610, %v1861
        %5627 = vrot.lane.b32.xlu0 %v5611, 96
        %v5628 = vpop.permute.xlu0 %5627
        %5629 = vrot.lane.b32.xlu0 %v5612, 96
        %v5630 = vpop.permute.xlu0 %5629
        %5631 = vrot.lane.b32.xlu0 %v5613, 96
        %v5632 = vpop.permute.xlu0 %5631
        %5633 = vrot.lane.b32.xlu0 %v5614, 96
        %v5634 = vpop.permute.xlu0 %5633
        %5635 = vrot.lane.b32.xlu0 %v5615, 96
        %v5636 = vpop.permute.xlu0 %5635
        %5637 = vrot.lane.b32.xlu0 %v5616, 96
        %v5638 = vpop.permute.xlu0 %5637
        %5639 = vrot.lane.b32.xlu0 %v5617, 96
        %v5640 = vpop.permute.xlu0 %5639
        %5641 = vrot.lane.b32.xlu0 %v5618, 96
        %v5642 = vpop.permute.xlu0 %5641
        %5651 = vst.msk [vmem:[#allocation3 + $0x10] sm:$0xff] %vm2097, %v5628
        %5652 = vst.msk [vmem:[#allocation3 + $0x48] sm:$0xff] %vm2097, %v5630
        %5653 = vst.msk [vmem:[#allocation3 + $0x80] sm:$0xff] %vm2097, %v5632
        %5654 = vst.msk [vmem:[#allocation3 + $0xb8] sm:$0xff] %vm2097, %v5634
        %5655 = vst.msk [vmem:[#allocation3 + $0xf0] sm:$0xff] %vm2097, %v5636
        %5656 = vst.msk [vmem:[#allocation3 + $0x128] sm:$0xff] %vm2097, %v5638
        %5657 = vst.msk [vmem:[#allocation3 + $0x160] sm:$0xff] %vm2097, %v5640
        %5658 = vst.msk [vmem:[#allocation3 + $0x198] sm:$0xff] %vm2097, %v5642
        %v5659 = vld [vmem:[#allocation2 + $0x18] sm:$0xff]
        %v5660 = vld [vmem:[#allocation2 + $0x20] sm:$0xff]
        %v5661 = vld [vmem:[#allocation2 + $0x28] sm:$0xff]
        %v5662 = vld [vmem:[#allocation2 + $0x30] sm:$0xff]
        %v5663 = vld [vmem:[#allocation2 + $0x38] sm:$0xff]
        %v5664 = vld [vmem:[#allocation2 + $0x40] sm:$0xff]
        %v5665 = vld [vmem:[#allocation2 + $0x48] sm:$0xff]
        %v5666 = vld [vmem:[#allocation2 + $0x50] sm:$0xff]
        %v5667 = vmul.f32 %v5659, %v1923
        %v5668 = vmul.f32 %v5660, %v1928
        %v5669 = vmul.f32 %v5661, %v1933
        %v5670 = vmul.f32 %v5662, %v1938
        %v5671 = vmul.f32 %v5663, %v1943
        %v5672 = vmul.f32 %v5664, %v1948
        %v5673 = vmul.f32 %v5665, %v1953
        %v5674 = vmul.f32 %v5666, %v1958
        %5675 = vst.msk [vmem:[#allocation3 + $0x18] sm:$0xff] %vm546, %v5667
        %5676 = vst.msk [vmem:[#allocation3 + $0x50] sm:$0xff] %vm546, %v5668
        %5677 = vst.msk [vmem:[#allocation3 + $0x88] sm:$0xff] %vm546, %v5669
        %5678 = vst.msk [vmem:[#allocation3 + $0xc0] sm:$0xff] %vm546, %v5670
        %5679 = vst.msk [vmem:[#allocation3 + $0xf8] sm:$0xff] %vm546, %v5671
        %5680 = vst.msk [vmem:[#allocation3 + $0x130] sm:$0xff] %vm546, %v5672
        %5681 = vst.msk [vmem:[#allocation3 + $0x168] sm:$0xff] %vm546, %v5673
        %5682 = vst.msk [vmem:[#allocation3 + $0x1a0] sm:$0xff] %vm546, %v5674
        %v5683 = vld [vmem:[#allocation2 + $0x19] sm:$0xff]
        %v5684 = vld [vmem:[#allocation2 + $0x21] sm:$0xff]
        %v5685 = vld [vmem:[#allocation2 + $0x29] sm:$0xff]
        %v5686 = vld [vmem:[#allocation2 + $0x31] sm:$0xff]
        %v5687 = vld [vmem:[#allocation2 + $0x39] sm:$0xff]
        %v5688 = vld [vmem:[#allocation2 + $0x41] sm:$0xff]
        %v5689 = vld [vmem:[#allocation2 + $0x49] sm:$0xff]
        %v5690 = vld [vmem:[#allocation2 + $0x51] sm:$0xff]
        %v5691 = vmul.f32 %v5683, %v2020
        %v5692 = vmul.f32 %v5684, %v2025
        %v5693 = vmul.f32 %v5685, %v2030
        %v5694 = vmul.f32 %v5686, %v2035
        %v5695 = vmul.f32 %v5687, %v2040
        %v5696 = vmul.f32 %v5688, %v2045
        %v5697 = vmul.f32 %v5689, %v2050
        %v5698 = vmul.f32 %v5690, %v2055
        %5707 = vrot.lane.b32.xlu0 %v5691, 32
        %v5708 = vpop.permute.xlu0 %5707
        %5709 = vrot.lane.b32.xlu0 %v5692, 32
        %v5710 = vpop.permute.xlu0 %5709
        %5711 = vrot.lane.b32.xlu0 %v5693, 32
        %v5712 = vpop.permute.xlu0 %5711
        %5713 = vrot.lane.b32.xlu0 %v5694, 32
        %v5714 = vpop.permute.xlu0 %5713
        %5715 = vrot.lane.b32.xlu0 %v5695, 32
        %v5716 = vpop.permute.xlu0 %5715
        %5717 = vrot.lane.b32.xlu0 %v5696, 32
        %v5718 = vpop.permute.xlu0 %5717
        %5719 = vrot.lane.b32.xlu0 %v5697, 32
        %v5720 = vpop.permute.xlu0 %5719
        %5721 = vrot.lane.b32.xlu0 %v5698, 32
        %v5722 = vpop.permute.xlu0 %5721
        %5731 = vst.msk [vmem:[#allocation3 + $0x18] sm:$0xff] %vm1903, %v5708
        %5732 = vst.msk [vmem:[#allocation3 + $0x50] sm:$0xff] %vm1903, %v5710
        %5733 = vst.msk [vmem:[#allocation3 + $0x88] sm:$0xff] %vm1903, %v5712
        %5734 = vst.msk [vmem:[#allocation3 + $0xc0] sm:$0xff] %vm1903, %v5714
        %5735 = vst.msk [vmem:[#allocation3 + $0xf8] sm:$0xff] %vm1903, %v5716
        %5736 = vst.msk [vmem:[#allocation3 + $0x130] sm:$0xff] %vm1903, %v5718
        %5737 = vst.msk [vmem:[#allocation3 + $0x168] sm:$0xff] %vm1903, %v5720
        %5738 = vst.msk [vmem:[#allocation3 + $0x1a0] sm:$0xff] %vm1903, %v5722
        %v5739 = vld [vmem:[#allocation2 + $0x1a] sm:$0xff]
        %v5740 = vld [vmem:[#allocation2 + $0x22] sm:$0xff]
        %v5741 = vld [vmem:[#allocation2 + $0x2a] sm:$0xff]
        %v5742 = vld [vmem:[#allocation2 + $0x32] sm:$0xff]
        %v5743 = vld [vmem:[#allocation2 + $0x3a] sm:$0xff]
        %v5744 = vld [vmem:[#allocation2 + $0x42] sm:$0xff]
        %v5745 = vld [vmem:[#allocation2 + $0x4a] sm:$0xff]
        %v5746 = vld [vmem:[#allocation2 + $0x52] sm:$0xff]
        %v5747 = vmul.f32 %v5739, %v2117
        %v5748 = vmul.f32 %v5740, %v2122
        %v5749 = vmul.f32 %v5741, %v2127
        %v5750 = vmul.f32 %v5742, %v2132
        %v5751 = vmul.f32 %v5743, %v2137
        %v5752 = vmul.f32 %v5744, %v2142
        %v5753 = vmul.f32 %v5745, %v2147
        %v5754 = vmul.f32 %v5746, %v2152
        %5763 = vrot.lane.b32.xlu0 %v5747, 64
        %v5764 = vpop.permute.xlu0 %5763
        %5765 = vrot.lane.b32.xlu0 %v5748, 64
        %v5766 = vpop.permute.xlu0 %5765
        %5767 = vrot.lane.b32.xlu0 %v5749, 64
        %v5768 = vpop.permute.xlu0 %5767
        %5769 = vrot.lane.b32.xlu0 %v5750, 64
        %v5770 = vpop.permute.xlu0 %5769
        %5771 = vrot.lane.b32.xlu0 %v5751, 64
        %v5772 = vpop.permute.xlu0 %5771
        %5773 = vrot.lane.b32.xlu0 %v5752, 64
        %v5774 = vpop.permute.xlu0 %5773
        %5775 = vrot.lane.b32.xlu0 %v5753, 64
        %v5776 = vpop.permute.xlu0 %5775
        %5777 = vrot.lane.b32.xlu0 %v5754, 64
        %v5778 = vpop.permute.xlu0 %5777
        %5787 = vst.msk [vmem:[#allocation3 + $0x18] sm:$0xff] %vm2000, %v5764
        %5788 = vst.msk [vmem:[#allocation3 + $0x50] sm:$0xff] %vm2000, %v5766
        %5789 = vst.msk [vmem:[#allocation3 + $0x88] sm:$0xff] %vm2000, %v5768
        %5790 = vst.msk [vmem:[#allocation3 + $0xc0] sm:$0xff] %vm2000, %v5770
        %5791 = vst.msk [vmem:[#allocation3 + $0xf8] sm:$0xff] %vm2000, %v5772
        %5792 = vst.msk [vmem:[#allocation3 + $0x130] sm:$0xff] %vm2000, %v5774
        %5793 = vst.msk [vmem:[#allocation3 + $0x168] sm:$0xff] %vm2000, %v5776
        %5794 = vst.msk [vmem:[#allocation3 + $0x1a0] sm:$0xff] %vm2000, %v5778
        %v5795 = vld [vmem:[#allocation2 + $0x1e] sm:$0xff]
        %v5796 = vld [vmem:[#allocation2 + $0x26] sm:$0xff]
        %v5797 = vld [vmem:[#allocation2 + $0x2e] sm:$0xff]
        %v5798 = vld [vmem:[#allocation2 + $0x36] sm:$0xff]
        %v5799 = vld [vmem:[#allocation2 + $0x3e] sm:$0xff]
        %v5800 = vld [vmem:[#allocation2 + $0x46] sm:$0xff]
        %v5801 = vld [vmem:[#allocation2 + $0x4e] sm:$0xff]
        %v5802 = vld [vmem:[#allocation2 + $0x56] sm:$0xff]
        %v5803 = vmul.f32 %v5795, %v1762
        %v5804 = vmul.f32 %v5796, %v1767
        %v5805 = vmul.f32 %v5797, %v1772
        %v5806 = vmul.f32 %v5798, %v1777
        %v5807 = vmul.f32 %v5799, %v1782
        %v5808 = vmul.f32 %v5800, %v1787
        %v5809 = vmul.f32 %v5801, %v1792
        %v5810 = vmul.f32 %v5802, %v1797
        %5819 = vrot.lane.b32.xlu0 %v5803, 96
        %v5820 = vpop.permute.xlu0 %5819
        %5821 = vrot.lane.b32.xlu0 %v5804, 96
        %v5822 = vpop.permute.xlu0 %5821
        %5823 = vrot.lane.b32.xlu0 %v5805, 96
        %v5824 = vpop.permute.xlu0 %5823
        %5825 = vrot.lane.b32.xlu0 %v5806, 96
        %v5826 = vpop.permute.xlu0 %5825
        %5827 = vrot.lane.b32.xlu0 %v5807, 96
        %v5828 = vpop.permute.xlu0 %5827
        %5829 = vrot.lane.b32.xlu0 %v5808, 96
        %v5830 = vpop.permute.xlu0 %5829
        %5831 = vrot.lane.b32.xlu0 %v5809, 96
        %v5832 = vpop.permute.xlu0 %5831
        %5833 = vrot.lane.b32.xlu0 %v5810, 96
        %v5834 = vpop.permute.xlu0 %5833
        %5843 = vst.msk [vmem:[#allocation3 + $0x18] sm:$0xff] %vm2097, %v5820
        %5844 = vst.msk [vmem:[#allocation3 + $0x50] sm:$0xff] %vm2097, %v5822
        %5845 = vst.msk [vmem:[#allocation3 + $0x88] sm:$0xff] %vm2097, %v5824
        %5846 = vst.msk [vmem:[#allocation3 + $0xc0] sm:$0xff] %vm2097, %v5826
        %5847 = vst.msk [vmem:[#allocation3 + $0xf8] sm:$0xff] %vm2097, %v5828
        %5848 = vst.msk [vmem:[#allocation3 + $0x130] sm:$0xff] %vm2097, %v5830
        %5849 = vst.msk [vmem:[#allocation3 + $0x168] sm:$0xff] %vm2097, %v5832
        %5850 = vst.msk [vmem:[#allocation3 + $0x1a0] sm:$0xff] %vm2097, %v5834
        %v5851 = vld [vmem:[#allocation2 + $0x1f] sm:$0xff]
        %v5852 = vld [vmem:[#allocation2 + $0x27] sm:$0xff]
        %v5853 = vld [vmem:[#allocation2 + $0x2f] sm:$0xff]
        %v5854 = vld [vmem:[#allocation2 + $0x37] sm:$0xff]
        %v5855 = vld [vmem:[#allocation2 + $0x3f] sm:$0xff]
        %v5856 = vld [vmem:[#allocation2 + $0x47] sm:$0xff]
        %v5857 = vld [vmem:[#allocation2 + $0x4f] sm:$0xff]
        %v5858 = vld [vmem:[#allocation2 + $0x57] sm:$0xff]
        %v5859 = vmul.f32 %v5851, %v1826
        %v5860 = vmul.f32 %v5852, %v1831
        %v5861 = vmul.f32 %v5853, %v1836
        %v5862 = vmul.f32 %v5854, %v1841
        %v5863 = vmul.f32 %v5855, %v1846
        %v5864 = vmul.f32 %v5856, %v1851
        %v5865 = vmul.f32 %v5857, %v1856
        %v5866 = vmul.f32 %v5858, %v1861
        %5867 = vst.msk [vmem:[#allocation3 + $0x20] sm:$0xff] %vm546, %v5859
        %5868 = vst.msk [vmem:[#allocation3 + $0x58] sm:$0xff] %vm546, %v5860
        %5869 = vst.msk [vmem:[#allocation3 + $0x90] sm:$0xff] %vm546, %v5861
        %5870 = vst.msk [vmem:[#allocation3 + $0xc8] sm:$0xff] %vm546, %v5862
        %5871 = vst.msk [vmem:[#allocation3 + $0x100] sm:$0xff] %vm546, %v5863
        %5872 = vst.msk [vmem:[#allocation3 + $0x138] sm:$0xff] %vm546, %v5864
        %5873 = vst.msk [vmem:[#allocation3 + $0x170] sm:$0xff] %vm546, %v5865
        %5874 = vst.msk [vmem:[#allocation3 + $0x1a8] sm:$0xff] %vm546, %v5866
        %v5875 = vld [vmem:[#allocation2 + $0x20] sm:$0xff]
        %v5876 = vld [vmem:[#allocation2 + $0x28] sm:$0xff]
        %v5877 = vld [vmem:[#allocation2 + $0x30] sm:$0xff]
        %v5878 = vld [vmem:[#allocation2 + $0x38] sm:$0xff]
        %v5879 = vld [vmem:[#allocation2 + $0x40] sm:$0xff]
        %v5880 = vld [vmem:[#allocation2 + $0x48] sm:$0xff]
        %v5881 = vld [vmem:[#allocation2 + $0x50] sm:$0xff]
        %v5882 = vld [vmem:[#allocation2 + $0x58] sm:$0xff]
        %v5883 = vmul.f32 %v5875, %v1923
        %v5884 = vmul.f32 %v5876, %v1928
        %v5885 = vmul.f32 %v5877, %v1933
        %v5886 = vmul.f32 %v5878, %v1938
        %v5887 = vmul.f32 %v5879, %v1943
        %v5888 = vmul.f32 %v5880, %v1948
        %v5889 = vmul.f32 %v5881, %v1953
        %v5890 = vmul.f32 %v5882, %v1958
        %5899 = vrot.lane.b32.xlu0 %v5883, 32
        %v5900 = vpop.permute.xlu0 %5899
        %5901 = vrot.lane.b32.xlu0 %v5884, 32
        %v5902 = vpop.permute.xlu0 %5901
        %5903 = vrot.lane.b32.xlu0 %v5885, 32
        %v5904 = vpop.permute.xlu0 %5903
        %5905 = vrot.lane.b32.xlu0 %v5886, 32
        %v5906 = vpop.permute.xlu0 %5905
        %5907 = vrot.lane.b32.xlu0 %v5887, 32
        %v5908 = vpop.permute.xlu0 %5907
        %5909 = vrot.lane.b32.xlu0 %v5888, 32
        %v5910 = vpop.permute.xlu0 %5909
        %5911 = vrot.lane.b32.xlu0 %v5889, 32
        %v5912 = vpop.permute.xlu0 %5911
        %5913 = vrot.lane.b32.xlu0 %v5890, 32
        %v5914 = vpop.permute.xlu0 %5913
        %5923 = vst.msk [vmem:[#allocation3 + $0x20] sm:$0xff] %vm1903, %v5900
        %5924 = vst.msk [vmem:[#allocation3 + $0x58] sm:$0xff] %vm1903, %v5902
        %5925 = vst.msk [vmem:[#allocation3 + $0x90] sm:$0xff] %vm1903, %v5904
        %5926 = vst.msk [vmem:[#allocation3 + $0xc8] sm:$0xff] %vm1903, %v5906
        %5927 = vst.msk [vmem:[#allocation3 + $0x100] sm:$0xff] %vm1903, %v5908
        %5928 = vst.msk [vmem:[#allocation3 + $0x138] sm:$0xff] %vm1903, %v5910
        %5929 = vst.msk [vmem:[#allocation3 + $0x170] sm:$0xff] %vm1903, %v5912
        %5930 = vst.msk [vmem:[#allocation3 + $0x1a8] sm:$0xff] %vm1903, %v5914
        %v5931 = vld [vmem:[#allocation2 + $0x21] sm:$0xff]
        %v5932 = vld [vmem:[#allocation2 + $0x29] sm:$0xff]
        %v5933 = vld [vmem:[#allocation2 + $0x31] sm:$0xff]
        %v5934 = vld [vmem:[#allocation2 + $0x39] sm:$0xff]
        %v5935 = vld [vmem:[#allocation2 + $0x41] sm:$0xff]
        %v5936 = vld [vmem:[#allocation2 + $0x49] sm:$0xff]
        %v5937 = vld [vmem:[#allocation2 + $0x51] sm:$0xff]
        %v5938 = vld [vmem:[#allocation2 + $0x59] sm:$0xff]
        %v5939 = vmul.f32 %v5931, %v2020
        %v5940 = vmul.f32 %v5932, %v2025
        %v5941 = vmul.f32 %v5933, %v2030
        %v5942 = vmul.f32 %v5934, %v2035
        %v5943 = vmul.f32 %v5935, %v2040
        %v5944 = vmul.f32 %v5936, %v2045
        %v5945 = vmul.f32 %v5937, %v2050
        %v5946 = vmul.f32 %v5938, %v2055
        %5955 = vrot.lane.b32.xlu0 %v5939, 64
        %v5956 = vpop.permute.xlu0 %5955
        %5957 = vrot.lane.b32.xlu0 %v5940, 64
        %v5958 = vpop.permute.xlu0 %5957
        %5959 = vrot.lane.b32.xlu0 %v5941, 64
        %v5960 = vpop.permute.xlu0 %5959
        %5961 = vrot.lane.b32.xlu0 %v5942, 64
        %v5962 = vpop.permute.xlu0 %5961
        %5963 = vrot.lane.b32.xlu0 %v5943, 64
        %v5964 = vpop.permute.xlu0 %5963
        %5965 = vrot.lane.b32.xlu0 %v5944, 64
        %v5966 = vpop.permute.xlu0 %5965
        %5967 = vrot.lane.b32.xlu0 %v5945, 64
        %v5968 = vpop.permute.xlu0 %5967
        %5969 = vrot.lane.b32.xlu0 %v5946, 64
        %v5970 = vpop.permute.xlu0 %5969
        %5979 = vst.msk [vmem:[#allocation3 + $0x20] sm:$0xff] %vm2000, %v5956
        %5980 = vst.msk [vmem:[#allocation3 + $0x58] sm:$0xff] %vm2000, %v5958
        %5981 = vst.msk [vmem:[#allocation3 + $0x90] sm:$0xff] %vm2000, %v5960
        %5982 = vst.msk [vmem:[#allocation3 + $0xc8] sm:$0xff] %vm2000, %v5962
        %5983 = vst.msk [vmem:[#allocation3 + $0x100] sm:$0xff] %vm2000, %v5964
        %5984 = vst.msk [vmem:[#allocation3 + $0x138] sm:$0xff] %vm2000, %v5966
        %5985 = vst.msk [vmem:[#allocation3 + $0x170] sm:$0xff] %vm2000, %v5968
        %5986 = vst.msk [vmem:[#allocation3 + $0x1a8] sm:$0xff] %vm2000, %v5970
        %v5987 = vld [vmem:[#allocation2 + $0x22] sm:$0xff]
        %v5988 = vld [vmem:[#allocation2 + $0x2a] sm:$0xff]
        %v5989 = vld [vmem:[#allocation2 + $0x32] sm:$0xff]
        %v5990 = vld [vmem:[#allocation2 + $0x3a] sm:$0xff]
        %v5991 = vld [vmem:[#allocation2 + $0x42] sm:$0xff]
        %v5992 = vld [vmem:[#allocation2 + $0x4a] sm:$0xff]
        %v5993 = vld [vmem:[#allocation2 + $0x52] sm:$0xff]
        %v5994 = vld [vmem:[#allocation2 + $0x5a] sm:$0xff]
        %v5995 = vmul.f32 %v5987, %v2117
        %v5996 = vmul.f32 %v5988, %v2122
        %v5997 = vmul.f32 %v5989, %v2127
        %v5998 = vmul.f32 %v5990, %v2132
        %v5999 = vmul.f32 %v5991, %v2137
        %v6000 = vmul.f32 %v5992, %v2142
        %v6001 = vmul.f32 %v5993, %v2147
        %v6002 = vmul.f32 %v5994, %v2152
        %6011 = vrot.lane.b32.xlu0 %v5995, 96
        %v6012 = vpop.permute.xlu0 %6011
        %6013 = vrot.lane.b32.xlu0 %v5996, 96
        %v6014 = vpop.permute.xlu0 %6013
        %6015 = vrot.lane.b32.xlu0 %v5997, 96
        %v6016 = vpop.permute.xlu0 %6015
        %6017 = vrot.lane.b32.xlu0 %v5998, 96
        %v6018 = vpop.permute.xlu0 %6017
        %6019 = vrot.lane.b32.xlu0 %v5999, 96
        %v6020 = vpop.permute.xlu0 %6019
        %6021 = vrot.lane.b32.xlu0 %v6000, 96
        %v6022 = vpop.permute.xlu0 %6021
        %6023 = vrot.lane.b32.xlu0 %v6001, 96
        %v6024 = vpop.permute.xlu0 %6023
        %6025 = vrot.lane.b32.xlu0 %v6002, 96
        %v6026 = vpop.permute.xlu0 %6025
        %6035 = vst.msk [vmem:[#allocation3 + $0x20] sm:$0xff] %vm2097, %v6012
        %6036 = vst.msk [vmem:[#allocation3 + $0x58] sm:$0xff] %vm2097, %v6014
        %6037 = vst.msk [vmem:[#allocation3 + $0x90] sm:$0xff] %vm2097, %v6016
        %6038 = vst.msk [vmem:[#allocation3 + $0xc8] sm:$0xff] %vm2097, %v6018
        %6039 = vst.msk [vmem:[#allocation3 + $0x100] sm:$0xff] %vm2097, %v6020
        %6040 = vst.msk [vmem:[#allocation3 + $0x138] sm:$0xff] %vm2097, %v6022
        %6041 = vst.msk [vmem:[#allocation3 + $0x170] sm:$0xff] %vm2097, %v6024
        %6042 = vst.msk [vmem:[#allocation3 + $0x1a8] sm:$0xff] %vm2097, %v6026
        %v6043 = vld [vmem:[#allocation2 + $0x26] sm:$0xff]
        %v6044 = vld [vmem:[#allocation2 + $0x2e] sm:$0xff]
        %v6045 = vld [vmem:[#allocation2 + $0x36] sm:$0xff]
        %v6046 = vld [vmem:[#allocation2 + $0x3e] sm:$0xff]
        %v6047 = vld [vmem:[#allocation2 + $0x46] sm:$0xff]
        %v6048 = vld [vmem:[#allocation2 + $0x4e] sm:$0xff]
        %v6049 = vld [vmem:[#allocation2 + $0x56] sm:$0xff]
        %v6050 = vld [vmem:[#allocation2 + $0x5e] sm:$0xff]
        %v6051 = vmul.f32 %v6043, %v1762
        %v6052 = vmul.f32 %v6044, %v1767
        %v6053 = vmul.f32 %v6045, %v1772
        %v6054 = vmul.f32 %v6046, %v1777
        %v6055 = vmul.f32 %v6047, %v1782
        %v6056 = vmul.f32 %v6048, %v1787
        %v6057 = vmul.f32 %v6049, %v1792
        %v6058 = vmul.f32 %v6050, %v1797
        %6059 = vst.msk [vmem:[#allocation3 + $0x28] sm:$0xff] %vm546, %v6051
        %6060 = vst.msk [vmem:[#allocation3 + $0x60] sm:$0xff] %vm546, %v6052
        %6061 = vst.msk [vmem:[#allocation3 + $0x98] sm:$0xff] %vm546, %v6053
        %6062 = vst.msk [vmem:[#allocation3 + $0xd0] sm:$0xff] %vm546, %v6054
        %6063 = vst.msk [vmem:[#allocation3 + $0x108] sm:$0xff] %vm546, %v6055
        %6064 = vst.msk [vmem:[#allocation3 + $0x140] sm:$0xff] %vm546, %v6056
        %6065 = vst.msk [vmem:[#allocation3 + $0x178] sm:$0xff] %vm546, %v6057
        %6066 = vst.msk [vmem:[#allocation3 + $0x1b0] sm:$0xff] %vm546, %v6058
        %v6067 = vld [vmem:[#allocation2 + $0x27] sm:$0xff]
        %v6068 = vld [vmem:[#allocation2 + $0x2f] sm:$0xff]
        %v6069 = vld [vmem:[#allocation2 + $0x37] sm:$0xff]
        %v6070 = vld [vmem:[#allocation2 + $0x3f] sm:$0xff]
        %v6071 = vld [vmem:[#allocation2 + $0x47] sm:$0xff]
        %v6072 = vld [vmem:[#allocation2 + $0x4f] sm:$0xff]
        %v6073 = vld [vmem:[#allocation2 + $0x57] sm:$0xff]
        %v6074 = vld [vmem:[#allocation2 + $0x5f] sm:$0xff]
        %v6075 = vmul.f32 %v6067, %v1826
        %v6076 = vmul.f32 %v6068, %v1831
        %v6077 = vmul.f32 %v6069, %v1836
        %v6078 = vmul.f32 %v6070, %v1841
        %v6079 = vmul.f32 %v6071, %v1846
        %v6080 = vmul.f32 %v6072, %v1851
        %v6081 = vmul.f32 %v6073, %v1856
        %v6082 = vmul.f32 %v6074, %v1861
        %6091 = vrot.lane.b32.xlu0 %v6075, 32
        %v6092 = vpop.permute.xlu0 %6091
        %6093 = vrot.lane.b32.xlu0 %v6076, 32
        %v6094 = vpop.permute.xlu0 %6093
        %6095 = vrot.lane.b32.xlu0 %v6077, 32
        %v6096 = vpop.permute.xlu0 %6095
        %6097 = vrot.lane.b32.xlu0 %v6078, 32
        %v6098 = vpop.permute.xlu0 %6097
        %6099 = vrot.lane.b32.xlu0 %v6079, 32
        %v6100 = vpop.permute.xlu0 %6099
        %6101 = vrot.lane.b32.xlu0 %v6080, 32
        %v6102 = vpop.permute.xlu0 %6101
        %6103 = vrot.lane.b32.xlu0 %v6081, 32
        %v6104 = vpop.permute.xlu0 %6103
        %6105 = vrot.lane.b32.xlu0 %v6082, 32
        %v6106 = vpop.permute.xlu0 %6105
        %6115 = vst.msk [vmem:[#allocation3 + $0x28] sm:$0xff] %vm1903, %v6092
        %6116 = vst.msk [vmem:[#allocation3 + $0x60] sm:$0xff] %vm1903, %v6094
        %6117 = vst.msk [vmem:[#allocation3 + $0x98] sm:$0xff] %vm1903, %v6096
        %6118 = vst.msk [vmem:[#allocation3 + $0xd0] sm:$0xff] %vm1903, %v6098
        %6119 = vst.msk [vmem:[#allocation3 + $0x108] sm:$0xff] %vm1903, %v6100
        %6120 = vst.msk [vmem:[#allocation3 + $0x140] sm:$0xff] %vm1903, %v6102
        %6121 = vst.msk [vmem:[#allocation3 + $0x178] sm:$0xff] %vm1903, %v6104
        %6122 = vst.msk [vmem:[#allocation3 + $0x1b0] sm:$0xff] %vm1903, %v6106
        %v6123 = vld [vmem:[#allocation2 + $0x28] sm:$0xff]
        %v6124 = vld [vmem:[#allocation2 + $0x30] sm:$0xff]
        %v6125 = vld [vmem:[#allocation2 + $0x38] sm:$0xff]
        %v6126 = vld [vmem:[#allocation2 + $0x40] sm:$0xff]
        %v6127 = vld [vmem:[#allocation2 + $0x48] sm:$0xff]
        %v6128 = vld [vmem:[#allocation2 + $0x50] sm:$0xff]
        %v6129 = vld [vmem:[#allocation2 + $0x58] sm:$0xff]
        %v6130 = vld [vmem:[#allocation2 + $0x60] sm:$0xff]
        %v6131 = vmul.f32 %v6123, %v1923
        %v6132 = vmul.f32 %v6124, %v1928
        %v6133 = vmul.f32 %v6125, %v1933
        %v6134 = vmul.f32 %v6126, %v1938
        %v6135 = vmul.f32 %v6127, %v1943
        %v6136 = vmul.f32 %v6128, %v1948
        %v6137 = vmul.f32 %v6129, %v1953
        %v6138 = vmul.f32 %v6130, %v1958
        %6147 = vrot.lane.b32.xlu0 %v6131, 64
        %v6148 = vpop.permute.xlu0 %6147
        %6149 = vrot.lane.b32.xlu0 %v6132, 64
        %v6150 = vpop.permute.xlu0 %6149
        %6151 = vrot.lane.b32.xlu0 %v6133, 64
        %v6152 = vpop.permute.xlu0 %6151
        %6153 = vrot.lane.b32.xlu0 %v6134, 64
        %v6154 = vpop.permute.xlu0 %6153
        %6155 = vrot.lane.b32.xlu0 %v6135, 64
        %v6156 = vpop.permute.xlu0 %6155
        %6157 = vrot.lane.b32.xlu0 %v6136, 64
        %v6158 = vpop.permute.xlu0 %6157
        %6159 = vrot.lane.b32.xlu0 %v6137, 64
        %v6160 = vpop.permute.xlu0 %6159
        %6161 = vrot.lane.b32.xlu0 %v6138, 64
        %v6162 = vpop.permute.xlu0 %6161
        %6171 = vst.msk [vmem:[#allocation3 + $0x28] sm:$0xff] %vm2000, %v6148
        %6172 = vst.msk [vmem:[#allocation3 + $0x60] sm:$0xff] %vm2000, %v6150
        %6173 = vst.msk [vmem:[#allocation3 + $0x98] sm:$0xff] %vm2000, %v6152
        %6174 = vst.msk [vmem:[#allocation3 + $0xd0] sm:$0xff] %vm2000, %v6154
        %6175 = vst.msk [vmem:[#allocation3 + $0x108] sm:$0xff] %vm2000, %v6156
        %6176 = vst.msk [vmem:[#allocation3 + $0x140] sm:$0xff] %vm2000, %v6158
        %6177 = vst.msk [vmem:[#allocation3 + $0x178] sm:$0xff] %vm2000, %v6160
        %6178 = vst.msk [vmem:[#allocation3 + $0x1b0] sm:$0xff] %vm2000, %v6162
        %v6179 = vld [vmem:[#allocation2 + $0x29] sm:$0xff]
        %v6180 = vld [vmem:[#allocation2 + $0x31] sm:$0xff]
        %v6181 = vld [vmem:[#allocation2 + $0x39] sm:$0xff]
        %v6182 = vld [vmem:[#allocation2 + $0x41] sm:$0xff]
        %v6183 = vld [vmem:[#allocation2 + $0x49] sm:$0xff]
        %v6184 = vld [vmem:[#allocation2 + $0x51] sm:$0xff]
        %v6185 = vld [vmem:[#allocation2 + $0x59] sm:$0xff]
        %v6186 = vld [vmem:[#allocation2 + $0x61] sm:$0xff]
        %v6187 = vmul.f32 %v6179, %v2020
        %v6188 = vmul.f32 %v6180, %v2025
        %v6189 = vmul.f32 %v6181, %v2030
        %v6190 = vmul.f32 %v6182, %v2035
        %v6191 = vmul.f32 %v6183, %v2040
        %v6192 = vmul.f32 %v6184, %v2045
        %v6193 = vmul.f32 %v6185, %v2050
        %v6194 = vmul.f32 %v6186, %v2055
        %6203 = vrot.lane.b32.xlu0 %v6187, 96
        %v6204 = vpop.permute.xlu0 %6203
        %6205 = vrot.lane.b32.xlu0 %v6188, 96
        %v6206 = vpop.permute.xlu0 %6205
        %6207 = vrot.lane.b32.xlu0 %v6189, 96
        %v6208 = vpop.permute.xlu0 %6207
        %6209 = vrot.lane.b32.xlu0 %v6190, 96
        %v6210 = vpop.permute.xlu0 %6209
        %6211 = vrot.lane.b32.xlu0 %v6191, 96
        %v6212 = vpop.permute.xlu0 %6211
        %6213 = vrot.lane.b32.xlu0 %v6192, 96
        %v6214 = vpop.permute.xlu0 %6213
        %6215 = vrot.lane.b32.xlu0 %v6193, 96
        %v6216 = vpop.permute.xlu0 %6215
        %6217 = vrot.lane.b32.xlu0 %v6194, 96
        %v6218 = vpop.permute.xlu0 %6217
        %6227 = vst.msk [vmem:[#allocation3 + $0x28] sm:$0xff] %vm2097, %v6204
        %6228 = vst.msk [vmem:[#allocation3 + $0x60] sm:$0xff] %vm2097, %v6206
        %6229 = vst.msk [vmem:[#allocation3 + $0x98] sm:$0xff] %vm2097, %v6208
        %6230 = vst.msk [vmem:[#allocation3 + $0xd0] sm:$0xff] %vm2097, %v6210
        %6231 = vst.msk [vmem:[#allocation3 + $0x108] sm:$0xff] %vm2097, %v6212
        %6232 = vst.msk [vmem:[#allocation3 + $0x140] sm:$0xff] %vm2097, %v6214
        %6233 = vst.msk [vmem:[#allocation3 + $0x178] sm:$0xff] %vm2097, %v6216
        %6234 = vst.msk [vmem:[#allocation3 + $0x1b0] sm:$0xff] %vm2097, %v6218
        %v6235 = vld [vmem:[#allocation2 + $0x2a] sm:$0xff]
        %v6236 = vld [vmem:[#allocation2 + $0x32] sm:$0xff]
        %v6237 = vld [vmem:[#allocation2 + $0x3a] sm:$0xff]
        %v6238 = vld [vmem:[#allocation2 + $0x42] sm:$0xff]
        %v6239 = vld [vmem:[#allocation2 + $0x4a] sm:$0xff]
        %v6240 = vld [vmem:[#allocation2 + $0x52] sm:$0xff]
        %v6241 = vld [vmem:[#allocation2 + $0x5a] sm:$0xff]
        %v6242 = vld [vmem:[#allocation2 + $0x62] sm:$0xff]
        %v6243 = vmul.f32 %v6235, %v2117
        %v6244 = vmul.f32 %v6236, %v2122
        %v6245 = vmul.f32 %v6237, %v2127
        %v6246 = vmul.f32 %v6238, %v2132
        %v6247 = vmul.f32 %v6239, %v2137
        %v6248 = vmul.f32 %v6240, %v2142
        %v6249 = vmul.f32 %v6241, %v2147
        %v6250 = vmul.f32 %v6242, %v2152
        %6251 = vst.msk [vmem:[#allocation3 + $0x30] sm:$0xff] %vm546, %v6243
        %6252 = vst.msk [vmem:[#allocation3 + $0x68] sm:$0xff] %vm546, %v6244
        %6253 = vst.msk [vmem:[#allocation3 + $0xa0] sm:$0xff] %vm546, %v6245
        %6254 = vst.msk [vmem:[#allocation3 + $0xd8] sm:$0xff] %vm546, %v6246
        %6255 = vst.msk [vmem:[#allocation3 + $0x110] sm:$0xff] %vm546, %v6247
        %6256 = vst.msk [vmem:[#allocation3 + $0x148] sm:$0xff] %vm546, %v6248
        %6257 = vst.msk [vmem:[#allocation3 + $0x180] sm:$0xff] %vm546, %v6249
        %6258 = vst.msk [vmem:[#allocation3 + $0x1b8] sm:$0xff] %vm546, %v6250
        %v6259 = vld [vmem:[#allocation3] sm:$0xff]
        %v6260 = vld [vmem:[#allocation3 + $0x8] sm:$0xff]
        %v6261 = vld [vmem:[#allocation3 + $0x10] sm:$0xff]
        %v6262 = vld [vmem:[#allocation3 + $0x18] sm:$0xff]
        %v6263 = vld [vmem:[#allocation3 + $0x20] sm:$0xff]
        %v6264 = vld [vmem:[#allocation3 + $0x28] sm:$0xff]
        %v6265 = vld [vmem:[#allocation3 + $0x30] sm:$0xff]
        %v6266 = vld [vmem:[#allocation3 + $0x38] sm:$0xff]
        %v6267 = vld [vmem:[#allocation3 + $0x40] sm:$0xff]
        %v6268 = vld [vmem:[#allocation3 + $0x48] sm:$0xff]
        %v6269 = vld [vmem:[#allocation3 + $0x50] sm:$0xff]
        %v6270 = vld [vmem:[#allocation3 + $0x58] sm:$0xff]
        %v6271 = vld [vmem:[#allocation3 + $0x60] sm:$0xff]
        %v6272 = vld [vmem:[#allocation3 + $0x68] sm:$0xff]
        %v6273 = vld [vmem:[#allocation3 + $0x70] sm:$0xff]
        %v6274 = vld [vmem:[#allocation3 + $0x78] sm:$0xff]
        %v6275 = vld [vmem:[#allocation3 + $0x80] sm:$0xff]
        %v6276 = vld [vmem:[#allocation3 + $0x88] sm:$0xff]
        %v6277 = vld [vmem:[#allocation3 + $0x90] sm:$0xff]
        %v6278 = vld [vmem:[#allocation3 + $0x98] sm:$0xff]
        %v6279 = vld [vmem:[#allocation3 + $0xa0] sm:$0xff]
        %v6280 = vld [vmem:[#allocation3 + $0xa8] sm:$0xff]
        %v6281 = vld [vmem:[#allocation3 + $0xb0] sm:$0xff]
        %v6282 = vld [vmem:[#allocation3 + $0xb8] sm:$0xff]
        %v6283 = vld [vmem:[#allocation3 + $0xc0] sm:$0xff]
        %v6284 = vld [vmem:[#allocation3 + $0xc8] sm:$0xff]
        %v6285 = vld [vmem:[#allocation3 + $0xd0] sm:$0xff]
        %v6286 = vld [vmem:[#allocation3 + $0xd8] sm:$0xff]
        %v6287 = vld [vmem:[#allocation3 + $0xe0] sm:$0xff]
        %v6288 = vld [vmem:[#allocation3 + $0xe8] sm:$0xff]
        %v6289 = vld [vmem:[#allocation3 + $0xf0] sm:$0xff]
        %v6290 = vld [vmem:[#allocation3 + $0xf8] sm:$0xff]
        %v6291 = vld [vmem:[#allocation3 + $0x100] sm:$0xff]
        %v6292 = vld [vmem:[#allocation3 + $0x108] sm:$0xff]
        %v6293 = vld [vmem:[#allocation3 + $0x110] sm:$0xff]
        %v6294 = vld [vmem:[#allocation3 + $0x118] sm:$0xff]
        %v6295 = vld [vmem:[#allocation3 + $0x120] sm:$0xff]
        %v6296 = vld [vmem:[#allocation3 + $0x128] sm:$0xff]
        %v6297 = vld [vmem:[#allocation3 + $0x130] sm:$0xff]
        %v6298 = vld [vmem:[#allocation3 + $0x138] sm:$0xff]
        %v6299 = vld [vmem:[#allocation3 + $0x140] sm:$0xff]
        %v6300 = vld [vmem:[#allocation3 + $0x148] sm:$0xff]
        %v6301 = vld [vmem:[#allocation3 + $0x150] sm:$0xff]
        %v6302 = vld [vmem:[#allocation3 + $0x158] sm:$0xff]
        %v6303 = vld [vmem:[#allocation3 + $0x160] sm:$0xff]
        %v6304 = vld [vmem:[#allocation3 + $0x168] sm:$0xff]
        %v6305 = vld [vmem:[#allocation3 + $0x170] sm:$0xff]
        %v6306 = vld [vmem:[#allocation3 + $0x178] sm:$0xff]
        %v6307 = vld [vmem:[#allocation3 + $0x180] sm:$0xff]
        %v6308 = vld [vmem:[#allocation3 + $0x188] sm:$0xff]
        %v6309 = vld [vmem:[#allocation3 + $0x190] sm:$0xff]
        %v6310 = vld [vmem:[#allocation3 + $0x198] sm:$0xff]
        %v6311 = vld [vmem:[#allocation3 + $0x1a0] sm:$0xff]
        %v6312 = vld [vmem:[#allocation3 + $0x1a8] sm:$0xff]
        %v6313 = vld [vmem:[#allocation3 + $0x1b0] sm:$0xff]
        %v6314 = vld [vmem:[#allocation3 + $0x1b8] sm:$0xff]
        %s6315 = scalar_lea.vmem %s11, 800
        %v6316 = vld [vmem:[%s6315] sm:$0xff]
        %v6317 = vld [vmem:[%s6315 + $0x8] sm:$0xff]
        %v6318 = vld [vmem:[%s6315 + $0x10] sm:$0xff]
        %v6319 = vld [vmem:[%s6315 + $0x18] sm:$0xff]
        %v6320 = vld [vmem:[%s6315 + $0x20] sm:$0xff]
        %v6321 = vld [vmem:[%s6315 + $0x28] sm:$0xff]
        %v6322 = vld [vmem:[%s6315 + $0x30] sm:$0xff]
        %v6323 = vld [vmem:[%s6315 + $0x38] sm:$0xff]
        %v6324 = vld [vmem:[%s6315 + $0x40] sm:$0xff]
        %v6325 = vld [vmem:[%s6315 + $0x48] sm:$0xff]
        %v6326 = vld [vmem:[%s6315 + $0x50] sm:$0xff]
        %v6327 = vld [vmem:[%s6315 + $0x58] sm:$0xff]
        %v6328 = vld [vmem:[%s6315 + $0x60] sm:$0xff]
        %v6329 = vld [vmem:[%s6315 + $0x68] sm:$0xff]
        %v6330 = vld [vmem:[%s6315 + $0x70] sm:$0xff]
        %v6331 = vld [vmem:[%s6315 + $0x78] sm:$0xff]
        %v6332 = vld [vmem:[%s6315 + $0x80] sm:$0xff]
        %v6333 = vld [vmem:[%s6315 + $0x88] sm:$0xff]
        %v6334 = vld [vmem:[%s6315 + $0x90] sm:$0xff]
        %v6335 = vld [vmem:[%s6315 + $0x98] sm:$0xff]
        %v6336 = vld [vmem:[%s6315 + $0xa0] sm:$0xff]
        %v6337 = vld [vmem:[%s6315 + $0xa8] sm:$0xff]
        %v6338 = vld [vmem:[%s6315 + $0xb0] sm:$0xff]
        %v6339 = vld [vmem:[%s6315 + $0xb8] sm:$0xff]
        %v6340 = vld [vmem:[%s6315 + $0xc0] sm:$0xff]
        %v6341 = vld [vmem:[%s6315 + $0xc8] sm:$0xff]
        %v6342 = vld [vmem:[%s6315 + $0xd0] sm:$0xff]
        %v6343 = vld [vmem:[%s6315 + $0xd8] sm:$0xff]
        %v6344 = vld [vmem:[%s6315 + $0xe0] sm:$0xff]
        %v6345 = vld [vmem:[%s6315 + $0xe8] sm:$0xff]
        %v6346 = vld [vmem:[%s6315 + $0xf0] sm:$0xff]
        %v6347 = vld [vmem:[%s6315 + $0xf8] sm:$0xff]
        %v6348 = vld [vmem:[%s6315 + $0x100] sm:$0xff]
        %v6349 = vld [vmem:[%s6315 + $0x108] sm:$0xff]
        %v6350 = vld [vmem:[%s6315 + $0x110] sm:$0xff]
        %v6351 = vld [vmem:[%s6315 + $0x118] sm:$0xff]
        %v6352 = vld [vmem:[%s6315 + $0x120] sm:$0xff]
        %v6353 = vld [vmem:[%s6315 + $0x128] sm:$0xff]
        %v6354 = vld [vmem:[%s6315 + $0x130] sm:$0xff]
        %v6355 = vld [vmem:[%s6315 + $0x138] sm:$0xff]
        %v6356 = vld [vmem:[%s6315 + $0x140] sm:$0xff]
        %v6357 = vld [vmem:[%s6315 + $0x148] sm:$0xff]
        %v6358 = vld [vmem:[%s6315 + $0x150] sm:$0xff]
        %v6359 = vld [vmem:[%s6315 + $0x158] sm:$0xff]
        %v6360 = vld [vmem:[%s6315 + $0x160] sm:$0xff]
        %v6361 = vld [vmem:[%s6315 + $0x168] sm:$0xff]
        %v6362 = vld [vmem:[%s6315 + $0x170] sm:$0xff]
        %v6363 = vld [vmem:[%s6315 + $0x178] sm:$0xff]
        %v6364 = vld [vmem:[%s6315 + $0x180] sm:$0xff]
        %v6365 = vld [vmem:[%s6315 + $0x188] sm:$0xff]
        %v6366 = vld [vmem:[%s6315 + $0x190] sm:$0xff]
        %v6367 = vld [vmem:[%s6315 + $0x198] sm:$0xff]
        %v6368 = vld [vmem:[%s6315 + $0x1a0] sm:$0xff]
        %v6369 = vld [vmem:[%s6315 + $0x1a8] sm:$0xff]
        %v6370 = vld [vmem:[%s6315 + $0x1b0] sm:$0xff]
        %v6371 = vld [vmem:[%s6315 + $0x1b8] sm:$0xff]
        %v6372 = vld [vmem:[%s6315 + $0x1c0] sm:$0xff]
        %v6373 = vld [vmem:[%s6315 + $0x1c8] sm:$0xff]
        %v6374 = vld [vmem:[%s6315 + $0x1d0] sm:$0xff]
        %v6375 = vld [vmem:[%s6315 + $0x1d8] sm:$0xff]
        %v6376 = vld [vmem:[%s6315 + $0x1e0] sm:$0xff]
        %v6377 = vld [vmem:[%s6315 + $0x1e8] sm:$0xff]
        %v6378 = vld [vmem:[%s6315 + $0x1f0] sm:$0xff]
        %v6379 = vld [vmem:[%s6315 + $0x1f8] sm:$0xff]
        %v6380 = vld [vmem:[%s6315 + $0x200] sm:$0xff]
        %v6381 = vld [vmem:[%s6315 + $0x208] sm:$0xff]
        %v6382 = vld [vmem:[%s6315 + $0x210] sm:$0xff]
        %v6383 = vld [vmem:[%s6315 + $0x218] sm:$0xff]
        %v6384 = vld [vmem:[%s6315 + $0x220] sm:$0xff]
        %v6385 = vld [vmem:[%s6315 + $0x228] sm:$0xff]
        %v6386 = vld [vmem:[%s6315 + $0x230] sm:$0xff]
        %v6387 = vld [vmem:[%s6315 + $0x238] sm:$0xff]
        %v6388 = vld [vmem:[%s6315 + $0x240] sm:$0xff]
        %v6389 = vld [vmem:[%s6315 + $0x248] sm:$0xff]
        %v6390 = vld [vmem:[%s6315 + $0x250] sm:$0xff]
        %v6391 = vld [vmem:[%s6315 + $0x258] sm:$0xff]
        %v6392 = vld [vmem:[%s6315 + $0x260] sm:$0xff]
        %v6393 = vld [vmem:[%s6315 + $0x268] sm:$0xff]
        %v6394 = vld [vmem:[%s6315 + $0x270] sm:$0xff]
        %v6395 = vld [vmem:[%s6315 + $0x278] sm:$0xff]
        %v6396 = vld [vmem:[%s6315 + $0x280] sm:$0xff]
        %v6397 = vld [vmem:[%s6315 + $0x288] sm:$0xff]
        %v6398 = vld [vmem:[%s6315 + $0x290] sm:$0xff]
        %v6399 = vld [vmem:[%s6315 + $0x298] sm:$0xff]
        %v6400 = vld [vmem:[%s6315 + $0x2a0] sm:$0xff]
        %v6401 = vld [vmem:[%s6315 + $0x2a8] sm:$0xff]
        %v6402 = vld [vmem:[%s6315 + $0x2b0] sm:$0xff]
        %v6403 = vld [vmem:[%s6315 + $0x2b8] sm:$0xff]
        %v6404 = vld [vmem:[%s6315 + $0x2c0] sm:$0xff]
        %v6405 = vld [vmem:[%s6315 + $0x2c8] sm:$0xff]
        %v6406 = vld [vmem:[%s6315 + $0x2d0] sm:$0xff]
        %v6407 = vld [vmem:[%s6315 + $0x2d8] sm:$0xff]
        %v6408 = vld [vmem:[%s6315 + $0x2e0] sm:$0xff]
        %v6409 = vld [vmem:[%s6315 + $0x2e8] sm:$0xff]
        %v6410 = vld [vmem:[%s6315 + $0x2f0] sm:$0xff]
        %v6411 = vld [vmem:[%s6315 + $0x2f8] sm:$0xff]
        %v6412 = vld [vmem:[%s6315 + $0x300] sm:$0xff]
        %v6413 = vld [vmem:[%s6315 + $0x308] sm:$0xff]
        %v6414 = vld [vmem:[%s6315 + $0x310] sm:$0xff]
        %v6415 = vld [vmem:[%s6315 + $0x318] sm:$0xff]
        %s6416 = scalar_lea.vmem %s12, 1
        %v6417 = vld [vmem:[%s6416] sm:$0x1]
        %v6419 = vlaneseq
        %v6420 = vshrl.u32 %v6419, 7
        %v6421 = vsub.s32 0, %v6420
        %v6422 = vrot.slane %v6417, %v6421
        %v6425 = vsel %vm546, %v6265, 0
        %v6428 = vsel %vm546, %v6272, 0
        %v6431 = vsel %vm546, %v6279, 0
        %v6434 = vsel %vm546, %v6286, 0
        %v6437 = vsel %vm546, %v6293, 0
        %v6440 = vsel %vm546, %v6300, 0
        %v6443 = vsel %vm546, %v6307, 0
        %v6446 = vsel %vm546, %v6314, 0
        %6448 = vmatprep.subr.mxu0 0.0
        %6449 = vmatpush1.msra.mxu0 %v6331
        %6450 = vmatprep.subr.mxu0 0.0
        %6451 = vmatpush1.msra.mxu0 %v6330
        %6452 = vmatprep.subr.mxu0 0.0
        %6453 = vmatpush1.msra.mxu0 %v6329
        %6454 = vmatprep.subr.mxu0 0.0
        %6455 = vmatpush1.msra.mxu0 %v6328
        %6456 = vmatprep.subr.mxu0 0.0
        %6457 = vmatpush1.msra.mxu0 %v6327
        %6458 = vmatprep.subr.mxu0 0.0
        %6459 = vmatpush1.msra.mxu0 %v6326
        %6460 = vmatprep.subr.mxu0 0.0
        %6461 = vmatpush1.msra.mxu0 %v6325
        %6462 = vmatprep.subr.mxu0 0.0
        %6463 = vmatpush1.msra.mxu0 %v6324
        %6464 = vmatprep.subr.mxu0 0.0
        %6465 = vmatpush1.msra.mxu0 %v6323
        %6466 = vmatprep.subr.mxu0 0.0
        %6467 = vmatpush1.msra.mxu0 %v6322
        %6468 = vmatprep.subr.mxu0 0.0
        %6469 = vmatpush1.msra.mxu0 %v6321
        %6470 = vmatprep.subr.mxu0 0.0
        %6471 = vmatpush1.msra.mxu0 %v6320
        %6472 = vmatprep.subr.mxu0 0.0
        %6473 = vmatpush1.msra.mxu0 %v6319
        %6474 = vmatprep.subr.mxu0 0.0
        %6475 = vmatpush1.msra.mxu0 %v6318
        %6476 = vmatprep.subr.mxu0 0.0
        %6477 = vmatpush1.msra.mxu0 %v6317
        %6478 = vmatprep.subr.mxu0 0.0
        %6479 = vmatpush1.msra.mxu0 %v6316
        %6480 = vmatprep.subr.mxu0 0.0
        %6481 = vmatpush2.msra.mxu0 %v6347
        %6482 = vmatprep.subr.mxu0 0.0
        %6483 = vmatpush2.msra.mxu0 %v6346
        %6484 = vmatprep.subr.mxu0 0.0
        %6485 = vmatpush2.msra.mxu0 %v6345
        %6486 = vmatprep.subr.mxu0 0.0
        %6487 = vmatpush2.msra.mxu0 %v6344
        %6488 = vmatprep.subr.mxu0 0.0
        %6489 = vmatpush2.msra.mxu0 %v6343
        %6490 = vmatprep.subr.mxu0 0.0
        %6491 = vmatpush2.msra.mxu0 %v6342
        %6492 = vmatprep.subr.mxu0 0.0
        %6493 = vmatpush2.msra.mxu0 %v6341
        %6494 = vmatprep.subr.mxu0 0.0
        %6495 = vmatpush2.msra.mxu0 %v6340
        %6496 = vmatprep.subr.mxu0 0.0
        %6497 = vmatpush2.msra.mxu0 %v6339
        %6498 = vmatprep.subr.mxu0 0.0
        %6499 = vmatpush2.msra.mxu0 %v6338
        %6500 = vmatprep.subr.mxu0 0.0
        %6501 = vmatpush2.msra.mxu0 %v6337
        %6502 = vmatprep.subr.mxu0 0.0
        %6503 = vmatpush2.msra.mxu0 %v6336
        %6504 = vmatprep.subr.mxu0 0.0
        %6505 = vmatpush2.msra.mxu0 %v6335
        %6506 = vmatprep.subr.mxu0 0.0
        %6507 = vmatpush2.msra.mxu0 %v6334
        %6508 = vmatprep.subr.mxu0 0.0
        %6509 = vmatpush2.msra.mxu0 %v6333
        %6510 = vmatprep.subr.mxu0 0.0
        %6511 = vmatpush2.msra.mxu0 %v6332
        %6512 = vmatprep.mubr.f32.mxu0 %v6260
        %6513 = vmatmul.mubr.f32.gmra.mxu0 %v6259
        %v6514 = vpop.f32.mrf.mxu0
        %v6515 = vadd.f32 %v6422, %v6514
        %v6516 = vpop.f32.mrf.mxu0
        %6517 = vmatprep.mubr.f32.mxu0 %v6267
        %6518 = vmatmul.mubr.f32.gmra.mxu0 %v6266
        %v6519 = vpop.f32.mrf.mxu0
        %v6520 = vadd.f32 %v6422, %v6519
        %v6521 = vpop.f32.mrf.mxu0
        %6522 = vmatprep.mubr.f32.mxu0 %v6274
        %6523 = vmatmul.mubr.f32.gmra.mxu0 %v6273
        %v6524 = vpop.f32.mrf.mxu0
        %v6525 = vadd.f32 %v6422, %v6524
        %v6526 = vpop.f32.mrf.mxu0
        %6527 = vmatprep.mubr.f32.mxu0 %v6281
        %6528 = vmatmul.mubr.f32.gmra.mxu0 %v6280
        %v6529 = vpop.f32.mrf.mxu0
        %v6530 = vadd.f32 %v6422, %v6529
        %v6531 = vpop.f32.mrf.mxu0
        %6532 = vmatprep.mubr.f32.mxu0 %v6288
        %6533 = vmatmul.mubr.f32.gmra.mxu0 %v6287
        %v6534 = vpop.f32.mrf.mxu0
        %v6535 = vadd.f32 %v6422, %v6534
        %v6536 = vpop.f32.mrf.mxu0
        %6537 = vmatprep.mubr.f32.mxu0 %v6295
        %6538 = vmatmul.mubr.f32.gmra.mxu0 %v6294
        %v6539 = vpop.f32.mrf.mxu0
        %v6540 = vadd.f32 %v6422, %v6539
        %v6541 = vpop.f32.mrf.mxu0
        %6542 = vmatprep.mubr.f32.mxu0 %v6302
        %6543 = vmatmul.mubr.f32.gmra.mxu0 %v6301
        %v6544 = vpop.f32.mrf.mxu0
        %v6545 = vadd.f32 %v6422, %v6544
        %v6546 = vpop.f32.mrf.mxu0
        %6547 = vmatprep.mubr.f32.mxu0 %v6309
        %6548 = vmatmul.mubr.f32.gmra.mxu0 %v6308
        %v6549 = vpop.f32.mrf.mxu0
        %v6550 = vadd.f32 %v6422, %v6549
        %v6551 = vpop.f32.mrf.mxu0
        %6552 = vdwg.mxu0
        %6553 = vmatprep.subr.mxu0 0.0
        %6554 = vmatpush1.msra.mxu0 %v6363
        %6555 = vmatprep.subr.mxu0 0.0
        %6556 = vmatpush1.msra.mxu0 %v6362
        %6557 = vmatprep.subr.mxu0 0.0
        %6558 = vmatpush1.msra.mxu0 %v6361
        %6559 = vmatprep.subr.mxu0 0.0
        %6560 = vmatpush1.msra.mxu0 %v6360
        %6561 = vmatprep.subr.mxu0 0.0
        %6562 = vmatpush1.msra.mxu0 %v6359
        %6563 = vmatprep.subr.mxu0 0.0
        %6564 = vmatpush1.msra.mxu0 %v6358
        %6565 = vmatprep.subr.mxu0 0.0
        %6566 = vmatpush1.msra.mxu0 %v6357
        %6567 = vmatprep.subr.mxu0 0.0
        %6568 = vmatpush1.msra.mxu0 %v6356
        %6569 = vmatprep.subr.mxu0 0.0
        %6570 = vmatpush1.msra.mxu0 %v6355
        %6571 = vmatprep.subr.mxu0 0.0
        %6572 = vmatpush1.msra.mxu0 %v6354
        %6573 = vmatprep.subr.mxu0 0.0
        %6574 = vmatpush1.msra.mxu0 %v6353
        %6575 = vmatprep.subr.mxu0 0.0
        %6576 = vmatpush1.msra.mxu0 %v6352
        %6577 = vmatprep.subr.mxu0 0.0
        %6578 = vmatpush1.msra.mxu0 %v6351
        %6579 = vmatprep.subr.mxu0 0.0
        %6580 = vmatpush1.msra.mxu0 %v6350
        %6581 = vmatprep.subr.mxu0 0.0
        %6582 = vmatpush1.msra.mxu0 %v6349
        %6583 = vmatprep.subr.mxu0 0.0
        %6584 = vmatpush1.msra.mxu0 %v6348
        %6585 = vmatprep.subr.mxu0 0.0
        %6586 = vmatpush2.msra.mxu0 %v6379
        %6587 = vmatprep.subr.mxu0 0.0
        %6588 = vmatpush2.msra.mxu0 %v6378
        %6589 = vmatprep.subr.mxu0 0.0
        %6590 = vmatpush2.msra.mxu0 %v6377
        %6591 = vmatprep.subr.mxu0 0.0
        %6592 = vmatpush2.msra.mxu0 %v6376
        %6593 = vmatprep.subr.mxu0 0.0
        %6594 = vmatpush2.msra.mxu0 %v6375
        %6595 = vmatprep.subr.mxu0 0.0
        %6596 = vmatpush2.msra.mxu0 %v6374
        %6597 = vmatprep.subr.mxu0 0.0
        %6598 = vmatpush2.msra.mxu0 %v6373
        %6599 = vmatprep.subr.mxu0 0.0
        %6600 = vmatpush2.msra.mxu0 %v6372
        %6601 = vmatprep.subr.mxu0 0.0
        %6602 = vmatpush2.msra.mxu0 %v6371
        %6603 = vmatprep.subr.mxu0 0.0
        %6604 = vmatpush2.msra.mxu0 %v6370
        %6605 = vmatprep.subr.mxu0 0.0
        %6606 = vmatpush2.msra.mxu0 %v6369
        %6607 = vmatprep.subr.mxu0 0.0
        %6608 = vmatpush2.msra.mxu0 %v6368
        %6609 = vmatprep.subr.mxu0 0.0
        %6610 = vmatpush2.msra.mxu0 %v6367
        %6611 = vmatprep.subr.mxu0 0.0
        %6612 = vmatpush2.msra.mxu0 %v6366
        %6613 = vmatprep.subr.mxu0 0.0
        %6614 = vmatpush2.msra.mxu0 %v6365
        %6615 = vmatprep.subr.mxu0 0.0
        %6616 = vmatpush2.msra.mxu0 %v6364
        %6617 = vmatprep.mubr.f32.mxu0 %v6262
        %6618 = vmatmul.mubr.f32.gmra.mxu0 %v6261
        %v6619 = vpop.f32.mrf.mxu0
        %v6620 = vadd.f32 %v6515, %v6619
        %v6621 = vpop.f32.mrf.mxu0
        %6622 = vmatprep.mubr.f32.mxu0 %v6269
        %6623 = vmatmul.mubr.f32.gmra.mxu0 %v6268
        %v6624 = vpop.f32.mrf.mxu0
        %v6625 = vadd.f32 %v6520, %v6624
        %v6626 = vpop.f32.mrf.mxu0
        %6627 = vmatprep.mubr.f32.mxu0 %v6276
        %6628 = vmatmul.mubr.f32.gmra.mxu0 %v6275
        %v6629 = vpop.f32.mrf.mxu0
        %v6630 = vadd.f32 %v6525, %v6629
        %v6631 = vpop.f32.mrf.mxu0
        %6632 = vmatprep.mubr.f32.mxu0 %v6283
        %6633 = vmatmul.mubr.f32.gmra.mxu0 %v6282
        %v6634 = vpop.f32.mrf.mxu0
        %v6635 = vadd.f32 %v6530, %v6634
        %v6636 = vpop.f32.mrf.mxu0
        %6637 = vmatprep.mubr.f32.mxu0 %v6290
        %6638 = vmatmul.mubr.f32.gmra.mxu0 %v6289
        %v6639 = vpop.f32.mrf.mxu0
        %v6640 = vadd.f32 %v6535, %v6639
        %v6641 = vpop.f32.mrf.mxu0
        %6642 = vmatprep.mubr.f32.mxu0 %v6297
        %6643 = vmatmul.mubr.f32.gmra.mxu0 %v6296
        %v6644 = vpop.f32.mrf.mxu0
        %v6645 = vadd.f32 %v6540, %v6644
        %v6646 = vpop.f32.mrf.mxu0
        %6647 = vmatprep.mubr.f32.mxu0 %v6304
        %6648 = vmatmul.mubr.f32.gmra.mxu0 %v6303
        %v6649 = vpop.f32.mrf.mxu0
        %v6650 = vadd.f32 %v6545, %v6649
        %v6651 = vpop.f32.mrf.mxu0
        %6652 = vmatprep.mubr.f32.mxu0 %v6311
        %6653 = vmatmul.mubr.f32.gmra.mxu0 %v6310
        %v6654 = vpop.f32.mrf.mxu0
        %v6655 = vadd.f32 %v6550, %v6654
        %v6656 = vpop.f32.mrf.mxu0
        %6657 = vdwg.mxu0
        %6658 = vmatprep.subr.mxu0 0.0
        %6659 = vmatpush1.msra.mxu0 %v6395
        %6660 = vmatprep.subr.mxu0 0.0
        %6661 = vmatpush1.msra.mxu0 %v6394
        %6662 = vmatprep.subr.mxu0 0.0
        %6663 = vmatpush1.msra.mxu0 %v6393
        %6664 = vmatprep.subr.mxu0 0.0
        %6665 = vmatpush1.msra.mxu0 %v6392
        %6666 = vmatprep.subr.mxu0 0.0
        %6667 = vmatpush1.msra.mxu0 %v6391
        %6668 = vmatprep.subr.mxu0 0.0
        %6669 = vmatpush1.msra.mxu0 %v6390
        %6670 = vmatprep.subr.mxu0 0.0
        %6671 = vmatpush1.msra.mxu0 %v6389
        %6672 = vmatprep.subr.mxu0 0.0
        %6673 = vmatpush1.msra.mxu0 %v6388
        %6674 = vmatprep.subr.mxu0 0.0
        %6675 = vmatpush1.msra.mxu0 %v6387
        %6676 = vmatprep.subr.mxu0 0.0
        %6677 = vmatpush1.msra.mxu0 %v6386
        %6678 = vmatprep.subr.mxu0 0.0
        %6679 = vmatpush1.msra.mxu0 %v6385
        %6680 = vmatprep.subr.mxu0 0.0
        %6681 = vmatpush1.msra.mxu0 %v6384
        %6682 = vmatprep.subr.mxu0 0.0
        %6683 = vmatpush1.msra.mxu0 %v6383
        %6684 = vmatprep.subr.mxu0 0.0
        %6685 = vmatpush1.msra.mxu0 %v6382
        %6686 = vmatprep.subr.mxu0 0.0
        %6687 = vmatpush1.msra.mxu0 %v6381
        %6688 = vmatprep.subr.mxu0 0.0
        %6689 = vmatpush1.msra.mxu0 %v6380
        %6690 = vmatprep.subr.mxu0 0.0
        %6691 = vmatpush2.msra.mxu0 %v6411
        %6692 = vmatprep.subr.mxu0 0.0
        %6693 = vmatpush2.msra.mxu0 %v6410
        %6694 = vmatprep.subr.mxu0 0.0
        %6695 = vmatpush2.msra.mxu0 %v6409
        %6696 = vmatprep.subr.mxu0 0.0
        %6697 = vmatpush2.msra.mxu0 %v6408
        %6698 = vmatprep.subr.mxu0 0.0
        %6699 = vmatpush2.msra.mxu0 %v6407
        %6700 = vmatprep.subr.mxu0 0.0
        %6701 = vmatpush2.msra.mxu0 %v6406
        %6702 = vmatprep.subr.mxu0 0.0
        %6703 = vmatpush2.msra.mxu0 %v6405
        %6704 = vmatprep.subr.mxu0 0.0
        %6705 = vmatpush2.msra.mxu0 %v6404
        %6706 = vmatprep.subr.mxu0 0.0
        %6707 = vmatpush2.msra.mxu0 %v6403
        %6708 = vmatprep.subr.mxu0 0.0
        %6709 = vmatpush2.msra.mxu0 %v6402
        %6710 = vmatprep.subr.mxu0 0.0
        %6711 = vmatpush2.msra.mxu0 %v6401
        %6712 = vmatprep.subr.mxu0 0.0
        %6713 = vmatpush2.msra.mxu0 %v6400
        %6714 = vmatprep.subr.mxu0 0.0
        %6715 = vmatpush2.msra.mxu0 %v6399
        %6716 = vmatprep.subr.mxu0 0.0
        %6717 = vmatpush2.msra.mxu0 %v6398
        %6718 = vmatprep.subr.mxu0 0.0
        %6719 = vmatpush2.msra.mxu0 %v6397
        %6720 = vmatprep.subr.mxu0 0.0
        %6721 = vmatpush2.msra.mxu0 %v6396
        %6722 = vmatprep.mubr.f32.mxu0 %v6264
        %6723 = vmatmul.mubr.f32.gmra.mxu0 %v6263
        %v6724 = vpop.f32.mrf.mxu0
        %v6725 = vadd.f32 %v6620, %v6724
        %v6726 = vpop.f32.mrf.mxu0
        %6727 = vmatprep.mubr.f32.mxu0 %v6271
        %6728 = vmatmul.mubr.f32.gmra.mxu0 %v6270
        %v6729 = vpop.f32.mrf.mxu0
        %v6730 = vadd.f32 %v6625, %v6729
        %v6731 = vpop.f32.mrf.mxu0
        %6732 = vmatprep.mubr.f32.mxu0 %v6278
        %6733 = vmatmul.mubr.f32.gmra.mxu0 %v6277
        %v6734 = vpop.f32.mrf.mxu0
        %v6735 = vadd.f32 %v6630, %v6734
        %v6736 = vpop.f32.mrf.mxu0
        %6737 = vmatprep.mubr.f32.mxu0 %v6285
        %6738 = vmatmul.mubr.f32.gmra.mxu0 %v6284
        %v6739 = vpop.f32.mrf.mxu0
        %v6740 = vadd.f32 %v6635, %v6739
        %v6741 = vpop.f32.mrf.mxu0
        %6742 = vmatprep.mubr.f32.mxu0 %v6292
        %6743 = vmatmul.mubr.f32.gmra.mxu0 %v6291
        %v6744 = vpop.f32.mrf.mxu0
        %v6745 = vadd.f32 %v6640, %v6744
        %v6746 = vpop.f32.mrf.mxu0
        %6747 = vmatprep.mubr.f32.mxu0 %v6299
        %6748 = vmatmul.mubr.f32.gmra.mxu0 %v6298
        %v6749 = vpop.f32.mrf.mxu0
        %v6750 = vadd.f32 %v6645, %v6749
        %v6751 = vpop.f32.mrf.mxu0
        %6752 = vmatprep.mubr.f32.mxu0 %v6306
        %6753 = vmatmul.mubr.f32.gmra.mxu0 %v6305
        %v6754 = vpop.f32.mrf.mxu0
        %v6755 = vadd.f32 %v6650, %v6754
        %v6756 = vpop.f32.mrf.mxu0
        %6757 = vmatprep.mubr.f32.mxu0 %v6313
        %6758 = vmatmul.mubr.f32.gmra.mxu0 %v6312
        %v6759 = vpop.f32.mrf.mxu0
        %v6760 = vadd.f32 %v6655, %v6759
        %v6761 = vpop.f32.mrf.mxu0
        %6762 = vdwg.mxu0
        %6763 = vmatprep.subr.mxu0 0.0
        %6764 = vmatpush1.msra.mxu0 0.0
        %6765 = vmatprep.subr.mxu0 0.0
        %6766 = vmatpush1.msra.mxu0 0.0
        %6767 = vmatprep.subr.mxu0 0.0
        %6768 = vmatpush1.msra.mxu0 0.0
        %6769 = vmatprep.subr.mxu0 0.0
        %6770 = vmatpush1.msra.mxu0 0.0
        %6771 = vmatprep.subr.mxu0 0.0
        %6772 = vmatpush1.msra.mxu0 0.0
        %6773 = vmatprep.subr.mxu0 0.0
        %6774 = vmatpush1.msra.mxu0 0.0
        %6775 = vmatprep.subr.mxu0 0.0
        %6776 = vmatpush1.msra.mxu0 0.0
        %6777 = vmatprep.subr.mxu0 0.0
        %6778 = vmatpush1.msra.mxu0 0.0
        %6779 = vmatprep.subr.mxu0 0.0
        %6780 = vmatpush1.msra.mxu0 0.0
        %6781 = vmatprep.subr.mxu0 0.0
        %6782 = vmatpush1.msra.mxu0 0.0
        %6783 = vmatprep.subr.mxu0 0.0
        %6784 = vmatpush1.msra.mxu0 0.0
        %6785 = vmatprep.subr.mxu0 0.0
        %6786 = vmatpush1.msra.mxu0 0.0
        %6787 = vmatprep.subr.mxu0 0.0
        %6788 = vmatpush1.msra.mxu0 %v6415
        %6789 = vmatprep.subr.mxu0 0.0
        %6790 = vmatpush1.msra.mxu0 %v6414
        %6791 = vmatprep.subr.mxu0 0.0
        %6792 = vmatpush1.msra.mxu0 %v6413
        %6793 = vmatprep.subr.mxu0 0.0
        %6794 = vmatpush1.msra.mxu0 %v6412
        %6795 = vmatprep.subr.mxu0 0.0
        %6796 = vmatpush2.msra.mxu0 0.0
        %6797 = vmatprep.subr.mxu0 0.0
        %6798 = vmatpush2.msra.mxu0 0.0
        %6799 = vmatprep.subr.mxu0 0.0
        %6800 = vmatpush2.msra.mxu0 0.0
        %6801 = vmatprep.subr.mxu0 0.0
        %6802 = vmatpush2.msra.mxu0 0.0
        %6803 = vmatprep.subr.mxu0 0.0
        %6804 = vmatpush2.msra.mxu0 0.0
        %6805 = vmatprep.subr.mxu0 0.0
        %6806 = vmatpush2.msra.mxu0 0.0
        %6807 = vmatprep.subr.mxu0 0.0
        %6808 = vmatpush2.msra.mxu0 0.0
        %6809 = vmatprep.subr.mxu0 0.0
        %6810 = vmatpush2.msra.mxu0 0.0
        %6811 = vmatprep.subr.mxu0 0.0
        %6812 = vmatpush2.msra.mxu0 0.0
        %6813 = vmatprep.subr.mxu0 0.0
        %6814 = vmatpush2.msra.mxu0 0.0
        %6815 = vmatprep.subr.mxu0 0.0
        %6816 = vmatpush2.msra.mxu0 0.0
        %6817 = vmatprep.subr.mxu0 0.0
        %6818 = vmatpush2.msra.mxu0 0.0
        %6819 = vmatprep.subr.mxu0 0.0
        %6820 = vmatpush2.msra.mxu0 0.0
        %6821 = vmatprep.subr.mxu0 0.0
        %6822 = vmatpush2.msra.mxu0 0.0
        %6823 = vmatprep.subr.mxu0 0.0
        %6824 = vmatpush2.msra.mxu0 0.0
        %6825 = vmatprep.subr.mxu0 0.0
        %6826 = vmatpush2.msra.mxu0 0.0
        %6827 = vmatprep.mubr.f32.mxu0 0.0
        %6828 = vmatmul.mubr.f32.gmra.mxu0 %v6425
        %v6829 = vpop.f32.mrf.mxu0
        %v6830 = vadd.f32 %v6725, %v6829
        %v6831 = vpop.f32.mrf.mxu0
        %6832 = vmatprep.mubr.f32.mxu0 0.0
        %6833 = vmatmul.mubr.f32.gmra.mxu0 %v6428
        %v6834 = vpop.f32.mrf.mxu0
        %v6835 = vadd.f32 %v6730, %v6834
        %v6836 = vpop.f32.mrf.mxu0
        %6837 = vmatprep.mubr.f32.mxu0 0.0
        %6838 = vmatmul.mubr.f32.gmra.mxu0 %v6431
        %v6839 = vpop.f32.mrf.mxu0
        %v6840 = vadd.f32 %v6735, %v6839
        %v6841 = vpop.f32.mrf.mxu0
        %6842 = vmatprep.mubr.f32.mxu0 0.0
        %6843 = vmatmul.mubr.f32.gmra.mxu0 %v6434
        %v6844 = vpop.f32.mrf.mxu0
        %v6845 = vadd.f32 %v6740, %v6844
        %v6846 = vpop.f32.mrf.mxu0
        %6847 = vmatprep.mubr.f32.mxu0 0.0
        %6848 = vmatmul.mubr.f32.gmra.mxu0 %v6437
        %v6849 = vpop.f32.mrf.mxu0
        %v6850 = vadd.f32 %v6745, %v6849
        %v6851 = vpop.f32.mrf.mxu0
        %6852 = vmatprep.mubr.f32.mxu0 0.0
        %6853 = vmatmul.mubr.f32.gmra.mxu0 %v6440
        %v6854 = vpop.f32.mrf.mxu0
        %v6855 = vadd.f32 %v6750, %v6854
        %v6856 = vpop.f32.mrf.mxu0
        %6857 = vmatprep.mubr.f32.mxu0 0.0
        %6858 = vmatmul.mubr.f32.gmra.mxu0 %v6443
        %v6859 = vpop.f32.mrf.mxu0
        %v6860 = vadd.f32 %v6755, %v6859
        %v6861 = vpop.f32.mrf.mxu0
        %6862 = vmatprep.mubr.f32.mxu0 0.0
        %6863 = vmatmul.mubr.f32.gmra.mxu0 %v6446
        %v6864 = vpop.f32.mrf.mxu0
        %v6865 = vadd.f32 %v6760, %v6864
        %v6866 = vpop.f32.mrf.mxu0
        %6867 = vdwg.mxu0
        %v6868 = vmul.f32 %v6830, 0.5
        %v6869 = vmul.f32 %v6835, 0.5
        %v6870 = vmul.f32 %v6840, 0.5
        %v6871 = vmul.f32 %v6845, 0.5
        %v6872 = vmul.f32 %v6850, 0.5
        %v6873 = vmul.f32 %v6855, 0.5
        %v6874 = vmul.f32 %v6860, 0.5
        %v6875 = vmul.f32 %v6865, 0.5
        %v6876 = vmul.f32 %v6830, 0.70710677
        %v6877 = vmul.f32 %v6835, 0.70710677
        %v6878 = vmul.f32 %v6840, 0.70710677
        %v6879 = vmul.f32 %v6845, 0.70710677
        %v6880 = vmul.f32 %v6850, 0.70710677
        %v6881 = vmul.f32 %v6855, 0.70710677
        %v6882 = vmul.f32 %v6860, 0.70710677
        %v6883 = vmul.f32 %v6865, 0.70710677
        %vm6884 = vcmp.ge.f32.partialorder %v6876, 0.0
        %vm6885 = vcmp.ge.f32.partialorder %v6877, 0.0
        %vm6886 = vcmp.ge.f32.partialorder %v6878, 0.0
        %vm6887 = vcmp.ge.f32.partialorder %v6879, 0.0
        %vm6888 = vcmp.ge.f32.partialorder %v6880, 0.0
        %vm6889 = vcmp.ge.f32.partialorder %v6881, 0.0
        %vm6890 = vcmp.ge.f32.partialorder %v6882, 0.0
        %vm6891 = vcmp.ge.f32.partialorder %v6883, 0.0
        %v6892 = vsel %vm6884, 1.0, -1.0
        %v6893 = vsel %vm6885, 1.0, -1.0
        %v6894 = vsel %vm6886, 1.0, -1.0
        %v6895 = vsel %vm6887, 1.0, -1.0
        %v6896 = vsel %vm6888, 1.0, -1.0
        %v6897 = vsel %vm6889, 1.0, -1.0
        %v6898 = vsel %vm6890, 1.0, -1.0
        %v6899 = vsel %vm6891, 1.0, -1.0
        %v6900 = vand.u32 2147483647, %v6876
        %v6901 = vand.u32 2147483647, %v6877
        %v6902 = vand.u32 2147483647, %v6878
        %v6903 = vand.u32 2147483647, %v6879
        %v6904 = vand.u32 2147483647, %v6880
        %v6905 = vand.u32 2147483647, %v6881
        %v6906 = vand.u32 2147483647, %v6882
        %v6907 = vand.u32 2147483647, %v6883
        %v6908 = vmul.f32 %v6900, 0.3275911
        %v6909 = vmul.f32 %v6901, 0.3275911
        %v6910 = vmul.f32 %v6902, 0.3275911
        %v6911 = vmul.f32 %v6903, 0.3275911
        %v6912 = vmul.f32 %v6904, 0.3275911
        %v6913 = vmul.f32 %v6905, 0.3275911
        %v6914 = vmul.f32 %v6906, 0.3275911
        %v6915 = vmul.f32 %v6907, 0.3275911
        %v6916 = vadd.f32 %v6908, 1.0
        %v6917 = vadd.f32 %v6909, 1.0
        %v6918 = vadd.f32 %v6910, 1.0
        %v6919 = vadd.f32 %v6911, 1.0
        %v6920 = vadd.f32 %v6912, 1.0
        %v6921 = vadd.f32 %v6913, 1.0
        %v6922 = vadd.f32 %v6914, 1.0
        %v6923 = vadd.f32 %v6915, 1.0
        %v6924 = vrcp.pop %v6916
        %v6925 = vmul.f32 1.0, %v6924
        %v6926 = vrcp.pop %v6917
        %v6927 = vmul.f32 1.0, %v6926
        %v6928 = vrcp.pop %v6918
        %v6929 = vmul.f32 1.0, %v6928
        %v6930 = vrcp.pop %v6919
        %v6931 = vmul.f32 1.0, %v6930
        %v6932 = vrcp.pop %v6920
        %v6933 = vmul.f32 1.0, %v6932
        %v6934 = vrcp.pop %v6921
        %v6935 = vmul.f32 1.0, %v6934
        %v6936 = vrcp.pop %v6922
        %v6937 = vmul.f32 1.0, %v6936
        %v6938 = vrcp.pop %v6923
        %v6939 = vmul.f32 1.0, %v6938
        %v6940 = vmul.f32 %v6925, 1.0614054
        %v6941 = vmul.f32 %v6927, 1.0614054
        %v6942 = vmul.f32 %v6929, 1.0614054
        %v6943 = vmul.f32 %v6931, 1.0614054
        %v6944 = vmul.f32 %v6933, 1.0614054
        %v6945 = vmul.f32 %v6935, 1.0614054
        %v6946 = vmul.f32 %v6937, 1.0614054
        %v6947 = vmul.f32 %v6939, 1.0614054
        %v6948 = vadd.f32 %v6940, -1.4531521
        %v6949 = vadd.f32 %v6941, -1.4531521
        %v6950 = vadd.f32 %v6942, -1.4531521
        %v6951 = vadd.f32 %v6943, -1.4531521
        %v6952 = vadd.f32 %v6944, -1.4531521
        %v6953 = vadd.f32 %v6945, -1.4531521
        %v6954 = vadd.f32 %v6946, -1.4531521
        %v6955 = vadd.f32 %v6947, -1.4531521
        %v6956 = vmul.f32 %v6948, %v6925
        %v6957 = vmul.f32 %v6949, %v6927
        %v6958 = vmul.f32 %v6950, %v6929
        %v6959 = vmul.f32 %v6951, %v6931
        %v6960 = vmul.f32 %v6952, %v6933
        %v6961 = vmul.f32 %v6953, %v6935
        %v6962 = vmul.f32 %v6954, %v6937
        %v6963 = vmul.f32 %v6955, %v6939
        %v6964 = vadd.f32 %v6956, 1.4214138
        %v6965 = vadd.f32 %v6957, 1.4214138
        %v6966 = vadd.f32 %v6958, 1.4214138
        %v6967 = vadd.f32 %v6959, 1.4214138
        %v6968 = vadd.f32 %v6960, 1.4214138
        %v6969 = vadd.f32 %v6961, 1.4214138
        %v6970 = vadd.f32 %v6962, 1.4214138
        %v6971 = vadd.f32 %v6963, 1.4214138
        %v6972 = vmul.f32 %v6964, %v6925
        %v6973 = vmul.f32 %v6965, %v6927
        %v6974 = vmul.f32 %v6966, %v6929
        %v6975 = vmul.f32 %v6967, %v6931
        %v6976 = vmul.f32 %v6968, %v6933
        %v6977 = vmul.f32 %v6969, %v6935
        %v6978 = vmul.f32 %v6970, %v6937
        %v6979 = vmul.f32 %v6971, %v6939
        %v6980 = vadd.f32 %v6972, -0.28449672
        %v6981 = vadd.f32 %v6973, -0.28449672
        %v6982 = vadd.f32 %v6974, -0.28449672
        %v6983 = vadd.f32 %v6975, -0.28449672
        %v6984 = vadd.f32 %v6976, -0.28449672
        %v6985 = vadd.f32 %v6977, -0.28449672
        %v6986 = vadd.f32 %v6978, -0.28449672
        %v6987 = vadd.f32 %v6979, -0.28449672
        %v6988 = vmul.f32 %v6980, %v6925
        %v6989 = vmul.f32 %v6981, %v6927
        %v6990 = vmul.f32 %v6982, %v6929
        %v6991 = vmul.f32 %v6983, %v6931
        %v6992 = vmul.f32 %v6984, %v6933
        %v6993 = vmul.f32 %v6985, %v6935
        %v6994 = vmul.f32 %v6986, %v6937
        %v6995 = vmul.f32 %v6987, %v6939
        %v6996 = vadd.f32 %v6988, 0.2548296
        %v6997 = vadd.f32 %v6989, 0.2548296
        %v6998 = vadd.f32 %v6990, 0.2548296
        %v6999 = vadd.f32 %v6991, 0.2548296
        %v7000 = vadd.f32 %v6992, 0.2548296
        %v7001 = vadd.f32 %v6993, 0.2548296
        %v7002 = vadd.f32 %v6994, 0.2548296
        %v7003 = vadd.f32 %v6995, 0.2548296
        %v7004 = vmul.f32 %v6996, %v6925
        %v7005 = vmul.f32 %v6997, %v6927
        %v7006 = vmul.f32 %v6998, %v6929
        %v7007 = vmul.f32 %v6999, %v6931
        %v7008 = vmul.f32 %v7000, %v6933
        %v7009 = vmul.f32 %v7001, %v6935
        %v7010 = vmul.f32 %v7002, %v6937
        %v7011 = vmul.f32 %v7003, %v6939
        %v7012 = vsub.f32 0.0, %v6900
        %v7013 = vsub.f32 0.0, %v6901
        %v7014 = vsub.f32 0.0, %v6902
        %v7015 = vsub.f32 0.0, %v6903
        %v7016 = vsub.f32 0.0, %v6904
        %v7017 = vsub.f32 0.0, %v6905
        %v7018 = vsub.f32 0.0, %v6906
        %v7019 = vsub.f32 0.0, %v6907
        %v7020 = vmul.f32 %v7012, %v6900
        %v7021 = vmul.f32 %v7013, %v6901
        %v7022 = vmul.f32 %v7014, %v6902
        %v7023 = vmul.f32 %v7015, %v6903
        %v7024 = vmul.f32 %v7016, %v6904
        %v7025 = vmul.f32 %v7017, %v6905
        %v7026 = vmul.f32 %v7018, %v6906
        %v7027 = vmul.f32 %v7019, %v6907
        %v7028 = vmul.f32 %v7020, 1.442695
        %v7029 = vpow.pop %v7028
        %v7030 = vmul.f32 %v7021, 1.442695
        %v7031 = vpow.pop %v7030
        %v7032 = vmul.f32 %v7022, 1.442695
        %v7033 = vpow.pop %v7032
        %v7034 = vmul.f32 %v7023, 1.442695
        %v7035 = vpow.pop %v7034
        %v7036 = vmul.f32 %v7024, 1.442695
        %v7037 = vpow.pop %v7036
        %v7038 = vmul.f32 %v7025, 1.442695
        %v7039 = vpow.pop %v7038
        %v7040 = vmul.f32 %v7026, 1.442695
        %v7041 = vpow.pop %v7040
        %v7042 = vmul.f32 %v7027, 1.442695
        %v7043 = vpow.pop %v7042
        %v7044 = vmul.f32 %v7004, %v7029
        %v7045 = vmul.f32 %v7005, %v7031
        %v7046 = vmul.f32 %v7006, %v7033
        %v7047 = vmul.f32 %v7007, %v7035
        %v7048 = vmul.f32 %v7008, %v7037
        %v7049 = vmul.f32 %v7009, %v7039
        %v7050 = vmul.f32 %v7010, %v7041
        %v7051 = vmul.f32 %v7011, %v7043
        %v7052 = vsub.f32 1.0, %v7044
        %v7053 = vsub.f32 1.0, %v7045
        %v7054 = vsub.f32 1.0, %v7046
        %v7055 = vsub.f32 1.0, %v7047
        %v7056 = vsub.f32 1.0, %v7048
        %v7057 = vsub.f32 1.0, %v7049
        %v7058 = vsub.f32 1.0, %v7050
        %v7059 = vsub.f32 1.0, %v7051
        %v7060 = vmul.f32 %v6892, %v7052
        %v7061 = vmul.f32 %v6893, %v7053
        %v7062 = vmul.f32 %v6894, %v7054
        %v7063 = vmul.f32 %v6895, %v7055
        %v7064 = vmul.f32 %v6896, %v7056
        %v7065 = vmul.f32 %v6897, %v7057
        %v7066 = vmul.f32 %v6898, %v7058
        %v7067 = vmul.f32 %v6899, %v7059
        %v7068 = vadd.f32 %v7060, 1.0
        %v7069 = vadd.f32 %v7061, 1.0
        %v7070 = vadd.f32 %v7062, 1.0
        %v7071 = vadd.f32 %v7063, 1.0
        %v7072 = vadd.f32 %v7064, 1.0
        %v7073 = vadd.f32 %v7065, 1.0
        %v7074 = vadd.f32 %v7066, 1.0
        %v7075 = vadd.f32 %v7067, 1.0
        %v7076 = vmul.f32 %v6868, %v7068
        %v7077 = vmul.f32 %v6869, %v7069
        %v7078 = vmul.f32 %v6870, %v7070
        %v7079 = vmul.f32 %v6871, %v7071
        %v7080 = vmul.f32 %v6872, %v7072
        %v7081 = vmul.f32 %v6873, %v7073
        %v7082 = vmul.f32 %v6874, %v7074
        %v7083 = vmul.f32 %v6875, %v7075
        %s7084 = scalar_lea.vmem %s13, 32
        %v7085 = vld [vmem:[%s7084] sm:$0xff]
        %v7086 = vld [vmem:[%s7084 + $0x8] sm:$0xff]
        %v7087 = vld [vmem:[%s7084 + $0x10] sm:$0xff]
        %v7088 = vld [vmem:[%s7084 + $0x18] sm:$0xff]
        %s7089 = scalar_lea.vmem %s14, 1
        %v7090 = vld [vmem:[%s7089] sm:$0x1]
        %v7092 = vlaneseq
        %v7093 = vshrl.u32 %v7092, 7
        %v7094 = vsub.s32 0, %v7093
        %v7095 = vrot.slane %v7090, %v7094
        %v7098 = vsel %vm546, %v7076, 0
        %v7101 = vsel %vm546, %v7077, 0
        %v7104 = vsel %vm546, %v7078, 0
        %v7107 = vsel %vm546, %v7079, 0
        %v7110 = vsel %vm546, %v7080, 0
        %v7113 = vsel %vm546, %v7081, 0
        %v7116 = vsel %vm546, %v7082, 0
        %v7119 = vsel %vm546, %v7083, 0
        %7121 = vmatprep.subr.mxu0 0.0
        %7122 = vmatpush1.msra.mxu0 0.0
        %7123 = vmatprep.subr.mxu0 0.0
        %7124 = vmatpush1.msra.mxu0 0.0
        %7125 = vmatprep.subr.mxu0 0.0
        %7126 = vmatpush1.msra.mxu0 0.0
        %7127 = vmatprep.subr.mxu0 0.0
        %7128 = vmatpush1.msra.mxu0 0.0
        %7129 = vmatprep.subr.mxu0 0.0
        %7130 = vmatpush1.msra.mxu0 0.0
        %7131 = vmatprep.subr.mxu0 0.0
        %7132 = vmatpush1.msra.mxu0 0.0
        %7133 = vmatprep.subr.mxu0 0.0
        %7134 = vmatpush1.msra.mxu0 0.0
        %7135 = vmatprep.subr.mxu0 0.0
        %7136 = vmatpush1.msra.mxu0 0.0
        %7137 = vmatprep.subr.mxu0 0.0
        %7138 = vmatpush1.msra.mxu0 0.0
        %7139 = vmatprep.subr.mxu0 0.0
        %7140 = vmatpush1.msra.mxu0 0.0
        %7141 = vmatprep.subr.mxu0 0.0
        %7142 = vmatpush1.msra.mxu0 0.0
        %7143 = vmatprep.subr.mxu0 0.0
        %7144 = vmatpush1.msra.mxu0 0.0
        %7145 = vmatprep.subr.mxu0 0.0
        %7146 = vmatpush1.msra.mxu0 %v7088
        %7147 = vmatprep.subr.mxu0 0.0
        %7148 = vmatpush1.msra.mxu0 %v7087
        %7149 = vmatprep.subr.mxu0 0.0
        %7150 = vmatpush1.msra.mxu0 %v7086
        %7151 = vmatprep.subr.mxu0 0.0
        %7152 = vmatpush1.msra.mxu0 %v7085
        %7153 = vmatprep.subr.mxu0 0.0
        %7154 = vmatpush2.msra.mxu0 0.0
        %7155 = vmatprep.subr.mxu0 0.0
        %7156 = vmatpush2.msra.mxu0 0.0
        %7157 = vmatprep.subr.mxu0 0.0
        %7158 = vmatpush2.msra.mxu0 0.0
        %7159 = vmatprep.subr.mxu0 0.0
        %7160 = vmatpush2.msra.mxu0 0.0
        %7161 = vmatprep.subr.mxu0 0.0
        %7162 = vmatpush2.msra.mxu0 0.0
        %7163 = vmatprep.subr.mxu0 0.0
        %7164 = vmatpush2.msra.mxu0 0.0
        %7165 = vmatprep.subr.mxu0 0.0
        %7166 = vmatpush2.msra.mxu0 0.0
        %7167 = vmatprep.subr.mxu0 0.0
        %7168 = vmatpush2.msra.mxu0 0.0
        %7169 = vmatprep.subr.mxu0 0.0
        %7170 = vmatpush2.msra.mxu0 0.0
        %7171 = vmatprep.subr.mxu0 0.0
        %7172 = vmatpush2.msra.mxu0 0.0
        %7173 = vmatprep.subr.mxu0 0.0
        %7174 = vmatpush2.msra.mxu0 0.0
        %7175 = vmatprep.subr.mxu0 0.0
        %7176 = vmatpush2.msra.mxu0 0.0
        %7177 = vmatprep.subr.mxu0 0.0
        %7178 = vmatpush2.msra.mxu0 0.0
        %7179 = vmatprep.subr.mxu0 0.0
        %7180 = vmatpush2.msra.mxu0 0.0
        %7181 = vmatprep.subr.mxu0 0.0
        %7182 = vmatpush2.msra.mxu0 0.0
        %7183 = vmatprep.subr.mxu0 0.0
        %7184 = vmatpush2.msra.mxu0 0.0
        %7185 = vmatprep.mubr.f32.mxu0 0.0
        %7186 = vmatmul.mubr.f32.gmra.mxu0 %v7098
        %v7187 = vpop.f32.mrf.mxu0
        %v7188 = vadd.f32 %v7095, %v7187
        %v7189 = vpop.f32.mrf.mxu0
        %7190 = vmatprep.mubr.f32.mxu0 0.0
        %7191 = vmatmul.mubr.f32.gmra.mxu0 %v7101
        %v7192 = vpop.f32.mrf.mxu0
        %v7193 = vadd.f32 %v7095, %v7192
        %v7194 = vpop.f32.mrf.mxu0
        %7195 = vmatprep.mubr.f32.mxu0 0.0
        %7196 = vmatmul.mubr.f32.gmra.mxu0 %v7104
        %v7197 = vpop.f32.mrf.mxu0
        %v7198 = vadd.f32 %v7095, %v7197
        %v7199 = vpop.f32.mrf.mxu0
        %7200 = vmatprep.mubr.f32.mxu0 0.0
        %7201 = vmatmul.mubr.f32.gmra.mxu0 %v7107
        %v7202 = vpop.f32.mrf.mxu0
        %v7203 = vadd.f32 %v7095, %v7202
        %v7204 = vpop.f32.mrf.mxu0
        %7205 = vmatprep.mubr.f32.mxu0 0.0
        %7206 = vmatmul.mubr.f32.gmra.mxu0 %v7110
        %v7207 = vpop.f32.mrf.mxu0
        %v7208 = vadd.f32 %v7095, %v7207
        %v7209 = vpop.f32.mrf.mxu0
        %7210 = vmatprep.mubr.f32.mxu0 0.0
        %7211 = vmatmul.mubr.f32.gmra.mxu0 %v7113
        %v7212 = vpop.f32.mrf.mxu0
        %v7213 = vadd.f32 %v7095, %v7212
        %v7214 = vpop.f32.mrf.mxu0
        %7215 = vmatprep.mubr.f32.mxu0 0.0
        %7216 = vmatmul.mubr.f32.gmra.mxu0 %v7116
        %v7217 = vpop.f32.mrf.mxu0
        %v7218 = vadd.f32 %v7095, %v7217
        %v7219 = vpop.f32.mrf.mxu0
        %7220 = vmatprep.mubr.f32.mxu0 0.0
        %7221 = vmatmul.mubr.f32.gmra.mxu0 %v7119
        %v7222 = vpop.f32.mrf.mxu0
        %v7223 = vadd.f32 %v7095, %v7222
        %v7224 = vpop.f32.mrf.mxu0
        %7225 = vdwg.mxu0
        %v7226 = vmul.f32 %v7188, 0.5
        %v7227 = vmul.f32 %v7193, 0.5
        %v7228 = vmul.f32 %v7198, 0.5
        %v7229 = vmul.f32 %v7203, 0.5
        %v7230 = vmul.f32 %v7208, 0.5
        %v7231 = vmul.f32 %v7213, 0.5
        %v7232 = vmul.f32 %v7218, 0.5
        %v7233 = vmul.f32 %v7223, 0.5
        %v7234 = vmul.f32 %v7188, 0.70710677
        %v7235 = vmul.f32 %v7193, 0.70710677
        %v7236 = vmul.f32 %v7198, 0.70710677
        %v7237 = vmul.f32 %v7203, 0.70710677
        %v7238 = vmul.f32 %v7208, 0.70710677
        %v7239 = vmul.f32 %v7213, 0.70710677
        %v7240 = vmul.f32 %v7218, 0.70710677
        %v7241 = vmul.f32 %v7223, 0.70710677
        %vm7242 = vcmp.ge.f32.partialorder %v7234, 0.0
        %vm7243 = vcmp.ge.f32.partialorder %v7235, 0.0
        %vm7244 = vcmp.ge.f32.partialorder %v7236, 0.0
        %vm7245 = vcmp.ge.f32.partialorder %v7237, 0.0
        %vm7246 = vcmp.ge.f32.partialorder %v7238, 0.0
        %vm7247 = vcmp.ge.f32.partialorder %v7239, 0.0
        %vm7248 = vcmp.ge.f32.partialorder %v7240, 0.0
        %vm7249 = vcmp.ge.f32.partialorder %v7241, 0.0
        %v7250 = vsel %vm7242, 1.0, -1.0
        %v7251 = vsel %vm7243, 1.0, -1.0
        %v7252 = vsel %vm7244, 1.0, -1.0
        %v7253 = vsel %vm7245, 1.0, -1.0
        %v7254 = vsel %vm7246, 1.0, -1.0
        %v7255 = vsel %vm7247, 1.0, -1.0
        %v7256 = vsel %vm7248, 1.0, -1.0
        %v7257 = vsel %vm7249, 1.0, -1.0
        %v7258 = vand.u32 2147483647, %v7234
        %v7259 = vand.u32 2147483647, %v7235
        %v7260 = vand.u32 2147483647, %v7236
        %v7261 = vand.u32 2147483647, %v7237
        %v7262 = vand.u32 2147483647, %v7238
        %v7263 = vand.u32 2147483647, %v7239
        %v7264 = vand.u32 2147483647, %v7240
        %v7265 = vand.u32 2147483647, %v7241
        %v7266 = vmul.f32 %v7258, 0.3275911
        %v7267 = vmul.f32 %v7259, 0.3275911
        %v7268 = vmul.f32 %v7260, 0.3275911
        %v7269 = vmul.f32 %v7261, 0.3275911
        %v7270 = vmul.f32 %v7262, 0.3275911
        %v7271 = vmul.f32 %v7263, 0.3275911
        %v7272 = vmul.f32 %v7264, 0.3275911
        %v7273 = vmul.f32 %v7265, 0.3275911
        %v7274 = vadd.f32 %v7266, 1.0
        %v7275 = vadd.f32 %v7267, 1.0
        %v7276 = vadd.f32 %v7268, 1.0
        %v7277 = vadd.f32 %v7269, 1.0
        %v7278 = vadd.f32 %v7270, 1.0
        %v7279 = vadd.f32 %v7271, 1.0
        %v7280 = vadd.f32 %v7272, 1.0
        %v7281 = vadd.f32 %v7273, 1.0
        %v7282 = vrcp.pop %v7274
        %v7283 = vmul.f32 1.0, %v7282
        %v7284 = vrcp.pop %v7275
        %v7285 = vmul.f32 1.0, %v7284
        %v7286 = vrcp.pop %v7276
        %v7287 = vmul.f32 1.0, %v7286
        %v7288 = vrcp.pop %v7277
        %v7289 = vmul.f32 1.0, %v7288
        %v7290 = vrcp.pop %v7278
        %v7291 = vmul.f32 1.0, %v7290
        %v7292 = vrcp.pop %v7279
        %v7293 = vmul.f32 1.0, %v7292
        %v7294 = vrcp.pop %v7280
        %v7295 = vmul.f32 1.0, %v7294
        %v7296 = vrcp.pop %v7281
        %v7297 = vmul.f32 1.0, %v7296
        %v7298 = vmul.f32 %v7283, 1.0614054
        %v7299 = vmul.f32 %v7285, 1.0614054
        %v7300 = vmul.f32 %v7287, 1.0614054
        %v7301 = vmul.f32 %v7289, 1.0614054
        %v7302 = vmul.f32 %v7291, 1.0614054
        %v7303 = vmul.f32 %v7293, 1.0614054
        %v7304 = vmul.f32 %v7295, 1.0614054
        %v7305 = vmul.f32 %v7297, 1.0614054
        %v7306 = vadd.f32 %v7298, -1.4531521
        %v7307 = vadd.f32 %v7299, -1.4531521
        %v7308 = vadd.f32 %v7300, -1.4531521
        %v7309 = vadd.f32 %v7301, -1.4531521
        %v7310 = vadd.f32 %v7302, -1.4531521
        %v7311 = vadd.f32 %v7303, -1.4531521
        %v7312 = vadd.f32 %v7304, -1.4531521
        %v7313 = vadd.f32 %v7305, -1.4531521
        %v7314 = vmul.f32 %v7306, %v7283
        %v7315 = vmul.f32 %v7307, %v7285
        %v7316 = vmul.f32 %v7308, %v7287
        %v7317 = vmul.f32 %v7309, %v7289
        %v7318 = vmul.f32 %v7310, %v7291
        %v7319 = vmul.f32 %v7311, %v7293
        %v7320 = vmul.f32 %v7312, %v7295
        %v7321 = vmul.f32 %v7313, %v7297
        %v7322 = vadd.f32 %v7314, 1.4214138
        %v7323 = vadd.f32 %v7315, 1.4214138
        %v7324 = vadd.f32 %v7316, 1.4214138
        %v7325 = vadd.f32 %v7317, 1.4214138
        %v7326 = vadd.f32 %v7318, 1.4214138
        %v7327 = vadd.f32 %v7319, 1.4214138
        %v7328 = vadd.f32 %v7320, 1.4214138
        %v7329 = vadd.f32 %v7321, 1.4214138
        %v7330 = vmul.f32 %v7322, %v7283
        %v7331 = vmul.f32 %v7323, %v7285
        %v7332 = vmul.f32 %v7324, %v7287
        %v7333 = vmul.f32 %v7325, %v7289
        %v7334 = vmul.f32 %v7326, %v7291
        %v7335 = vmul.f32 %v7327, %v7293
        %v7336 = vmul.f32 %v7328, %v7295
        %v7337 = vmul.f32 %v7329, %v7297
        %v7338 = vadd.f32 %v7330, -0.28449672
        %v7339 = vadd.f32 %v7331, -0.28449672
        %v7340 = vadd.f32 %v7332, -0.28449672
        %v7341 = vadd.f32 %v7333, -0.28449672
        %v7342 = vadd.f32 %v7334, -0.28449672
        %v7343 = vadd.f32 %v7335, -0.28449672
        %v7344 = vadd.f32 %v7336, -0.28449672
        %v7345 = vadd.f32 %v7337, -0.28449672
        %v7346 = vmul.f32 %v7338, %v7283
        %v7347 = vmul.f32 %v7339, %v7285
        %v7348 = vmul.f32 %v7340, %v7287
        %v7349 = vmul.f32 %v7341, %v7289
        %v7350 = vmul.f32 %v7342, %v7291
        %v7351 = vmul.f32 %v7343, %v7293
        %v7352 = vmul.f32 %v7344, %v7295
        %v7353 = vmul.f32 %v7345, %v7297
        %v7354 = vadd.f32 %v7346, 0.2548296
        %v7355 = vadd.f32 %v7347, 0.2548296
        %v7356 = vadd.f32 %v7348, 0.2548296
        %v7357 = vadd.f32 %v7349, 0.2548296
        %v7358 = vadd.f32 %v7350, 0.2548296
        %v7359 = vadd.f32 %v7351, 0.2548296
        %v7360 = vadd.f32 %v7352, 0.2548296
        %v7361 = vadd.f32 %v7353, 0.2548296
        %v7362 = vmul.f32 %v7354, %v7283
        %v7363 = vmul.f32 %v7355, %v7285
        %v7364 = vmul.f32 %v7356, %v7287
        %v7365 = vmul.f32 %v7357, %v7289
        %v7366 = vmul.f32 %v7358, %v7291
        %v7367 = vmul.f32 %v7359, %v7293
        %v7368 = vmul.f32 %v7360, %v7295
        %v7369 = vmul.f32 %v7361, %v7297
        %v7370 = vsub.f32 0.0, %v7258
        %v7371 = vsub.f32 0.0, %v7259
        %v7372 = vsub.f32 0.0, %v7260
        %v7373 = vsub.f32 0.0, %v7261
        %v7374 = vsub.f32 0.0, %v7262
        %v7375 = vsub.f32 0.0, %v7263
        %v7376 = vsub.f32 0.0, %v7264
        %v7377 = vsub.f32 0.0, %v7265
        %v7378 = vmul.f32 %v7370, %v7258
        %v7379 = vmul.f32 %v7371, %v7259
        %v7380 = vmul.f32 %v7372, %v7260
        %v7381 = vmul.f32 %v7373, %v7261
        %v7382 = vmul.f32 %v7374, %v7262
        %v7383 = vmul.f32 %v7375, %v7263
        %v7384 = vmul.f32 %v7376, %v7264
        %v7385 = vmul.f32 %v7377, %v7265
        %v7386 = vmul.f32 %v7378, 1.442695
        %v7387 = vpow.pop %v7386
        %v7388 = vmul.f32 %v7379, 1.442695
        %v7389 = vpow.pop %v7388
        %v7390 = vmul.f32 %v7380, 1.442695
        %v7391 = vpow.pop %v7390
        %v7392 = vmul.f32 %v7381, 1.442695
        %v7393 = vpow.pop %v7392
        %v7394 = vmul.f32 %v7382, 1.442695
        %v7395 = vpow.pop %v7394
        %v7396 = vmul.f32 %v7383, 1.442695
        %v7397 = vpow.pop %v7396
        %v7398 = vmul.f32 %v7384, 1.442695
        %v7399 = vpow.pop %v7398
        %v7400 = vmul.f32 %v7385, 1.442695
        %v7401 = vpow.pop %v7400
        %v7402 = vmul.f32 %v7362, %v7387
        %v7403 = vmul.f32 %v7363, %v7389
        %v7404 = vmul.f32 %v7364, %v7391
        %v7405 = vmul.f32 %v7365, %v7393
        %v7406 = vmul.f32 %v7366, %v7395
        %v7407 = vmul.f32 %v7367, %v7397
        %v7408 = vmul.f32 %v7368, %v7399
        %v7409 = vmul.f32 %v7369, %v7401
        %v7410 = vsub.f32 1.0, %v7402
        %v7411 = vsub.f32 1.0, %v7403
        %v7412 = vsub.f32 1.0, %v7404
        %v7413 = vsub.f32 1.0, %v7405
        %v7414 = vsub.f32 1.0, %v7406
        %v7415 = vsub.f32 1.0, %v7407
        %v7416 = vsub.f32 1.0, %v7408
        %v7417 = vsub.f32 1.0, %v7409
        %v7418 = vmul.f32 %v7250, %v7410
        %v7419 = vmul.f32 %v7251, %v7411
        %v7420 = vmul.f32 %v7252, %v7412
        %v7421 = vmul.f32 %v7253, %v7413
        %v7422 = vmul.f32 %v7254, %v7414
        %v7423 = vmul.f32 %v7255, %v7415
        %v7424 = vmul.f32 %v7256, %v7416
        %v7425 = vmul.f32 %v7257, %v7417
        %v7426 = vadd.f32 %v7418, 1.0
        %v7427 = vadd.f32 %v7419, 1.0
        %v7428 = vadd.f32 %v7420, 1.0
        %v7429 = vadd.f32 %v7421, 1.0
        %v7430 = vadd.f32 %v7422, 1.0
        %v7431 = vadd.f32 %v7423, 1.0
        %v7432 = vadd.f32 %v7424, 1.0
        %v7433 = vadd.f32 %v7425, 1.0
        %v7434 = vmul.f32 %v7226, %v7426
        %v7435 = vmul.f32 %v7227, %v7427
        %v7436 = vmul.f32 %v7228, %v7428
        %v7437 = vmul.f32 %v7229, %v7429
        %v7438 = vmul.f32 %v7230, %v7430
        %v7439 = vmul.f32 %v7231, %v7431
        %v7440 = vmul.f32 %v7232, %v7432
        %v7441 = vmul.f32 %v7233, %v7433
        %v7442 = vadd.f32 %v4309, %v7434
        %v7443 = vadd.f32 %v4310, %v7435
        %v7444 = vadd.f32 %v4311, %v7436
        %v7445 = vadd.f32 %v4312, %v7437
        %v7446 = vadd.f32 %v4313, %v7438
        %v7447 = vadd.f32 %v4314, %v7439
        %v7448 = vadd.f32 %v4315, %v7440
        %v7449 = vadd.f32 %v4316, %v7441
        %v7451 = vsel %vm546, %v4740, 0
        %7453 = vmatprep.subr.mxu0 0.0
        %7454 = vmatpush1.msra.mxu0 0.0
        %7455 = vmatprep.subr.mxu0 0.0
        %7456 = vmatpush1.msra.mxu0 0.0
        %7457 = vmatprep.subr.mxu0 0.0
        %7458 = vmatpush1.msra.mxu0 0.0
        %7459 = vmatprep.subr.mxu0 0.0
        %7460 = vmatpush1.msra.mxu0 0.0
        %7461 = vmatprep.subr.mxu0 0.0
        %7462 = vmatpush1.msra.mxu0 0.0
        %7463 = vmatprep.subr.mxu0 0.0
        %7464 = vmatpush1.msra.mxu0 0.0
        %7465 = vmatprep.subr.mxu0 0.0
        %7466 = vmatpush1.msra.mxu0 0.0
        %7467 = vmatprep.subr.mxu0 0.0
        %7468 = vmatpush1.msra.mxu0 0.0
        %7469 = vmatprep.subr.mxu0 0.0
        %7470 = vmatpush1.msra.mxu0 0.0
        %7471 = vmatprep.subr.mxu0 0.0
        %7472 = vmatpush1.msra.mxu0 0.0
        %7473 = vmatprep.subr.mxu0 0.0
        %7474 = vmatpush1.msra.mxu0 0.0
        %7475 = vmatprep.subr.mxu0 0.0
        %7476 = vmatpush1.msra.mxu0 0.0
        %7477 = vmatprep.subr.mxu0 0.0
        %7478 = vmatpush1.msra.mxu0 %v564
        %7479 = vmatprep.subr.mxu0 0.0
        %7480 = vmatpush1.msra.mxu0 %v563
        %7481 = vmatprep.subr.mxu0 0.0
        %7482 = vmatpush1.msra.mxu0 %v562
        %7483 = vmatprep.subr.mxu0 0.0
        %7484 = vmatpush1.msra.mxu0 %v561
        %7485 = vmatprep.subr.mxu0 0.0
        %7486 = vmatpush2.msra.mxu0 0.0
        %7487 = vmatprep.subr.mxu0 0.0
        %7488 = vmatpush2.msra.mxu0 0.0
        %7489 = vmatprep.subr.mxu0 0.0
        %7490 = vmatpush2.msra.mxu0 0.0
        %7491 = vmatprep.subr.mxu0 0.0
        %7492 = vmatpush2.msra.mxu0 0.0
        %7493 = vmatprep.subr.mxu0 0.0
        %7494 = vmatpush2.msra.mxu0 0.0
        %7495 = vmatprep.subr.mxu0 0.0
        %7496 = vmatpush2.msra.mxu0 0.0
        %7497 = vmatprep.subr.mxu0 0.0
        %7498 = vmatpush2.msra.mxu0 0.0
        %7499 = vmatprep.subr.mxu0 0.0
        %7500 = vmatpush2.msra.mxu0 0.0
        %7501 = vmatprep.subr.mxu0 0.0
        %7502 = vmatpush2.msra.mxu0 0.0
        %7503 = vmatprep.subr.mxu0 0.0
        %7504 = vmatpush2.msra.mxu0 0.0
        %7505 = vmatprep.subr.mxu0 0.0
        %7506 = vmatpush2.msra.mxu0 0.0
        %7507 = vmatprep.subr.mxu0 0.0
        %7508 = vmatpush2.msra.mxu0 0.0
        %7509 = vmatprep.subr.mxu0 0.0
        %7510 = vmatpush2.msra.mxu0 0.0
        %7511 = vmatprep.subr.mxu0 0.0
        %7512 = vmatpush2.msra.mxu0 0.0
        %7513 = vmatprep.subr.mxu0 0.0
        %7514 = vmatpush2.msra.mxu0 0.0
        %7515 = vmatprep.subr.mxu0 0.0
        %7516 = vmatpush2.msra.mxu0 0.0
        %7517 = vmatprep.mubr.f32.mxu0 0.0
        %7518 = vmatmul.mubr.f32.gmra.mxu0 %v7451
        %v7519 = vpop.f32.mrf.mxu0
        %v7520 = vadd.f32 0.0, %v7519
        %v7521 = vpop.f32.mrf.mxu0
        %7522 = vdwg.mxu0
        %v7524 = vsel %vm546, %v7442, 0
        %v7527 = vsel %vm546, %v7443, 0
        %v7530 = vsel %vm546, %v7444, 0
        %v7533 = vsel %vm546, %v7445, 0
        %v7536 = vsel %vm546, %v7446, 0
        %v7539 = vsel %vm546, %v7447, 0
        %v7542 = vsel %vm546, %v7448, 0
        %v7545 = vsel %vm546, %v7449, 0
        %7547 = vmatprep.subr.mxu0 0.0
        %7548 = vmatpush1.msra.mxu0 0.0
        %7549 = vmatprep.subr.mxu0 0.0
        %7550 = vmatpush1.msra.mxu0 0.0
        %7551 = vmatprep.subr.mxu0 0.0
        %7552 = vmatpush1.msra.mxu0 0.0
        %7553 = vmatprep.subr.mxu0 0.0
        %7554 = vmatpush1.msra.mxu0 0.0
        %7555 = vmatprep.subr.mxu0 0.0
        %7556 = vmatpush1.msra.mxu0 0.0
        %7557 = vmatprep.subr.mxu0 0.0
        %7558 = vmatpush1.msra.mxu0 0.0
        %7559 = vmatprep.subr.mxu0 0.0
        %7560 = vmatpush1.msra.mxu0 0.0
        %7561 = vmatprep.subr.mxu0 0.0
        %7562 = vmatpush1.msra.mxu0 0.0
        %7563 = vmatprep.subr.mxu0 0.0
        %7564 = vmatpush1.msra.mxu0 0.0
        %7565 = vmatprep.subr.mxu0 0.0
        %7566 = vmatpush1.msra.mxu0 0.0
        %7567 = vmatprep.subr.mxu0 0.0
        %7568 = vmatpush1.msra.mxu0 0.0
        %7569 = vmatprep.subr.mxu0 0.0
        %7570 = vmatpush1.msra.mxu0 0.0
        %7571 = vmatprep.subr.mxu0 0.0
        %7572 = vmatpush1.msra.mxu0 %v568
        %7573 = vmatprep.subr.mxu0 0.0
        %7574 = vmatpush1.msra.mxu0 %v567
        %7575 = vmatprep.subr.mxu0 0.0
        %7576 = vmatpush1.msra.mxu0 %v566
        %7577 = vmatprep.subr.mxu0 0.0
        %7578 = vmatpush1.msra.mxu0 %v565
        %7579 = vmatprep.subr.mxu0 0.0
        %7580 = vmatpush2.msra.mxu0 0.0
        %7581 = vmatprep.subr.mxu0 0.0
        %7582 = vmatpush2.msra.mxu0 0.0
        %7583 = vmatprep.subr.mxu0 0.0
        %7584 = vmatpush2.msra.mxu0 0.0
        %7585 = vmatprep.subr.mxu0 0.0
        %7586 = vmatpush2.msra.mxu0 0.0
        %7587 = vmatprep.subr.mxu0 0.0
        %7588 = vmatpush2.msra.mxu0 0.0
        %7589 = vmatprep.subr.mxu0 0.0
        %7590 = vmatpush2.msra.mxu0 0.0
        %7591 = vmatprep.subr.mxu0 0.0
        %7592 = vmatpush2.msra.mxu0 0.0
        %7593 = vmatprep.subr.mxu0 0.0
        %7594 = vmatpush2.msra.mxu0 0.0
        %7595 = vmatprep.subr.mxu0 0.0
        %7596 = vmatpush2.msra.mxu0 0.0
        %7597 = vmatprep.subr.mxu0 0.0
        %7598 = vmatpush2.msra.mxu0 0.0
        %7599 = vmatprep.subr.mxu0 0.0
        %7600 = vmatpush2.msra.mxu0 0.0
        %7601 = vmatprep.subr.mxu0 0.0
        %7602 = vmatpush2.msra.mxu0 0.0
        %7603 = vmatprep.subr.mxu0 0.0
        %7604 = vmatpush2.msra.mxu0 0.0
        %7605 = vmatprep.subr.mxu0 0.0
        %7606 = vmatpush2.msra.mxu0 0.0
        %7607 = vmatprep.subr.mxu0 0.0
        %7608 = vmatpush2.msra.mxu0 0.0
        %7609 = vmatprep.subr.mxu0 0.0
        %7610 = vmatpush2.msra.mxu0 0.0
        %7611 = vmatprep.mubr.f32.mxu0 0.0
        %7612 = vmatmul.mubr.f32.gmra.mxu0 %v7524
        %v7613 = vpop.f32.mrf.mxu0
        %v7614 = vadd.f32 0.0, %v7613
        %v7615 = vpop.f32.mrf.mxu0
        %7616 = vmatprep.mubr.f32.mxu0 0.0
        %7617 = vmatmul.mubr.f32.gmra.mxu0 %v7527
        %v7618 = vpop.f32.mrf.mxu0
        %v7619 = vadd.f32 0.0, %v7618
        %v7620 = vpop.f32.mrf.mxu0
        %7621 = vmatprep.mubr.f32.mxu0 0.0
        %7622 = vmatmul.mubr.f32.gmra.mxu0 %v7530
        %v7623 = vpop.f32.mrf.mxu0
        %v7624 = vadd.f32 0.0, %v7623
        %v7625 = vpop.f32.mrf.mxu0
        %7626 = vmatprep.mubr.f32.mxu0 0.0
        %7627 = vmatmul.mubr.f32.gmra.mxu0 %v7533
        %v7628 = vpop.f32.mrf.mxu0
        %v7629 = vadd.f32 0.0, %v7628
        %v7630 = vpop.f32.mrf.mxu0
        %7631 = vmatprep.mubr.f32.mxu0 0.0
        %7632 = vmatmul.mubr.f32.gmra.mxu0 %v7536
        %v7633 = vpop.f32.mrf.mxu0
        %v7634 = vadd.f32 0.0, %v7633
        %v7635 = vpop.f32.mrf.mxu0
        %7636 = vmatprep.mubr.f32.mxu0 0.0
        %7637 = vmatmul.mubr.f32.gmra.mxu0 %v7539
        %v7638 = vpop.f32.mrf.mxu0
        %v7639 = vadd.f32 0.0, %v7638
        %v7640 = vpop.f32.mrf.mxu0
        %7641 = vmatprep.mubr.f32.mxu0 0.0
        %7642 = vmatmul.mubr.f32.gmra.mxu0 %v7542
        %v7643 = vpop.f32.mrf.mxu0
        %v7644 = vadd.f32 0.0, %v7643
        %v7645 = vpop.f32.mrf.mxu0
        %7646 = vmatprep.mubr.f32.mxu0 0.0
        %7647 = vmatmul.mubr.f32.gmra.mxu0 %v7545
        %v7648 = vpop.f32.mrf.mxu0
        %v7649 = vadd.f32 0.0, %v7648
        %v7650 = vpop.f32.mrf.mxu0
        %7651 = vdwg.mxu0
        %v7653 = vsel %vm546, %v7520, 0
        %v7656 = vsel %vm546, %v7614, 0
        %v7659 = vsel %vm546, %v7619, 0
        %v7662 = vsel %vm546, %v7624, 0
        %v7665 = vsel %vm546, %v7629, 0
        %v7668 = vsel %vm546, %v7634, 0
        %v7671 = vsel %vm546, %v7639, 0
        %v7674 = vsel %vm546, %v7644, 0
        %v7677 = vsel %vm546, %v7649, 0
        %7679 = vmatprep.subr.mxu0 0.0
        %7680 = vmatpush1.xpose.msra.mxu0 0.0
        %7681 = vmatprep.subr.mxu0 0.0
        %7682 = vmatpush1.xpose.msra.mxu0 0.0
        %7683 = vmatprep.subr.mxu0 0.0
        %7684 = vmatpush1.xpose.msra.mxu0 0.0
        %7685 = vmatprep.subr.mxu0 0.0
        %7686 = vmatpush1.xpose.msra.mxu0 0.0
        %7687 = vmatprep.subr.mxu0 0.0
        %7688 = vmatpush1.xpose.msra.mxu0 0.0
        %7689 = vmatprep.subr.mxu0 0.0
        %7690 = vmatpush1.xpose.msra.mxu0 0.0
        %7691 = vmatprep.subr.mxu0 0.0
        %7692 = vmatpush1.xpose.msra.mxu0 0.0
        %7693 = vmatprep.subr.mxu0 0.0
        %7694 = vmatpush1.xpose.msra.mxu0 0.0
        %7695 = vmatprep.subr.mxu0 0.0
        %7696 = vmatpush1.xpose.msra.mxu0 %v7677
        %7697 = vmatprep.subr.mxu0 0.0
        %7698 = vmatpush1.xpose.msra.mxu0 %v7674
        %7699 = vmatprep.subr.mxu0 0.0
        %7700 = vmatpush1.xpose.msra.mxu0 %v7671
        %7701 = vmatprep.subr.mxu0 0.0
        %7702 = vmatpush1.xpose.msra.mxu0 %v7668
        %7703 = vmatprep.subr.mxu0 0.0
        %7704 = vmatpush1.xpose.msra.mxu0 %v7665
        %7705 = vmatprep.subr.mxu0 0.0
        %7706 = vmatpush1.xpose.msra.mxu0 %v7662
        %7707 = vmatprep.subr.mxu0 0.0
        %7708 = vmatpush1.xpose.msra.mxu0 %v7659
        %7709 = vmatprep.subr.mxu0 0.0
        %7710 = vmatpush1.xpose.msra.mxu0 %v7656
        %7711 = vmatprep.subr.mxu0 0.0
        %7712 = vmatpush2.xpose.msra.mxu0 0.0
        %7713 = vmatprep.subr.mxu0 0.0
        %7714 = vmatpush2.xpose.msra.mxu0 0.0
        %7715 = vmatprep.subr.mxu0 0.0
        %7716 = vmatpush2.xpose.msra.mxu0 0.0
        %7717 = vmatprep.subr.mxu0 0.0
        %7718 = vmatpush2.xpose.msra.mxu0 0.0
        %7719 = vmatprep.subr.mxu0 0.0
        %7720 = vmatpush2.xpose.msra.mxu0 0.0
        %7721 = vmatprep.subr.mxu0 0.0
        %7722 = vmatpush2.xpose.msra.mxu0 0.0
        %7723 = vmatprep.subr.mxu0 0.0
        %7724 = vmatpush2.xpose.msra.mxu0 0.0
        %7725 = vmatprep.subr.mxu0 0.0
        %7726 = vmatpush2.xpose.msra.mxu0 0.0
        %7727 = vmatprep.subr.mxu0 0.0
        %7728 = vmatpush2.xpose.msra.mxu0 0.0
        %7729 = vmatprep.subr.mxu0 0.0
        %7730 = vmatpush2.xpose.msra.mxu0 0.0
        %7731 = vmatprep.subr.mxu0 0.0
        %7732 = vmatpush2.xpose.msra.mxu0 0.0
        %7733 = vmatprep.subr.mxu0 0.0
        %7734 = vmatpush2.xpose.msra.mxu0 0.0
        %7735 = vmatprep.subr.mxu0 0.0
        %7736 = vmatpush2.xpose.msra.mxu0 0.0
        %7737 = vmatprep.subr.mxu0 0.0
        %7738 = vmatpush2.xpose.msra.mxu0 0.0
        %7739 = vmatprep.subr.mxu0 0.0
        %7740 = vmatpush2.xpose.msra.mxu0 0.0
        %7741 = vmatprep.subr.mxu0 0.0
        %7742 = vmatpush2.xpose.msra.mxu0 0.0
        %7743 = vmatprep.mubr.f32.mxu0 0.0
        %7744 = vmatmul.mubr.f32.gmra.mxu0 %v7653
        %v7745 = vpop.f32.mrf.mxu0
        %v7746 = vadd.f32 0.0, %v7745
        %v7747 = vpop.f32.mrf.mxu0
        %7748 = vdwg.mxu0
        %v7749 = vmul.f32 %v7746, 0.17677669
        %v7750 = vsel %vm1283, %v7749, -inf
        %7751 = vmax.xlane.f32.xlu0 %v7750
        %v7752 = vpop.xlane.xlu0 %7751
        %v7753 = vsub.f32 %v7749, %v7752
        %v7754 = vmul.f32 %v7753, 1.442695
        %v7755 = vpow.pop %v7754
        %v7756 = vsel %vm1283, %v7755, 0.0
        %7757 = vadd.xlane.f32.xlu0 %v7756
        %v7758 = vpop.xlane.xlu0 %7757
        %v7759 = vrcp.pop %v7758
        %v7760 = vmul.f32 %v7755, %v7759
        %7761 = vrot.lane.b32.xlu0 %v7614, 96
        %v7762 = vpop.permute.xlu0 %7761
        %7763 = vrot.lane.b32.xlu0 %v7619, 96
        %v7764 = vpop.permute.xlu0 %7763
        %7765 = vrot.lane.b32.xlu0 %v7624, 96
        %v7766 = vpop.permute.xlu0 %7765
        %7767 = vrot.lane.b32.xlu0 %v7629, 96
        %v7768 = vpop.permute.xlu0 %7767
        %7769 = vrot.lane.b32.xlu0 %v7634, 96
        %v7770 = vpop.permute.xlu0 %7769
        %7771 = vrot.lane.b32.xlu0 %v7639, 96
        %v7772 = vpop.permute.xlu0 %7771
        %7773 = vrot.lane.b32.xlu0 %v7644, 96
        %v7774 = vpop.permute.xlu0 %7773
        %7775 = vrot.lane.b32.xlu0 %v7649, 96
        %v7776 = vpop.permute.xlu0 %7775
        %v7786 = vsel %vm1319, %v7760, 0
        %7788 = vmatprep.subr.mxu0 0.0
        %7789 = vmatpush1.msra.mxu0 0.0
        %7790 = vmatprep.subr.mxu0 0.0
        %7791 = vmatpush1.msra.mxu0 0.0
        %7792 = vmatprep.subr.mxu0 0.0
        %7793 = vmatpush1.msra.mxu0 0.0
        %7794 = vmatprep.subr.mxu0 0.0
        %7795 = vmatpush1.msra.mxu0 0.0
        %7796 = vmatprep.subr.mxu0 0.0
        %7797 = vmatpush1.msra.mxu0 0.0
        %7798 = vmatprep.subr.mxu0 0.0
        %7799 = vmatpush1.msra.mxu0 0.0
        %7800 = vmatprep.subr.mxu0 0.0
        %7801 = vmatpush1.msra.mxu0 0.0
        %7802 = vmatprep.subr.mxu0 0.0
        %7803 = vmatpush1.msra.mxu0 0.0
        %7804 = vmatprep.subr.mxu0 0.0
        %7805 = vmatpush1.msra.mxu0 %v7776
        %7806 = vmatprep.subr.mxu0 0.0
        %7807 = vmatpush1.msra.mxu0 %v7774
        %7808 = vmatprep.subr.mxu0 0.0
        %7809 = vmatpush1.msra.mxu0 %v7772
        %7810 = vmatprep.subr.mxu0 0.0
        %7811 = vmatpush1.msra.mxu0 %v7770
        %7812 = vmatprep.subr.mxu0 0.0
        %7813 = vmatpush1.msra.mxu0 %v7768
        %7814 = vmatprep.subr.mxu0 0.0
        %7815 = vmatpush1.msra.mxu0 %v7766
        %7816 = vmatprep.subr.mxu0 0.0
        %7817 = vmatpush1.msra.mxu0 %v7764
        %7818 = vmatprep.subr.mxu0 0.0
        %7819 = vmatpush1.msra.mxu0 %v7762
        %7820 = vmatprep.subr.mxu0 0.0
        %7821 = vmatpush2.msra.mxu0 0.0
        %7822 = vmatprep.subr.mxu0 0.0
        %7823 = vmatpush2.msra.mxu0 0.0
        %7824 = vmatprep.subr.mxu0 0.0
        %7825 = vmatpush2.msra.mxu0 0.0
        %7826 = vmatprep.subr.mxu0 0.0
        %7827 = vmatpush2.msra.mxu0 0.0
        %7828 = vmatprep.subr.mxu0 0.0
        %7829 = vmatpush2.msra.mxu0 0.0
        %7830 = vmatprep.subr.mxu0 0.0
        %7831 = vmatpush2.msra.mxu0 0.0
        %7832 = vmatprep.subr.mxu0 0.0
        %7833 = vmatpush2.msra.mxu0 0.0
        %7834 = vmatprep.subr.mxu0 0.0
        %7835 = vmatpush2.msra.mxu0 0.0
        %7836 = vmatprep.subr.mxu0 0.0
        %7837 = vmatpush2.msra.mxu0 0.0
        %7838 = vmatprep.subr.mxu0 0.0
        %7839 = vmatpush2.msra.mxu0 0.0
        %7840 = vmatprep.subr.mxu0 0.0
        %7841 = vmatpush2.msra.mxu0 0.0
        %7842 = vmatprep.subr.mxu0 0.0
        %7843 = vmatpush2.msra.mxu0 0.0
        %7844 = vmatprep.subr.mxu0 0.0
        %7845 = vmatpush2.msra.mxu0 0.0
        %7846 = vmatprep.subr.mxu0 0.0
        %7847 = vmatpush2.msra.mxu0 0.0
        %7848 = vmatprep.subr.mxu0 0.0
        %7849 = vmatpush2.msra.mxu0 0.0
        %7850 = vmatprep.subr.mxu0 0.0
        %7851 = vmatpush2.msra.mxu0 0.0
        %7852 = vmatprep.mubr.f32.mxu0 0.0
        %7853 = vmatmul.mubr.f32.gmra.mxu0 %v7786
        %v7854 = vpop.f32.mrf.mxu0
        %v7855 = vadd.f32 0.0, %v7854
        %v7856 = vpop.f32.mrf.mxu0
        %7857 = vdwg.mxu0
        %v7858 = vadd.f32 %v4740, %v7855
        %v7859 = vsel %vm1394, %v7858, 0.0
        %7860 = vadd.xlane.f32.xlu0 %v7859
        %v7861 = vpop.xlane.xlu0 %7860
        %v7862 = vmul.f32 %v7861, %v1398
        %v7863 = vsub.f32 %v7858, %v7862
        %v7864 = vmul.f32 %v7863, %v7863
        %v7865 = vsel %vm1394, %v7864, 0.0
        %7866 = vadd.xlane.f32.xlu0 %v7865
        %v7867 = vpop.xlane.xlu0 %7866
        %v7868 = vmul.f32 %v7867, %v1398
        %v7869 = vadd.f32 %v7868, 1e-05
        %v7870 = vrsqrt.pop %v7869
        %v7871 = vmul.f32 %v7863, %v7870
        %v7872 = vmul.f32 %v7871, %v569
        %v7873 = vadd.f32 %v7872, %v570
        %v7874 = vld [vmem:[%s15] sm:$0xff]
        %v7875 = vld [vmem:[%s15 + $0x8] sm:$0xff]
        %v7876 = vld [vmem:[%s15 + $0x10] sm:$0xff]
        %v7877 = vld [vmem:[%s15 + $0x18] sm:$0xff]
        %v7878 = vld [vmem:[%s16] sm:$0x1]
        %v7880 = vsel %vm546, %v7873, 0
        %7882 = vmatprep.subr.mxu0 0.0
        %7883 = vmatpush1.msra.mxu0 0.0
        %7884 = vmatprep.subr.mxu0 0.0
        %7885 = vmatpush1.msra.mxu0 0.0
        %7886 = vmatprep.subr.mxu0 0.0
        %7887 = vmatpush1.msra.mxu0 0.0
        %7888 = vmatprep.subr.mxu0 0.0
        %7889 = vmatpush1.msra.mxu0 0.0
        %7890 = vmatprep.subr.mxu0 0.0
        %7891 = vmatpush1.msra.mxu0 0.0
        %7892 = vmatprep.subr.mxu0 0.0
        %7893 = vmatpush1.msra.mxu0 0.0
        %7894 = vmatprep.subr.mxu0 0.0
        %7895 = vmatpush1.msra.mxu0 0.0
        %7896 = vmatprep.subr.mxu0 0.0
        %7897 = vmatpush1.msra.mxu0 0.0
        %7898 = vmatprep.subr.mxu0 0.0
        %7899 = vmatpush1.msra.mxu0 0.0
        %7900 = vmatprep.subr.mxu0 0.0
        %7901 = vmatpush1.msra.mxu0 0.0
        %7902 = vmatprep.subr.mxu0 0.0
        %7903 = vmatpush1.msra.mxu0 0.0
        %7904 = vmatprep.subr.mxu0 0.0
        %7905 = vmatpush1.msra.mxu0 0.0
        %7906 = vmatprep.subr.mxu0 0.0
        %7907 = vmatpush1.msra.mxu0 %v7877
        %7908 = vmatprep.subr.mxu0 0.0
        %7909 = vmatpush1.msra.mxu0 %v7876
        %7910 = vmatprep.subr.mxu0 0.0
        %7911 = vmatpush1.msra.mxu0 %v7875
        %7912 = vmatprep.subr.mxu0 0.0
        %7913 = vmatpush1.msra.mxu0 %v7874
        %7914 = vmatprep.subr.mxu0 0.0
        %7915 = vmatpush2.msra.mxu0 0.0
        %7916 = vmatprep.subr.mxu0 0.0
        %7917 = vmatpush2.msra.mxu0 0.0
        %7918 = vmatprep.subr.mxu0 0.0
        %7919 = vmatpush2.msra.mxu0 0.0
        %7920 = vmatprep.subr.mxu0 0.0
        %7921 = vmatpush2.msra.mxu0 0.0
        %7922 = vmatprep.subr.mxu0 0.0
        %7923 = vmatpush2.msra.mxu0 0.0
        %7924 = vmatprep.subr.mxu0 0.0
        %7925 = vmatpush2.msra.mxu0 0.0
        %7926 = vmatprep.subr.mxu0 0.0
        %7927 = vmatpush2.msra.mxu0 0.0
        %7928 = vmatprep.subr.mxu0 0.0
        %7929 = vmatpush2.msra.mxu0 0.0
        %7930 = vmatprep.subr.mxu0 0.0
        %7931 = vmatpush2.msra.mxu0 0.0
        %7932 = vmatprep.subr.mxu0 0.0
        %7933 = vmatpush2.msra.mxu0 0.0
        %7934 = vmatprep.subr.mxu0 0.0
        %7935 = vmatpush2.msra.mxu0 0.0
        %7936 = vmatprep.subr.mxu0 0.0
        %7937 = vmatpush2.msra.mxu0 0.0
        %7938 = vmatprep.subr.mxu0 0.0
        %7939 = vmatpush2.msra.mxu0 0.0
        %7940 = vmatprep.subr.mxu0 0.0
        %7941 = vmatpush2.msra.mxu0 0.0
        %7942 = vmatprep.subr.mxu0 0.0
        %7943 = vmatpush2.msra.mxu0 0.0
        %7944 = vmatprep.subr.mxu0 0.0
        %7945 = vmatpush2.msra.mxu0 0.0
        %7946 = vmatprep.mubr.f32.mxu0 0.0
        %7947 = vmatmul.mubr.f32.gmra.mxu0 %v7880
        %v7948 = vpop.f32.mrf.mxu0
        %v7949 = vadd.f32 %v7878, %v7948
        %v7950 = vpop.f32.mrf.mxu0
        %7951 = vdwg.mxu0
        %vm7952 = vcmask 73728
        %7953 = vst.msk [vmem:[%s540] sm:$0x1] %vm7952, %v7949
        %s7954 = sand.u32 %s401, 1
        %s7955 = scalar_lea.sflag [#allocation5], %s7954
        %s7956 = sand.u32 %s401, 1
        %s7957 = scalar_lea.vmem [#allocation4], %s7956
        // Predicated region
        $region89: #{conformer_forward.1} parent=87 // pred_check
          %p7958 = pneg %p411
        $region90: #{conformer_forward.1} parent=87 // pred_check_branch
          %7960 = sbr.rel (%p7958) target = $region92
        $region91: #{conformer_forward.1} parent=87 // pred_region
          %s7962 = ssub.s32 16, 16
          %7963 = vsyncadd %s7955, %s7962
          %s7964 = smul.addr %s31, 16
          %s7965 = scalar_lea.hbm %s17, %s7964
          %s7967 = sshll.u32 %s7957, 4
          %s7968 = int_to_ptr.vmem [resolvable:$true] %s7967
          %7970 = dma.vmem_to_hbm [thread:$0]  %s7968, 16, %s7965, %s7955
        $region92: #{conformer_forward.1} parent=87 // pred_fallthru
          _
      $region88: #{conformer_forward.1} parent=5 // pred_fallthru
        _
      %p7971 = scmp.le.s32.totalorder 2, %s26
      // Predicated region
      $region93: #{conformer_forward.1} parent=5 // pred_check
        %p7972 = pneg %p7971
      $region94: #{conformer_forward.1} parent=5 // pred_check_branch
        %7974 = sbr.rel (%p7972) target = $region96
      $region95: #{conformer_forward.1} parent=5 // pred_region
        %s7975 = ssub.s32 %s26, 2
        // Predicated region
        $region97: #{conformer_forward.1} parent=95 // pred_check
          %p7976 = pneg %p417
        $region98: #{conformer_forward.1} parent=95 // pred_check_branch
          %7978 = sbr.rel (%p7976) target = $region100
        $region99: #{conformer_forward.1} parent=95 // pred_region
          %s7979 = sand.u32 %s402, 1
          %s7980 = scalar_lea.sflag [#allocation5], %s7979
          %s7981 = sand.u32 %s402, 1
          %s7982 = scalar_lea.vmem [#allocation4], %s7981
          %7983 = dma.done %s7980, 16
        $region100: #{conformer_forward.1} parent=95 // pred_fallthru
          _
      $region96: #{conformer_forward.1} parent=5 // pred_fallthru
        _
    $region6: #{conformer_forward.1} parent=1 // loop_footer
      %s30 = sadd.s32 1, %s26
    $region7: #{conformer_forward.1} parent=1 // loop_footer_branch
      %25 = sbr.rel target = $region3
    $region8: #{conformer_forward.1} parent=1 // loop_exit
      _
    %7984 = vsyncpa [#allocation5], 1
    %s7985 = scalar_lea.sflag [#allocation5], 1
    %7986 = vsyncpa %s7985, 1

</llo_original>
